<compile_context>
chip_gen: v5e
topology: v5e:2x2
jax: 0.10.0
libtpu: 0.0.40
codegen_flags: <defaults>
</compile_context>

<pallas_src>
import functools

import jax
import jax.numpy as jnp
from jax.experimental import pallas as pl
from jax.experimental.pallas import tpu as pltpu


# Rows of output per tile in the toy test.  At production spatial sizes bump
# to 512-1024 (and raise vmem_limit_bytes) to amortize per-grid-step overhead.
ROW_TILE_TARGET = 128


def _pick_conv_row_tile(H, W, target_rows=ROW_TILE_TARGET):
    """Largest th dividing H with (th*W) % 8 == 0 and th*W <= target_rows."""
    best = H  # full-extent block is always legal
    for th in range(1, H + 1):
        if H % th == 0 and (th * W) % 8 == 0 and th * W <= target_rows:
            best = th
    return best


def _pick_div_tile(total, target=ROW_TILE_TARGET):
    """Largest multiple-of-8 divisor of `total` that is <= target."""
    best = total  # full-extent block is always legal
    for t in range(1, total + 1):
        if total % t == 0 and t % 8 == 0 and t <= target:
            best = t
    return best


# ----------------------------------------------------------------------------
# Kernel 1: fused dilated 3x3 conv + folded-BN + ReLU (no im2col)
# ----------------------------------------------------------------------------
def _dilated_conv_bn_relu_kernel(x_ref, w_ref, bias_ref, o_ref,
                                 *, rate, base, th, W, Cin, Cout):
    """One (batch, row-tile) grid step.

    x_ref:    (1, Hp, Wp, Cin)  bf16  padded image of this batch element
    w_ref:    (3, 3, Cin, Cout) bf16  conv weight with BN scale folded in
    bias_ref: (1, Cout)         f32   folded BN bias
    o_ref:    (1, th*W, Cout)   bf16  output rows [rt*th, rt*th + th)
    """
    rt = pl.program_id(1)
    row0 = rt * th
    acc = jnp.zeros((th * W, Cout), jnp.float32)
    # Static unroll over the 9 dilation taps: 9 shifted MXU matmuls
    # accumulated in f32 (no HBM im2col materialization).
    for kh in range(3):
        for kw in range(3):
            xs = x_ref[0,
                       pl.ds(row0 + base + kh * rate, th),
                       pl.ds(base + kw * rate, W),
                       :]
            xs = xs.reshape(th * W, Cin)
            acc = acc + jnp.dot(xs, w_ref[kh, kw],
                                preferred_element_type=jnp.float32)
    y = acc + bias_ref[...]
    o_ref[0] = jnp.maximum(y, 0.0).astype(o_ref.dtype)


def dilated_conv_bn_relu(x_pad, w_folded, bias, *, rate, rmax, H, W):
    """x_pad: (B, H+2*rmax, W+2*rmax, Cin) bf16 -> (B, H*W, Cout) bf16."""
    B, Hp, Wp, Cin = x_pad.shape
    Cout = w_folded.shape[-1]
    th = _pick_conv_row_tile(H, W)
    n_rt = H // th
    kernel = functools.partial(
        _dilated_conv_bn_relu_kernel,
        rate=rate, base=rmax - rate, th=th, W=W, Cin=Cin, Cout=Cout)
    return pl.pallas_call(
        kernel,
        out_shape=jax.ShapeDtypeStruct((B, H * W, Cout), jnp.bfloat16),
        grid_spec=pltpu.PrefetchScalarGridSpec(
            num_scalar_prefetch=0,
            grid=(B, n_rt),
            in_specs=[
                # Full padded image per batch element (resident across row
                # tiles; only re-fetched when the batch index changes).
                pl.BlockSpec((1, Hp, Wp, Cin), lambda b, rt: (b, 0, 0, 0)),
                pl.BlockSpec((3, 3, Cin, Cout), lambda b, rt: (0, 0, 0, 0)),
                pl.BlockSpec((1, Cout), lambda b, rt: (0, 0)),
            ],
            out_specs=pl.BlockSpec((1, th * W, Cout),
                                   lambda b, rt: (b, rt, 0)),
        ),
        compiler_params=pltpu.CompilerParams(
            dimension_semantics=("parallel", "parallel")),
    )(x_pad, w_folded, bias)


# ----------------------------------------------------------------------------
# Kernel 2: tiled global average pool (AdaptiveAvgPool2d((1,1)))
# ----------------------------------------------------------------------------
def _global_avg_pool_kernel(x_ref, o_ref, *, inv_hw):
    c = pl.program_id(1)

    @pl.when(c == 0)
    def _():
        o_ref[...] = jnp.zeros_like(o_ref)

    o_ref[...] += jnp.sum(x_ref[...].astype(jnp.float32), axis=1,
                          keepdims=True)

    @pl.when(c == pl.num_programs(1) - 1)
    def _():
        o_ref[...] *= inv_hw


def global_avg_pool(x_flat):
    """x: (B, H*W, Cin) bf16 -> (B, Cin) f32 spatial mean."""
    B, HW, Cin = x_flat.shape
    chunk = _pick_div_tile(HW)
    n_chunks = HW // chunk
    kernel = functools.partial(_global_avg_pool_kernel, inv_hw=1.0 / HW)
    pooled = pl.pallas_call(
        kernel,
        out_shape=jax.ShapeDtypeStruct((B, 1, Cin), jnp.float32),
        grid_spec=pltpu.PrefetchScalarGridSpec(
            num_scalar_prefetch=0,
            grid=(B, n_chunks),
            in_specs=[pl.BlockSpec((1, chunk, Cin), lambda b, c: (b, c, 0))],
            out_specs=pl.BlockSpec((1, 1, Cin), lambda b, c: (b, 0, 0)),
        ),
        compiler_params=pltpu.CompilerParams(
            dimension_semantics=("parallel", "arbitrary")),
    )(x_flat)
    return pooled.reshape(B, Cin)


# ----------------------------------------------------------------------------
# Kernel 3: projection 1x1 conv + BN + ReLU, fused over branches (+pool bias)
# ----------------------------------------------------------------------------
def _project_kernel(*args, n_branch):
    """args = f_0..f_{nb-1}, w_ref, pool_ref, bias_ref, o_ref.

    f_i:     (1, tr, Cout)      bf16  branch feature tile
    w_ref:   (nb, Cout, Cout)   bf16  projection weight slices (BN-scaled)
    pool_ref:(1, 1, Cout)       f32   per-batch image-pool contribution
    bias_ref:(1, Cout)          f32   projection folded BN bias
    o_ref:   (1, tr, Cout)      f32
    """
    f_refs = args[:n_branch]
    w_ref, pool_ref, bias_ref, o_ref = args[n_branch:]
    tr, cout = o_ref.shape[1], o_ref.shape[2]
    acc = jnp.zeros((tr, cout), jnp.float32)
    for i in range(n_branch):
        acc = acc + jnp.dot(f_refs[i][0], w_ref[i],
                            preferred_element_type=jnp.float32)
    y = acc + pool_ref[0] + bias_ref[...]
    o_ref[0] = jnp.maximum(y, 0.0)


def project_bn_relu(branch_feats, w_branches, pool_contrib, bias):
    nb = len(branch_feats)
    B, HW, Cout = branch_feats[0].shape
    tr = _pick_div_tile(HW)
    n_rt = HW // tr
    kernel = functools.partial(_project_kernel, n_branch=nb)
    in_specs = ([pl.BlockSpec((1, tr, Cout), lambda b, rt: (b, rt, 0))
                 for _ in range(nb)]
                + [pl.BlockSpec((nb, Cout, Cout), lambda b, rt: (0, 0, 0)),
                   pl.BlockSpec((1, 1, Cout), lambda b, rt: (b, 0, 0)),
                   pl.BlockSpec((1, Cout), lambda b, rt: (0, 0))])
    return pl.pallas_call(
        kernel,
        out_shape=jax.ShapeDtypeStruct((B, HW, Cout), jnp.float32),
        grid_spec=pltpu.PrefetchScalarGridSpec(
            num_scalar_prefetch=0,
            grid=(B, n_rt),
            in_specs=in_specs,
            out_specs=pl.BlockSpec((1, tr, Cout), lambda b, rt: (b, rt, 0)),
        ),
        compiler_params=pltpu.CompilerParams(
            dimension_semantics=("parallel", "parallel")),
    )(*branch_feats, w_branches, pool_contrib, bias)


# ----------------------------------------------------------------------------
# Plain-JAX glue
# ----------------------------------------------------------------------------
def fold_bn(gamma, beta, mean, var, eps=1e-5):
    scale = gamma / jnp.sqrt(var + eps)
    bias = beta - mean * scale
    return scale, bias


def init_aspp_params(key, in_channels, out_channels, dilation_rates):
    params = {"branches": [], "rates": tuple(dilation_rates)}
    n_branch = len(dilation_rates)

    def bn_params(k, c):
        kg, kb = jax.random.split(k)
        return dict(
            gamma=1.0 + 0.1 * jax.random.normal(kg, (c,), jnp.float32),
            beta=0.1 * jax.random.normal(kb, (c,), jnp.float32),
            mean=jnp.zeros((c,), jnp.float32),
            var=jnp.ones((c,), jnp.float32),
        )

    keys = jax.random.split(key, n_branch + 2)
    for i, _rate in enumerate(dilation_rates):
        kw_, kb_ = jax.random.split(keys[i])
        w = 0.1 * jax.random.normal(
            kw_, (3, 3, in_channels, out_channels), jnp.float32)
        params["branches"].append(dict(w=w, bn=bn_params(kb_, out_channels)))

    kw_, kb_ = jax.random.split(keys[n_branch])
    params["image_pool"] = dict(
        w=0.1 * jax.random.normal(kw_, (in_channels, out_channels),
                                  jnp.float32),
        bn=bn_params(kb_, out_channels))

    kw_, kb_ = jax.random.split(keys[n_branch + 1])
    params["project"] = dict(
        w=0.1 * jax.random.normal(
            kw_, ((n_branch + 1) * out_channels, out_channels), jnp.float32),
        bn=bn_params(kb_, out_channels))
    return params


# ----------------------------------------------------------------------------
# ASPP forward
# ----------------------------------------------------------------------------
def aspp_forward(params, x_nchw):
    B, Cin, H, W = x_nchw.shape
    rates = params["rates"]
    nb = len(rates)
    rmax = max(rates)
    Cout = params["project"]["w"].shape[-1]

    x = jnp.transpose(x_nchw, (0, 2, 3, 1)).astype(jnp.float32)   # NHWC
    x_bf = x.astype(jnp.bfloat16)
    # Pad ONCE with the max rate; per-branch tap offsets absorb the rest.
    x_pad = jnp.pad(x_bf, ((0, 0), (rmax, rmax), (rmax, rmax), (0, 0)))

    # ---- dilated 3x3 branches: fused conv + BN + ReLU (no im2col) ----
    branch_feats = []
    for rate, br in zip(rates, params["branches"]):
        scale, bias = fold_bn(br["bn"]["gamma"], br["bn"]["beta"],
                              br["bn"]["mean"], br["bn"]["var"])
        w_folded = (br["w"] * scale[None, None, None, :]).astype(jnp.bfloat16)
        feats = dilated_conv_bn_relu(
            x_pad, w_folded, bias.reshape(1, -1).astype(jnp.float32),
            rate=rate, rmax=rmax, H=H, W=W)
        branch_feats.append(feats)                 # (B, H*W, Cout) bf16

    # ---- image-pool branch: tiled Pallas pool, tiny 1x1 conv in plain jnp ----
    pooled = global_avg_pool(x_bf.reshape(B, H * W, Cin))        # (B, Cin) f32
    ip = params["image_pool"]
    s_ip, b_ip = fold_bn(ip["bn"]["gamma"], ip["bn"]["beta"],
                         ip["bn"]["mean"], ip["bn"]["var"])
    img_feat = jnp.maximum(
        pooled @ (ip["w"] * s_ip[None, :]) + b_ip[None, :], 0.0)  # (B, Cout)

    # ---- projection: per-branch matmuls + per-batch pool bias + BN + ReLU ----
    pr = params["project"]
    s_pr, b_pr = fold_bn(pr["bn"]["gamma"], pr["bn"]["beta"],
                         pr["bn"]["mean"], pr["bn"]["var"])
    w_proj = pr["w"] * s_pr[None, :]               # fold BN scale into weights
    w_proj_branches = w_proj[:nb * Cout].reshape(nb, Cout, Cout)
    w_proj_pool = w_proj[nb * Cout:]               # (Cout, Cout)
    # Bilinear upsampling of the 1x1 pooled feature is a constant broadcast,
    # so its projection contribution reduces exactly to a per-batch bias.
    pool_contrib = (img_feat @ w_proj_pool).reshape(B, 1, Cout)  # f32

    out = project_bn_relu(
        branch_feats, w_proj_branches.astype(jnp.bfloat16),
        pool_contrib.astype(jnp.float32),
        b_pr.reshape(1, -1).astype(jnp.float32))   # (B, H*W, Cout) f32

    # Dropout(0.5) is identity in eval mode.
    out = out.reshape(B, H, W, Cout)
    return jnp.transpose(out, (0, 3, 1, 2))        # back to NCHW


if __name__ == "__main__":
    key = jax.random.PRNGKey(0)
    k_param, k_x = jax.random.split(key)

    B, Cin, H, W = 2, 4, 16, 16
    Cout = 8
    rates = (1, 2, 3)

    params = init_aspp_params(k_param, Cin, Cout, rates)
    x = jax.random.normal(k_x, (B, Cin, H, W), jnp.float32)

    fwd = jax.jit(functools.partial(aspp_forward, params))
    out = fwd(x)
    out = jax.block_until_ready(out)

    assert out.shape == (B, Cout, H, W), out.shape
    assert bool(jnp.all(jnp.isfinite(out)))
    assert bool(jnp.all(out >= 0.0))   # final ReLU
    print("KERNEL_OK")
</pallas_src>

<mosaic_0001>
module attributes {stable_mosaic.version = 11 : i64} {
  func.func @_global_avg_pool_kernel(%arg0: i32, %arg1: i32, %arg2: memref<1x128x4xbf16, #tpu.memory_space<vmem>>, %arg3: memref<1x1x4xf32, #tpu.memory_space<vmem>>) attributes {dimension_semantics = [#tpu.dimension_semantics<parallel>, #tpu.dimension_semantics<arbitrary>], iteration_bounds = array<i64: 2, 2>, scalar_prefetch = 0 : i64, scratch_operands = 0 : i64, tpu.core_type = #tpu.core_type<tc>, window_params = [{transform_indices = @transform_0, window_bounds = array<i64: 1, 128, 4>}, {transform_indices = @transform_1, window_bounds = array<i64: 1, 1, 4>}]} {
    %c0_i32 = arith.constant 0 : i32
    %0 = arith.cmpi eq, %arg1, %c0_i32 : i32
    %1 = arith.extui %0 : i1 to i32
    %c0_i32_0 = arith.constant 0 : i32
    %2 = arith.cmpi ne, %1, %c0_i32_0 : i32
    scf.if %2 {
      %cst_10 = arith.constant 0.000000e+00 : f32
      %13 = vector.broadcast %cst_10 : f32 to vector<1x1x4xf32>
      %c0_11 = arith.constant 0 : index
      %c0_12 = arith.constant 0 : index
      %c0_13 = arith.constant 0 : index
      %14 = vector.load %arg3[%c0_11, %c0_12, %c0_13] : memref<1x1x4xf32, #tpu.memory_space<vmem>>, vector<1x1x4xf32>
      tpu.vector_store %arg3[%c0_11, %c0_12, %c0_13], %13 {strides = array<i32>} : memref<1x1x4xf32, #tpu.memory_space<vmem>>, vector<1x1x4xf32>,
    } else {
    }
    %c0 = arith.constant 0 : index
    %c0_1 = arith.constant 0 : index
    %c0_2 = arith.constant 0 : index
    %3 = vector.load %arg3[%c0, %c0_1, %c0_2] : memref<1x1x4xf32, #tpu.memory_space<vmem>>, vector<1x1x4xf32>
    %c0_3 = arith.constant 0 : index
    %c0_4 = arith.constant 0 : index
    %c0_5 = arith.constant 0 : index
    %4 = vector.load %arg2[%c0_3, %c0_4, %c0_5] : memref<1x128x4xbf16, #tpu.memory_space<vmem>>, vector<1x128x4xbf16>
    %5 = arith.extf %4 : vector<1x128x4xbf16> to vector<1x128x4xf32>
    %cst = arith.constant dense<0.000000e+00> : vector<1x4xf32>
    %6 = vector.multi_reduction <add>, %5, %cst [1] : vector<1x128x4xf32> to vector<1x4xf32>
    %7 = vector.shape_cast %6 : vector<1x4xf32> to vector<1x1x4xf32>
    %8 = arith.addf %3, %7 : vector<1x1x4xf32>
    %c0_6 = arith.constant 0 : index
    %c0_7 = arith.constant 0 : index
    %c0_8 = arith.constant 0 : index
    %9 = vector.load %arg3[%c0_6, %c0_7, %c0_8] : memref<1x1x4xf32, #tpu.memory_space<vmem>>, vector<1x1x4xf32>
    tpu.vector_store %arg3[%c0_6, %c0_7, %c0_8], %8 {strides = array<i32>} : memref<1x1x4xf32, #tpu.memory_space<vmem>>, vector<1x1x4xf32>,
    %c1_i32 = arith.constant 1 : i32
    %10 = arith.cmpi eq, %arg1, %c1_i32 : i32
    %11 = arith.extui %10 : i1 to i32
    %c0_i32_9 = arith.constant 0 : i32
    %12 = arith.cmpi ne, %11, %c0_i32_9 : i32
    scf.if %12 {
      %c0_10 = arith.constant 0 : index
      %c0_11 = arith.constant 0 : index
      %c0_12 = arith.constant 0 : index
      %13 = vector.load %arg3[%c0_10, %c0_11, %c0_12] : memref<1x1x4xf32, #tpu.memory_space<vmem>>, vector<1x1x4xf32>
      %cst_13 = arith.constant 3.906250e-03 : f32
      %14 = vector.broadcast %cst_13 : f32 to vector<1x1x4xf32>
      %15 = arith.mulf %13, %14 : vector<1x1x4xf32>
      %c0_14 = arith.constant 0 : index
      %c0_15 = arith.constant 0 : index
      %c0_16 = arith.constant 0 : index
      %16 = vector.load %arg3[%c0_14, %c0_15, %c0_16] : memref<1x1x4xf32, #tpu.memory_space<vmem>>, vector<1x1x4xf32>
      tpu.vector_store %arg3[%c0_14, %c0_15, %c0_16], %15 {strides = array<i32>} : memref<1x1x4xf32, #tpu.memory_space<vmem>>, vector<1x1x4xf32>,
    } else {
    }
    return
  }
  func.func @transform_0(%arg0: i32, %arg1: i32) -> (i32, i32, i32) {
    %c0_i32 = arith.constant 0 : i32
    %c0_i32_0 = arith.constant 0 : i32
    return %arg0, %arg1, %c0_i32 : i32, i32, i32
  }
  func.func @transform_1(%arg0: i32, %arg1: i32) -> (i32, i32, i32) {
    %c0_i32 = arith.constant 0 : i32
    %c0_i32_0 = arith.constant 0 : i32
    %c0_i32_1 = arith.constant 0 : i32
    return %arg0, %c0_i32, %c0_i32_0 : i32, i32, i32
  }
}

module attributes {stable_mosaic.version = 11 : i64} {
  func.func @_dilated_conv_bn_relu_kernel(%arg0: i32, %arg1: i32, %arg2: memref<1x22x22x4xbf16, #tpu.memory_space<vmem>>, %arg3: memref<3x3x4x8xbf16, #tpu.memory_space<vmem>>, %arg4: memref<1x8xf32, #tpu.memory_space<vmem>>, %arg5: memref<1x128x8xbf16, #tpu.memory_space<vmem>>) attributes {dimension_semantics = [#tpu.dimension_semantics<parallel>, #tpu.dimension_semantics<parallel>], iteration_bounds = array<i64: 2, 2>, scalar_prefetch = 0 : i64, scratch_operands = 0 : i64, tpu.core_type = #tpu.core_type<tc>, window_params = [{transform_indices = @transform_0, window_bounds = array<i64: 1, 22, 22, 4>}, {pipeline_mode = #tpu.pipeline_mode<synchronous>, transform_indices = @transform_1, window_bounds = array<i64: 3, 3, 4, 8>}, {pipeline_mode = #tpu.pipeline_mode<synchronous>, transform_indices = @transform_2, window_bounds = array<i64: 1, 8>}, {transform_indices = @transform_3, window_bounds = array<i64: 1, 128, 8>}]} {
    %c8_i32 = arith.constant 8 : i32
    %0 = arith.muli %arg1, %c8_i32 : i32
    %cst = arith.constant 0.000000e+00 : f32
    %1 = vector.broadcast %cst : f32 to vector<128x8xf32>
    %c1_i32 = arith.constant 1 : i32
    %2 = arith.addi %0, %c1_i32 : i32
    %c0_i32 = arith.constant 0 : i32
    %3 = arith.addi %2, %c0_i32 : i32
    %c0 = arith.constant 0 : index
    %4 = arith.index_cast %3 : i32 to index
    %c1 = arith.constant 1 : index
    %c0_0 = arith.constant 0 : index
    %5 = vector.load %arg2[%c0, %4, %c1, %c0_0] : memref<1x22x22x4xbf16, #tpu.memory_space<vmem>>, vector<1x8x16x4xbf16>
    %6 = vector.shape_cast %5 : vector<1x8x16x4xbf16> to vector<8x16x4xbf16>
    %7 = vector.shape_cast %6 : vector<8x16x4xbf16> to vector<128x4xbf16>
    %c0_1 = arith.constant 0 : index
    %c0_2 = arith.constant 0 : index
    %c0_3 = arith.constant 0 : index
    %c0_4 = arith.constant 0 : index
    %8 = vector.load %arg3[%c0_1, %c0_2, %c0_3, %c0_4] : memref<3x3x4x8xbf16, #tpu.memory_space<vmem>>, vector<1x1x4x8xbf16>
    %9 = vector.shape_cast %8 : vector<1x1x4x8xbf16> to vector<4x8xbf16>
    %cst_5 = arith.constant dense<0.000000e+00> : vector<128x8xf32>
    %10 = tpu.matmul %7, %9, %cst_5 {dimension_numbers = #tpu.dot_dimension_numbers<[1], [0], [0], [1], [0, 0, 1, 1], [], []>} : vector<128x4xbf16>, vector<4x8xbf16>, vector<128x8xf32> -> vector<128x8xf32>
    %11 = arith.addf %1, %10 : vector<128x8xf32>
    %c1_i32_6 = arith.constant 1 : i32
    %12 = arith.addi %0, %c1_i32_6 : i32
    %c0_i32_7 = arith.constant 0 : i32
    %13 = arith.addi %12, %c0_i32_7 : i32
    %c0_8 = arith.constant 0 : index
    %14 = arith.index_cast %13 : i32 to index
    %c3 = arith.constant 3 : index
    %c0_9 = arith.constant 0 : index
    %15 = vector.load %arg2[%c0_8, %14, %c3, %c0_9] : memref<1x22x22x4xbf16, #tpu.memory_space<vmem>>, vector<1x8x16x4xbf16>
    %16 = vector.shape_cast %15 : vector<1x8x16x4xbf16> to vector<8x16x4xbf16>
    %17 = vector.shape_cast %16 : vector<8x16x4xbf16> to vector<128x4xbf16>
    %c0_10 = arith.constant 0 : index
    %c1_11 = arith.constant 1 : index
    %c0_12 = arith.constant 0 : index
    %c0_13 = arith.constant 0 : index
    %18 = vector.load %arg3[%c0_10, %c1_11, %c0_12, %c0_13] : memref<3x3x4x8xbf16, #tpu.memory_space<vmem>>, vector<1x1x4x8xbf16>
    %19 = vector.shape_cast %18 : vector<1x1x4x8xbf16> to vector<4x8xbf16>
    %cst_14 = arith.constant dense<0.000000e+00> : vector<128x8xf32>
    %20 = tpu.matmul %17, %19, %cst_14 {dimension_numbers = #tpu.dot_dimension_numbers<[1], [0], [0], [1], [0, 0, 1, 1], [], []>} : vector<128x4xbf16>, vector<4x8xbf16>, vector<128x8xf32> -> vector<128x8xf32>
    %21 = arith.addf %11, %20 : vector<128x8xf32>
    %c1_i32_15 = arith.constant 1 : i32
    %22 = arith.addi %0, %c1_i32_15 : i32
    %c0_i32_16 = arith.constant 0 : i32
    %23 = arith.addi %22, %c0_i32_16 : i32
    %c0_17 = arith.constant 0 : index
    %24 = arith.index_cast %23 : i32 to index
    %c5 = arith.constant 5 : index
    %c0_18 = arith.constant 0 : index
    %25 = vector.load %arg2[%c0_17, %24, %c5, %c0_18] : memref<1x22x22x4xbf16, #tpu.memory_space<vmem>>, vector<1x8x16x4xbf16>
    %26 = vector.shape_cast %25 : vector<1x8x16x4xbf16> to vector<8x16x4xbf16>
    %27 = vector.shape_cast %26 : vector<8x16x4xbf16> to vector<128x4xbf16>
    %c0_19 = arith.constant 0 : index
    %c2 = arith.constant 2 : index
    %c0_20 = arith.constant 0 : index
    %c0_21 = arith.constant 0 : index
    %28 = vector.load %arg3[%c0_19, %c2, %c0_20, %c0_21] : memref<3x3x4x8xbf16, #tpu.memory_space<vmem>>, vector<1x1x4x8xbf16>
    %29 = vector.shape_cast %28 : vector<1x1x4x8xbf16> to vector<4x8xbf16>
    %cst_22 = arith.constant dense<0.000000e+00> : vector<128x8xf32>
    %30 = tpu.matmul %27, %29, %cst_22 {dimension_numbers = #tpu.dot_dimension_numbers<[1], [0], [0], [1], [0, 0, 1, 1], [], []>} : vector<128x4xbf16>, vector<4x8xbf16>, vector<128x8xf32> -> vector<128x8xf32>
    %31 = arith.addf %21, %30 : vector<128x8xf32>
    %c1_i32_23 = arith.constant 1 : i32
    %32 = arith.addi %0, %c1_i32_23 : i32
    %c2_i32 = arith.constant 2 : i32
    %33 = arith.addi %32, %c2_i32 : i32
    %c0_24 = arith.constant 0 : index
    %34 = arith.index_cast %33 : i32 to index
    %c1_25 = arith.constant 1 : index
    %c0_26 = arith.constant 0 : index
    %35 = vector.load %arg2[%c0_24, %34, %c1_25, %c0_26] : memref<1x22x22x4xbf16, #tpu.memory_space<vmem>>, vector<1x8x16x4xbf16>
    %36 = vector.shape_cast %35 : vector<1x8x16x4xbf16> to vector<8x16x4xbf16>
    %37 = vector.shape_cast %36 : vector<8x16x4xbf16> to vector<128x4xbf16>
    %c1_27 = arith.constant 1 : index
    %c0_28 = arith.constant 0 : index
    %c0_29 = arith.constant 0 : index
    %c0_30 = arith.constant 0 : index
    %38 = vector.load %arg3[%c1_27, %c0_28, %c0_29, %c0_30] : memref<3x3x4x8xbf16, #tpu.memory_space<vmem>>, vector<1x1x4x8xbf16>
    %39 = vector.shape_cast %38 : vector<1x1x4x8xbf16> to vector<4x8xbf16>
    %cst_31 = arith.constant dense<0.000000e+00> : vector<128x8xf32>
    %40 = tpu.matmul %37, %39, %cst_31 {dimension_numbers = #tpu.dot_dimension_numbers<[1], [0], [0], [1], [0, 0, 1, 1], [], []>} : vector<128x4xbf16>, vector<4x8xbf16>, vector<128x8xf32> -> vector<128x8xf32>
    %41 = arith.addf %31, %40 : vector<128x8xf32>
    %c1_i32_32 = arith.constant 1 : i32
    %42 = arith.addi %0, %c1_i32_32 : i32
    %c2_i32_33 = arith.constant 2 : i32
    %43 = arith.addi %42, %c2_i32_33 : i32
    %c0_34 = arith.constant 0 : index
    %44 = arith.index_cast %43 : i32 to index
    %c3_35 = arith.constant 3 : index
    %c0_36 = arith.constant 0 : index
    %45 = vector.load %arg2[%c0_34, %44, %c3_35, %c0_36] : memref<1x22x22x4xbf16, #tpu.memory_space<vmem>>, vector<1x8x16x4xbf16>
    %46 = vector.shape_cast %45 : vector<1x8x16x4xbf16> to vector<8x16x4xbf16>
    %47 = vector.shape_cast %46 : vector<8x16x4xbf16> to vector<128x4xbf16>
    %c1_37 = arith.constant 1 : index
    %c1_38 = arith.constant 1 : index
    %c0_39 = arith.constant 0 : index
    %c0_40 = arith.constant 0 : index
    %48 = vector.load %arg3[%c1_37, %c1_38, %c0_39, %c0_40] : memref<3x3x4x8xbf16, #tpu.memory_space<vmem>>, vector<1x1x4x8xbf16>
    %49 = vector.shape_cast %48 : vector<1x1x4x8xbf16> to vector<4x8xbf16>
    %cst_41 = arith.constant dense<0.000000e+00> : vector<128x8xf32>
    %50 = tpu.matmul %47, %49, %cst_41 {dimension_numbers = #tpu.dot_dimension_numbers<[1], [0], [0], [1], [0, 0, 1, 1], [], []>} : vector<128x4xbf16>, vector<4x8xbf16>, vector<128x8xf32> -> vector<128x8xf32>
    %51 = arith.addf %41, %50 : vector<128x8xf32>
    %c1_i32_42 = arith.constant 1 : i32
    %52 = arith.addi %0, %c1_i32_42 : i32
    %c2_i32_43 = arith.constant 2 : i32
    %53 = arith.addi %52, %c2_i32_43 : i32
    %c0_44 = arith.constant 0 : index
    %54 = arith.index_cast %53 : i32 to index
    %c5_45 = arith.constant 5 : index
    %c0_46 = arith.constant 0 : index
    %55 = vector.load %arg2[%c0_44, %54, %c5_45, %c0_46] : memref<1x22x22x4xbf16, #tpu.memory_space<vmem>>, vector<1x8x16x4xbf16>
    %56 = vector.shape_cast %55 : vector<1x8x16x4xbf16> to vector<8x16x4xbf16>
    %57 = vector.shape_cast %56 : vector<8x16x4xbf16> to vector<128x4xbf16>
    %c1_47 = arith.constant 1 : index
    %c2_48 = arith.constant 2 : index
    %c0_49 = arith.constant 0 : index
    %c0_50 = arith.constant 0 : index
    %58 = vector.load %arg3[%c1_47, %c2_48, %c0_49, %c0_50] : memref<3x3x4x8xbf16, #tpu.memory_space<vmem>>, vector<1x1x4x8xbf16>
    %59 = vector.shape_cast %58 : vector<1x1x4x8xbf16> to vector<4x8xbf16>
    %cst_51 = arith.constant dense<0.000000e+00> : vector<128x8xf32>
    %60 = tpu.matmul %57, %59, %cst_51 {dimension_numbers = #tpu.dot_dimension_numbers<[1], [0], [0], [1], [0, 0, 1, 1], [], []>} : vector<128x4xbf16>, vector<4x8xbf16>, vector<128x8xf32> -> vector<128x8xf32>
    %61 = arith.addf %51, %60 : vector<128x8xf32>
    %c1_i32_52 = arith.constant 1 : i32
    %62 = arith.addi %0, %c1_i32_52 : i32
    %c4_i32 = arith.constant 4 : i32
    %63 = arith.addi %62, %c4_i32 : i32
    %c0_53 = arith.constant 0 : index
    %64 = arith.index_cast %63 : i32 to index
    %c1_54 = arith.constant 1 : index
    %c0_55 = arith.constant 0 : index
    %65 = vector.load %arg2[%c0_53, %64, %c1_54, %c0_55] : memref<1x22x22x4xbf16, #tpu.memory_space<vmem>>, vector<1x8x16x4xbf16>
    %66 = vector.shape_cast %65 : vector<1x8x16x4xbf16> to vector<8x16x4xbf16>
    %67 = vector.shape_cast %66 : vector<8x16x4xbf16> to vector<128x4xbf16>
    %c2_56 = arith.constant 2 : index
    %c0_57 = arith.constant 0 : index
    %c0_58 = arith.constant 0 : index
    %c0_59 = arith.constant 0 : index
    %68 = vector.load %arg3[%c2_56, %c0_57, %c0_58, %c0_59] : memref<3x3x4x8xbf16, #tpu.memory_space<vmem>>, vector<1x1x4x8xbf16>
    %69 = vector.shape_cast %68 : vector<1x1x4x8xbf16> to vector<4x8xbf16>
    %cst_60 = arith.constant dense<0.000000e+00> : vector<128x8xf32>
    %70 = tpu.matmul %67, %69, %cst_60 {dimension_numbers = #tpu.dot_dimension_numbers<[1], [0], [0], [1], [0, 0, 1, 1], [], []>} : vector<128x4xbf16>, vector<4x8xbf16>, vector<128x8xf32> -> vector<128x8xf32>
    %71 = arith.addf %61, %70 : vector<128x8xf32>
    %c1_i32_61 = arith.constant 1 : i32
    %72 = arith.addi %0, %c1_i32_61 : i32
    %c4_i32_62 = arith.constant 4 : i32
    %73 = arith.addi %72, %c4_i32_62 : i32
    %c0_63 = arith.constant 0 : index
    %74 = arith.index_cast %73 : i32 to index
    %c3_64 = arith.constant 3 : index
    %c0_65 = arith.constant 0 : index
    %75 = vector.load %arg2[%c0_63, %74, %c3_64, %c0_65] : memref<1x22x22x4xbf16, #tpu.memory_space<vmem>>, vector<1x8x16x4xbf16>
    %76 = vector.shape_cast %75 : vector<1x8x16x4xbf16> to vector<8x16x4xbf16>
    %77 = vector.shape_cast %76 : vector<8x16x4xbf16> to vector<128x4xbf16>
    %c2_66 = arith.constant 2 : index
    %c1_67 = arith.constant 1 : index
    %c0_68 = arith.constant 0 : index
    %c0_69 = arith.constant 0 : index
    %78 = vector.load %arg3[%c2_66, %c1_67, %c0_68, %c0_69] : memref<3x3x4x8xbf16, #tpu.memory_space<vmem>>, vector<1x1x4x8xbf16>
    %79 = vector.shape_cast %78 : vector<1x1x4x8xbf16> to vector<4x8xbf16>
    %cst_70 = arith.constant dense<0.000000e+00> : vector<128x8xf32>
    %80 = tpu.matmul %77, %79, %cst_70 {dimension_numbers = #tpu.dot_dimension_numbers<[1], [0], [0], [1], [0, 0, 1, 1], [], []>} : vector<128x4xbf16>, vector<4x8xbf16>, vector<128x8xf32> -> vector<128x8xf32>
    %81 = arith.addf %71, %80 : vector<128x8xf32>
    %c1_i32_71 = arith.constant 1 : i32
    %82 = arith.addi %0, %c1_i32_71 : i32
    %c4_i32_72 = arith.constant 4 : i32
    %83 = arith.addi %82, %c4_i32_72 : i32
    %c0_73 = arith.constant 0 : index
    %84 = arith.index_cast %83 : i32 to index
    %c5_74 = arith.constant 5 : index
    %c0_75 = arith.constant 0 : index
    %85 = vector.load %arg2[%c0_73, %84, %c5_74, %c0_75] : memref<1x22x22x4xbf16, #tpu.memory_space<vmem>>, vector<1x8x16x4xbf16>
    %86 = vector.shape_cast %85 : vector<1x8x16x4xbf16> to vector<8x16x4xbf16>
    %87 = vector.shape_cast %86 : vector<8x16x4xbf16> to vector<128x4xbf16>
    %c2_76 = arith.constant 2 : index
    %c2_77 = arith.constant 2 : index
    %c0_78 = arith.constant 0 : index
    %c0_79 = arith.constant 0 : index
    %88 = vector.load %arg3[%c2_76, %c2_77, %c0_78, %c0_79] : memref<3x3x4x8xbf16, #tpu.memory_space<vmem>>, vector<1x1x4x8xbf16>
    %89 = vector.shape_cast %88 : vector<1x1x4x8xbf16> to vector<4x8xbf16>
    %cst_80 = arith.constant dense<0.000000e+00> : vector<128x8xf32>
    %90 = tpu.matmul %87, %89, %cst_80 {dimension_numbers = #tpu.dot_dimension_numbers<[1], [0], [0], [1], [0, 0, 1, 1], [], []>} : vector<128x4xbf16>, vector<4x8xbf16>, vector<128x8xf32> -> vector<128x8xf32>
    %91 = arith.addf %81, %90 : vector<128x8xf32>
    %c0_81 = arith.constant 0 : index
    %c0_82 = arith.constant 0 : index
    %92 = vector.load %arg4[%c0_81, %c0_82] : memref<1x8xf32, #tpu.memory_space<vmem>>, vector<1x8xf32>
    %93 = vector.broadcast %92 : vector<1x8xf32> to vector<128x8xf32>
    %94 = arith.addf %91, %93 : vector<128x8xf32>
    %cst_83 = arith.constant 0.000000e+00 : f32
    %95 = vector.broadcast %cst_83 : f32 to vector<128x8xf32>
    %96 = arith.maximumf %94, %95 : vector<128x8xf32>
    %97 = arith.truncf %96 : vector<128x8xf32> to vector<128x8xbf16>
    %c0_84 = arith.constant 0 : index
    %c0_85 = arith.constant 0 : index
    %c0_86 = arith.constant 0 : index
    %98 = vector.load %arg5[%c0_84, %c0_85, %c0_86] : memref<1x128x8xbf16, #tpu.memory_space<vmem>>, vector<1x128x8xbf16>
    %99 = vector.shape_cast %98 : vector<1x128x8xbf16> to vector<128x8xbf16>
    %100 = vector.shape_cast %97 : vector<128x8xbf16> to vector<1x128x8xbf16>
    tpu.vector_store %arg5[%c0_84, %c0_85, %c0_86], %100 {strides = array<i32>} : memref<1x128x8xbf16, #tpu.memory_space<vmem>>, vector<1x128x8xbf16>,
    return
  }
  func.func @transform_0(%arg0: i32, %arg1: i32) -> (i32, i32, i32, i32) {
    %c0_i32 = arith.constant 0 : i32
    %c0_i32_0 = arith.constant 0 : i32
    %c0_i32_1 = arith.constant 0 : i32
    %c0_i32_2 = arith.constant 0 : i32
    return %arg0, %c0_i32, %c0_i32_0, %c0_i32_1 : i32, i32, i32, i32
  }
  func.func @transform_1(%arg0: i32, %arg1: i32) -> (i32, i32, i32, i32) {
    %c0_i32 = arith.constant 0 : i32
    %c0_i32_0 = arith.constant 0 : i32
    %c0_i32_1 = arith.constant 0 : i32
    %c0_i32_2 = arith.constant 0 : i32
    %c0_i32_3 = arith.constant 0 : i32
    return %c0_i32, %c0_i32_0, %c0_i32_1, %c0_i32_2 : i32, i32, i32, i32
  }
  func.func @transform_2(%arg0: i32, %arg1: i32) -> (i32, i32) {
    %c0_i32 = arith.constant 0 : i32
    %c0_i32_0 = arith.constant 0 : i32
    %c0_i32_1 = arith.constant 0 : i32
    return %c0_i32, %c0_i32_0 : i32, i32
  }
  func.func @transform_3(%arg0: i32, %arg1: i32) -> (i32, i32, i32) {
    %c0_i32 = arith.constant 0 : i32
    %c0_i32_0 = arith.constant 0 : i32
    return %arg0, %arg1, %c0_i32 : i32, i32, i32
  }
}

module attributes {stable_mosaic.version = 11 : i64} {
  func.func @_dilated_conv_bn_relu_kernel(%arg0: i32, %arg1: i32, %arg2: memref<1x22x22x4xbf16, #tpu.memory_space<vmem>>, %arg3: memref<3x3x4x8xbf16, #tpu.memory_space<vmem>>, %arg4: memref<1x8xf32, #tpu.memory_space<vmem>>, %arg5: memref<1x128x8xbf16, #tpu.memory_space<vmem>>) attributes {dimension_semantics = [#tpu.dimension_semantics<parallel>, #tpu.dimension_semantics<parallel>], iteration_bounds = array<i64: 2, 2>, scalar_prefetch = 0 : i64, scratch_operands = 0 : i64, tpu.core_type = #tpu.core_type<tc>, window_params = [{transform_indices = @transform_0, window_bounds = array<i64: 1, 22, 22, 4>}, {pipeline_mode = #tpu.pipeline_mode<synchronous>, transform_indices = @transform_1, window_bounds = array<i64: 3, 3, 4, 8>}, {pipeline_mode = #tpu.pipeline_mode<synchronous>, transform_indices = @transform_2, window_bounds = array<i64: 1, 8>}, {transform_indices = @transform_3, window_bounds = array<i64: 1, 128, 8>}]} {
    %c8_i32 = arith.constant 8 : i32
    %0 = arith.muli %arg1, %c8_i32 : i32
    %cst = arith.constant 0.000000e+00 : f32
    %1 = vector.broadcast %cst : f32 to vector<128x8xf32>
    %c0_i32 = arith.constant 0 : i32
    %2 = arith.addi %0, %c0_i32 : i32
    %c0_i32_0 = arith.constant 0 : i32
    %3 = arith.addi %2, %c0_i32_0 : i32
    %c0 = arith.constant 0 : index
    %4 = arith.index_cast %3 : i32 to index
    %c0_1 = arith.constant 0 : index
    %c0_2 = arith.constant 0 : index
    %5 = vector.load %arg2[%c0, %4, %c0_1, %c0_2] : memref<1x22x22x4xbf16, #tpu.memory_space<vmem>>, vector<1x8x16x4xbf16>
    %6 = vector.shape_cast %5 : vector<1x8x16x4xbf16> to vector<8x16x4xbf16>
    %7 = vector.shape_cast %6 : vector<8x16x4xbf16> to vector<128x4xbf16>
    %c0_3 = arith.constant 0 : index
    %c0_4 = arith.constant 0 : index
    %c0_5 = arith.constant 0 : index
    %c0_6 = arith.constant 0 : index
    %8 = vector.load %arg3[%c0_3, %c0_4, %c0_5, %c0_6] : memref<3x3x4x8xbf16, #tpu.memory_space<vmem>>, vector<1x1x4x8xbf16>
    %9 = vector.shape_cast %8 : vector<1x1x4x8xbf16> to vector<4x8xbf16>
    %cst_7 = arith.constant dense<0.000000e+00> : vector<128x8xf32>
    %10 = tpu.matmul %7, %9, %cst_7 {dimension_numbers = #tpu.dot_dimension_numbers<[1], [0], [0], [1], [0, 0, 1, 1], [], []>} : vector<128x4xbf16>, vector<4x8xbf16>, vector<128x8xf32> -> vector<128x8xf32>
    %11 = arith.addf %1, %10 : vector<128x8xf32>
    %c0_i32_8 = arith.constant 0 : i32
    %12 = arith.addi %0, %c0_i32_8 : i32
    %c0_i32_9 = arith.constant 0 : i32
    %13 = arith.addi %12, %c0_i32_9 : i32
    %c0_10 = arith.constant 0 : index
    %14 = arith.index_cast %13 : i32 to index
    %c3 = arith.constant 3 : index
    %c0_11 = arith.constant 0 : index
    %15 = vector.load %arg2[%c0_10, %14, %c3, %c0_11] : memref<1x22x22x4xbf16, #tpu.memory_space<vmem>>, vector<1x8x16x4xbf16>
    %16 = vector.shape_cast %15 : vector<1x8x16x4xbf16> to vector<8x16x4xbf16>
    %17 = vector.shape_cast %16 : vector<8x16x4xbf16> to vector<128x4xbf16>
    %c0_12 = arith.constant 0 : index
    %c1 = arith.constant 1 : index
    %c0_13 = arith.constant 0 : index
    %c0_14 = arith.constant 0 : index
    %18 = vector.load %arg3[%c0_12, %c1, %c0_13, %c0_14] : memref<3x3x4x8xbf16, #tpu.memory_space<vmem>>, vector<1x1x4x8xbf16>
    %19 = vector.shape_cast %18 : vector<1x1x4x8xbf16> to vector<4x8xbf16>
    %cst_15 = arith.constant dense<0.000000e+00> : vector<128x8xf32>
    %20 = tpu.matmul %17, %19, %cst_15 {dimension_numbers = #tpu.dot_dimension_numbers<[1], [0], [0], [1], [0, 0, 1, 1], [], []>} : vector<128x4xbf16>, vector<4x8xbf16>, vector<128x8xf32> -> vector<128x8xf32>
    %21 = arith.addf %11, %20 : vector<128x8xf32>
    %c0_i32_16 = arith.constant 0 : i32
    %22 = arith.addi %0, %c0_i32_16 : i32
    %c0_i32_17 = arith.constant 0 : i32
    %23 = arith.addi %22, %c0_i32_17 : i32
    %c0_18 = arith.constant 0 : index
    %24 = arith.index_cast %23 : i32 to index
    %c6 = arith.constant 6 : index
    %c0_19 = arith.constant 0 : index
    %25 = vector.load %arg2[%c0_18, %24, %c6, %c0_19] : memref<1x22x22x4xbf16, #tpu.memory_space<vmem>>, vector<1x8x16x4xbf16>
    %26 = vector.shape_cast %25 : vector<1x8x16x4xbf16> to vector<8x16x4xbf16>
    %27 = vector.shape_cast %26 : vector<8x16x4xbf16> to vector<128x4xbf16>
    %c0_20 = arith.constant 0 : index
    %c2 = arith.constant 2 : index
    %c0_21 = arith.constant 0 : index
    %c0_22 = arith.constant 0 : index
    %28 = vector.load %arg3[%c0_20, %c2, %c0_21, %c0_22] : memref<3x3x4x8xbf16, #tpu.memory_space<vmem>>, vector<1x1x4x8xbf16>
    %29 = vector.shape_cast %28 : vector<1x1x4x8xbf16> to vector<4x8xbf16>
    %cst_23 = arith.constant dense<0.000000e+00> : vector<128x8xf32>
    %30 = tpu.matmul %27, %29, %cst_23 {dimension_numbers = #tpu.dot_dimension_numbers<[1], [0], [0], [1], [0, 0, 1, 1], [], []>} : vector<128x4xbf16>, vector<4x8xbf16>, vector<128x8xf32> -> vector<128x8xf32>
    %31 = arith.addf %21, %30 : vector<128x8xf32>
    %c0_i32_24 = arith.constant 0 : i32
    %32 = arith.addi %0, %c0_i32_24 : i32
    %c3_i32 = arith.constant 3 : i32
    %33 = arith.addi %32, %c3_i32 : i32
    %c0_25 = arith.constant 0 : index
    %34 = arith.index_cast %33 : i32 to index
    %c0_26 = arith.constant 0 : index
    %c0_27 = arith.constant 0 : index
    %35 = vector.load %arg2[%c0_25, %34, %c0_26, %c0_27] : memref<1x22x22x4xbf16, #tpu.memory_space<vmem>>, vector<1x8x16x4xbf16>
    %36 = vector.shape_cast %35 : vector<1x8x16x4xbf16> to vector<8x16x4xbf16>
    %37 = vector.shape_cast %36 : vector<8x16x4xbf16> to vector<128x4xbf16>
    %c1_28 = arith.constant 1 : index
    %c0_29 = arith.constant 0 : index
    %c0_30 = arith.constant 0 : index
    %c0_31 = arith.constant 0 : index
    %38 = vector.load %arg3[%c1_28, %c0_29, %c0_30, %c0_31] : memref<3x3x4x8xbf16, #tpu.memory_space<vmem>>, vector<1x1x4x8xbf16>
    %39 = vector.shape_cast %38 : vector<1x1x4x8xbf16> to vector<4x8xbf16>
    %cst_32 = arith.constant dense<0.000000e+00> : vector<128x8xf32>
    %40 = tpu.matmul %37, %39, %cst_32 {dimension_numbers = #tpu.dot_dimension_numbers<[1], [0], [0], [1], [0, 0, 1, 1], [], []>} : vector<128x4xbf16>, vector<4x8xbf16>, vector<128x8xf32> -> vector<128x8xf32>
    %41 = arith.addf %31, %40 : vector<128x8xf32>
    %c0_i32_33 = arith.constant 0 : i32
    %42 = arith.addi %0, %c0_i32_33 : i32
    %c3_i32_34 = arith.constant 3 : i32
    %43 = arith.addi %42, %c3_i32_34 : i32
    %c0_35 = arith.constant 0 : index
    %44 = arith.index_cast %43 : i32 to index
    %c3_36 = arith.constant 3 : index
    %c0_37 = arith.constant 0 : index
    %45 = vector.load %arg2[%c0_35, %44, %c3_36, %c0_37] : memref<1x22x22x4xbf16, #tpu.memory_space<vmem>>, vector<1x8x16x4xbf16>
    %46 = vector.shape_cast %45 : vector<1x8x16x4xbf16> to vector<8x16x4xbf16>
    %47 = vector.shape_cast %46 : vector<8x16x4xbf16> to vector<128x4xbf16>
    %c1_38 = arith.constant 1 : index
    %c1_39 = arith.constant 1 : index
    %c0_40 = arith.constant 0 : index
    %c0_41 = arith.constant 0 : index
    %48 = vector.load %arg3[%c1_38, %c1_39, %c0_40, %c0_41] : memref<3x3x4x8xbf16, #tpu.memory_space<vmem>>, vector<1x1x4x8xbf16>
    %49 = vector.shape_cast %48 : vector<1x1x4x8xbf16> to vector<4x8xbf16>
    %cst_42 = arith.constant dense<0.000000e+00> : vector<128x8xf32>
    %50 = tpu.matmul %47, %49, %cst_42 {dimension_numbers = #tpu.dot_dimension_numbers<[1], [0], [0], [1], [0, 0, 1, 1], [], []>} : vector<128x4xbf16>, vector<4x8xbf16>, vector<128x8xf32> -> vector<128x8xf32>
    %51 = arith.addf %41, %50 : vector<128x8xf32>
    %c0_i32_43 = arith.constant 0 : i32
    %52 = arith.addi %0, %c0_i32_43 : i32
    %c3_i32_44 = arith.constant 3 : i32
    %53 = arith.addi %52, %c3_i32_44 : i32
    %c0_45 = arith.constant 0 : index
    %54 = arith.index_cast %53 : i32 to index
    %c6_46 = arith.constant 6 : index
    %c0_47 = arith.constant 0 : index
    %55 = vector.load %arg2[%c0_45, %54, %c6_46, %c0_47] : memref<1x22x22x4xbf16, #tpu.memory_space<vmem>>, vector<1x8x16x4xbf16>
    %56 = vector.shape_cast %55 : vector<1x8x16x4xbf16> to vector<8x16x4xbf16>
    %57 = vector.shape_cast %56 : vector<8x16x4xbf16> to vector<128x4xbf16>
    %c1_48 = arith.constant 1 : index
    %c2_49 = arith.constant 2 : index
    %c0_50 = arith.constant 0 : index
    %c0_51 = arith.constant 0 : index
    %58 = vector.load %arg3[%c1_48, %c2_49, %c0_50, %c0_51] : memref<3x3x4x8xbf16, #tpu.memory_space<vmem>>, vector<1x1x4x8xbf16>
    %59 = vector.shape_cast %58 : vector<1x1x4x8xbf16> to vector<4x8xbf16>
    %cst_52 = arith.constant dense<0.000000e+00> : vector<128x8xf32>
    %60 = tpu.matmul %57, %59, %cst_52 {dimension_numbers = #tpu.dot_dimension_numbers<[1], [0], [0], [1], [0, 0, 1, 1], [], []>} : vector<128x4xbf16>, vector<4x8xbf16>, vector<128x8xf32> -> vector<128x8xf32>
    %61 = arith.addf %51, %60 : vector<128x8xf32>
    %c0_i32_53 = arith.constant 0 : i32
    %62 = arith.addi %0, %c0_i32_53 : i32
    %c6_i32 = arith.constant 6 : i32
    %63 = arith.addi %62, %c6_i32 : i32
    %c0_54 = arith.constant 0 : index
    %64 = arith.index_cast %63 : i32 to index
    %c0_55 = arith.constant 0 : index
    %c0_56 = arith.constant 0 : index
    %65 = vector.load %arg2[%c0_54, %64, %c0_55, %c0_56] : memref<1x22x22x4xbf16, #tpu.memory_space<vmem>>, vector<1x8x16x4xbf16>
    %66 = vector.shape_cast %65 : vector<1x8x16x4xbf16> to vector<8x16x4xbf16>
    %67 = vector.shape_cast %66 : vector<8x16x4xbf16> to vector<128x4xbf16>
    %c2_57 = arith.constant 2 : index
    %c0_58 = arith.constant 0 : index
    %c0_59 = arith.constant 0 : index
    %c0_60 = arith.constant 0 : index
    %68 = vector.load %arg3[%c2_57, %c0_58, %c0_59, %c0_60] : memref<3x3x4x8xbf16, #tpu.memory_space<vmem>>, vector<1x1x4x8xbf16>
    %69 = vector.shape_cast %68 : vector<1x1x4x8xbf16> to vector<4x8xbf16>
    %cst_61 = arith.constant dense<0.000000e+00> : vector<128x8xf32>
    %70 = tpu.matmul %67, %69, %cst_61 {dimension_numbers = #tpu.dot_dimension_numbers<[1], [0], [0], [1], [0, 0, 1, 1], [], []>} : vector<128x4xbf16>, vector<4x8xbf16>, vector<128x8xf32> -> vector<128x8xf32>
    %71 = arith.addf %61, %70 : vector<128x8xf32>
    %c0_i32_62 = arith.constant 0 : i32
    %72 = arith.addi %0, %c0_i32_62 : i32
    %c6_i32_63 = arith.constant 6 : i32
    %73 = arith.addi %72, %c6_i32_63 : i32
    %c0_64 = arith.constant 0 : index
    %74 = arith.index_cast %73 : i32 to index
    %c3_65 = arith.constant 3 : index
    %c0_66 = arith.constant 0 : index
    %75 = vector.load %arg2[%c0_64, %74, %c3_65, %c0_66] : memref<1x22x22x4xbf16, #tpu.memory_space<vmem>>, vector<1x8x16x4xbf16>
    %76 = vector.shape_cast %75 : vector<1x8x16x4xbf16> to vector<8x16x4xbf16>
    %77 = vector.shape_cast %76 : vector<8x16x4xbf16> to vector<128x4xbf16>
    %c2_67 = arith.constant 2 : index
    %c1_68 = arith.constant 1 : index
    %c0_69 = arith.constant 0 : index
    %c0_70 = arith.constant 0 : index
    %78 = vector.load %arg3[%c2_67, %c1_68, %c0_69, %c0_70] : memref<3x3x4x8xbf16, #tpu.memory_space<vmem>>, vector<1x1x4x8xbf16>
    %79 = vector.shape_cast %78 : vector<1x1x4x8xbf16> to vector<4x8xbf16>
    %cst_71 = arith.constant dense<0.000000e+00> : vector<128x8xf32>
    %80 = tpu.matmul %77, %79, %cst_71 {dimension_numbers = #tpu.dot_dimension_numbers<[1], [0], [0], [1], [0, 0, 1, 1], [], []>} : vector<128x4xbf16>, vector<4x8xbf16>, vector<128x8xf32> -> vector<128x8xf32>
    %81 = arith.addf %71, %80 : vector<128x8xf32>
    %c0_i32_72 = arith.constant 0 : i32
    %82 = arith.addi %0, %c0_i32_72 : i32
    %c6_i32_73 = arith.constant 6 : i32
    %83 = arith.addi %82, %c6_i32_73 : i32
    %c0_74 = arith.constant 0 : index
    %84 = arith.index_cast %83 : i32 to index
    %c6_75 = arith.constant 6 : index
    %c0_76 = arith.constant 0 : index
    %85 = vector.load %arg2[%c0_74, %84, %c6_75, %c0_76] : memref<1x22x22x4xbf16, #tpu.memory_space<vmem>>, vector<1x8x16x4xbf16>
    %86 = vector.shape_cast %85 : vector<1x8x16x4xbf16> to vector<8x16x4xbf16>
    %87 = vector.shape_cast %86 : vector<8x16x4xbf16> to vector<128x4xbf16>
    %c2_77 = arith.constant 2 : index
    %c2_78 = arith.constant 2 : index
    %c0_79 = arith.constant 0 : index
    %c0_80 = arith.constant 0 : index
    %88 = vector.load %arg3[%c2_77, %c2_78, %c0_79, %c0_80] : memref<3x3x4x8xbf16, #tpu.memory_space<vmem>>, vector<1x1x4x8xbf16>
    %89 = vector.shape_cast %88 : vector<1x1x4x8xbf16> to vector<4x8xbf16>
    %cst_81 = arith.constant dense<0.000000e+00> : vector<128x8xf32>
    %90 = tpu.matmul %87, %89, %cst_81 {dimension_numbers = #tpu.dot_dimension_numbers<[1], [0], [0], [1], [0, 0, 1, 1], [], []>} : vector<128x4xbf16>, vector<4x8xbf16>, vector<128x8xf32> -> vector<128x8xf32>
    %91 = arith.addf %81, %90 : vector<128x8xf32>
    %c0_82 = arith.constant 0 : index
    %c0_83 = arith.constant 0 : index
    %92 = vector.load %arg4[%c0_82, %c0_83] : memref<1x8xf32, #tpu.memory_space<vmem>>, vector<1x8xf32>
    %93 = vector.broadcast %92 : vector<1x8xf32> to vector<128x8xf32>
    %94 = arith.addf %91, %93 : vector<128x8xf32>
    %cst_84 = arith.constant 0.000000e+00 : f32
    %95 = vector.broadcast %cst_84 : f32 to vector<128x8xf32>
    %96 = arith.maximumf %94, %95 : vector<128x8xf32>
    %97 = arith.truncf %96 : vector<128x8xf32> to vector<128x8xbf16>
    %c0_85 = arith.constant 0 : index
    %c0_86 = arith.constant 0 : index
    %c0_87 = arith.constant 0 : index
    %98 = vector.load %arg5[%c0_85, %c0_86, %c0_87] : memref<1x128x8xbf16, #tpu.memory_space<vmem>>, vector<1x128x8xbf16>
    %99 = vector.shape_cast %98 : vector<1x128x8xbf16> to vector<128x8xbf16>
    %100 = vector.shape_cast %97 : vector<128x8xbf16> to vector<1x128x8xbf16>
    tpu.vector_store %arg5[%c0_85, %c0_86, %c0_87], %100 {strides = array<i32>} : memref<1x128x8xbf16, #tpu.memory_space<vmem>>, vector<1x128x8xbf16>,
    return
  }
  func.func @transform_0(%arg0: i32, %arg1: i32) -> (i32, i32, i32, i32) {
    %c0_i32 = arith.constant 0 : i32
    %c0_i32_0 = arith.constant 0 : i32
    %c0_i32_1 = arith.constant 0 : i32
    %c0_i32_2 = arith.constant 0 : i32
    return %arg0, %c0_i32, %c0_i32_0, %c0_i32_1 : i32, i32, i32, i32
  }
  func.func @transform_1(%arg0: i32, %arg1: i32) -> (i32, i32, i32, i32) {
    %c0_i32 = arith.constant 0 : i32
    %c0_i32_0 = arith.constant 0 : i32
    %c0_i32_1 = arith.constant 0 : i32
    %c0_i32_2 = arith.constant 0 : i32
    %c0_i32_3 = arith.constant 0 : i32
    return %c0_i32, %c0_i32_0, %c0_i32_1, %c0_i32_2 : i32, i32, i32, i32
  }
  func.func @transform_2(%arg0: i32, %arg1: i32) -> (i32, i32) {
    %c0_i32 = arith.constant 0 : i32
    %c0_i32_0 = arith.constant 0 : i32
    %c0_i32_1 = arith.constant 0 : i32
    return %c0_i32, %c0_i32_0 : i32, i32
  }
  func.func @transform_3(%arg0: i32, %arg1: i32) -> (i32, i32, i32) {
    %c0_i32 = arith.constant 0 : i32
    %c0_i32_0 = arith.constant 0 : i32
    return %arg0, %arg1, %c0_i32 : i32, i32, i32
  }
}

module attributes {stable_mosaic.version = 11 : i64} {
  func.func @_dilated_conv_bn_relu_kernel(%arg0: i32, %arg1: i32, %arg2: memref<1x22x22x4xbf16, #tpu.memory_space<vmem>>, %arg3: memref<3x3x4x8xbf16, #tpu.memory_space<vmem>>, %arg4: memref<1x8xf32, #tpu.memory_space<vmem>>, %arg5: memref<1x128x8xbf16, #tpu.memory_space<vmem>>) attributes {dimension_semantics = [#tpu.dimension_semantics<parallel>, #tpu.dimension_semantics<parallel>], iteration_bounds = array<i64: 2, 2>, scalar_prefetch = 0 : i64, scratch_operands = 0 : i64, tpu.core_type = #tpu.core_type<tc>, window_params = [{transform_indices = @transform_0, window_bounds = array<i64: 1, 22, 22, 4>}, {pipeline_mode = #tpu.pipeline_mode<synchronous>, transform_indices = @transform_1, window_bounds = array<i64: 3, 3, 4, 8>}, {pipeline_mode = #tpu.pipeline_mode<synchronous>, transform_indices = @transform_2, window_bounds = array<i64: 1, 8>}, {transform_indices = @transform_3, window_bounds = array<i64: 1, 128, 8>}]} {
    %c8_i32 = arith.constant 8 : i32
    %0 = arith.muli %arg1, %c8_i32 : i32
    %cst = arith.constant 0.000000e+00 : f32
    %1 = vector.broadcast %cst : f32 to vector<128x8xf32>
    %c2_i32 = arith.constant 2 : i32
    %2 = arith.addi %0, %c2_i32 : i32
    %c0_i32 = arith.constant 0 : i32
    %3 = arith.addi %2, %c0_i32 : i32
    %c0 = arith.constant 0 : index
    %4 = arith.index_cast %3 : i32 to index
    %c2 = arith.constant 2 : index
    %c0_0 = arith.constant 0 : index
    %5 = vector.load %arg2[%c0, %4, %c2, %c0_0] : memref<1x22x22x4xbf16, #tpu.memory_space<vmem>>, vector<1x8x16x4xbf16>
    %6 = vector.shape_cast %5 : vector<1x8x16x4xbf16> to vector<8x16x4xbf16>
    %7 = vector.shape_cast %6 : vector<8x16x4xbf16> to vector<128x4xbf16>
    %c0_1 = arith.constant 0 : index
    %c0_2 = arith.constant 0 : index
    %c0_3 = arith.constant 0 : index
    %c0_4 = arith.constant 0 : index
    %8 = vector.load %arg3[%c0_1, %c0_2, %c0_3, %c0_4] : memref<3x3x4x8xbf16, #tpu.memory_space<vmem>>, vector<1x1x4x8xbf16>
    %9 = vector.shape_cast %8 : vector<1x1x4x8xbf16> to vector<4x8xbf16>
    %cst_5 = arith.constant dense<0.000000e+00> : vector<128x8xf32>
    %10 = tpu.matmul %7, %9, %cst_5 {dimension_numbers = #tpu.dot_dimension_numbers<[1], [0], [0], [1], [0, 0, 1, 1], [], []>} : vector<128x4xbf16>, vector<4x8xbf16>, vector<128x8xf32> -> vector<128x8xf32>
    %11 = arith.addf %1, %10 : vector<128x8xf32>
    %c2_i32_6 = arith.constant 2 : i32
    %12 = arith.addi %0, %c2_i32_6 : i32
    %c0_i32_7 = arith.constant 0 : i32
    %13 = arith.addi %12, %c0_i32_7 : i32
    %c0_8 = arith.constant 0 : index
    %14 = arith.index_cast %13 : i32 to index
    %c3 = arith.constant 3 : index
    %c0_9 = arith.constant 0 : index
    %15 = vector.load %arg2[%c0_8, %14, %c3, %c0_9] : memref<1x22x22x4xbf16, #tpu.memory_space<vmem>>, vector<1x8x16x4xbf16>
    %16 = vector.shape_cast %15 : vector<1x8x16x4xbf16> to vector<8x16x4xbf16>
    %17 = vector.shape_cast %16 : vector<8x16x4xbf16> to vector<128x4xbf16>
    %c0_10 = arith.constant 0 : index
    %c1 = arith.constant 1 : index
    %c0_11 = arith.constant 0 : index
    %c0_12 = arith.constant 0 : index
    %18 = vector.load %arg3[%c0_10, %c1, %c0_11, %c0_12] : memref<3x3x4x8xbf16, #tpu.memory_space<vmem>>, vector<1x1x4x8xbf16>
    %19 = vector.shape_cast %18 : vector<1x1x4x8xbf16> to vector<4x8xbf16>
    %cst_13 = arith.constant dense<0.000000e+00> : vector<128x8xf32>
    %20 = tpu.matmul %17, %19, %cst_13 {dimension_numbers = #tpu.dot_dimension_numbers<[1], [0], [0], [1], [0, 0, 1, 1], [], []>} : vector<128x4xbf16>, vector<4x8xbf16>, vector<128x8xf32> -> vector<128x8xf32>
    %21 = arith.addf %11, %20 : vector<128x8xf32>
    %c2_i32_14 = arith.constant 2 : i32
    %22 = arith.addi %0, %c2_i32_14 : i32
    %c0_i32_15 = arith.constant 0 : i32
    %23 = arith.addi %22, %c0_i32_15 : i32
    %c0_16 = arith.constant 0 : index
    %24 = arith.index_cast %23 : i32 to index
    %c4 = arith.constant 4 : index
    %c0_17 = arith.constant 0 : index
    %25 = vector.load %arg2[%c0_16, %24, %c4, %c0_17] : memref<1x22x22x4xbf16, #tpu.memory_space<vmem>>, vector<1x8x16x4xbf16>
    %26 = vector.shape_cast %25 : vector<1x8x16x4xbf16> to vector<8x16x4xbf16>
    %27 = vector.shape_cast %26 : vector<8x16x4xbf16> to vector<128x4xbf16>
    %c0_18 = arith.constant 0 : index
    %c2_19 = arith.constant 2 : index
    %c0_20 = arith.constant 0 : index
    %c0_21 = arith.constant 0 : index
    %28 = vector.load %arg3[%c0_18, %c2_19, %c0_20, %c0_21] : memref<3x3x4x8xbf16, #tpu.memory_space<vmem>>, vector<1x1x4x8xbf16>
    %29 = vector.shape_cast %28 : vector<1x1x4x8xbf16> to vector<4x8xbf16>
    %cst_22 = arith.constant dense<0.000000e+00> : vector<128x8xf32>
    %30 = tpu.matmul %27, %29, %cst_22 {dimension_numbers = #tpu.dot_dimension_numbers<[1], [0], [0], [1], [0, 0, 1, 1], [], []>} : vector<128x4xbf16>, vector<4x8xbf16>, vector<128x8xf32> -> vector<128x8xf32>
    %31 = arith.addf %21, %30 : vector<128x8xf32>
    %c2_i32_23 = arith.constant 2 : i32
    %32 = arith.addi %0, %c2_i32_23 : i32
    %c1_i32 = arith.constant 1 : i32
    %33 = arith.addi %32, %c1_i32 : i32
    %c0_24 = arith.constant 0 : index
    %34 = arith.index_cast %33 : i32 to index
    %c2_25 = arith.constant 2 : index
    %c0_26 = arith.constant 0 : index
    %35 = vector.load %arg2[%c0_24, %34, %c2_25, %c0_26] : memref<1x22x22x4xbf16, #tpu.memory_space<vmem>>, vector<1x8x16x4xbf16>
    %36 = vector.shape_cast %35 : vector<1x8x16x4xbf16> to vector<8x16x4xbf16>
    %37 = vector.shape_cast %36 : vector<8x16x4xbf16> to vector<128x4xbf16>
    %c1_27 = arith.constant 1 : index
    %c0_28 = arith.constant 0 : index
    %c0_29 = arith.constant 0 : index
    %c0_30 = arith.constant 0 : index
    %38 = vector.load %arg3[%c1_27, %c0_28, %c0_29, %c0_30] : memref<3x3x4x8xbf16, #tpu.memory_space<vmem>>, vector<1x1x4x8xbf16>
    %39 = vector.shape_cast %38 : vector<1x1x4x8xbf16> to vector<4x8xbf16>
    %cst_31 = arith.constant dense<0.000000e+00> : vector<128x8xf32>
    %40 = tpu.matmul %37, %39, %cst_31 {dimension_numbers = #tpu.dot_dimension_numbers<[1], [0], [0], [1], [0, 0, 1, 1], [], []>} : vector<128x4xbf16>, vector<4x8xbf16>, vector<128x8xf32> -> vector<128x8xf32>
    %41 = arith.addf %31, %40 : vector<128x8xf32>
    %c2_i32_32 = arith.constant 2 : i32
    %42 = arith.addi %0, %c2_i32_32 : i32
    %c1_i32_33 = arith.constant 1 : i32
    %43 = arith.addi %42, %c1_i32_33 : i32
    %c0_34 = arith.constant 0 : index
    %44 = arith.index_cast %43 : i32 to index
    %c3_35 = arith.constant 3 : index
    %c0_36 = arith.constant 0 : index
    %45 = vector.load %arg2[%c0_34, %44, %c3_35, %c0_36] : memref<1x22x22x4xbf16, #tpu.memory_space<vmem>>, vector<1x8x16x4xbf16>
    %46 = vector.shape_cast %45 : vector<1x8x16x4xbf16> to vector<8x16x4xbf16>
    %47 = vector.shape_cast %46 : vector<8x16x4xbf16> to vector<128x4xbf16>
    %c1_37 = arith.constant 1 : index
    %c1_38 = arith.constant 1 : index
    %c0_39 = arith.constant 0 : index
    %c0_40 = arith.constant 0 : index
    %48 = vector.load %arg3[%c1_37, %c1_38, %c0_39, %c0_40] : memref<3x3x4x8xbf16, #tpu.memory_space<vmem>>, vector<1x1x4x8xbf16>
    %49 = vector.shape_cast %48 : vector<1x1x4x8xbf16> to vector<4x8xbf16>
    %cst_41 = arith.constant dense<0.000000e+00> : vector<128x8xf32>
    %50 = tpu.matmul %47, %49, %cst_41 {dimension_numbers = #tpu.dot_dimension_numbers<[1], [0], [0], [1], [0, 0, 1, 1], [], []>} : vector<128x4xbf16>, vector<4x8xbf16>, vector<128x8xf32> -> vector<128x8xf32>
    %51 = arith.addf %41, %50 : vector<128x8xf32>
    %c2_i32_42 = arith.constant 2 : i32
    %52 = arith.addi %0, %c2_i32_42 : i32
    %c1_i32_43 = arith.constant 1 : i32
    %53 = arith.addi %52, %c1_i32_43 : i32
    %c0_44 = arith.constant 0 : index
    %54 = arith.index_cast %53 : i32 to index
    %c4_45 = arith.constant 4 : index
    %c0_46 = arith.constant 0 : index
    %55 = vector.load %arg2[%c0_44, %54, %c4_45, %c0_46] : memref<1x22x22x4xbf16, #tpu.memory_space<vmem>>, vector<1x8x16x4xbf16>
    %56 = vector.shape_cast %55 : vector<1x8x16x4xbf16> to vector<8x16x4xbf16>
    %57 = vector.shape_cast %56 : vector<8x16x4xbf16> to vector<128x4xbf16>
    %c1_47 = arith.constant 1 : index
    %c2_48 = arith.constant 2 : index
    %c0_49 = arith.constant 0 : index
    %c0_50 = arith.constant 0 : index
    %58 = vector.load %arg3[%c1_47, %c2_48, %c0_49, %c0_50] : memref<3x3x4x8xbf16, #tpu.memory_space<vmem>>, vector<1x1x4x8xbf16>
    %59 = vector.shape_cast %58 : vector<1x1x4x8xbf16> to vector<4x8xbf16>
    %cst_51 = arith.constant dense<0.000000e+00> : vector<128x8xf32>
    %60 = tpu.matmul %57, %59, %cst_51 {dimension_numbers = #tpu.dot_dimension_numbers<[1], [0], [0], [1], [0, 0, 1, 1], [], []>} : vector<128x4xbf16>, vector<4x8xbf16>, vector<128x8xf32> -> vector<128x8xf32>
    %61 = arith.addf %51, %60 : vector<128x8xf32>
    %c2_i32_52 = arith.constant 2 : i32
    %62 = arith.addi %0, %c2_i32_52 : i32
    %c2_i32_53 = arith.constant 2 : i32
    %63 = arith.addi %62, %c2_i32_53 : i32
    %c0_54 = arith.constant 0 : index
    %64 = arith.index_cast %63 : i32 to index
    %c2_55 = arith.constant 2 : index
    %c0_56 = arith.constant 0 : index
    %65 = vector.load %arg2[%c0_54, %64, %c2_55, %c0_56] : memref<1x22x22x4xbf16, #tpu.memory_space<vmem>>, vector<1x8x16x4xbf16>
    %66 = vector.shape_cast %65 : vector<1x8x16x4xbf16> to vector<8x16x4xbf16>
    %67 = vector.shape_cast %66 : vector<8x16x4xbf16> to vector<128x4xbf16>
    %c2_57 = arith.constant 2 : index
    %c0_58 = arith.constant 0 : index
    %c0_59 = arith.constant 0 : index
    %c0_60 = arith.constant 0 : index
    %68 = vector.load %arg3[%c2_57, %c0_58, %c0_59, %c0_60] : memref<3x3x4x8xbf16, #tpu.memory_space<vmem>>, vector<1x1x4x8xbf16>
    %69 = vector.shape_cast %68 : vector<1x1x4x8xbf16> to vector<4x8xbf16>
    %cst_61 = arith.constant dense<0.000000e+00> : vector<128x8xf32>
    %70 = tpu.matmul %67, %69, %cst_61 {dimension_numbers = #tpu.dot_dimension_numbers<[1], [0], [0], [1], [0, 0, 1, 1], [], []>} : vector<128x4xbf16>, vector<4x8xbf16>, vector<128x8xf32> -> vector<128x8xf32>
    %71 = arith.addf %61, %70 : vector<128x8xf32>
    %c2_i32_62 = arith.constant 2 : i32
    %72 = arith.addi %0, %c2_i32_62 : i32
    %c2_i32_63 = arith.constant 2 : i32
    %73 = arith.addi %72, %c2_i32_63 : i32
    %c0_64 = arith.constant 0 : index
    %74 = arith.index_cast %73 : i32 to index
    %c3_65 = arith.constant 3 : index
    %c0_66 = arith.constant 0 : index
    %75 = vector.load %arg2[%c0_64, %74, %c3_65, %c0_66] : memref<1x22x22x4xbf16, #tpu.memory_space<vmem>>, vector<1x8x16x4xbf16>
    %76 = vector.shape_cast %75 : vector<1x8x16x4xbf16> to vector<8x16x4xbf16>
    %77 = vector.shape_cast %76 : vector<8x16x4xbf16> to vector<128x4xbf16>
    %c2_67 = arith.constant 2 : index
    %c1_68 = arith.constant 1 : index
    %c0_69 = arith.constant 0 : index
    %c0_70 = arith.constant 0 : index
    %78 = vector.load %arg3[%c2_67, %c1_68, %c0_69, %c0_70] : memref<3x3x4x8xbf16, #tpu.memory_space<vmem>>, vector<1x1x4x8xbf16>
    %79 = vector.shape_cast %78 : vector<1x1x4x8xbf16> to vector<4x8xbf16>
    %cst_71 = arith.constant dense<0.000000e+00> : vector<128x8xf32>
    %80 = tpu.matmul %77, %79, %cst_71 {dimension_numbers = #tpu.dot_dimension_numbers<[1], [0], [0], [1], [0, 0, 1, 1], [], []>} : vector<128x4xbf16>, vector<4x8xbf16>, vector<128x8xf32> -> vector<128x8xf32>
    %81 = arith.addf %71, %80 : vector<128x8xf32>
    %c2_i32_72 = arith.constant 2 : i32
    %82 = arith.addi %0, %c2_i32_72 : i32
    %c2_i32_73 = arith.constant 2 : i32
    %83 = arith.addi %82, %c2_i32_73 : i32
    %c0_74 = arith.constant 0 : index
    %84 = arith.index_cast %83 : i32 to index
    %c4_75 = arith.constant 4 : index
    %c0_76 = arith.constant 0 : index
    %85 = vector.load %arg2[%c0_74, %84, %c4_75, %c0_76] : memref<1x22x22x4xbf16, #tpu.memory_space<vmem>>, vector<1x8x16x4xbf16>
    %86 = vector.shape_cast %85 : vector<1x8x16x4xbf16> to vector<8x16x4xbf16>
    %87 = vector.shape_cast %86 : vector<8x16x4xbf16> to vector<128x4xbf16>
    %c2_77 = arith.constant 2 : index
    %c2_78 = arith.constant 2 : index
    %c0_79 = arith.constant 0 : index
    %c0_80 = arith.constant 0 : index
    %88 = vector.load %arg3[%c2_77, %c2_78, %c0_79, %c0_80] : memref<3x3x4x8xbf16, #tpu.memory_space<vmem>>, vector<1x1x4x8xbf16>
    %89 = vector.shape_cast %88 : vector<1x1x4x8xbf16> to vector<4x8xbf16>
    %cst_81 = arith.constant dense<0.000000e+00> : vector<128x8xf32>
    %90 = tpu.matmul %87, %89, %cst_81 {dimension_numbers = #tpu.dot_dimension_numbers<[1], [0], [0], [1], [0, 0, 1, 1], [], []>} : vector<128x4xbf16>, vector<4x8xbf16>, vector<128x8xf32> -> vector<128x8xf32>
    %91 = arith.addf %81, %90 : vector<128x8xf32>
    %c0_82 = arith.constant 0 : index
    %c0_83 = arith.constant 0 : index
    %92 = vector.load %arg4[%c0_82, %c0_83] : memref<1x8xf32, #tpu.memory_space<vmem>>, vector<1x8xf32>
    %93 = vector.broadcast %92 : vector<1x8xf32> to vector<128x8xf32>
    %94 = arith.addf %91, %93 : vector<128x8xf32>
    %cst_84 = arith.constant 0.000000e+00 : f32
    %95 = vector.broadcast %cst_84 : f32 to vector<128x8xf32>
    %96 = arith.maximumf %94, %95 : vector<128x8xf32>
    %97 = arith.truncf %96 : vector<128x8xf32> to vector<128x8xbf16>
    %c0_85 = arith.constant 0 : index
    %c0_86 = arith.constant 0 : index
    %c0_87 = arith.constant 0 : index
    %98 = vector.load %arg5[%c0_85, %c0_86, %c0_87] : memref<1x128x8xbf16, #tpu.memory_space<vmem>>, vector<1x128x8xbf16>
    %99 = vector.shape_cast %98 : vector<1x128x8xbf16> to vector<128x8xbf16>
    %100 = vector.shape_cast %97 : vector<128x8xbf16> to vector<1x128x8xbf16>
    tpu.vector_store %arg5[%c0_85, %c0_86, %c0_87], %100 {strides = array<i32>} : memref<1x128x8xbf16, #tpu.memory_space<vmem>>, vector<1x128x8xbf16>,
    return
  }
  func.func @transform_0(%arg0: i32, %arg1: i32) -> (i32, i32, i32, i32) {
    %c0_i32 = arith.constant 0 : i32
    %c0_i32_0 = arith.constant 0 : i32
    %c0_i32_1 = arith.constant 0 : i32
    %c0_i32_2 = arith.constant 0 : i32
    return %arg0, %c0_i32, %c0_i32_0, %c0_i32_1 : i32, i32, i32, i32
  }
  func.func @transform_1(%arg0: i32, %arg1: i32) -> (i32, i32, i32, i32) {
    %c0_i32 = arith.constant 0 : i32
    %c0_i32_0 = arith.constant 0 : i32
    %c0_i32_1 = arith.constant 0 : i32
    %c0_i32_2 = arith.constant 0 : i32
    %c0_i32_3 = arith.constant 0 : i32
    return %c0_i32, %c0_i32_0, %c0_i32_1, %c0_i32_2 : i32, i32, i32, i32
  }
  func.func @transform_2(%arg0: i32, %arg1: i32) -> (i32, i32) {
    %c0_i32 = arith.constant 0 : i32
    %c0_i32_0 = arith.constant 0 : i32
    %c0_i32_1 = arith.constant 0 : i32
    return %c0_i32, %c0_i32_0 : i32, i32
  }
  func.func @transform_3(%arg0: i32, %arg1: i32) -> (i32, i32, i32) {
    %c0_i32 = arith.constant 0 : i32
    %c0_i32_0 = arith.constant 0 : i32
    return %arg0, %arg1, %c0_i32 : i32, i32, i32
  }
}

module attributes {stable_mosaic.version = 11 : i64} {
  func.func @_project_kernel(%arg0: i32, %arg1: i32, %arg2: memref<1x128x8xbf16, #tpu.memory_space<vmem>>, %arg3: memref<1x128x8xbf16, #tpu.memory_space<vmem>>, %arg4: memref<1x128x8xbf16, #tpu.memory_space<vmem>>, %arg5: memref<3x8x8xbf16, #tpu.memory_space<vmem>>, %arg6: memref<1x1x8xf32, #tpu.memory_space<vmem>>, %arg7: memref<1x8xf32, #tpu.memory_space<vmem>>, %arg8: memref<1x128x8xf32, #tpu.memory_space<vmem>>) attributes {dimension_semantics = [#tpu.dimension_semantics<parallel>, #tpu.dimension_semantics<parallel>], iteration_bounds = array<i64: 2, 2>, scalar_prefetch = 0 : i64, scratch_operands = 0 : i64, tpu.core_type = #tpu.core_type<tc>, window_params = [{transform_indices = @transform_0, window_bounds = array<i64: 1, 128, 8>}, {transform_indices = @transform_1, window_bounds = array<i64: 1, 128, 8>}, {transform_indices = @transform_2, window_bounds = array<i64: 1, 128, 8>}, {pipeline_mode = #tpu.pipeline_mode<synchronous>, transform_indices = @transform_3, window_bounds = array<i64: 3, 8, 8>}, {transform_indices = @transform_4, window_bounds = array<i64: 1, 1, 8>}, {pipeline_mode = #tpu.pipeline_mode<synchronous>, transform_indices = @transform_5, window_bounds = array<i64: 1, 8>}, {transform_indices = @transform_6, window_bounds = array<i64: 1, 128, 8>}]} {
    %cst = arith.constant 0.000000e+00 : f32
    %0 = vector.broadcast %cst : f32 to vector<128x8xf32>
    %c0 = arith.constant 0 : index
    %c0_0 = arith.constant 0 : index
    %c0_1 = arith.constant 0 : index
    %1 = vector.load %arg2[%c0, %c0_0, %c0_1] : memref<1x128x8xbf16, #tpu.memory_space<vmem>>, vector<1x128x8xbf16>
    %2 = vector.shape_cast %1 : vector<1x128x8xbf16> to vector<128x8xbf16>
    %c0_2 = arith.constant 0 : index
    %c0_3 = arith.constant 0 : index
    %c0_4 = arith.constant 0 : index
    %3 = vector.load %arg5[%c0_2, %c0_3, %c0_4] : memref<3x8x8xbf16, #tpu.memory_space<vmem>>, vector<1x8x8xbf16>
    %4 = vector.shape_cast %3 : vector<1x8x8xbf16> to vector<8x8xbf16>
    %cst_5 = arith.constant dense<0.000000e+00> : vector<128x8xf32>
    %5 = tpu.matmul %2, %4, %cst_5 {dimension_numbers = #tpu.dot_dimension_numbers<[1], [0], [0], [1], [0, 0, 1, 1], [], []>} : vector<128x8xbf16>, vector<8x8xbf16>, vector<128x8xf32> -> vector<128x8xf32>
    %6 = arith.addf %0, %5 : vector<128x8xf32>
    %c0_6 = arith.constant 0 : index
    %c0_7 = arith.constant 0 : index
    %c0_8 = arith.constant 0 : index
    %7 = vector.load %arg3[%c0_6, %c0_7, %c0_8] : memref<1x128x8xbf16, #tpu.memory_space<vmem>>, vector<1x128x8xbf16>
    %8 = vector.shape_cast %7 : vector<1x128x8xbf16> to vector<128x8xbf16>
    %c1 = arith.constant 1 : index
    %c0_9 = arith.constant 0 : index
    %c0_10 = arith.constant 0 : index
    %9 = vector.load %arg5[%c1, %c0_9, %c0_10] : memref<3x8x8xbf16, #tpu.memory_space<vmem>>, vector<1x8x8xbf16>
    %10 = vector.shape_cast %9 : vector<1x8x8xbf16> to vector<8x8xbf16>
    %cst_11 = arith.constant dense<0.000000e+00> : vector<128x8xf32>
    %11 = tpu.matmul %8, %10, %cst_11 {dimension_numbers = #tpu.dot_dimension_numbers<[1], [0], [0], [1], [0, 0, 1, 1], [], []>} : vector<128x8xbf16>, vector<8x8xbf16>, vector<128x8xf32> -> vector<128x8xf32>
    %12 = arith.addf %6, %11 : vector<128x8xf32>
    %c0_12 = arith.constant 0 : index
    %c0_13 = arith.constant 0 : index
    %c0_14 = arith.constant 0 : index
    %13 = vector.load %arg4[%c0_12, %c0_13, %c0_14] : memref<1x128x8xbf16, #tpu.memory_space<vmem>>, vector<1x128x8xbf16>
    %14 = vector.shape_cast %13 : vector<1x128x8xbf16> to vector<128x8xbf16>
    %c2 = arith.constant 2 : index
    %c0_15 = arith.constant 0 : index
    %c0_16 = arith.constant 0 : index
    %15 = vector.load %arg5[%c2, %c0_15, %c0_16] : memref<3x8x8xbf16, #tpu.memory_space<vmem>>, vector<1x8x8xbf16>
    %16 = vector.shape_cast %15 : vector<1x8x8xbf16> to vector<8x8xbf16>
    %cst_17 = arith.constant dense<0.000000e+00> : vector<128x8xf32>
    %17 = tpu.matmul %14, %16, %cst_17 {dimension_numbers = #tpu.dot_dimension_numbers<[1], [0], [0], [1], [0, 0, 1, 1], [], []>} : vector<128x8xbf16>, vector<8x8xbf16>, vector<128x8xf32> -> vector<128x8xf32>
    %18 = arith.addf %12, %17 : vector<128x8xf32>
    %c0_18 = arith.constant 0 : index
    %c0_19 = arith.constant 0 : index
    %c0_20 = arith.constant 0 : index
    %19 = vector.load %arg6[%c0_18, %c0_19, %c0_20] : memref<1x1x8xf32, #tpu.memory_space<vmem>>, vector<1x1x8xf32>
    %20 = vector.shape_cast %19 : vector<1x1x8xf32> to vector<1x8xf32>
    %21 = vector.broadcast %20 : vector<1x8xf32> to vector<128x8xf32>
    %22 = arith.addf %18, %21 : vector<128x8xf32>
    %c0_21 = arith.constant 0 : index
    %c0_22 = arith.constant 0 : index
    %23 = vector.load %arg7[%c0_21, %c0_22] : memref<1x8xf32, #tpu.memory_space<vmem>>, vector<1x8xf32>
    %24 = vector.broadcast %23 : vector<1x8xf32> to vector<128x8xf32>
    %25 = arith.addf %22, %24 : vector<128x8xf32>
    %cst_23 = arith.constant 0.000000e+00 : f32
    %26 = vector.broadcast %cst_23 : f32 to vector<128x8xf32>
    %27 = arith.maximumf %25, %26 : vector<128x8xf32>
    %c0_24 = arith.constant 0 : index
    %c0_25 = arith.constant 0 : index
    %c0_26 = arith.constant 0 : index
    %28 = vector.load %arg8[%c0_24, %c0_25, %c0_26] : memref<1x128x8xf32, #tpu.memory_space<vmem>>, vector<1x128x8xf32>
    %29 = vector.shape_cast %28 : vector<1x128x8xf32> to vector<128x8xf32>
    %30 = vector.shape_cast %27 : vector<128x8xf32> to vector<1x128x8xf32>
    tpu.vector_store %arg8[%c0_24, %c0_25, %c0_26], %30 {strides = array<i32>} : memref<1x128x8xf32, #tpu.memory_space<vmem>>, vector<1x128x8xf32>,
    return
  }
  func.func @transform_0(%arg0: i32, %arg1: i32) -> (i32, i32, i32) {
    %c0_i32 = arith.constant 0 : i32
    %c0_i32_0 = arith.constant 0 : i32
    return %arg0, %arg1, %c0_i32 : i32, i32, i32
  }
  func.func @transform_1(%arg0: i32, %arg1: i32) -> (i32, i32, i32) {
    %c0_i32 = arith.constant 0 : i32
    %c0_i32_0 = arith.constant 0 : i32
    return %arg0, %arg1, %c0_i32 : i32, i32, i32
  }
  func.func @transform_2(%arg0: i32, %arg1: i32) -> (i32, i32, i32) {
    %c0_i32 = arith.constant 0 : i32
    %c0_i32_0 = arith.constant 0 : i32
    return %arg0, %arg1, %c0_i32 : i32, i32, i32
  }
  func.func @transform_3(%arg0: i32, %arg1: i32) -> (i32, i32, i32) {
    %c0_i32 = arith.constant 0 : i32
    %c0_i32_0 = arith.constant 0 : i32
    %c0_i32_1 = arith.constant 0 : i32
    %c0_i32_2 = arith.constant 0 : i32
    return %c0_i32, %c0_i32_0, %c0_i32_1 : i32, i32, i32
  }
  func.func @transform_4(%arg0: i32, %arg1: i32) -> (i32, i32, i32) {
    %c0_i32 = arith.constant 0 : i32
    %c0_i32_0 = arith.constant 0 : i32
    %c0_i32_1 = arith.constant 0 : i32
    return %arg0, %c0_i32, %c0_i32_0 : i32, i32, i32
  }
  func.func @transform_5(%arg0: i32, %arg1: i32) -> (i32, i32) {
    %c0_i32 = arith.constant 0 : i32
    %c0_i32_0 = arith.constant 0 : i32
    %c0_i32_1 = arith.constant 0 : i32
    return %c0_i32, %c0_i32_0 : i32, i32
  }
  func.func @transform_6(%arg0: i32, %arg1: i32) -> (i32, i32, i32) {
    %c0_i32 = arith.constant 0 : i32
    %c0_i32_0 = arith.constant 0 : i32
    return %arg0, %arg1, %c0_i32 : i32, i32, i32
  }
}

</mosaic_0001>

<llo_original>
// kernel: aspp_forward.8
$region0: #{aspp_forward.8}
  #allocation0 [shape = 'u32[]', space=smem, size = 0x4, offset = 0x4, fixed_abs, tag = 'smem constant byte address 0x4 - core index']
  #allocation1 [shape = 'u32[72,128]{1,0:T(1,128)}', space=vmem, size = 0x9000, scoped, tag = 'internal scratch']
  %s0 = inlined_call_operand.vmem [shape: bf16[2,256,4], index: 0, kind: input, shape index: {}]
  %s1 = inlined_call_operand.vmem [shape: f32[2,1,4], index: 1, kind: output, shape index: {}]
  %s2 = sld [smem:[#allocation0]]
  $region45: #{aspp_forward.8} parent=0
    _
  %s4 = ssub.s32 1, %s2
  %s5 = scalar_select 0, %s4, %s2
  loop: start=0, step=1, limit=6
  $region2: #{aspp_forward.8} parent=0 // loop_pre_header
    _
  $region3: #{aspp_forward.8} parent=0 // loop_header
    %s7 = sphi 0, %s11
    %p8 = scmp.ge.s32.totalorder %s7, 6
    %s14 = sphi 0, %s26
    %s15 = sphi 0, %s22
    %s16 = sphi 0, %s14
    %s17 = sphi 0, %s15
    %s18 = sphi 0, %s16
    %s19 = sphi 0, %s17
    %s31 = sphi 0, %s33
    %s34 = sphi 0, %s31
    %s35 = sphi 0, %s34
    %s51 = sphi 0, %s35
    %s57 = sphi 0, %s59
    %s60 = sphi 0, %s57
    %s61 = sphi 0, %s60
    %s77 = sphi 0, %s61
  $region4: #{aspp_forward.8} parent=0 // loop_header_branch
    %10 = sbr.rel (%p8) target = $region8
  $region5: #{aspp_forward.8} parent=0 // loop_body
    %s12 = ssub.s32 %s7, 1
    %s13 = ssub.s32 %s7, 2
    %s20 = sadd.s32 1, %s15
    %p21 = scmp.ge.s32.totalorder %s20, 2
    %s22 = scalar_select %p21, 0, %s20
    %s23 = sadd.s32 1, %s14
    %s24 = scalar_select %p21, %s23, %s14
    %p25 = scmp.ge.s32.totalorder %s24, 2
    %s26 = scalar_select %p25, 0, %s24
    %s27 = ssub.s32 %s14, %s26
    %s28 = ssub.s32 %s15, %s22
    %s29 = sor.u32 %s27, %s28
    %p30 = scmp.eq.s32.totalorder %s29, 0
    %s32 = sadd.s32 %s31, 1
    %s33 = scalar_select %p30, %s31, %s32
    %p36 = pneg %p30
    %p37 = scmp.eq.s32.totalorder %s7, 3
    %p38 = por %p36, %p37
    %p39 = scmp.ne.s32.totalorder %s31, %s34
    %p40 = scmp.eq.s32.totalorder %s7, 0
    %p41 = por %p39, %p40
    %p42 = scmp.ne.s32.totalorder %s31, %s34
    %p43 = scmp.eq.s32.totalorder %s12, 3
    %p44 = por %p42, %p43
    %p45 = scmp.ne.s32.totalorder %s34, %s35
    %p46 = scmp.eq.s32.totalorder %s12, 0
    %p47 = por %p45, %p46
    %p48 = scmp.ne.s32.totalorder %s34, %s35
    %p49 = scmp.eq.s32.totalorder %s13, 3
    %p50 = por %p48, %p49
    %p52 = scmp.ne.s32.totalorder %s35, %s51
    %p53 = scmp.eq.s32.totalorder %s13, 0
    %p54 = por %p52, %p53
    %s55 = ssub.s32 %s14, %s26
    %p56 = scmp.eq.s32.totalorder %s55, 0
    %s58 = sadd.s32 %s57, 1
    %s59 = scalar_select %p56, %s57, %s58
    %p62 = pneg %p56
    %p63 = scmp.eq.s32.totalorder %s7, 3
    %p64 = por %p62, %p63
    %p65 = scmp.ne.s32.totalorder %s57, %s60
    %p66 = scmp.eq.s32.totalorder %s7, 0
    %p67 = por %p65, %p66
    %p68 = scmp.ne.s32.totalorder %s57, %s60
    %p69 = scmp.eq.s32.totalorder %s12, 3
    %p70 = por %p68, %p69
    %p71 = scmp.ne.s32.totalorder %s60, %s61
    %p72 = scmp.eq.s32.totalorder %s12, 0
    %p73 = por %p71, %p72
    %p74 = scmp.ne.s32.totalorder %s60, %s61
    %p75 = scmp.eq.s32.totalorder %s13, 3
    %p76 = por %p74, %p75
    %p78 = scmp.ne.s32.totalorder %s61, %s77
    %p79 = scmp.eq.s32.totalorder %s13, 0
    %p80 = por %p78, %p79
    %p81 = scmp.le.s32.totalorder 1, %s7
    %p82 = scmp.lt.s32.totalorder %s7, 5
    %p83 = pnand %p81, %p82
    %p84 = pneg %p83
    // Predicated region
    $region9: #{aspp_forward.8} parent=5 // pred_check
      _
    $region10: #{aspp_forward.8} parent=5 // pred_check_branch
      %86 = sbr.rel (%p83) target = $region12
    $region11: #{aspp_forward.8} parent=5 // pred_region
      %s87 = ssub.s32 %s7, 1
    $region12: #{aspp_forward.8} parent=5 // pred_fallthru
      _
    %p88 = scmp.lt.s32.totalorder %s7, 4
    // Predicated region
    $region13: #{aspp_forward.8} parent=5 // pred_check
      %p89 = pneg %p88
    $region14: #{aspp_forward.8} parent=5 // pred_check_branch
      %91 = sbr.rel (%p89) target = $region16
    $region15: #{aspp_forward.8} parent=5 // pred_region
      // Predicated region
      $region17: #{aspp_forward.8} parent=15 // pred_check
        %p92 = pneg %p41
      $region18: #{aspp_forward.8} parent=15 // pred_check_branch
        %94 = sbr.rel (%p92) target = $region20
      $region19: #{aspp_forward.8} parent=15 // pred_region
        %s95 = smul.u32 16, %s15
        %p96 = scmp.lt.s32.totalorder %s14, 1
        %s97 = scalar_select %p96, %s14, 1
        %p98 = scmp.lt.s32.totalorder %s95, 31
        %s99 = scalar_select %p98, %s95, 31
        %s100 = smul.addr %s97, 32
        %s101 = sadd.s32 %s99, %s100
        %s102 = smul.addr %s101, 4
        %s103 = scalar_lea.vmem %s0, %s102
        %s104 = smul.u32 16, %s15
      $region20: #{aspp_forward.8} parent=15 // pred_fallthru
        _
    $region16: #{aspp_forward.8} parent=5 // pred_fallthru
      _
    %p105 = scmp.le.s32.totalorder 1, %s7
    %p106 = scmp.lt.s32.totalorder %s7, 5
    %p107 = pnand %p105, %p106
    %p108 = pneg %p107
    // Predicated region
    $region21: #{aspp_forward.8} parent=5 // pred_check
      _
    $region22: #{aspp_forward.8} parent=5 // pred_check_branch
      %110 = sbr.rel (%p107) target = $region24
    $region23: #{aspp_forward.8} parent=5 // pred_region
      %s111 = ssub.s32 %s7, 1
      %s112 = smul.u32 16, %s17
      %p113 = scmp.lt.s32.totalorder %s16, 1
      %s114 = scalar_select %p113, %s16, 1
      %p115 = scmp.lt.s32.totalorder %s112, 31
      %s116 = scalar_select %p115, %s112, 31
      %s117 = smul.addr %s114, 32
      %s118 = sadd.s32 %s116, %s117
      %s119 = smul.addr %s118, 4
      %s120 = scalar_lea.vmem %s0, %s119
      %p121 = pneg %p47
      %p122 = pneg %p44
      %p123 = pneg %p73
      %p124 = pneg %p70
      %p125 = scmp.lt.s32.totalorder %s16, 1
      %s126 = scalar_select %p125, %s16, 1
      %s127 = scalar_lea.vmem %s1, %s126
      %s128 = smul.u32 16, %s17
      %p129 = scmp.lt.s32.totalorder %s16, 1
      %s130 = scalar_select %p129, %s16, 1
      %p131 = scmp.lt.s32.totalorder %s128, 31
      %s132 = scalar_select %p131, %s128, 31
      %s133 = smul.addr %s130, 32
      %s134 = sadd.s32 %s132, %s133
      %s135 = smul.addr %s134, 4
      %s136 = scalar_lea.vmem %s0, %s135
      %s137 = smul.u32 16, %s17
      %p138 = scmp.lt.s32.totalorder %s16, 1
      %s139 = scalar_select %p138, %s16, 1
      %s140 = scalar_lea.vmem %s1, %s139
      %p141 = scmp.eq.s32.totalorder %s17, 0
      // Predicated region
      $region25: #{aspp_forward.8} parent=23 // pred_check
        %p142 = pneg %p141
      $region26: #{aspp_forward.8} parent=23 // pred_check_branch
        %144 = sbr.rel (%p142) target = $region28
      $region27: #{aspp_forward.8} parent=23 // pred_region
        %vm145 = vcmask 24576
        %146 = vst.msk [vmem:[%s140] sm:$0x1] %vm145, 0.0
      $region28: #{aspp_forward.8} parent=23 // pred_fallthru
        _
      %v147 = vld [vmem:[%s140] sm:$0x1]
      %v148 = vld [vmem:[%s136] sm:$0xf]
      %v149 = vld [vmem:[%s136 + $0x4] sm:$0xf]
      %v150 = vld [vmem:[%s136 + $0x8] sm:$0xf]
      %v151 = vld [vmem:[%s136 + $0xc] sm:$0xf]
      %v152 = vld [vmem:[%s136 + $0x10] sm:$0xf]
      %v153 = vld [vmem:[%s136 + $0x14] sm:$0xf]
      %v154 = vld [vmem:[%s136 + $0x18] sm:$0xf]
      %v155 = vld [vmem:[%s136 + $0x1c] sm:$0xf]
      %v156 = vld [vmem:[%s136 + $0x20] sm:$0xf]
      %v157 = vld [vmem:[%s136 + $0x24] sm:$0xf]
      %v158 = vld [vmem:[%s136 + $0x28] sm:$0xf]
      %v159 = vld [vmem:[%s136 + $0x2c] sm:$0xf]
      %v160 = vld [vmem:[%s136 + $0x30] sm:$0xf]
      %v161 = vld [vmem:[%s136 + $0x34] sm:$0xf]
      %v162 = vld [vmem:[%s136 + $0x38] sm:$0xf]
      %v163 = vld [vmem:[%s136 + $0x3c] sm:$0xf]
      %v164 = vunpack.c.l.bf16 %v148
      %v165 = vunpack.c.l.bf16 %v149
      %v166 = vunpack.c.l.bf16 %v150
      %v167 = vunpack.c.l.bf16 %v151
      %v168 = vunpack.c.l.bf16 %v152
      %v169 = vunpack.c.l.bf16 %v153
      %v170 = vunpack.c.l.bf16 %v154
      %v171 = vunpack.c.l.bf16 %v155
      %v172 = vunpack.c.l.bf16 %v156
      %v173 = vunpack.c.l.bf16 %v157
      %v174 = vunpack.c.l.bf16 %v158
      %v175 = vunpack.c.l.bf16 %v159
      %v176 = vunpack.c.l.bf16 %v160
      %v177 = vunpack.c.l.bf16 %v161
      %v178 = vunpack.c.l.bf16 %v162
      %v179 = vunpack.c.l.bf16 %v163
      %vm180 = vcmask 31744
      %v181 = vsel %vm180, %v164, 0.0
      %v182 = vsel %vm180, %v165, 0.0
      %v183 = vadd.f32 %v181, %v182
      %v184 = vsel %vm180, %v166, 0.0
      %v185 = vadd.f32 %v183, %v184
      %v186 = vsel %vm180, %v167, 0.0
      %v187 = vadd.f32 %v185, %v186
      %v188 = vsel %vm180, %v168, 0.0
      %v189 = vadd.f32 %v187, %v188
      %v190 = vsel %vm180, %v169, 0.0
      %v191 = vadd.f32 %v189, %v190
      %v192 = vsel %vm180, %v170, 0.0
      %v193 = vadd.f32 %v191, %v192
      %v194 = vsel %vm180, %v171, 0.0
      %v195 = vadd.f32 %v193, %v194
      %v196 = vsel %vm180, %v172, 0.0
      %v197 = vadd.f32 %v195, %v196
      %v198 = vsel %vm180, %v173, 0.0
      %v199 = vadd.f32 %v197, %v198
      %v200 = vsel %vm180, %v174, 0.0
      %v201 = vadd.f32 %v199, %v200
      %v202 = vsel %vm180, %v175, 0.0
      %v203 = vadd.f32 %v201, %v202
      %v204 = vsel %vm180, %v176, 0.0
      %v205 = vadd.f32 %v203, %v204
      %v206 = vsel %vm180, %v177, 0.0
      %v207 = vadd.f32 %v205, %v206
      %v208 = vsel %vm180, %v178, 0.0
      %v209 = vadd.f32 %v207, %v208
      %v210 = vsel %vm180, %v179, 0.0
      %v211 = vadd.f32 %v209, %v210
      %v212 = vrot.slane %v211, 4
      %v213 = vadd.f32 %v211, %v212
      %v214 = vrot.slane %v213, 2
      %v215 = vadd.f32 %v213, %v214
      %v216 = vrot.slane %v215, 1
      %v217 = vadd.f32 %v215, %v216
      %v218 = vadd.f32 %v147, %v217
      %vm219 = vcmask 24576
      %220 = vst.msk [vmem:[%s140] sm:$0x1] %vm219, %v218
      %p221 = scmp.eq.s32.totalorder %s17, 1
      // Predicated region
      $region29: #{aspp_forward.8} parent=23 // pred_check
        %p222 = pneg %p221
      $region30: #{aspp_forward.8} parent=23 // pred_check_branch
        %224 = sbr.rel (%p222) target = $region32
      $region31: #{aspp_forward.8} parent=23 // pred_region
        %v225 = vld [vmem:[%s140] sm:$0x1]
        %v226 = vmul.f32 %v225, 0.00390625
        %227 = vst.msk [vmem:[%s140] sm:$0x1] %vm219, %v226
      $region32: #{aspp_forward.8} parent=23 // pred_fallthru
        _
      %p228 = scmp.lt.s32.totalorder %s16, 1
      %s229 = scalar_select %p228, %s16, 1
      %s230 = scalar_lea.vmem %s1, %s229
      // Predicated region
      $region33: #{aspp_forward.8} parent=23 // pred_check
        %p231 = pneg %p70
      $region34: #{aspp_forward.8} parent=23 // pred_check_branch
        %233 = sbr.rel (%p231) target = $region36
      $region35: #{aspp_forward.8} parent=23 // pred_region
        _
      $region36: #{aspp_forward.8} parent=23 // pred_fallthru
        _
    $region24: #{aspp_forward.8} parent=5 // pred_fallthru
      _
    %p234 = scmp.le.s32.totalorder 2, %s7
    // Predicated region
    $region37: #{aspp_forward.8} parent=5 // pred_check
      %p235 = pneg %p234
    $region38: #{aspp_forward.8} parent=5 // pred_check_branch
      %237 = sbr.rel (%p235) target = $region40
    $region39: #{aspp_forward.8} parent=5 // pred_region
      %s238 = ssub.s32 %s7, 2
      // Predicated region
      $region41: #{aspp_forward.8} parent=39 // pred_check
        %p239 = pneg %p76
      $region42: #{aspp_forward.8} parent=39 // pred_check_branch
        %241 = sbr.rel (%p239) target = $region44
      $region43: #{aspp_forward.8} parent=39 // pred_region
        %p242 = scmp.lt.s32.totalorder %s18, 1
        %s243 = scalar_select %p242, %s18, 1
        %s244 = scalar_lea.vmem %s1, %s243
      $region44: #{aspp_forward.8} parent=39 // pred_fallthru
        _
    $region40: #{aspp_forward.8} parent=5 // pred_fallthru
      _
  $region6: #{aspp_forward.8} parent=0 // loop_footer
    %s11 = sadd.s32 1, %s7
  $region7: #{aspp_forward.8} parent=0 // loop_footer_branch
    %6 = sbr.rel target = $region3
  $region8: #{aspp_forward.8} parent=0 // loop_exit
    _

// kernel: aspp_forward.9
$region0: #{aspp_forward.9}
  #allocation0 [shape = 'u32[]', space=smem, size = 0x4, offset = 0x4, fixed_abs, tag = 'smem constant byte address 0x4 - core index']
  #allocation1 [shape = 'u32[72,128]{1,0:T(1,128)}', space=vmem, size = 0x9000, scoped, tag = 'internal scratch']
  %s0 = inlined_call_operand.vmem [shape: bf16[2,256,8], index: 0, kind: input, shape index: {}]
  %s1 = inlined_call_operand.vmem [shape: bf16[2,256,8], index: 1, kind: input, shape index: {}]
  %s2 = inlined_call_operand.vmem [shape: bf16[2,256,8], index: 2, kind: input, shape index: {}]
  %s3 = inlined_call_operand.vmem [shape: bf16[3,8,8], index: 3, kind: input, shape index: {}]
  %s4 = inlined_call_operand.vmem [shape: f32[2,1,8], index: 4, kind: input, shape index: {}]
  %s5 = inlined_call_operand.vmem [shape: f32[1,8], index: 5, kind: input, shape index: {}]
  %s6 = inlined_call_operand.vmem [shape: f32[2,256,8], index: 6, kind: output, shape index: {}]
  %s7 = sld [smem:[#allocation0]]
  $region57: #{aspp_forward.9} parent=0
    _
  %s9 = ssub.s32 1, %s7
  %s10 = scalar_select 0, %s9, %s7
  loop: start=0, step=1, limit=6
  $region2: #{aspp_forward.9} parent=0 // loop_pre_header
    _
  $region3: #{aspp_forward.9} parent=0 // loop_header
    %s12 = sphi 0, %s16
    %p13 = scmp.ge.s32.totalorder %s12, 6
    %s19 = sphi 0, %s31
    %s20 = sphi 0, %s27
    %s21 = sphi 0, %s19
    %s22 = sphi 0, %s20
    %s23 = sphi 0, %s21
    %s24 = sphi 0, %s22
    %s36 = sphi 0, %s38
    %s39 = sphi 0, %s36
    %s40 = sphi 0, %s39
    %s56 = sphi 0, %s40
    %s64 = sphi 0, %s66
    %s67 = sphi 0, %s64
    %s68 = sphi 0, %s67
    %s84 = sphi 0, %s68
    %s92 = sphi 0, %s94
    %s95 = sphi 0, %s92
    %s96 = sphi 0, %s95
    %s112 = sphi 0, %s96
    %s116 = sphi 0, %s116
    %s118 = sphi 0, %s116
    %s119 = sphi 0, %s118
    %s133 = sphi 0, %s119
    %s139 = sphi 0, %s141
    %s142 = sphi 0, %s139
    %s143 = sphi 0, %s142
    %s159 = sphi 0, %s143
    %s163 = sphi 0, %s163
    %s165 = sphi 0, %s163
    %s166 = sphi 0, %s165
    %s180 = sphi 0, %s166
    %s188 = sphi 0, %s190
    %s191 = sphi 0, %s188
    %s192 = sphi 0, %s191
    %s208 = sphi 0, %s192
  $region4: #{aspp_forward.9} parent=0 // loop_header_branch
    %15 = sbr.rel (%p13) target = $region8
  $region5: #{aspp_forward.9} parent=0 // loop_body
    %s17 = ssub.s32 %s12, 1
    %s18 = ssub.s32 %s12, 2
    %s25 = sadd.s32 1, %s20
    %p26 = scmp.ge.s32.totalorder %s25, 2
    %s27 = scalar_select %p26, 0, %s25
    %s28 = sadd.s32 1, %s19
    %s29 = scalar_select %p26, %s28, %s19
    %p30 = scmp.ge.s32.totalorder %s29, 2
    %s31 = scalar_select %p30, 0, %s29
    %s32 = ssub.s32 %s19, %s31
    %s33 = ssub.s32 %s20, %s27
    %s34 = sor.u32 %s32, %s33
    %p35 = scmp.eq.s32.totalorder %s34, 0
    %s37 = sadd.s32 %s36, 1
    %s38 = scalar_select %p35, %s36, %s37
    %p41 = pneg %p35
    %p42 = scmp.eq.s32.totalorder %s12, 3
    %p43 = por %p41, %p42
    %p44 = scmp.ne.s32.totalorder %s36, %s39
    %p45 = scmp.eq.s32.totalorder %s12, 0
    %p46 = por %p44, %p45
    %p47 = scmp.ne.s32.totalorder %s36, %s39
    %p48 = scmp.eq.s32.totalorder %s17, 3
    %p49 = por %p47, %p48
    %p50 = scmp.ne.s32.totalorder %s39, %s40
    %p51 = scmp.eq.s32.totalorder %s17, 0
    %p52 = por %p50, %p51
    %p53 = scmp.ne.s32.totalorder %s39, %s40
    %p54 = scmp.eq.s32.totalorder %s18, 3
    %p55 = por %p53, %p54
    %p57 = scmp.ne.s32.totalorder %s40, %s56
    %p58 = scmp.eq.s32.totalorder %s18, 0
    %p59 = por %p57, %p58
    %s60 = ssub.s32 %s19, %s31
    %s61 = ssub.s32 %s20, %s27
    %s62 = sor.u32 %s60, %s61
    %p63 = scmp.eq.s32.totalorder %s62, 0
    %s65 = sadd.s32 %s64, 1
    %s66 = scalar_select %p63, %s64, %s65
    %p69 = pneg %p63
    %p70 = scmp.eq.s32.totalorder %s12, 3
    %p71 = por %p69, %p70
    %p72 = scmp.ne.s32.totalorder %s64, %s67
    %p73 = scmp.eq.s32.totalorder %s12, 0
    %p74 = por %p72, %p73
    %p75 = scmp.ne.s32.totalorder %s64, %s67
    %p76 = scmp.eq.s32.totalorder %s17, 3
    %p77 = por %p75, %p76
    %p78 = scmp.ne.s32.totalorder %s67, %s68
    %p79 = scmp.eq.s32.totalorder %s17, 0
    %p80 = por %p78, %p79
    %p81 = scmp.ne.s32.totalorder %s67, %s68
    %p82 = scmp.eq.s32.totalorder %s18, 3
    %p83 = por %p81, %p82
    %p85 = scmp.ne.s32.totalorder %s68, %s84
    %p86 = scmp.eq.s32.totalorder %s18, 0
    %p87 = por %p85, %p86
    %s88 = ssub.s32 %s19, %s31
    %s89 = ssub.s32 %s20, %s27
    %s90 = sor.u32 %s88, %s89
    %p91 = scmp.eq.s32.totalorder %s90, 0
    %s93 = sadd.s32 %s92, 1
    %s94 = scalar_select %p91, %s92, %s93
    %p97 = pneg %p91
    %p98 = scmp.eq.s32.totalorder %s12, 3
    %p99 = por %p97, %p98
    %p100 = scmp.ne.s32.totalorder %s92, %s95
    %p101 = scmp.eq.s32.totalorder %s12, 0
    %p102 = por %p100, %p101
    %p103 = scmp.ne.s32.totalorder %s92, %s95
    %p104 = scmp.eq.s32.totalorder %s17, 3
    %p105 = por %p103, %p104
    %p106 = scmp.ne.s32.totalorder %s95, %s96
    %p107 = scmp.eq.s32.totalorder %s17, 0
    %p108 = por %p106, %p107
    %p109 = scmp.ne.s32.totalorder %s95, %s96
    %p110 = scmp.eq.s32.totalorder %s18, 3
    %p111 = por %p109, %p110
    %p113 = scmp.ne.s32.totalorder %s96, %s112
    %p114 = scmp.eq.s32.totalorder %s18, 0
    %p115 = por %p113, %p114
    %s117 = sadd.s32 %s116, 1
    %p120 = scmp.eq.s32.totalorder %s12, 3
    %p121 = scmp.ne.s32.totalorder %s116, %s118
    %p122 = scmp.eq.s32.totalorder %s12, 0
    %p123 = por %p121, %p122
    %p124 = scmp.ne.s32.totalorder %s116, %s118
    %p125 = scmp.eq.s32.totalorder %s17, 3
    %p126 = por %p124, %p125
    %p127 = scmp.ne.s32.totalorder %s118, %s119
    %p128 = scmp.eq.s32.totalorder %s17, 0
    %p129 = por %p127, %p128
    %p130 = scmp.ne.s32.totalorder %s118, %s119
    %p131 = scmp.eq.s32.totalorder %s18, 3
    %p132 = por %p130, %p131
    %p134 = scmp.ne.s32.totalorder %s119, %s133
    %p135 = scmp.eq.s32.totalorder %s18, 0
    %p136 = por %p134, %p135
    %s137 = ssub.s32 %s19, %s31
    %p138 = scmp.eq.s32.totalorder %s137, 0
    %s140 = sadd.s32 %s139, 1
    %s141 = scalar_select %p138, %s139, %s140
    %p144 = pneg %p138
    %p145 = scmp.eq.s32.totalorder %s12, 3
    %p146 = por %p144, %p145
    %p147 = scmp.ne.s32.totalorder %s139, %s142
    %p148 = scmp.eq.s32.totalorder %s12, 0
    %p149 = por %p147, %p148
    %p150 = scmp.ne.s32.totalorder %s139, %s142
    %p151 = scmp.eq.s32.totalorder %s17, 3
    %p152 = por %p150, %p151
    %p153 = scmp.ne.s32.totalorder %s142, %s143
    %p154 = scmp.eq.s32.totalorder %s17, 0
    %p155 = por %p153, %p154
    %p156 = scmp.ne.s32.totalorder %s142, %s143
    %p157 = scmp.eq.s32.totalorder %s18, 3
    %p158 = por %p156, %p157
    %p160 = scmp.ne.s32.totalorder %s143, %s159
    %p161 = scmp.eq.s32.totalorder %s18, 0
    %p162 = por %p160, %p161
    %s164 = sadd.s32 %s163, 1
    %p167 = scmp.eq.s32.totalorder %s12, 3
    %p168 = scmp.ne.s32.totalorder %s163, %s165
    %p169 = scmp.eq.s32.totalorder %s12, 0
    %p170 = por %p168, %p169
    %p171 = scmp.ne.s32.totalorder %s163, %s165
    %p172 = scmp.eq.s32.totalorder %s17, 3
    %p173 = por %p171, %p172
    %p174 = scmp.ne.s32.totalorder %s165, %s166
    %p175 = scmp.eq.s32.totalorder %s17, 0
    %p176 = por %p174, %p175
    %p177 = scmp.ne.s32.totalorder %s165, %s166
    %p178 = scmp.eq.s32.totalorder %s18, 3
    %p179 = por %p177, %p178
    %p181 = scmp.ne.s32.totalorder %s166, %s180
    %p182 = scmp.eq.s32.totalorder %s18, 0
    %p183 = por %p181, %p182
    %s184 = ssub.s32 %s19, %s31
    %s185 = ssub.s32 %s20, %s27
    %s186 = sor.u32 %s184, %s185
    %p187 = scmp.eq.s32.totalorder %s186, 0
    %s189 = sadd.s32 %s188, 1
    %s190 = scalar_select %p187, %s188, %s189
    %p193 = pneg %p187
    %p194 = scmp.eq.s32.totalorder %s12, 3
    %p195 = por %p193, %p194
    %p196 = scmp.ne.s32.totalorder %s188, %s191
    %p197 = scmp.eq.s32.totalorder %s12, 0
    %p198 = por %p196, %p197
    %p199 = scmp.ne.s32.totalorder %s188, %s191
    %p200 = scmp.eq.s32.totalorder %s17, 3
    %p201 = por %p199, %p200
    %p202 = scmp.ne.s32.totalorder %s191, %s192
    %p203 = scmp.eq.s32.totalorder %s17, 0
    %p204 = por %p202, %p203
    %p205 = scmp.ne.s32.totalorder %s191, %s192
    %p206 = scmp.eq.s32.totalorder %s18, 3
    %p207 = por %p205, %p206
    %p209 = scmp.ne.s32.totalorder %s192, %s208
    %p210 = scmp.eq.s32.totalorder %s18, 0
    %p211 = por %p209, %p210
    %p212 = scmp.le.s32.totalorder 1, %s12
    %p213 = scmp.lt.s32.totalorder %s12, 5
    %p214 = pnand %p212, %p213
    %p215 = pneg %p214
    // Predicated region
    $region9: #{aspp_forward.9} parent=5 // pred_check
      _
    $region10: #{aspp_forward.9} parent=5 // pred_check_branch
      %217 = sbr.rel (%p214) target = $region12
    $region11: #{aspp_forward.9} parent=5 // pred_region
      %s218 = ssub.s32 %s12, 1
      // Predicated region
      $region13: #{aspp_forward.9} parent=11 // pred_check
        %p219 = pneg %p129
      $region14: #{aspp_forward.9} parent=11 // pred_check_branch
        %221 = sbr.rel (%p219) target = $region16
      $region15: #{aspp_forward.9} parent=11 // pred_region
        _
      $region16: #{aspp_forward.9} parent=11 // pred_fallthru
        _
      // Predicated region
      $region17: #{aspp_forward.9} parent=11 // pred_check
        %p222 = pneg %p176
      $region18: #{aspp_forward.9} parent=11 // pred_check_branch
        %224 = sbr.rel (%p222) target = $region20
      $region19: #{aspp_forward.9} parent=11 // pred_region
        _
      $region20: #{aspp_forward.9} parent=11 // pred_fallthru
        _
    $region12: #{aspp_forward.9} parent=5 // pred_fallthru
      _
    %p225 = scmp.lt.s32.totalorder %s12, 4
    // Predicated region
    $region21: #{aspp_forward.9} parent=5 // pred_check
      %p226 = pneg %p225
    $region22: #{aspp_forward.9} parent=5 // pred_check_branch
      %228 = sbr.rel (%p226) target = $region24
    $region23: #{aspp_forward.9} parent=5 // pred_region
      // Predicated region
      $region25: #{aspp_forward.9} parent=23 // pred_check
        %p229 = pneg %p46
      $region26: #{aspp_forward.9} parent=23 // pred_check_branch
        %231 = sbr.rel (%p229) target = $region28
      $region27: #{aspp_forward.9} parent=23 // pred_region
        %s232 = smul.u32 16, %s20
        %p233 = scmp.lt.s32.totalorder %s19, 1
        %s234 = scalar_select %p233, %s19, 1
        %p235 = scmp.lt.s32.totalorder %s232, 31
        %s236 = scalar_select %p235, %s232, 31
        %s237 = smul.addr %s234, 32
        %s238 = sadd.s32 %s236, %s237
        %s239 = smul.addr %s238, 4
        %s240 = scalar_lea.vmem %s0, %s239
        %s241 = smul.u32 16, %s20
      $region28: #{aspp_forward.9} parent=23 // pred_fallthru
        _
      // Predicated region
      $region29: #{aspp_forward.9} parent=23 // pred_check
        %p242 = pneg %p74
      $region30: #{aspp_forward.9} parent=23 // pred_check_branch
        %244 = sbr.rel (%p242) target = $region32
      $region31: #{aspp_forward.9} parent=23 // pred_region
        %s245 = smul.u32 16, %s20
        %p246 = scmp.lt.s32.totalorder %s19, 1
        %s247 = scalar_select %p246, %s19, 1
        %p248 = scmp.lt.s32.totalorder %s245, 31
        %s249 = scalar_select %p248, %s245, 31
        %s250 = smul.addr %s247, 32
        %s251 = sadd.s32 %s249, %s250
        %s252 = smul.addr %s251, 4
        %s253 = scalar_lea.vmem %s1, %s252
        %s254 = smul.u32 16, %s20
      $region32: #{aspp_forward.9} parent=23 // pred_fallthru
        _
      // Predicated region
      $region33: #{aspp_forward.9} parent=23 // pred_check
        %p255 = pneg %p102
      $region34: #{aspp_forward.9} parent=23 // pred_check_branch
        %257 = sbr.rel (%p255) target = $region36
      $region35: #{aspp_forward.9} parent=23 // pred_region
        %s258 = smul.u32 16, %s20
        %p259 = scmp.lt.s32.totalorder %s19, 1
        %s260 = scalar_select %p259, %s19, 1
        %p261 = scmp.lt.s32.totalorder %s258, 31
        %s262 = scalar_select %p261, %s258, 31
        %s263 = smul.addr %s260, 32
        %s264 = sadd.s32 %s262, %s263
        %s265 = smul.addr %s264, 4
        %s266 = scalar_lea.vmem %s2, %s265
        %s267 = smul.u32 16, %s20
      $region36: #{aspp_forward.9} parent=23 // pred_fallthru
        _
      // Predicated region
      $region37: #{aspp_forward.9} parent=23 // pred_check
        %p268 = pneg %p149
      $region38: #{aspp_forward.9} parent=23 // pred_check_branch
        %270 = sbr.rel (%p268) target = $region40
      $region39: #{aspp_forward.9} parent=23 // pred_region
        %p271 = scmp.lt.s32.totalorder %s19, 1
        %s272 = scalar_select %p271, %s19, 1
        %s273 = scalar_lea.vmem %s4, %s272
      $region40: #{aspp_forward.9} parent=23 // pred_fallthru
        _
    $region24: #{aspp_forward.9} parent=5 // pred_fallthru
      _
    %p274 = scmp.le.s32.totalorder 1, %s12
    %p275 = scmp.lt.s32.totalorder %s12, 5
    %p276 = pnand %p274, %p275
    %p277 = pneg %p276
    // Predicated region
    $region41: #{aspp_forward.9} parent=5 // pred_check
      _
    $region42: #{aspp_forward.9} parent=5 // pred_check_branch
      %279 = sbr.rel (%p276) target = $region44
    $region43: #{aspp_forward.9} parent=5 // pred_region
      %s280 = ssub.s32 %s12, 1
      %s281 = smul.u32 16, %s22
      %p282 = scmp.lt.s32.totalorder %s21, 1
      %s283 = scalar_select %p282, %s21, 1
      %p284 = scmp.lt.s32.totalorder %s281, 31
      %s285 = scalar_select %p284, %s281, 31
      %s286 = smul.addr %s283, 32
      %s287 = sadd.s32 %s285, %s286
      %s288 = smul.addr %s287, 4
      %s289 = scalar_lea.vmem %s0, %s288
      %p290 = pneg %p52
      %p291 = pneg %p49
      %s292 = smul.u32 16, %s22
      %p293 = scmp.lt.s32.totalorder %s21, 1
      %s294 = scalar_select %p293, %s21, 1
      %p295 = scmp.lt.s32.totalorder %s292, 31
      %s296 = scalar_select %p295, %s292, 31
      %s297 = smul.addr %s294, 32
      %s298 = sadd.s32 %s296, %s297
      %s299 = smul.addr %s298, 4
      %s300 = scalar_lea.vmem %s1, %s299
      %p301 = pneg %p80
      %p302 = pneg %p77
      %s303 = smul.u32 16, %s22
      %p304 = scmp.lt.s32.totalorder %s21, 1
      %s305 = scalar_select %p304, %s21, 1
      %p306 = scmp.lt.s32.totalorder %s303, 31
      %s307 = scalar_select %p306, %s303, 31
      %s308 = smul.addr %s305, 32
      %s309 = sadd.s32 %s307, %s308
      %s310 = smul.addr %s309, 4
      %s311 = scalar_lea.vmem %s2, %s310
      %p312 = pneg %p108
      %p313 = pneg %p105
      %p314 = pneg %p129
      %p315 = pneg %p126
      %p316 = scmp.lt.s32.totalorder %s21, 1
      %s317 = scalar_select %p316, %s21, 1
      %s318 = scalar_lea.vmem %s4, %s317
      %p319 = pneg %p155
      %p320 = pneg %p152
      %p321 = pneg %p176
      %p322 = pneg %p173
      %p323 = pneg %p204
      %p324 = pneg %p201
      %s325 = smul.u32 16, %s22
      %p326 = scmp.lt.s32.totalorder %s21, 1
      %s327 = scalar_select %p326, %s21, 1
      %p328 = scmp.lt.s32.totalorder %s325, 31
      %s329 = scalar_select %p328, %s325, 31
      %s330 = smul.addr %s327, 32
      %s331 = sadd.s32 %s329, %s330
      %s332 = smul.addr %s331, 8
      %s333 = scalar_lea.vmem %s6, %s332
      %s334 = smul.u32 16, %s22
      %p335 = scmp.lt.s32.totalorder %s21, 1
      %s336 = scalar_select %p335, %s21, 1
      %p337 = scmp.lt.s32.totalorder %s334, 31
      %s338 = scalar_select %p337, %s334, 31
      %s339 = smul.addr %s336, 32
      %s340 = sadd.s32 %s338, %s339
      %s341 = smul.addr %s340, 4
      %s342 = scalar_lea.vmem %s0, %s341
      %s343 = smul.u32 16, %s22
      %s344 = smul.u32 16, %s22
      %p345 = scmp.lt.s32.totalorder %s21, 1
      %s346 = scalar_select %p345, %s21, 1
      %p347 = scmp.lt.s32.totalorder %s344, 31
      %s348 = scalar_select %p347, %s344, 31
      %s349 = smul.addr %s346, 32
      %s350 = sadd.s32 %s348, %s349
      %s351 = smul.addr %s350, 4
      %s352 = scalar_lea.vmem %s1, %s351
      %s353 = smul.u32 16, %s22
      %s354 = smul.u32 16, %s22
      %p355 = scmp.lt.s32.totalorder %s21, 1
      %s356 = scalar_select %p355, %s21, 1
      %p357 = scmp.lt.s32.totalorder %s354, 31
      %s358 = scalar_select %p357, %s354, 31
      %s359 = smul.addr %s356, 32
      %s360 = sadd.s32 %s358, %s359
      %s361 = smul.addr %s360, 4
      %s362 = scalar_lea.vmem %s2, %s361
      %s363 = smul.u32 16, %s22
      %p364 = scmp.lt.s32.totalorder %s21, 1
      %s365 = scalar_select %p364, %s21, 1
      %s366 = scalar_lea.vmem %s4, %s365
      %s367 = smul.u32 16, %s22
      %p368 = scmp.lt.s32.totalorder %s21, 1
      %s369 = scalar_select %p368, %s21, 1
      %p370 = scmp.lt.s32.totalorder %s367, 31
      %s371 = scalar_select %p370, %s367, 31
      %s372 = smul.addr %s369, 32
      %s373 = sadd.s32 %s371, %s372
      %s374 = smul.addr %s373, 8
      %s375 = scalar_lea.vmem %s6, %s374
      %s376 = smul.u32 16, %s22
      %v378 = vld [vmem:[%s342] sm:$0xf]
      %v379 = vld [vmem:[%s342 + $0x4] sm:$0xf]
      %v380 = vld [vmem:[%s342 + $0x8] sm:$0xf]
      %v381 = vld [vmem:[%s342 + $0xc] sm:$0xf]
      %v382 = vld [vmem:[%s342 + $0x10] sm:$0xf]
      %v383 = vld [vmem:[%s342 + $0x14] sm:$0xf]
      %v384 = vld [vmem:[%s342 + $0x18] sm:$0xf]
      %v385 = vld [vmem:[%s342 + $0x1c] sm:$0xf]
      %v386 = vld [vmem:[%s342 + $0x20] sm:$0xf]
      %v387 = vld [vmem:[%s342 + $0x24] sm:$0xf]
      %v388 = vld [vmem:[%s342 + $0x28] sm:$0xf]
      %v389 = vld [vmem:[%s342 + $0x2c] sm:$0xf]
      %v390 = vld [vmem:[%s342 + $0x30] sm:$0xf]
      %v391 = vld [vmem:[%s342 + $0x34] sm:$0xf]
      %v392 = vld [vmem:[%s342 + $0x38] sm:$0xf]
      %v393 = vld [vmem:[%s342 + $0x3c] sm:$0xf]
      %v394 = vld [vmem:[%s3] sm:$0xf]
      %v395 = vld [vmem:[%s352] sm:$0xf]
      %v396 = vld [vmem:[%s352 + $0x4] sm:$0xf]
      %v397 = vld [vmem:[%s352 + $0x8] sm:$0xf]
      %v398 = vld [vmem:[%s352 + $0xc] sm:$0xf]
      %v399 = vld [vmem:[%s352 + $0x10] sm:$0xf]
      %v400 = vld [vmem:[%s352 + $0x14] sm:$0xf]
      %v401 = vld [vmem:[%s352 + $0x18] sm:$0xf]
      %v402 = vld [vmem:[%s352 + $0x1c] sm:$0xf]
      %v403 = vld [vmem:[%s352 + $0x20] sm:$0xf]
      %v404 = vld [vmem:[%s352 + $0x24] sm:$0xf]
      %v405 = vld [vmem:[%s352 + $0x28] sm:$0xf]
      %v406 = vld [vmem:[%s352 + $0x2c] sm:$0xf]
      %v407 = vld [vmem:[%s352 + $0x30] sm:$0xf]
      %v408 = vld [vmem:[%s352 + $0x34] sm:$0xf]
      %v409 = vld [vmem:[%s352 + $0x38] sm:$0xf]
      %v410 = vld [vmem:[%s352 + $0x3c] sm:$0xf]
      %s411 = scalar_lea.vmem %s3, 4
      %v412 = vld [vmem:[%s411] sm:$0xf]
      %v429 = vunpack.c.l.b16 %v395
      %v430 = vunpack.c.l.b16 %v396
      %v431 = vunpack.c.l.b16 %v397
      %v432 = vunpack.c.l.b16 %v398
      %v433 = vunpack.c.l.b16 %v399
      %v434 = vunpack.c.l.b16 %v400
      %v435 = vunpack.c.l.b16 %v401
      %v436 = vunpack.c.l.b16 %v402
      %v437 = vunpack.c.l.b16 %v403
      %v438 = vunpack.c.l.b16 %v404
      %v439 = vunpack.c.l.b16 %v405
      %v440 = vunpack.c.l.b16 %v406
      %v441 = vunpack.c.l.b16 %v407
      %v442 = vunpack.c.l.b16 %v408
      %v443 = vunpack.c.l.b16 %v409
      %v444 = vunpack.c.l.b16 %v410
      %v445 = vpack.c.b16 %v430, %v429
      %v446 = vpack.c.b16 %v432, %v431
      %v447 = vpack.c.b16 %v434, %v433
      %v448 = vpack.c.b16 %v436, %v435
      %v449 = vpack.c.b16 %v438, %v437
      %v450 = vpack.c.b16 %v440, %v439
      %v451 = vpack.c.b16 %v442, %v441
      %v452 = vpack.c.b16 %v444, %v443
      %vm453 = vcmask 64512
      %v455 = vsel %vm453, %v445, 0
      %v458 = vsel %vm453, %v446, 0
      %v461 = vsel %vm453, %v447, 0
      %v464 = vsel %vm453, %v448, 0
      %v467 = vsel %vm453, %v449, 0
      %v470 = vsel %vm453, %v450, 0
      %v473 = vsel %vm453, %v451, 0
      %v476 = vsel %vm453, %v452, 0
      %vm478 = vcmask 1043456
      %v480 = vsel %vm478, %v412, 0
      %482 = vmatpush.bf16.msra.mxu0 0
      %483 = vmatpush.bf16.msra.mxu0 0
      %484 = vmatpush.bf16.msra.mxu0 0
      %485 = vmatpush.bf16.msra.mxu0 0
      %486 = vmatpush.bf16.msra.mxu0 0
      %487 = vmatpush.bf16.msra.mxu0 0
      %488 = vmatpush.bf16.msra.mxu0 0
      %489 = vmatpush.bf16.msra.mxu0 %v480
      %490 = vmatmul.bf16.gmra.mxu0 %v455
      %v491 = vpop.f32.mrf.mxu0
      %v492 = vadd.f32 0.0, %v491
      %v493 = vpop.f32.mrf.mxu0
      %v494 = vadd.f32 0.0, %v493
      %495 = vmatmul.bf16.gmra.mxu0 %v458
      %v496 = vpop.f32.mrf.mxu0
      %v497 = vadd.f32 0.0, %v496
      %v498 = vpop.f32.mrf.mxu0
      %v499 = vadd.f32 0.0, %v498
      %500 = vmatmul.bf16.gmra.mxu0 %v461
      %v501 = vpop.f32.mrf.mxu0
      %v502 = vadd.f32 0.0, %v501
      %v503 = vpop.f32.mrf.mxu0
      %v504 = vadd.f32 0.0, %v503
      %505 = vmatmul.bf16.gmra.mxu0 %v464
      %v506 = vpop.f32.mrf.mxu0
      %v507 = vadd.f32 0.0, %v506
      %v508 = vpop.f32.mrf.mxu0
      %v509 = vadd.f32 0.0, %v508
      %510 = vmatmul.bf16.gmra.mxu0 %v467
      %v511 = vpop.f32.mrf.mxu0
      %v512 = vadd.f32 0.0, %v511
      %v513 = vpop.f32.mrf.mxu0
      %v514 = vadd.f32 0.0, %v513
      %515 = vmatmul.bf16.gmra.mxu0 %v470
      %v516 = vpop.f32.mrf.mxu0
      %v517 = vadd.f32 0.0, %v516
      %v518 = vpop.f32.mrf.mxu0
      %v519 = vadd.f32 0.0, %v518
      %520 = vmatmul.bf16.gmra.mxu0 %v473
      %v521 = vpop.f32.mrf.mxu0
      %v522 = vadd.f32 0.0, %v521
      %v523 = vpop.f32.mrf.mxu0
      %v524 = vadd.f32 0.0, %v523
      %525 = vmatmul.bf16.gmra.mxu0 %v476
      %v526 = vpop.f32.mrf.mxu0
      %v527 = vadd.f32 0.0, %v526
      %v528 = vpop.f32.mrf.mxu0
      %v529 = vadd.f32 0.0, %v528
      %530 = vdwg.mxu0
      %v547 = vunpack.c.l.b16 %v378
      %v548 = vunpack.c.l.b16 %v379
      %v549 = vunpack.c.l.b16 %v380
      %v550 = vunpack.c.l.b16 %v381
      %v551 = vunpack.c.l.b16 %v382
      %v552 = vunpack.c.l.b16 %v383
      %v553 = vunpack.c.l.b16 %v384
      %v554 = vunpack.c.l.b16 %v385
      %v555 = vunpack.c.l.b16 %v386
      %v556 = vunpack.c.l.b16 %v387
      %v557 = vunpack.c.l.b16 %v388
      %v558 = vunpack.c.l.b16 %v389
      %v559 = vunpack.c.l.b16 %v390
      %v560 = vunpack.c.l.b16 %v391
      %v561 = vunpack.c.l.b16 %v392
      %v562 = vunpack.c.l.b16 %v393
      %v563 = vpack.c.b16 %v548, %v547
      %v564 = vpack.c.b16 %v550, %v549
      %v565 = vpack.c.b16 %v552, %v551
      %v566 = vpack.c.b16 %v554, %v553
      %v567 = vpack.c.b16 %v556, %v555
      %v568 = vpack.c.b16 %v558, %v557
      %v569 = vpack.c.b16 %v560, %v559
      %v570 = vpack.c.b16 %v562, %v561
      %v572 = vsel %vm453, %v563, 0
      %v575 = vsel %vm453, %v564, 0
      %v578 = vsel %vm453, %v565, 0
      %v581 = vsel %vm453, %v566, 0
      %v584 = vsel %vm453, %v567, 0
      %v587 = vsel %vm453, %v568, 0
      %v590 = vsel %vm453, %v569, 0
      %v593 = vsel %vm453, %v570, 0
      %v596 = vsel %vm478, %v394, 0
      %598 = vmatpush.bf16.msra.mxu0 0
      %599 = vmatpush.bf16.msra.mxu0 0
      %600 = vmatpush.bf16.msra.mxu0 0
      %601 = vmatpush.bf16.msra.mxu0 0
      %602 = vmatpush.bf16.msra.mxu0 0
      %603 = vmatpush.bf16.msra.mxu0 0
      %604 = vmatpush.bf16.msra.mxu0 0
      %605 = vmatpush.bf16.msra.mxu0 %v596
      %606 = vmatmul.bf16.gmra.mxu0 %v572
      %v607 = vpop.f32.mrf.mxu0
      %v608 = vadd.f32 %v492, %v607
      %v609 = vpop.f32.mrf.mxu0
      %v610 = vadd.f32 %v494, %v609
      %611 = vmatmul.bf16.gmra.mxu0 %v575
      %v612 = vpop.f32.mrf.mxu0
      %v613 = vadd.f32 %v497, %v612
      %v614 = vpop.f32.mrf.mxu0
      %v615 = vadd.f32 %v499, %v614
      %616 = vmatmul.bf16.gmra.mxu0 %v578
      %v617 = vpop.f32.mrf.mxu0
      %v618 = vadd.f32 %v502, %v617
      %v619 = vpop.f32.mrf.mxu0
      %v620 = vadd.f32 %v504, %v619
      %621 = vmatmul.bf16.gmra.mxu0 %v581
      %v622 = vpop.f32.mrf.mxu0
      %v623 = vadd.f32 %v507, %v622
      %v624 = vpop.f32.mrf.mxu0
      %v625 = vadd.f32 %v509, %v624
      %626 = vmatmul.bf16.gmra.mxu0 %v584
      %v627 = vpop.f32.mrf.mxu0
      %v628 = vadd.f32 %v512, %v627
      %v629 = vpop.f32.mrf.mxu0
      %v630 = vadd.f32 %v514, %v629
      %631 = vmatmul.bf16.gmra.mxu0 %v587
      %v632 = vpop.f32.mrf.mxu0
      %v633 = vadd.f32 %v517, %v632
      %v634 = vpop.f32.mrf.mxu0
      %v635 = vadd.f32 %v519, %v634
      %636 = vmatmul.bf16.gmra.mxu0 %v590
      %v637 = vpop.f32.mrf.mxu0
      %v638 = vadd.f32 %v522, %v637
      %v639 = vpop.f32.mrf.mxu0
      %v640 = vadd.f32 %v524, %v639
      %641 = vmatmul.bf16.gmra.mxu0 %v593
      %v642 = vpop.f32.mrf.mxu0
      %v643 = vadd.f32 %v527, %v642
      %v644 = vpop.f32.mrf.mxu0
      %v645 = vadd.f32 %v529, %v644
      %646 = vdwg.mxu0
      %v647 = vld [vmem:[%s362] sm:$0xf]
      %v648 = vld [vmem:[%s362 + $0x4] sm:$0xf]
      %v649 = vld [vmem:[%s362 + $0x8] sm:$0xf]
      %v650 = vld [vmem:[%s362 + $0xc] sm:$0xf]
      %v651 = vld [vmem:[%s362 + $0x10] sm:$0xf]
      %v652 = vld [vmem:[%s362 + $0x14] sm:$0xf]
      %v653 = vld [vmem:[%s362 + $0x18] sm:$0xf]
      %v654 = vld [vmem:[%s362 + $0x1c] sm:$0xf]
      %v655 = vld [vmem:[%s362 + $0x20] sm:$0xf]
      %v656 = vld [vmem:[%s362 + $0x24] sm:$0xf]
      %v657 = vld [vmem:[%s362 + $0x28] sm:$0xf]
      %v658 = vld [vmem:[%s362 + $0x2c] sm:$0xf]
      %v659 = vld [vmem:[%s362 + $0x30] sm:$0xf]
      %v660 = vld [vmem:[%s362 + $0x34] sm:$0xf]
      %v661 = vld [vmem:[%s362 + $0x38] sm:$0xf]
      %v662 = vld [vmem:[%s362 + $0x3c] sm:$0xf]
      %s663 = scalar_lea.vmem %s3, 8
      %v664 = vld [vmem:[%s663] sm:$0xf]
      %v681 = vunpack.c.l.b16 %v647
      %v682 = vunpack.c.l.b16 %v648
      %v683 = vunpack.c.l.b16 %v649
      %v684 = vunpack.c.l.b16 %v650
      %v685 = vunpack.c.l.b16 %v651
      %v686 = vunpack.c.l.b16 %v652
      %v687 = vunpack.c.l.b16 %v653
      %v688 = vunpack.c.l.b16 %v654
      %v689 = vunpack.c.l.b16 %v655
      %v690 = vunpack.c.l.b16 %v656
      %v691 = vunpack.c.l.b16 %v657
      %v692 = vunpack.c.l.b16 %v658
      %v693 = vunpack.c.l.b16 %v659
      %v694 = vunpack.c.l.b16 %v660
      %v695 = vunpack.c.l.b16 %v661
      %v696 = vunpack.c.l.b16 %v662
      %v697 = vpack.c.b16 %v682, %v681
      %v698 = vpack.c.b16 %v684, %v683
      %v699 = vpack.c.b16 %v686, %v685
      %v700 = vpack.c.b16 %v688, %v687
      %v701 = vpack.c.b16 %v690, %v689
      %v702 = vpack.c.b16 %v692, %v691
      %v703 = vpack.c.b16 %v694, %v693
      %v704 = vpack.c.b16 %v696, %v695
      %v706 = vsel %vm453, %v697, 0
      %v709 = vsel %vm453, %v698, 0
      %v712 = vsel %vm453, %v699, 0
      %v715 = vsel %vm453, %v700, 0
      %v718 = vsel %vm453, %v701, 0
      %v721 = vsel %vm453, %v702, 0
      %v724 = vsel %vm453, %v703, 0
      %v727 = vsel %vm453, %v704, 0
      %v730 = vsel %vm478, %v664, 0
      %732 = vmatpush.bf16.msra.mxu0 0
      %733 = vmatpush.bf16.msra.mxu0 0
      %734 = vmatpush.bf16.msra.mxu0 0
      %735 = vmatpush.bf16.msra.mxu0 0
      %736 = vmatpush.bf16.msra.mxu0 0
      %737 = vmatpush.bf16.msra.mxu0 0
      %738 = vmatpush.bf16.msra.mxu0 0
      %739 = vmatpush.bf16.msra.mxu0 %v730
      %740 = vmatmul.bf16.gmra.mxu0 %v706
      %v741 = vpop.f32.mrf.mxu0
      %v742 = vadd.f32 0.0, %v741
      %v743 = vpop.f32.mrf.mxu0
      %v744 = vadd.f32 0.0, %v743
      %745 = vmatmul.bf16.gmra.mxu0 %v709
      %v746 = vpop.f32.mrf.mxu0
      %v747 = vadd.f32 0.0, %v746
      %v748 = vpop.f32.mrf.mxu0
      %v749 = vadd.f32 0.0, %v748
      %750 = vmatmul.bf16.gmra.mxu0 %v712
      %v751 = vpop.f32.mrf.mxu0
      %v752 = vadd.f32 0.0, %v751
      %v753 = vpop.f32.mrf.mxu0
      %v754 = vadd.f32 0.0, %v753
      %755 = vmatmul.bf16.gmra.mxu0 %v715
      %v756 = vpop.f32.mrf.mxu0
      %v757 = vadd.f32 0.0, %v756
      %v758 = vpop.f32.mrf.mxu0
      %v759 = vadd.f32 0.0, %v758
      %760 = vmatmul.bf16.gmra.mxu0 %v718
      %v761 = vpop.f32.mrf.mxu0
      %v762 = vadd.f32 0.0, %v761
      %v763 = vpop.f32.mrf.mxu0
      %v764 = vadd.f32 0.0, %v763
      %765 = vmatmul.bf16.gmra.mxu0 %v721
      %v766 = vpop.f32.mrf.mxu0
      %v767 = vadd.f32 0.0, %v766
      %v768 = vpop.f32.mrf.mxu0
      %v769 = vadd.f32 0.0, %v768
      %770 = vmatmul.bf16.gmra.mxu0 %v724
      %v771 = vpop.f32.mrf.mxu0
      %v772 = vadd.f32 0.0, %v771
      %v773 = vpop.f32.mrf.mxu0
      %v774 = vadd.f32 0.0, %v773
      %775 = vmatmul.bf16.gmra.mxu0 %v727
      %v776 = vpop.f32.mrf.mxu0
      %v777 = vadd.f32 0.0, %v776
      %v778 = vpop.f32.mrf.mxu0
      %v779 = vadd.f32 0.0, %v778
      %780 = vdwg.mxu0
      %v781 = vadd.f32 %v608, %v742
      %v782 = vadd.f32 %v610, %v744
      %v783 = vadd.f32 %v613, %v747
      %v784 = vadd.f32 %v615, %v749
      %v785 = vadd.f32 %v618, %v752
      %v786 = vadd.f32 %v620, %v754
      %v787 = vadd.f32 %v623, %v757
      %v788 = vadd.f32 %v625, %v759
      %v789 = vadd.f32 %v628, %v762
      %v790 = vadd.f32 %v630, %v764
      %v791 = vadd.f32 %v633, %v767
      %v792 = vadd.f32 %v635, %v769
      %v793 = vadd.f32 %v638, %v772
      %v794 = vadd.f32 %v640, %v774
      %v795 = vadd.f32 %v643, %v777
      %v796 = vadd.f32 %v645, %v779
      %v797 = vld [vmem:[%s366] sm:$0x1]
      %v799 = vperm.slane %v797, 0
      %v801 = vadd.f32 %v781, %v799
      %v802 = vadd.f32 %v782, %v799
      %v803 = vadd.f32 %v783, %v799
      %v804 = vadd.f32 %v784, %v799
      %v805 = vadd.f32 %v785, %v799
      %v806 = vadd.f32 %v786, %v799
      %v807 = vadd.f32 %v787, %v799
      %v808 = vadd.f32 %v788, %v799
      %v809 = vadd.f32 %v789, %v799
      %v810 = vadd.f32 %v790, %v799
      %v811 = vadd.f32 %v791, %v799
      %v812 = vadd.f32 %v792, %v799
      %v813 = vadd.f32 %v793, %v799
      %v814 = vadd.f32 %v794, %v799
      %v815 = vadd.f32 %v795, %v799
      %v816 = vadd.f32 %v796, %v799
      %v817 = vld [vmem:[%s5] sm:$0x1]
      %v819 = vperm.slane %v817, 0
      %v821 = vadd.f32 %v801, %v819
      %v822 = vadd.f32 %v802, %v819
      %v823 = vadd.f32 %v803, %v819
      %v824 = vadd.f32 %v804, %v819
      %v825 = vadd.f32 %v805, %v819
      %v826 = vadd.f32 %v806, %v819
      %v827 = vadd.f32 %v807, %v819
      %v828 = vadd.f32 %v808, %v819
      %v829 = vadd.f32 %v809, %v819
      %v830 = vadd.f32 %v810, %v819
      %v831 = vadd.f32 %v811, %v819
      %v832 = vadd.f32 %v812, %v819
      %v833 = vadd.f32 %v813, %v819
      %v834 = vadd.f32 %v814, %v819
      %v835 = vadd.f32 %v815, %v819
      %v836 = vadd.f32 %v816, %v819
      %v837 = vmax.f32 %v821, 0.0
      %v838 = vmax.f32 %v822, 0.0
      %v839 = vmax.f32 %v823, 0.0
      %v840 = vmax.f32 %v824, 0.0
      %v841 = vmax.f32 %v825, 0.0
      %v842 = vmax.f32 %v826, 0.0
      %v843 = vmax.f32 %v827, 0.0
      %v844 = vmax.f32 %v828, 0.0
      %v845 = vmax.f32 %v829, 0.0
      %v846 = vmax.f32 %v830, 0.0
      %v847 = vmax.f32 %v831, 0.0
      %v848 = vmax.f32 %v832, 0.0
      %v849 = vmax.f32 %v833, 0.0
      %v850 = vmax.f32 %v834, 0.0
      %v851 = vmax.f32 %v835, 0.0
      %v852 = vmax.f32 %v836, 0.0
      %853 = vst.msk [vmem:[%s375] sm:$0xff] %vm453, %v837
      %854 = vst.msk [vmem:[%s375 + $0x8] sm:$0xff] %vm453, %v838
      %855 = vst.msk [vmem:[%s375 + $0x10] sm:$0xff] %vm453, %v839
      %856 = vst.msk [vmem:[%s375 + $0x18] sm:$0xff] %vm453, %v840
      %857 = vst.msk [vmem:[%s375 + $0x20] sm:$0xff] %vm453, %v841
      %858 = vst.msk [vmem:[%s375 + $0x28] sm:$0xff] %vm453, %v842
      %859 = vst.msk [vmem:[%s375 + $0x30] sm:$0xff] %vm453, %v843
      %860 = vst.msk [vmem:[%s375 + $0x38] sm:$0xff] %vm453, %v844
      %861 = vst.msk [vmem:[%s375 + $0x40] sm:$0xff] %vm453, %v845
      %862 = vst.msk [vmem:[%s375 + $0x48] sm:$0xff] %vm453, %v846
      %863 = vst.msk [vmem:[%s375 + $0x50] sm:$0xff] %vm453, %v847
      %864 = vst.msk [vmem:[%s375 + $0x58] sm:$0xff] %vm453, %v848
      %865 = vst.msk [vmem:[%s375 + $0x60] sm:$0xff] %vm453, %v849
      %866 = vst.msk [vmem:[%s375 + $0x68] sm:$0xff] %vm453, %v850
      %867 = vst.msk [vmem:[%s375 + $0x70] sm:$0xff] %vm453, %v851
      %868 = vst.msk [vmem:[%s375 + $0x78] sm:$0xff] %vm453, %v852
      %s869 = smul.u32 16, %s22
      %p870 = scmp.lt.s32.totalorder %s21, 1
      %s871 = scalar_select %p870, %s21, 1
      %p872 = scmp.lt.s32.totalorder %s869, 31
      %s873 = scalar_select %p872, %s869, 31
      %s874 = smul.addr %s871, 32
      %s875 = sadd.s32 %s873, %s874
      %s876 = smul.addr %s875, 8
      %s877 = scalar_lea.vmem %s6, %s876
      // Predicated region
      $region45: #{aspp_forward.9} parent=43 // pred_check
        %p878 = pneg %p201
      $region46: #{aspp_forward.9} parent=43 // pred_check_branch
        %880 = sbr.rel (%p878) target = $region48
      $region47: #{aspp_forward.9} parent=43 // pred_region
        %s881 = smul.u32 16, %s22
      $region48: #{aspp_forward.9} parent=43 // pred_fallthru
        _
    $region44: #{aspp_forward.9} parent=5 // pred_fallthru
      _
    %p882 = scmp.le.s32.totalorder 2, %s12
    // Predicated region
    $region49: #{aspp_forward.9} parent=5 // pred_check
      %p883 = pneg %p882
    $region50: #{aspp_forward.9} parent=5 // pred_check_branch
      %885 = sbr.rel (%p883) target = $region52
    $region51: #{aspp_forward.9} parent=5 // pred_region
      %s886 = ssub.s32 %s12, 2
      // Predicated region
      $region53: #{aspp_forward.9} parent=51 // pred_check
        %p887 = pneg %p207
      $region54: #{aspp_forward.9} parent=51 // pred_check_branch
        %889 = sbr.rel (%p887) target = $region56
      $region55: #{aspp_forward.9} parent=51 // pred_region
        %s890 = smul.u32 16, %s24
        %p891 = scmp.lt.s32.totalorder %s23, 1
        %s892 = scalar_select %p891, %s23, 1
        %p893 = scmp.lt.s32.totalorder %s890, 31
        %s894 = scalar_select %p893, %s890, 31
        %s895 = smul.addr %s892, 32
        %s896 = sadd.s32 %s894, %s895
        %s897 = smul.addr %s896, 8
        %s898 = scalar_lea.vmem %s6, %s897
      $region56: #{aspp_forward.9} parent=51 // pred_fallthru
        _
    $region52: #{aspp_forward.9} parent=5 // pred_fallthru
      _
  $region6: #{aspp_forward.9} parent=0 // loop_footer
    %s16 = sadd.s32 1, %s12
  $region7: #{aspp_forward.9} parent=0 // loop_footer_branch
    %11 = sbr.rel target = $region3
  $region8: #{aspp_forward.9} parent=0 // loop_exit
    _

// kernel: aspp_forward.5
$region0: #{aspp_forward.5}
  #allocation0 [shape = 'u32[]', space=smem, size = 0x4, offset = 0x4, fixed_abs, tag = 'smem constant byte address 0x4 - core index']
  #allocation1 [shape = 'u32[72,128]{1,0:T(1,128)}', space=vmem, size = 0x9000, scoped, tag = 'internal scratch']
  %s0 = inlined_call_operand.vmem [shape: bf16[2,22,22,4], index: 0, kind: input, shape index: {}]
  %s1 = inlined_call_operand.vmem [shape: bf16[3,3,4,8], index: 1, kind: input, shape index: {}]
  %s2 = inlined_call_operand.vmem [shape: f32[1,8], index: 2, kind: input, shape index: {}]
  %s3 = inlined_call_operand.vmem [shape: bf16[2,256,8], index: 3, kind: output, shape index: {}]
  %s4 = sld [smem:[#allocation0]]
  $region45: #{aspp_forward.5} parent=0
    _
  %s6 = ssub.s32 1, %s4
  %s7 = scalar_select 0, %s6, %s4
  loop: start=0, step=1, limit=6
  $region2: #{aspp_forward.5} parent=0 // loop_pre_header
    _
  $region3: #{aspp_forward.5} parent=0 // loop_header
    %s9 = sphi 0, %s13
    %p10 = scmp.ge.s32.totalorder %s9, 6
    %s16 = sphi 0, %s28
    %s17 = sphi 0, %s24
    %s18 = sphi 0, %s16
    %s19 = sphi 0, %s17
    %s20 = sphi 0, %s18
    %s21 = sphi 0, %s19
    %s31 = sphi 0, %s33
    %s34 = sphi 0, %s31
    %s35 = sphi 0, %s34
    %s51 = sphi 0, %s35
    %s55 = sphi 0, %s55
    %s57 = sphi 0, %s55
    %s58 = sphi 0, %s57
    %s72 = sphi 0, %s58
    %s76 = sphi 0, %s76
    %s78 = sphi 0, %s76
    %s79 = sphi 0, %s78
    %s93 = sphi 0, %s79
    %s101 = sphi 0, %s103
    %s104 = sphi 0, %s101
    %s105 = sphi 0, %s104
    %s121 = sphi 0, %s105
  $region4: #{aspp_forward.5} parent=0 // loop_header_branch
    %12 = sbr.rel (%p10) target = $region8
  $region5: #{aspp_forward.5} parent=0 // loop_body
    %s14 = ssub.s32 %s9, 1
    %s15 = ssub.s32 %s9, 2
    %s22 = sadd.s32 1, %s17
    %p23 = scmp.ge.s32.totalorder %s22, 2
    %s24 = scalar_select %p23, 0, %s22
    %s25 = sadd.s32 1, %s16
    %s26 = scalar_select %p23, %s25, %s16
    %p27 = scmp.ge.s32.totalorder %s26, 2
    %s28 = scalar_select %p27, 0, %s26
    %s29 = ssub.s32 %s16, %s28
    %p30 = scmp.eq.s32.totalorder %s29, 0
    %s32 = sadd.s32 %s31, 1
    %s33 = scalar_select %p30, %s31, %s32
    %p36 = pneg %p30
    %p37 = scmp.eq.s32.totalorder %s9, 3
    %p38 = por %p36, %p37
    %p39 = scmp.ne.s32.totalorder %s31, %s34
    %p40 = scmp.eq.s32.totalorder %s9, 0
    %p41 = por %p39, %p40
    %p42 = scmp.ne.s32.totalorder %s31, %s34
    %p43 = scmp.eq.s32.totalorder %s14, 3
    %p44 = por %p42, %p43
    %p45 = scmp.ne.s32.totalorder %s34, %s35
    %p46 = scmp.eq.s32.totalorder %s14, 0
    %p47 = por %p45, %p46
    %p48 = scmp.ne.s32.totalorder %s34, %s35
    %p49 = scmp.eq.s32.totalorder %s15, 3
    %p50 = por %p48, %p49
    %p52 = scmp.ne.s32.totalorder %s35, %s51
    %p53 = scmp.eq.s32.totalorder %s15, 0
    %p54 = por %p52, %p53
    %s56 = sadd.s32 %s55, 1
    %p59 = scmp.eq.s32.totalorder %s9, 3
    %p60 = scmp.ne.s32.totalorder %s55, %s57
    %p61 = scmp.eq.s32.totalorder %s9, 0
    %p62 = por %p60, %p61
    %p63 = scmp.ne.s32.totalorder %s55, %s57
    %p64 = scmp.eq.s32.totalorder %s14, 3
    %p65 = por %p63, %p64
    %p66 = scmp.ne.s32.totalorder %s57, %s58
    %p67 = scmp.eq.s32.totalorder %s14, 0
    %p68 = por %p66, %p67
    %p69 = scmp.ne.s32.totalorder %s57, %s58
    %p70 = scmp.eq.s32.totalorder %s15, 3
    %p71 = por %p69, %p70
    %p73 = scmp.ne.s32.totalorder %s58, %s72
    %p74 = scmp.eq.s32.totalorder %s15, 0
    %p75 = por %p73, %p74
    %s77 = sadd.s32 %s76, 1
    %p80 = scmp.eq.s32.totalorder %s9, 3
    %p81 = scmp.ne.s32.totalorder %s76, %s78
    %p82 = scmp.eq.s32.totalorder %s9, 0
    %p83 = por %p81, %p82
    %p84 = scmp.ne.s32.totalorder %s76, %s78
    %p85 = scmp.eq.s32.totalorder %s14, 3
    %p86 = por %p84, %p85
    %p87 = scmp.ne.s32.totalorder %s78, %s79
    %p88 = scmp.eq.s32.totalorder %s14, 0
    %p89 = por %p87, %p88
    %p90 = scmp.ne.s32.totalorder %s78, %s79
    %p91 = scmp.eq.s32.totalorder %s15, 3
    %p92 = por %p90, %p91
    %p94 = scmp.ne.s32.totalorder %s79, %s93
    %p95 = scmp.eq.s32.totalorder %s15, 0
    %p96 = por %p94, %p95
    %s97 = ssub.s32 %s16, %s28
    %s98 = ssub.s32 %s17, %s24
    %s99 = sor.u32 %s97, %s98
    %p100 = scmp.eq.s32.totalorder %s99, 0
    %s102 = sadd.s32 %s101, 1
    %s103 = scalar_select %p100, %s101, %s102
    %p106 = pneg %p100
    %p107 = scmp.eq.s32.totalorder %s9, 3
    %p108 = por %p106, %p107
    %p109 = scmp.ne.s32.totalorder %s101, %s104
    %p110 = scmp.eq.s32.totalorder %s9, 0
    %p111 = por %p109, %p110
    %p112 = scmp.ne.s32.totalorder %s101, %s104
    %p113 = scmp.eq.s32.totalorder %s14, 3
    %p114 = por %p112, %p113
    %p115 = scmp.ne.s32.totalorder %s104, %s105
    %p116 = scmp.eq.s32.totalorder %s14, 0
    %p117 = por %p115, %p116
    %p118 = scmp.ne.s32.totalorder %s104, %s105
    %p119 = scmp.eq.s32.totalorder %s15, 3
    %p120 = por %p118, %p119
    %p122 = scmp.ne.s32.totalorder %s105, %s121
    %p123 = scmp.eq.s32.totalorder %s15, 0
    %p124 = por %p122, %p123
    %p125 = scmp.le.s32.totalorder 1, %s9
    %p126 = scmp.lt.s32.totalorder %s9, 5
    %p127 = pnand %p125, %p126
    %p128 = pneg %p127
    // Predicated region
    $region9: #{aspp_forward.5} parent=5 // pred_check
      _
    $region10: #{aspp_forward.5} parent=5 // pred_check_branch
      %130 = sbr.rel (%p127) target = $region12
    $region11: #{aspp_forward.5} parent=5 // pred_region
      %s131 = ssub.s32 %s9, 1
      // Predicated region
      $region13: #{aspp_forward.5} parent=11 // pred_check
        %p132 = pneg %p68
      $region14: #{aspp_forward.5} parent=11 // pred_check_branch
        %134 = sbr.rel (%p132) target = $region16
      $region15: #{aspp_forward.5} parent=11 // pred_region
        _
      $region16: #{aspp_forward.5} parent=11 // pred_fallthru
        _
      // Predicated region
      $region17: #{aspp_forward.5} parent=11 // pred_check
        %p135 = pneg %p89
      $region18: #{aspp_forward.5} parent=11 // pred_check_branch
        %137 = sbr.rel (%p135) target = $region20
      $region19: #{aspp_forward.5} parent=11 // pred_region
        _
      $region20: #{aspp_forward.5} parent=11 // pred_fallthru
        _
    $region12: #{aspp_forward.5} parent=5 // pred_fallthru
      _
    %p138 = scmp.lt.s32.totalorder %s9, 4
    // Predicated region
    $region21: #{aspp_forward.5} parent=5 // pred_check
      %p139 = pneg %p138
    $region22: #{aspp_forward.5} parent=5 // pred_check_branch
      %141 = sbr.rel (%p139) target = $region24
    $region23: #{aspp_forward.5} parent=5 // pred_region
      // Predicated region
      $region25: #{aspp_forward.5} parent=23 // pred_check
        %p142 = pneg %p41
      $region26: #{aspp_forward.5} parent=23 // pred_check_branch
        %144 = sbr.rel (%p142) target = $region28
      $region27: #{aspp_forward.5} parent=23 // pred_region
        %p145 = scmp.lt.s32.totalorder %s16, 1
        %s146 = scalar_select %p145, %s16, 1
        %s147 = smul.addr %s146, 66
        %s148 = smul.addr %s147, 4
        %s149 = scalar_lea.vmem %s0, %s148
      $region28: #{aspp_forward.5} parent=23 // pred_fallthru
        _
    $region24: #{aspp_forward.5} parent=5 // pred_fallthru
      _
    %p150 = scmp.le.s32.totalorder 1, %s9
    %p151 = scmp.lt.s32.totalorder %s9, 5
    %p152 = pnand %p150, %p151
    %p153 = pneg %p152
    // Predicated region
    $region29: #{aspp_forward.5} parent=5 // pred_check
      _
    $region30: #{aspp_forward.5} parent=5 // pred_check_branch
      %155 = sbr.rel (%p152) target = $region32
    $region31: #{aspp_forward.5} parent=5 // pred_region
      %s156 = ssub.s32 %s9, 1
      %p157 = scmp.lt.s32.totalorder %s18, 1
      %s158 = scalar_select %p157, %s18, 1
      %s159 = smul.addr %s158, 66
      %s160 = smul.addr %s159, 4
      %s161 = scalar_lea.vmem %s0, %s160
      %p162 = pneg %p47
      %p163 = pneg %p44
      %p164 = pneg %p68
      %p165 = pneg %p65
      %p166 = pneg %p89
      %p167 = pneg %p86
      %p168 = pneg %p117
      %p169 = pneg %p114
      %s170 = smul.u32 16, %s19
      %p171 = scmp.lt.s32.totalorder %s18, 1
      %s172 = scalar_select %p171, %s18, 1
      %p173 = scmp.lt.s32.totalorder %s170, 31
      %s174 = scalar_select %p173, %s170, 31
      %s175 = smul.addr %s172, 32
      %s176 = sadd.s32 %s174, %s175
      %s177 = smul.addr %s176, 4
      %s178 = scalar_lea.vmem %s3, %s177
      %p179 = scmp.lt.s32.totalorder %s18, 1
      %s180 = scalar_select %p179, %s18, 1
      %s181 = smul.addr %s180, 66
      %s182 = smul.addr %s181, 4
      %s183 = scalar_lea.vmem %s0, %s182
      %s184 = smul.u32 16, %s19
      %p185 = scmp.lt.s32.totalorder %s18, 1
      %s186 = scalar_select %p185, %s18, 1
      %p187 = scmp.lt.s32.totalorder %s184, 31
      %s188 = scalar_select %p187, %s184, 31
      %s189 = smul.addr %s186, 32
      %s190 = sadd.s32 %s188, %s189
      %s191 = smul.addr %s190, 4
      %s192 = scalar_lea.vmem %s3, %s191
      %s193 = smul.u32 16, %s19
      %s195 = smul.u32 %s19, 8
      %s196 = sadd.s32 %s195, 2
      %s197 = smul.u32 %s196, 3
      %s198 = smul.addr %s197, 4
      %s199 = scalar_lea.vmem %s183, %s198
      %v200 = vld [vmem:[%s199] sm:$0xe]
      %v201 = vld [vmem:[%s199 + $0x4] sm:$0xf]
      %v202 = vld [vmem:[%s199 + $0x8] sm:$0x1]
      %v203 = vld [vmem:[%s199 + $0xc] sm:$0xe]
      %v204 = vld [vmem:[%s199 + $0x10] sm:$0xf]
      %v205 = vld [vmem:[%s199 + $0x14] sm:$0x1]
      %v206 = vld [vmem:[%s199 + $0x18] sm:$0xe]
      %v207 = vld [vmem:[%s199 + $0x1c] sm:$0xf]
      %v208 = vld [vmem:[%s199 + $0x20] sm:$0x1]
      %v209 = vld [vmem:[%s199 + $0x24] sm:$0xe]
      %v210 = vld [vmem:[%s199 + $0x28] sm:$0xf]
      %v211 = vld [vmem:[%s199 + $0x2c] sm:$0x1]
      %v212 = vld [vmem:[%s199 + $0x30] sm:$0xe]
      %v213 = vld [vmem:[%s199 + $0x34] sm:$0xf]
      %v214 = vld [vmem:[%s199 + $0x38] sm:$0x1]
      %v215 = vld [vmem:[%s199 + $0x3c] sm:$0xe]
      %v216 = vld [vmem:[%s199 + $0x40] sm:$0xf]
      %v217 = vld [vmem:[%s199 + $0x44] sm:$0x1]
      %v218 = vld [vmem:[%s199 + $0x48] sm:$0xe]
      %v219 = vld [vmem:[%s199 + $0x4c] sm:$0xf]
      %v220 = vld [vmem:[%s199 + $0x50] sm:$0x1]
      %v221 = vld [vmem:[%s199 + $0x54] sm:$0xe]
      %v222 = vld [vmem:[%s199 + $0x58] sm:$0xf]
      %v223 = vld [vmem:[%s199 + $0x5c] sm:$0x1]
      %vm248 = vcmask 1042432
      %vm249 = vcmask 1046532
      %vm250 = vmor %vm248, %vm249
      %v251 = vrot.slane %v200, 5
      %v252 = vrot.slane %v251, 4
      %v253 = vrot.slane %v201, 5
      %v254 = vsel %vm250, %v252, %v253
      %v255 = vrot.slane %v253, 4
      %v256 = vrot.slane %v202, 5
      %v257 = vsel %vm250, %v255, %v256
      %v258 = vrot.slane %v203, 5
      %v259 = vrot.slane %v258, 4
      %v260 = vrot.slane %v204, 5
      %v261 = vsel %vm250, %v259, %v260
      %v262 = vrot.slane %v260, 4
      %v263 = vrot.slane %v205, 5
      %v264 = vsel %vm250, %v262, %v263
      %v265 = vrot.slane %v206, 5
      %v266 = vrot.slane %v265, 4
      %v267 = vrot.slane %v207, 5
      %v268 = vsel %vm250, %v266, %v267
      %v269 = vrot.slane %v267, 4
      %v270 = vrot.slane %v208, 5
      %v271 = vsel %vm250, %v269, %v270
      %v272 = vrot.slane %v209, 5
      %v273 = vrot.slane %v272, 4
      %v274 = vrot.slane %v210, 5
      %v275 = vsel %vm250, %v273, %v274
      %v276 = vrot.slane %v274, 4
      %v277 = vrot.slane %v211, 5
      %v278 = vsel %vm250, %v276, %v277
      %v279 = vrot.slane %v212, 5
      %v280 = vrot.slane %v279, 4
      %v281 = vrot.slane %v213, 5
      %v282 = vsel %vm250, %v280, %v281
      %v283 = vrot.slane %v281, 4
      %v284 = vrot.slane %v214, 5
      %v285 = vsel %vm250, %v283, %v284
      %v286 = vrot.slane %v215, 5
      %v287 = vrot.slane %v286, 4
      %v288 = vrot.slane %v216, 5
      %v289 = vsel %vm250, %v287, %v288
      %v290 = vrot.slane %v288, 4
      %v291 = vrot.slane %v217, 5
      %v292 = vsel %vm250, %v290, %v291
      %v293 = vrot.slane %v218, 5
      %v294 = vrot.slane %v293, 4
      %v295 = vrot.slane %v219, 5
      %v296 = vsel %vm250, %v294, %v295
      %v297 = vrot.slane %v295, 4
      %v298 = vrot.slane %v220, 5
      %v299 = vsel %vm250, %v297, %v298
      %v300 = vrot.slane %v221, 5
      %v301 = vrot.slane %v300, 4
      %v302 = vrot.slane %v222, 5
      %v303 = vsel %vm250, %v301, %v302
      %v304 = vrot.slane %v302, 4
      %v305 = vrot.slane %v223, 5
      %v306 = vsel %vm250, %v304, %v305
      %v307 = vld [vmem:[%s1] sm:$0x3]
      %v308 = vld [vmem:[%s199 + $0x8] sm:$0x3]
      %v309 = vld [vmem:[%s199 + $0x14] sm:$0x3]
      %v310 = vld [vmem:[%s199 + $0x20] sm:$0x3]
      %v311 = vld [vmem:[%s199 + $0x2c] sm:$0x3]
      %v312 = vld [vmem:[%s199 + $0x38] sm:$0x3]
      %v313 = vld [vmem:[%s199 + $0x44] sm:$0x3]
      %v314 = vld [vmem:[%s199 + $0x50] sm:$0x3]
      %v315 = vld [vmem:[%s199 + $0x5c] sm:$0x3]
      %vm316 = vsmask.f32 2304
      %vm317 = vsmask.f32 6416
      %vm318 = vmor %vm316, %vm317
      %v320 = vshrl.u32 %v200, 16
      %v322 = vrot.slane %v320, 5
      %v323 = vshll.u32 %v200, 16
      %v325 = vrot.slane %v323, 6
      %v326 = vor.u32 %v322, %v325
      %v327 = vrot.slane %v326, 4
      %v329 = vshrl.u32 %v201, 16
      %v331 = vrot.slane %v329, 5
      %v332 = vshll.u32 %v201, 16
      %v334 = vrot.slane %v332, 6
      %v335 = vor.u32 %v331, %v334
      %v336 = vsel %vm318, %v327, %v335
      %v337 = vrot.slane %v335, 4
      %v339 = vshrl.u32 %v308, 16
      %v341 = vrot.slane %v339, 5
      %v342 = vshll.u32 %v308, 16
      %v344 = vrot.slane %v342, 6
      %v345 = vor.u32 %v341, %v344
      %v346 = vsel %vm318, %v337, %v345
      %v348 = vshrl.u32 %v203, 16
      %v350 = vrot.slane %v348, 5
      %v351 = vshll.u32 %v203, 16
      %v353 = vrot.slane %v351, 6
      %v354 = vor.u32 %v350, %v353
      %v355 = vrot.slane %v354, 4
      %v357 = vshrl.u32 %v204, 16
      %v359 = vrot.slane %v357, 5
      %v360 = vshll.u32 %v204, 16
      %v362 = vrot.slane %v360, 6
      %v363 = vor.u32 %v359, %v362
      %v364 = vsel %vm318, %v355, %v363
      %v365 = vrot.slane %v363, 4
      %v367 = vshrl.u32 %v309, 16
      %v369 = vrot.slane %v367, 5
      %v370 = vshll.u32 %v309, 16
      %v372 = vrot.slane %v370, 6
      %v373 = vor.u32 %v369, %v372
      %v374 = vsel %vm318, %v365, %v373
      %v376 = vshrl.u32 %v206, 16
      %v378 = vrot.slane %v376, 5
      %v379 = vshll.u32 %v206, 16
      %v381 = vrot.slane %v379, 6
      %v382 = vor.u32 %v378, %v381
      %v383 = vrot.slane %v382, 4
      %v385 = vshrl.u32 %v207, 16
      %v387 = vrot.slane %v385, 5
      %v388 = vshll.u32 %v207, 16
      %v390 = vrot.slane %v388, 6
      %v391 = vor.u32 %v387, %v390
      %v392 = vsel %vm318, %v383, %v391
      %v393 = vrot.slane %v391, 4
      %v395 = vshrl.u32 %v310, 16
      %v397 = vrot.slane %v395, 5
      %v398 = vshll.u32 %v310, 16
      %v400 = vrot.slane %v398, 6
      %v401 = vor.u32 %v397, %v400
      %v402 = vsel %vm318, %v393, %v401
      %v404 = vshrl.u32 %v209, 16
      %v406 = vrot.slane %v404, 5
      %v407 = vshll.u32 %v209, 16
      %v409 = vrot.slane %v407, 6
      %v410 = vor.u32 %v406, %v409
      %v411 = vrot.slane %v410, 4
      %v413 = vshrl.u32 %v210, 16
      %v415 = vrot.slane %v413, 5
      %v416 = vshll.u32 %v210, 16
      %v418 = vrot.slane %v416, 6
      %v419 = vor.u32 %v415, %v418
      %v420 = vsel %vm318, %v411, %v419
      %v421 = vrot.slane %v419, 4
      %v423 = vshrl.u32 %v311, 16
      %v425 = vrot.slane %v423, 5
      %v426 = vshll.u32 %v311, 16
      %v428 = vrot.slane %v426, 6
      %v429 = vor.u32 %v425, %v428
      %v430 = vsel %vm318, %v421, %v429
      %v432 = vshrl.u32 %v212, 16
      %v434 = vrot.slane %v432, 5
      %v435 = vshll.u32 %v212, 16
      %v437 = vrot.slane %v435, 6
      %v438 = vor.u32 %v434, %v437
      %v439 = vrot.slane %v438, 4
      %v441 = vshrl.u32 %v213, 16
      %v443 = vrot.slane %v441, 5
      %v444 = vshll.u32 %v213, 16
      %v446 = vrot.slane %v444, 6
      %v447 = vor.u32 %v443, %v446
      %v448 = vsel %vm318, %v439, %v447
      %v449 = vrot.slane %v447, 4
      %v451 = vshrl.u32 %v312, 16
      %v453 = vrot.slane %v451, 5
      %v454 = vshll.u32 %v312, 16
      %v456 = vrot.slane %v454, 6
      %v457 = vor.u32 %v453, %v456
      %v458 = vsel %vm318, %v449, %v457
      %v460 = vshrl.u32 %v215, 16
      %v462 = vrot.slane %v460, 5
      %v463 = vshll.u32 %v215, 16
      %v465 = vrot.slane %v463, 6
      %v466 = vor.u32 %v462, %v465
      %v467 = vrot.slane %v466, 4
      %v469 = vshrl.u32 %v216, 16
      %v471 = vrot.slane %v469, 5
      %v472 = vshll.u32 %v216, 16
      %v474 = vrot.slane %v472, 6
      %v475 = vor.u32 %v471, %v474
      %v476 = vsel %vm318, %v467, %v475
      %v477 = vrot.slane %v475, 4
      %v479 = vshrl.u32 %v313, 16
      %v481 = vrot.slane %v479, 5
      %v482 = vshll.u32 %v313, 16
      %v484 = vrot.slane %v482, 6
      %v485 = vor.u32 %v481, %v484
      %v486 = vsel %vm318, %v477, %v485
      %v488 = vshrl.u32 %v218, 16
      %v490 = vrot.slane %v488, 5
      %v491 = vshll.u32 %v218, 16
      %v493 = vrot.slane %v491, 6
      %v494 = vor.u32 %v490, %v493
      %v495 = vrot.slane %v494, 4
      %v497 = vshrl.u32 %v219, 16
      %v499 = vrot.slane %v497, 5
      %v500 = vshll.u32 %v219, 16
      %v502 = vrot.slane %v500, 6
      %v503 = vor.u32 %v499, %v502
      %v504 = vsel %vm318, %v495, %v503
      %v505 = vrot.slane %v503, 4
      %v507 = vshrl.u32 %v314, 16
      %v509 = vrot.slane %v507, 5
      %v510 = vshll.u32 %v314, 16
      %v512 = vrot.slane %v510, 6
      %v513 = vor.u32 %v509, %v512
      %v514 = vsel %vm318, %v505, %v513
      %v516 = vshrl.u32 %v221, 16
      %v518 = vrot.slane %v516, 5
      %v519 = vshll.u32 %v221, 16
      %v521 = vrot.slane %v519, 6
      %v522 = vor.u32 %v518, %v521
      %v523 = vrot.slane %v522, 4
      %v525 = vshrl.u32 %v222, 16
      %v527 = vrot.slane %v525, 5
      %v528 = vshll.u32 %v222, 16
      %v530 = vrot.slane %v528, 6
      %v531 = vor.u32 %v527, %v530
      %v532 = vsel %vm318, %v523, %v531
      %v533 = vrot.slane %v531, 4
      %v535 = vshrl.u32 %v315, 16
      %v537 = vrot.slane %v535, 5
      %v538 = vshll.u32 %v315, 16
      %v540 = vrot.slane %v538, 6
      %v541 = vor.u32 %v537, %v540
      %v542 = vsel %vm318, %v533, %v541
      %s543 = scalar_lea.vmem %s1, 2
      %v544 = vld [vmem:[%s543] sm:$0x3]
      %v545 = vunpack.c.l.b16 %v336
      %v546 = vunpack.c.l.b16 %v346
      %v547 = vunpack.c.l.b16 %v364
      %v548 = vunpack.c.l.b16 %v374
      %v549 = vunpack.c.l.b16 %v392
      %v550 = vunpack.c.l.b16 %v402
      %v551 = vunpack.c.l.b16 %v420
      %v552 = vunpack.c.l.b16 %v430
      %v553 = vunpack.c.l.b16 %v448
      %v554 = vunpack.c.l.b16 %v458
      %v555 = vunpack.c.l.b16 %v476
      %v556 = vunpack.c.l.b16 %v486
      %v557 = vunpack.c.l.b16 %v504
      %v558 = vunpack.c.l.b16 %v514
      %v559 = vunpack.c.l.b16 %v532
      %v560 = vunpack.c.l.b16 %v542
      %v561 = vpack.c.b16 %v546, %v545
      %v562 = vpack.c.b16 %v548, %v547
      %v563 = vpack.c.b16 %v550, %v549
      %v564 = vpack.c.b16 %v552, %v551
      %v565 = vpack.c.b16 %v554, %v553
      %v566 = vpack.c.b16 %v556, %v555
      %v567 = vpack.c.b16 %v558, %v557
      %v568 = vpack.c.b16 %v560, %v559
      %vm569 = vcmask 31744
      %v571 = vsel %vm569, %v561, 0
      %v574 = vsel %vm569, %v562, 0
      %v577 = vsel %vm569, %v563, 0
      %v580 = vsel %vm569, %v564, 0
      %v583 = vsel %vm569, %v565, 0
      %v586 = vsel %vm569, %v566, 0
      %v589 = vsel %vm569, %v567, 0
      %v592 = vsel %vm569, %v568, 0
      %vm594 = vcmask 1041408
      %v596 = vsel %vm594, %v544, 0
      %598 = vmatpush.bf16.msra.mxu0 0
      %599 = vmatpush.bf16.msra.mxu0 0
      %600 = vmatpush.bf16.msra.mxu0 0
      %601 = vmatpush.bf16.msra.mxu0 0
      %602 = vmatpush.bf16.msra.mxu0 0
      %603 = vmatpush.bf16.msra.mxu0 0
      %604 = vmatpush.bf16.msra.mxu0 0
      %605 = vmatpush.bf16.msra.mxu0 %v596
      %606 = vmatmul.bf16.gmra.mxu0 %v571
      %v607 = vpop.f32.mrf.mxu0
      %v608 = vadd.f32 0.0, %v607
      %v609 = vpop.f32.mrf.mxu0
      %v610 = vadd.f32 0.0, %v609
      %611 = vmatmul.bf16.gmra.mxu0 %v574
      %v612 = vpop.f32.mrf.mxu0
      %v613 = vadd.f32 0.0, %v612
      %v614 = vpop.f32.mrf.mxu0
      %v615 = vadd.f32 0.0, %v614
      %616 = vmatmul.bf16.gmra.mxu0 %v577
      %v617 = vpop.f32.mrf.mxu0
      %v618 = vadd.f32 0.0, %v617
      %v619 = vpop.f32.mrf.mxu0
      %v620 = vadd.f32 0.0, %v619
      %621 = vmatmul.bf16.gmra.mxu0 %v580
      %v622 = vpop.f32.mrf.mxu0
      %v623 = vadd.f32 0.0, %v622
      %v624 = vpop.f32.mrf.mxu0
      %v625 = vadd.f32 0.0, %v624
      %626 = vmatmul.bf16.gmra.mxu0 %v583
      %v627 = vpop.f32.mrf.mxu0
      %v628 = vadd.f32 0.0, %v627
      %v629 = vpop.f32.mrf.mxu0
      %v630 = vadd.f32 0.0, %v629
      %631 = vmatmul.bf16.gmra.mxu0 %v586
      %v632 = vpop.f32.mrf.mxu0
      %v633 = vadd.f32 0.0, %v632
      %v634 = vpop.f32.mrf.mxu0
      %v635 = vadd.f32 0.0, %v634
      %636 = vmatmul.bf16.gmra.mxu0 %v589
      %v637 = vpop.f32.mrf.mxu0
      %v638 = vadd.f32 0.0, %v637
      %v639 = vpop.f32.mrf.mxu0
      %v640 = vadd.f32 0.0, %v639
      %641 = vmatmul.bf16.gmra.mxu0 %v592
      %v642 = vpop.f32.mrf.mxu0
      %v643 = vadd.f32 0.0, %v642
      %v644 = vpop.f32.mrf.mxu0
      %v645 = vadd.f32 0.0, %v644
      %646 = vdwg.mxu0
      %v647 = vunpack.c.l.b16 %v254
      %v648 = vunpack.c.l.b16 %v257
      %v649 = vunpack.c.l.b16 %v261
      %v650 = vunpack.c.l.b16 %v264
      %v651 = vunpack.c.l.b16 %v268
      %v652 = vunpack.c.l.b16 %v271
      %v653 = vunpack.c.l.b16 %v275
      %v654 = vunpack.c.l.b16 %v278
      %v655 = vunpack.c.l.b16 %v282
      %v656 = vunpack.c.l.b16 %v285
      %v657 = vunpack.c.l.b16 %v289
      %v658 = vunpack.c.l.b16 %v292
      %v659 = vunpack.c.l.b16 %v296
      %v660 = vunpack.c.l.b16 %v299
      %v661 = vunpack.c.l.b16 %v303
      %v662 = vunpack.c.l.b16 %v306
      %v663 = vpack.c.b16 %v648, %v647
      %v664 = vpack.c.b16 %v650, %v649
      %v665 = vpack.c.b16 %v652, %v651
      %v666 = vpack.c.b16 %v654, %v653
      %v667 = vpack.c.b16 %v656, %v655
      %v668 = vpack.c.b16 %v658, %v657
      %v669 = vpack.c.b16 %v660, %v659
      %v670 = vpack.c.b16 %v662, %v661
      %v672 = vsel %vm569, %v663, 0
      %v675 = vsel %vm569, %v664, 0
      %v678 = vsel %vm569, %v665, 0
      %v681 = vsel %vm569, %v666, 0
      %v684 = vsel %vm569, %v667, 0
      %v687 = vsel %vm569, %v668, 0
      %v690 = vsel %vm569, %v669, 0
      %v693 = vsel %vm569, %v670, 0
      %v696 = vsel %vm594, %v307, 0
      %698 = vmatpush.bf16.msra.mxu0 0
      %699 = vmatpush.bf16.msra.mxu0 0
      %700 = vmatpush.bf16.msra.mxu0 0
      %701 = vmatpush.bf16.msra.mxu0 0
      %702 = vmatpush.bf16.msra.mxu0 0
      %703 = vmatpush.bf16.msra.mxu0 0
      %704 = vmatpush.bf16.msra.mxu0 0
      %705 = vmatpush.bf16.msra.mxu0 %v696
      %706 = vmatmul.bf16.gmra.mxu0 %v672
      %v707 = vpop.f32.mrf.mxu0
      %v708 = vadd.f32 %v608, %v707
      %v709 = vpop.f32.mrf.mxu0
      %v710 = vadd.f32 %v610, %v709
      %711 = vmatmul.bf16.gmra.mxu0 %v675
      %v712 = vpop.f32.mrf.mxu0
      %v713 = vadd.f32 %v613, %v712
      %v714 = vpop.f32.mrf.mxu0
      %v715 = vadd.f32 %v615, %v714
      %716 = vmatmul.bf16.gmra.mxu0 %v678
      %v717 = vpop.f32.mrf.mxu0
      %v718 = vadd.f32 %v618, %v717
      %v719 = vpop.f32.mrf.mxu0
      %v720 = vadd.f32 %v620, %v719
      %721 = vmatmul.bf16.gmra.mxu0 %v681
      %v722 = vpop.f32.mrf.mxu0
      %v723 = vadd.f32 %v623, %v722
      %v724 = vpop.f32.mrf.mxu0
      %v725 = vadd.f32 %v625, %v724
      %726 = vmatmul.bf16.gmra.mxu0 %v684
      %v727 = vpop.f32.mrf.mxu0
      %v728 = vadd.f32 %v628, %v727
      %v729 = vpop.f32.mrf.mxu0
      %v730 = vadd.f32 %v630, %v729
      %731 = vmatmul.bf16.gmra.mxu0 %v687
      %v732 = vpop.f32.mrf.mxu0
      %v733 = vadd.f32 %v633, %v732
      %v734 = vpop.f32.mrf.mxu0
      %v735 = vadd.f32 %v635, %v734
      %736 = vmatmul.bf16.gmra.mxu0 %v690
      %v737 = vpop.f32.mrf.mxu0
      %v738 = vadd.f32 %v638, %v737
      %v739 = vpop.f32.mrf.mxu0
      %v740 = vadd.f32 %v640, %v739
      %741 = vmatmul.bf16.gmra.mxu0 %v693
      %v742 = vpop.f32.mrf.mxu0
      %v743 = vadd.f32 %v643, %v742
      %v744 = vpop.f32.mrf.mxu0
      %v745 = vadd.f32 %v645, %v744
      %746 = vdwg.mxu0
      %v747 = vld [vmem:[%s199] sm:$0xc]
      %v748 = vld [vmem:[%s199 + $0xc] sm:$0xc]
      %v749 = vld [vmem:[%s199 + $0x18] sm:$0xc]
      %v750 = vld [vmem:[%s199 + $0x24] sm:$0xc]
      %v751 = vld [vmem:[%s199 + $0x30] sm:$0xc]
      %v752 = vld [vmem:[%s199 + $0x3c] sm:$0xc]
      %v753 = vld [vmem:[%s199 + $0x48] sm:$0xc]
      %v754 = vld [vmem:[%s199 + $0x54] sm:$0xc]
      %vm771 = vcmask 1041408
      %vm772 = vcmask 1045508
      %vm773 = vmor %vm771, %vm772
      %v774 = vrot.slane %v747, 6
      %v775 = vrot.slane %v774, 4
      %v776 = vrot.slane %v201, 6
      %v777 = vsel %vm773, %v775, %v776
      %v778 = vrot.slane %v776, 4
      %v779 = vrot.slane %v308, 6
      %v780 = vsel %vm773, %v778, %v779
      %v781 = vrot.slane %v748, 6
      %v782 = vrot.slane %v781, 4
      %v783 = vrot.slane %v204, 6
      %v784 = vsel %vm773, %v782, %v783
      %v785 = vrot.slane %v783, 4
      %v786 = vrot.slane %v309, 6
      %v787 = vsel %vm773, %v785, %v786
      %v788 = vrot.slane %v749, 6
      %v789 = vrot.slane %v788, 4
      %v790 = vrot.slane %v207, 6
      %v791 = vsel %vm773, %v789, %v790
      %v792 = vrot.slane %v790, 4
      %v793 = vrot.slane %v310, 6
      %v794 = vsel %vm773, %v792, %v793
      %v795 = vrot.slane %v750, 6
      %v796 = vrot.slane %v795, 4
      %v797 = vrot.slane %v210, 6
      %v798 = vsel %vm773, %v796, %v797
      %v799 = vrot.slane %v797, 4
      %v800 = vrot.slane %v311, 6
      %v801 = vsel %vm773, %v799, %v800
      %v802 = vrot.slane %v751, 6
      %v803 = vrot.slane %v802, 4
      %v804 = vrot.slane %v213, 6
      %v805 = vsel %vm773, %v803, %v804
      %v806 = vrot.slane %v804, 4
      %v807 = vrot.slane %v312, 6
      %v808 = vsel %vm773, %v806, %v807
      %v809 = vrot.slane %v752, 6
      %v810 = vrot.slane %v809, 4
      %v811 = vrot.slane %v216, 6
      %v812 = vsel %vm773, %v810, %v811
      %v813 = vrot.slane %v811, 4
      %v814 = vrot.slane %v313, 6
      %v815 = vsel %vm773, %v813, %v814
      %v816 = vrot.slane %v753, 6
      %v817 = vrot.slane %v816, 4
      %v818 = vrot.slane %v219, 6
      %v819 = vsel %vm773, %v817, %v818
      %v820 = vrot.slane %v818, 4
      %v821 = vrot.slane %v314, 6
      %v822 = vsel %vm773, %v820, %v821
      %v823 = vrot.slane %v754, 6
      %v824 = vrot.slane %v823, 4
      %v825 = vrot.slane %v222, 6
      %v826 = vsel %vm773, %v824, %v825
      %v827 = vrot.slane %v825, 4
      %v828 = vrot.slane %v315, 6
      %v829 = vsel %vm773, %v827, %v828
      %s830 = scalar_lea.vmem %s1, 4
      %v831 = vld [vmem:[%s830] sm:$0x3]
      %v832 = vunpack.c.l.b16 %v777
      %v833 = vunpack.c.l.b16 %v780
      %v834 = vunpack.c.l.b16 %v784
      %v835 = vunpack.c.l.b16 %v787
      %v836 = vunpack.c.l.b16 %v791
      %v837 = vunpack.c.l.b16 %v794
      %v838 = vunpack.c.l.b16 %v798
      %v839 = vunpack.c.l.b16 %v801
      %v840 = vunpack.c.l.b16 %v805
      %v841 = vunpack.c.l.b16 %v808
      %v842 = vunpack.c.l.b16 %v812
      %v843 = vunpack.c.l.b16 %v815
      %v844 = vunpack.c.l.b16 %v819
      %v845 = vunpack.c.l.b16 %v822
      %v846 = vunpack.c.l.b16 %v826
      %v847 = vunpack.c.l.b16 %v829
      %v848 = vpack.c.b16 %v833, %v832
      %v849 = vpack.c.b16 %v835, %v834
      %v850 = vpack.c.b16 %v837, %v836
      %v851 = vpack.c.b16 %v839, %v838
      %v852 = vpack.c.b16 %v841, %v840
      %v853 = vpack.c.b16 %v843, %v842
      %v854 = vpack.c.b16 %v845, %v844
      %v855 = vpack.c.b16 %v847, %v846
      %v857 = vsel %vm569, %v848, 0
      %v860 = vsel %vm569, %v849, 0
      %v863 = vsel %vm569, %v850, 0
      %v866 = vsel %vm569, %v851, 0
      %v869 = vsel %vm569, %v852, 0
      %v872 = vsel %vm569, %v853, 0
      %v875 = vsel %vm569, %v854, 0
      %v878 = vsel %vm569, %v855, 0
      %v881 = vsel %vm594, %v831, 0
      %883 = vmatpush.bf16.msra.mxu0 0
      %884 = vmatpush.bf16.msra.mxu0 0
      %885 = vmatpush.bf16.msra.mxu0 0
      %886 = vmatpush.bf16.msra.mxu0 0
      %887 = vmatpush.bf16.msra.mxu0 0
      %888 = vmatpush.bf16.msra.mxu0 0
      %889 = vmatpush.bf16.msra.mxu0 0
      %890 = vmatpush.bf16.msra.mxu0 %v881
      %891 = vmatmul.bf16.gmra.mxu0 %v857
      %v892 = vpop.f32.mrf.mxu0
      %v893 = vadd.f32 0.0, %v892
      %v894 = vpop.f32.mrf.mxu0
      %v895 = vadd.f32 0.0, %v894
      %896 = vmatmul.bf16.gmra.mxu0 %v860
      %v897 = vpop.f32.mrf.mxu0
      %v898 = vadd.f32 0.0, %v897
      %v899 = vpop.f32.mrf.mxu0
      %v900 = vadd.f32 0.0, %v899
      %901 = vmatmul.bf16.gmra.mxu0 %v863
      %v902 = vpop.f32.mrf.mxu0
      %v903 = vadd.f32 0.0, %v902
      %v904 = vpop.f32.mrf.mxu0
      %v905 = vadd.f32 0.0, %v904
      %906 = vmatmul.bf16.gmra.mxu0 %v866
      %v907 = vpop.f32.mrf.mxu0
      %v908 = vadd.f32 0.0, %v907
      %v909 = vpop.f32.mrf.mxu0
      %v910 = vadd.f32 0.0, %v909
      %911 = vmatmul.bf16.gmra.mxu0 %v869
      %v912 = vpop.f32.mrf.mxu0
      %v913 = vadd.f32 0.0, %v912
      %v914 = vpop.f32.mrf.mxu0
      %v915 = vadd.f32 0.0, %v914
      %916 = vmatmul.bf16.gmra.mxu0 %v872
      %v917 = vpop.f32.mrf.mxu0
      %v918 = vadd.f32 0.0, %v917
      %v919 = vpop.f32.mrf.mxu0
      %v920 = vadd.f32 0.0, %v919
      %921 = vmatmul.bf16.gmra.mxu0 %v875
      %v922 = vpop.f32.mrf.mxu0
      %v923 = vadd.f32 0.0, %v922
      %v924 = vpop.f32.mrf.mxu0
      %v925 = vadd.f32 0.0, %v924
      %926 = vmatmul.bf16.gmra.mxu0 %v878
      %v927 = vpop.f32.mrf.mxu0
      %v928 = vadd.f32 0.0, %v927
      %v929 = vpop.f32.mrf.mxu0
      %v930 = vadd.f32 0.0, %v929
      %931 = vdwg.mxu0
      %v932 = vadd.f32 %v708, %v893
      %v933 = vadd.f32 %v710, %v895
      %v934 = vadd.f32 %v713, %v898
      %v935 = vadd.f32 %v715, %v900
      %v936 = vadd.f32 %v718, %v903
      %v937 = vadd.f32 %v720, %v905
      %v938 = vadd.f32 %v723, %v908
      %v939 = vadd.f32 %v725, %v910
      %v940 = vadd.f32 %v728, %v913
      %v941 = vadd.f32 %v730, %v915
      %v942 = vadd.f32 %v733, %v918
      %v943 = vadd.f32 %v735, %v920
      %v944 = vadd.f32 %v738, %v923
      %v945 = vadd.f32 %v740, %v925
      %v946 = vadd.f32 %v743, %v928
      %v947 = vadd.f32 %v745, %v930
      %s948 = sadd.s32 %s195, 3
      %s949 = smul.u32 %s948, 3
      %s950 = smul.addr %s949, 4
      %s951 = scalar_lea.vmem %s183, %s950
      %v952 = vld [vmem:[%s951] sm:$0xe]
      %v953 = vld [vmem:[%s951 + $0x4] sm:$0xf]
      %v954 = vld [vmem:[%s951 + $0x8] sm:$0x1]
      %v955 = vld [vmem:[%s951 + $0xc] sm:$0xe]
      %v956 = vld [vmem:[%s951 + $0x10] sm:$0xf]
      %v957 = vld [vmem:[%s951 + $0x14] sm:$0x1]
      %v958 = vld [vmem:[%s951 + $0x18] sm:$0xe]
      %v959 = vld [vmem:[%s951 + $0x1c] sm:$0xf]
      %v960 = vld [vmem:[%s951 + $0x20] sm:$0x1]
      %v961 = vld [vmem:[%s951 + $0x24] sm:$0xe]
      %v962 = vld [vmem:[%s951 + $0x28] sm:$0xf]
      %v963 = vld [vmem:[%s951 + $0x2c] sm:$0x1]
      %v964 = vld [vmem:[%s951 + $0x30] sm:$0xe]
      %v965 = vld [vmem:[%s951 + $0x34] sm:$0xf]
      %v966 = vld [vmem:[%s951 + $0x38] sm:$0x1]
      %v967 = vld [vmem:[%s951 + $0x3c] sm:$0xe]
      %v968 = vld [vmem:[%s951 + $0x40] sm:$0xf]
      %v969 = vld [vmem:[%s951 + $0x44] sm:$0x1]
      %v970 = vld [vmem:[%s951 + $0x48] sm:$0xe]
      %v971 = vld [vmem:[%s951 + $0x4c] sm:$0xf]
      %v972 = vld [vmem:[%s951 + $0x50] sm:$0x1]
      %v973 = vld [vmem:[%s951 + $0x54] sm:$0xe]
      %v974 = vld [vmem:[%s951 + $0x58] sm:$0xf]
      %v975 = vld [vmem:[%s951 + $0x5c] sm:$0x1]
      %v1000 = vrot.slane %v952, 5
      %v1001 = vrot.slane %v1000, 4
      %v1002 = vrot.slane %v953, 5
      %v1003 = vsel %vm250, %v1001, %v1002
      %v1004 = vrot.slane %v1002, 4
      %v1005 = vrot.slane %v954, 5
      %v1006 = vsel %vm250, %v1004, %v1005
      %v1007 = vrot.slane %v955, 5
      %v1008 = vrot.slane %v1007, 4
      %v1009 = vrot.slane %v956, 5
      %v1010 = vsel %vm250, %v1008, %v1009
      %v1011 = vrot.slane %v1009, 4
      %v1012 = vrot.slane %v957, 5
      %v1013 = vsel %vm250, %v1011, %v1012
      %v1014 = vrot.slane %v958, 5
      %v1015 = vrot.slane %v1014, 4
      %v1016 = vrot.slane %v959, 5
      %v1017 = vsel %vm250, %v1015, %v1016
      %v1018 = vrot.slane %v1016, 4
      %v1019 = vrot.slane %v960, 5
      %v1020 = vsel %vm250, %v1018, %v1019
      %v1021 = vrot.slane %v961, 5
      %v1022 = vrot.slane %v1021, 4
      %v1023 = vrot.slane %v962, 5
      %v1024 = vsel %vm250, %v1022, %v1023
      %v1025 = vrot.slane %v1023, 4
      %v1026 = vrot.slane %v963, 5
      %v1027 = vsel %vm250, %v1025, %v1026
      %v1028 = vrot.slane %v964, 5
      %v1029 = vrot.slane %v1028, 4
      %v1030 = vrot.slane %v965, 5
      %v1031 = vsel %vm250, %v1029, %v1030
      %v1032 = vrot.slane %v1030, 4
      %v1033 = vrot.slane %v966, 5
      %v1034 = vsel %vm250, %v1032, %v1033
      %v1035 = vrot.slane %v967, 5
      %v1036 = vrot.slane %v1035, 4
      %v1037 = vrot.slane %v968, 5
      %v1038 = vsel %vm250, %v1036, %v1037
      %v1039 = vrot.slane %v1037, 4
      %v1040 = vrot.slane %v969, 5
      %v1041 = vsel %vm250, %v1039, %v1040
      %v1042 = vrot.slane %v970, 5
      %v1043 = vrot.slane %v1042, 4
      %v1044 = vrot.slane %v971, 5
      %v1045 = vsel %vm250, %v1043, %v1044
      %v1046 = vrot.slane %v1044, 4
      %v1047 = vrot.slane %v972, 5
      %v1048 = vsel %vm250, %v1046, %v1047
      %v1049 = vrot.slane %v973, 5
      %v1050 = vrot.slane %v1049, 4
      %v1051 = vrot.slane %v974, 5
      %v1052 = vsel %vm250, %v1050, %v1051
      %v1053 = vrot.slane %v1051, 4
      %v1054 = vrot.slane %v975, 5
      %v1055 = vsel %vm250, %v1053, %v1054
      %s1056 = scalar_lea.vmem %s1, 6
      %v1057 = vld [vmem:[%s1056] sm:$0x3]
      %v1058 = vunpack.c.l.b16 %v1003
      %v1059 = vunpack.c.l.b16 %v1006
      %v1060 = vunpack.c.l.b16 %v1010
      %v1061 = vunpack.c.l.b16 %v1013
      %v1062 = vunpack.c.l.b16 %v1017
      %v1063 = vunpack.c.l.b16 %v1020
      %v1064 = vunpack.c.l.b16 %v1024
      %v1065 = vunpack.c.l.b16 %v1027
      %v1066 = vunpack.c.l.b16 %v1031
      %v1067 = vunpack.c.l.b16 %v1034
      %v1068 = vunpack.c.l.b16 %v1038
      %v1069 = vunpack.c.l.b16 %v1041
      %v1070 = vunpack.c.l.b16 %v1045
      %v1071 = vunpack.c.l.b16 %v1048
      %v1072 = vunpack.c.l.b16 %v1052
      %v1073 = vunpack.c.l.b16 %v1055
      %v1074 = vpack.c.b16 %v1059, %v1058
      %v1075 = vpack.c.b16 %v1061, %v1060
      %v1076 = vpack.c.b16 %v1063, %v1062
      %v1077 = vpack.c.b16 %v1065, %v1064
      %v1078 = vpack.c.b16 %v1067, %v1066
      %v1079 = vpack.c.b16 %v1069, %v1068
      %v1080 = vpack.c.b16 %v1071, %v1070
      %v1081 = vpack.c.b16 %v1073, %v1072
      %v1083 = vsel %vm569, %v1074, 0
      %v1086 = vsel %vm569, %v1075, 0
      %v1089 = vsel %vm569, %v1076, 0
      %v1092 = vsel %vm569, %v1077, 0
      %v1095 = vsel %vm569, %v1078, 0
      %v1098 = vsel %vm569, %v1079, 0
      %v1101 = vsel %vm569, %v1080, 0
      %v1104 = vsel %vm569, %v1081, 0
      %v1107 = vsel %vm594, %v1057, 0
      %1109 = vmatpush.bf16.msra.mxu0 0
      %1110 = vmatpush.bf16.msra.mxu0 0
      %1111 = vmatpush.bf16.msra.mxu0 0
      %1112 = vmatpush.bf16.msra.mxu0 0
      %1113 = vmatpush.bf16.msra.mxu0 0
      %1114 = vmatpush.bf16.msra.mxu0 0
      %1115 = vmatpush.bf16.msra.mxu0 0
      %1116 = vmatpush.bf16.msra.mxu0 %v1107
      %1117 = vmatmul.bf16.gmra.mxu0 %v1083
      %v1118 = vpop.f32.mrf.mxu0
      %v1119 = vadd.f32 0.0, %v1118
      %v1120 = vpop.f32.mrf.mxu0
      %v1121 = vadd.f32 0.0, %v1120
      %1122 = vmatmul.bf16.gmra.mxu0 %v1086
      %v1123 = vpop.f32.mrf.mxu0
      %v1124 = vadd.f32 0.0, %v1123
      %v1125 = vpop.f32.mrf.mxu0
      %v1126 = vadd.f32 0.0, %v1125
      %1127 = vmatmul.bf16.gmra.mxu0 %v1089
      %v1128 = vpop.f32.mrf.mxu0
      %v1129 = vadd.f32 0.0, %v1128
      %v1130 = vpop.f32.mrf.mxu0
      %v1131 = vadd.f32 0.0, %v1130
      %1132 = vmatmul.bf16.gmra.mxu0 %v1092
      %v1133 = vpop.f32.mrf.mxu0
      %v1134 = vadd.f32 0.0, %v1133
      %v1135 = vpop.f32.mrf.mxu0
      %v1136 = vadd.f32 0.0, %v1135
      %1137 = vmatmul.bf16.gmra.mxu0 %v1095
      %v1138 = vpop.f32.mrf.mxu0
      %v1139 = vadd.f32 0.0, %v1138
      %v1140 = vpop.f32.mrf.mxu0
      %v1141 = vadd.f32 0.0, %v1140
      %1142 = vmatmul.bf16.gmra.mxu0 %v1098
      %v1143 = vpop.f32.mrf.mxu0
      %v1144 = vadd.f32 0.0, %v1143
      %v1145 = vpop.f32.mrf.mxu0
      %v1146 = vadd.f32 0.0, %v1145
      %1147 = vmatmul.bf16.gmra.mxu0 %v1101
      %v1148 = vpop.f32.mrf.mxu0
      %v1149 = vadd.f32 0.0, %v1148
      %v1150 = vpop.f32.mrf.mxu0
      %v1151 = vadd.f32 0.0, %v1150
      %1152 = vmatmul.bf16.gmra.mxu0 %v1104
      %v1153 = vpop.f32.mrf.mxu0
      %v1154 = vadd.f32 0.0, %v1153
      %v1155 = vpop.f32.mrf.mxu0
      %v1156 = vadd.f32 0.0, %v1155
      %1157 = vdwg.mxu0
      %v1158 = vadd.f32 %v932, %v1119
      %v1159 = vadd.f32 %v933, %v1121
      %v1160 = vadd.f32 %v934, %v1124
      %v1161 = vadd.f32 %v935, %v1126
      %v1162 = vadd.f32 %v936, %v1129
      %v1163 = vadd.f32 %v937, %v1131
      %v1164 = vadd.f32 %v938, %v1134
      %v1165 = vadd.f32 %v939, %v1136
      %v1166 = vadd.f32 %v940, %v1139
      %v1167 = vadd.f32 %v941, %v1141
      %v1168 = vadd.f32 %v942, %v1144
      %v1169 = vadd.f32 %v943, %v1146
      %v1170 = vadd.f32 %v944, %v1149
      %v1171 = vadd.f32 %v945, %v1151
      %v1172 = vadd.f32 %v946, %v1154
      %v1173 = vadd.f32 %v947, %v1156
      %v1174 = vld [vmem:[%s951 + $0x8] sm:$0x3]
      %v1175 = vld [vmem:[%s951 + $0x14] sm:$0x3]
      %v1176 = vld [vmem:[%s951 + $0x20] sm:$0x3]
      %v1177 = vld [vmem:[%s951 + $0x2c] sm:$0x3]
      %v1178 = vld [vmem:[%s951 + $0x38] sm:$0x3]
      %v1179 = vld [vmem:[%s951 + $0x44] sm:$0x3]
      %v1180 = vld [vmem:[%s951 + $0x50] sm:$0x3]
      %v1181 = vld [vmem:[%s951 + $0x5c] sm:$0x3]
      %v1183 = vshrl.u32 %v952, 16
      %v1185 = vrot.slane %v1183, 5
      %v1186 = vshll.u32 %v952, 16
      %v1188 = vrot.slane %v1186, 6
      %v1189 = vor.u32 %v1185, %v1188
      %v1190 = vrot.slane %v1189, 4
      %v1192 = vshrl.u32 %v953, 16
      %v1194 = vrot.slane %v1192, 5
      %v1195 = vshll.u32 %v953, 16
      %v1197 = vrot.slane %v1195, 6
      %v1198 = vor.u32 %v1194, %v1197
      %v1199 = vsel %vm318, %v1190, %v1198
      %v1200 = vrot.slane %v1198, 4
      %v1202 = vshrl.u32 %v1174, 16
      %v1204 = vrot.slane %v1202, 5
      %v1205 = vshll.u32 %v1174, 16
      %v1207 = vrot.slane %v1205, 6
      %v1208 = vor.u32 %v1204, %v1207
      %v1209 = vsel %vm318, %v1200, %v1208
      %v1211 = vshrl.u32 %v955, 16
      %v1213 = vrot.slane %v1211, 5
      %v1214 = vshll.u32 %v955, 16
      %v1216 = vrot.slane %v1214, 6
      %v1217 = vor.u32 %v1213, %v1216
      %v1218 = vrot.slane %v1217, 4
      %v1220 = vshrl.u32 %v956, 16
      %v1222 = vrot.slane %v1220, 5
      %v1223 = vshll.u32 %v956, 16
      %v1225 = vrot.slane %v1223, 6
      %v1226 = vor.u32 %v1222, %v1225
      %v1227 = vsel %vm318, %v1218, %v1226
      %v1228 = vrot.slane %v1226, 4
      %v1230 = vshrl.u32 %v1175, 16
      %v1232 = vrot.slane %v1230, 5
      %v1233 = vshll.u32 %v1175, 16
      %v1235 = vrot.slane %v1233, 6
      %v1236 = vor.u32 %v1232, %v1235
      %v1237 = vsel %vm318, %v1228, %v1236
      %v1239 = vshrl.u32 %v958, 16
      %v1241 = vrot.slane %v1239, 5
      %v1242 = vshll.u32 %v958, 16
      %v1244 = vrot.slane %v1242, 6
      %v1245 = vor.u32 %v1241, %v1244
      %v1246 = vrot.slane %v1245, 4
      %v1248 = vshrl.u32 %v959, 16
      %v1250 = vrot.slane %v1248, 5
      %v1251 = vshll.u32 %v959, 16
      %v1253 = vrot.slane %v1251, 6
      %v1254 = vor.u32 %v1250, %v1253
      %v1255 = vsel %vm318, %v1246, %v1254
      %v1256 = vrot.slane %v1254, 4
      %v1258 = vshrl.u32 %v1176, 16
      %v1260 = vrot.slane %v1258, 5
      %v1261 = vshll.u32 %v1176, 16
      %v1263 = vrot.slane %v1261, 6
      %v1264 = vor.u32 %v1260, %v1263
      %v1265 = vsel %vm318, %v1256, %v1264
      %v1267 = vshrl.u32 %v961, 16
      %v1269 = vrot.slane %v1267, 5
      %v1270 = vshll.u32 %v961, 16
      %v1272 = vrot.slane %v1270, 6
      %v1273 = vor.u32 %v1269, %v1272
      %v1274 = vrot.slane %v1273, 4
      %v1276 = vshrl.u32 %v962, 16
      %v1278 = vrot.slane %v1276, 5
      %v1279 = vshll.u32 %v962, 16
      %v1281 = vrot.slane %v1279, 6
      %v1282 = vor.u32 %v1278, %v1281
      %v1283 = vsel %vm318, %v1274, %v1282
      %v1284 = vrot.slane %v1282, 4
      %v1286 = vshrl.u32 %v1177, 16
      %v1288 = vrot.slane %v1286, 5
      %v1289 = vshll.u32 %v1177, 16
      %v1291 = vrot.slane %v1289, 6
      %v1292 = vor.u32 %v1288, %v1291
      %v1293 = vsel %vm318, %v1284, %v1292
      %v1295 = vshrl.u32 %v964, 16
      %v1297 = vrot.slane %v1295, 5
      %v1298 = vshll.u32 %v964, 16
      %v1300 = vrot.slane %v1298, 6
      %v1301 = vor.u32 %v1297, %v1300
      %v1302 = vrot.slane %v1301, 4
      %v1304 = vshrl.u32 %v965, 16
      %v1306 = vrot.slane %v1304, 5
      %v1307 = vshll.u32 %v965, 16
      %v1309 = vrot.slane %v1307, 6
      %v1310 = vor.u32 %v1306, %v1309
      %v1311 = vsel %vm318, %v1302, %v1310
      %v1312 = vrot.slane %v1310, 4
      %v1314 = vshrl.u32 %v1178, 16
      %v1316 = vrot.slane %v1314, 5
      %v1317 = vshll.u32 %v1178, 16
      %v1319 = vrot.slane %v1317, 6
      %v1320 = vor.u32 %v1316, %v1319
      %v1321 = vsel %vm318, %v1312, %v1320
      %v1323 = vshrl.u32 %v967, 16
      %v1325 = vrot.slane %v1323, 5
      %v1326 = vshll.u32 %v967, 16
      %v1328 = vrot.slane %v1326, 6
      %v1329 = vor.u32 %v1325, %v1328
      %v1330 = vrot.slane %v1329, 4
      %v1332 = vshrl.u32 %v968, 16
      %v1334 = vrot.slane %v1332, 5
      %v1335 = vshll.u32 %v968, 16
      %v1337 = vrot.slane %v1335, 6
      %v1338 = vor.u32 %v1334, %v1337
      %v1339 = vsel %vm318, %v1330, %v1338
      %v1340 = vrot.slane %v1338, 4
      %v1342 = vshrl.u32 %v1179, 16
      %v1344 = vrot.slane %v1342, 5
      %v1345 = vshll.u32 %v1179, 16
      %v1347 = vrot.slane %v1345, 6
      %v1348 = vor.u32 %v1344, %v1347
      %v1349 = vsel %vm318, %v1340, %v1348
      %v1351 = vshrl.u32 %v970, 16
      %v1353 = vrot.slane %v1351, 5
      %v1354 = vshll.u32 %v970, 16
      %v1356 = vrot.slane %v1354, 6
      %v1357 = vor.u32 %v1353, %v1356
      %v1358 = vrot.slane %v1357, 4
      %v1360 = vshrl.u32 %v971, 16
      %v1362 = vrot.slane %v1360, 5
      %v1363 = vshll.u32 %v971, 16
      %v1365 = vrot.slane %v1363, 6
      %v1366 = vor.u32 %v1362, %v1365
      %v1367 = vsel %vm318, %v1358, %v1366
      %v1368 = vrot.slane %v1366, 4
      %v1370 = vshrl.u32 %v1180, 16
      %v1372 = vrot.slane %v1370, 5
      %v1373 = vshll.u32 %v1180, 16
      %v1375 = vrot.slane %v1373, 6
      %v1376 = vor.u32 %v1372, %v1375
      %v1377 = vsel %vm318, %v1368, %v1376
      %v1379 = vshrl.u32 %v973, 16
      %v1381 = vrot.slane %v1379, 5
      %v1382 = vshll.u32 %v973, 16
      %v1384 = vrot.slane %v1382, 6
      %v1385 = vor.u32 %v1381, %v1384
      %v1386 = vrot.slane %v1385, 4
      %v1388 = vshrl.u32 %v974, 16
      %v1390 = vrot.slane %v1388, 5
      %v1391 = vshll.u32 %v974, 16
      %v1393 = vrot.slane %v1391, 6
      %v1394 = vor.u32 %v1390, %v1393
      %v1395 = vsel %vm318, %v1386, %v1394
      %v1396 = vrot.slane %v1394, 4
      %v1398 = vshrl.u32 %v1181, 16
      %v1400 = vrot.slane %v1398, 5
      %v1401 = vshll.u32 %v1181, 16
      %v1403 = vrot.slane %v1401, 6
      %v1404 = vor.u32 %v1400, %v1403
      %v1405 = vsel %vm318, %v1396, %v1404
      %s1406 = scalar_lea.vmem %s1, 8
      %v1407 = vld [vmem:[%s1406] sm:$0x3]
      %v1408 = vunpack.c.l.b16 %v1199
      %v1409 = vunpack.c.l.b16 %v1209
      %v1410 = vunpack.c.l.b16 %v1227
      %v1411 = vunpack.c.l.b16 %v1237
      %v1412 = vunpack.c.l.b16 %v1255
      %v1413 = vunpack.c.l.b16 %v1265
      %v1414 = vunpack.c.l.b16 %v1283
      %v1415 = vunpack.c.l.b16 %v1293
      %v1416 = vunpack.c.l.b16 %v1311
      %v1417 = vunpack.c.l.b16 %v1321
      %v1418 = vunpack.c.l.b16 %v1339
      %v1419 = vunpack.c.l.b16 %v1349
      %v1420 = vunpack.c.l.b16 %v1367
      %v1421 = vunpack.c.l.b16 %v1377
      %v1422 = vunpack.c.l.b16 %v1395
      %v1423 = vunpack.c.l.b16 %v1405
      %v1424 = vpack.c.b16 %v1409, %v1408
      %v1425 = vpack.c.b16 %v1411, %v1410
      %v1426 = vpack.c.b16 %v1413, %v1412
      %v1427 = vpack.c.b16 %v1415, %v1414
      %v1428 = vpack.c.b16 %v1417, %v1416
      %v1429 = vpack.c.b16 %v1419, %v1418
      %v1430 = vpack.c.b16 %v1421, %v1420
      %v1431 = vpack.c.b16 %v1423, %v1422
      %v1433 = vsel %vm569, %v1424, 0
      %v1436 = vsel %vm569, %v1425, 0
      %v1439 = vsel %vm569, %v1426, 0
      %v1442 = vsel %vm569, %v1427, 0
      %v1445 = vsel %vm569, %v1428, 0
      %v1448 = vsel %vm569, %v1429, 0
      %v1451 = vsel %vm569, %v1430, 0
      %v1454 = vsel %vm569, %v1431, 0
      %v1457 = vsel %vm594, %v1407, 0
      %1459 = vmatpush.bf16.msra.mxu0 0
      %1460 = vmatpush.bf16.msra.mxu0 0
      %1461 = vmatpush.bf16.msra.mxu0 0
      %1462 = vmatpush.bf16.msra.mxu0 0
      %1463 = vmatpush.bf16.msra.mxu0 0
      %1464 = vmatpush.bf16.msra.mxu0 0
      %1465 = vmatpush.bf16.msra.mxu0 0
      %1466 = vmatpush.bf16.msra.mxu0 %v1457
      %1467 = vmatmul.bf16.gmra.mxu0 %v1433
      %v1468 = vpop.f32.mrf.mxu0
      %v1469 = vadd.f32 0.0, %v1468
      %v1470 = vpop.f32.mrf.mxu0
      %v1471 = vadd.f32 0.0, %v1470
      %1472 = vmatmul.bf16.gmra.mxu0 %v1436
      %v1473 = vpop.f32.mrf.mxu0
      %v1474 = vadd.f32 0.0, %v1473
      %v1475 = vpop.f32.mrf.mxu0
      %v1476 = vadd.f32 0.0, %v1475
      %1477 = vmatmul.bf16.gmra.mxu0 %v1439
      %v1478 = vpop.f32.mrf.mxu0
      %v1479 = vadd.f32 0.0, %v1478
      %v1480 = vpop.f32.mrf.mxu0
      %v1481 = vadd.f32 0.0, %v1480
      %1482 = vmatmul.bf16.gmra.mxu0 %v1442
      %v1483 = vpop.f32.mrf.mxu0
      %v1484 = vadd.f32 0.0, %v1483
      %v1485 = vpop.f32.mrf.mxu0
      %v1486 = vadd.f32 0.0, %v1485
      %1487 = vmatmul.bf16.gmra.mxu0 %v1445
      %v1488 = vpop.f32.mrf.mxu0
      %v1489 = vadd.f32 0.0, %v1488
      %v1490 = vpop.f32.mrf.mxu0
      %v1491 = vadd.f32 0.0, %v1490
      %1492 = vmatmul.bf16.gmra.mxu0 %v1448
      %v1493 = vpop.f32.mrf.mxu0
      %v1494 = vadd.f32 0.0, %v1493
      %v1495 = vpop.f32.mrf.mxu0
      %v1496 = vadd.f32 0.0, %v1495
      %1497 = vmatmul.bf16.gmra.mxu0 %v1451
      %v1498 = vpop.f32.mrf.mxu0
      %v1499 = vadd.f32 0.0, %v1498
      %v1500 = vpop.f32.mrf.mxu0
      %v1501 = vadd.f32 0.0, %v1500
      %1502 = vmatmul.bf16.gmra.mxu0 %v1454
      %v1503 = vpop.f32.mrf.mxu0
      %v1504 = vadd.f32 0.0, %v1503
      %v1505 = vpop.f32.mrf.mxu0
      %v1506 = vadd.f32 0.0, %v1505
      %1507 = vdwg.mxu0
      %v1508 = vadd.f32 %v1158, %v1469
      %v1509 = vadd.f32 %v1159, %v1471
      %v1510 = vadd.f32 %v1160, %v1474
      %v1511 = vadd.f32 %v1161, %v1476
      %v1512 = vadd.f32 %v1162, %v1479
      %v1513 = vadd.f32 %v1163, %v1481
      %v1514 = vadd.f32 %v1164, %v1484
      %v1515 = vadd.f32 %v1165, %v1486
      %v1516 = vadd.f32 %v1166, %v1489
      %v1517 = vadd.f32 %v1167, %v1491
      %v1518 = vadd.f32 %v1168, %v1494
      %v1519 = vadd.f32 %v1169, %v1496
      %v1520 = vadd.f32 %v1170, %v1499
      %v1521 = vadd.f32 %v1171, %v1501
      %v1522 = vadd.f32 %v1172, %v1504
      %v1523 = vadd.f32 %v1173, %v1506
      %v1524 = vld [vmem:[%s951] sm:$0xc]
      %v1525 = vld [vmem:[%s951 + $0xc] sm:$0xc]
      %v1526 = vld [vmem:[%s951 + $0x18] sm:$0xc]
      %v1527 = vld [vmem:[%s951 + $0x24] sm:$0xc]
      %v1528 = vld [vmem:[%s951 + $0x30] sm:$0xc]
      %v1529 = vld [vmem:[%s951 + $0x3c] sm:$0xc]
      %v1530 = vld [vmem:[%s951 + $0x48] sm:$0xc]
      %v1531 = vld [vmem:[%s951 + $0x54] sm:$0xc]
      %v1548 = vrot.slane %v1524, 6
      %v1549 = vrot.slane %v1548, 4
      %v1550 = vrot.slane %v953, 6
      %v1551 = vsel %vm773, %v1549, %v1550
      %v1552 = vrot.slane %v1550, 4
      %v1553 = vrot.slane %v1174, 6
      %v1554 = vsel %vm773, %v1552, %v1553
      %v1555 = vrot.slane %v1525, 6
      %v1556 = vrot.slane %v1555, 4
      %v1557 = vrot.slane %v956, 6
      %v1558 = vsel %vm773, %v1556, %v1557
      %v1559 = vrot.slane %v1557, 4
      %v1560 = vrot.slane %v1175, 6
      %v1561 = vsel %vm773, %v1559, %v1560
      %v1562 = vrot.slane %v1526, 6
      %v1563 = vrot.slane %v1562, 4
      %v1564 = vrot.slane %v959, 6
      %v1565 = vsel %vm773, %v1563, %v1564
      %v1566 = vrot.slane %v1564, 4
      %v1567 = vrot.slane %v1176, 6
      %v1568 = vsel %vm773, %v1566, %v1567
      %v1569 = vrot.slane %v1527, 6
      %v1570 = vrot.slane %v1569, 4
      %v1571 = vrot.slane %v962, 6
      %v1572 = vsel %vm773, %v1570, %v1571
      %v1573 = vrot.slane %v1571, 4
      %v1574 = vrot.slane %v1177, 6
      %v1575 = vsel %vm773, %v1573, %v1574
      %v1576 = vrot.slane %v1528, 6
      %v1577 = vrot.slane %v1576, 4
      %v1578 = vrot.slane %v965, 6
      %v1579 = vsel %vm773, %v1577, %v1578
      %v1580 = vrot.slane %v1578, 4
      %v1581 = vrot.slane %v1178, 6
      %v1582 = vsel %vm773, %v1580, %v1581
      %v1583 = vrot.slane %v1529, 6
      %v1584 = vrot.slane %v1583, 4
      %v1585 = vrot.slane %v968, 6
      %v1586 = vsel %vm773, %v1584, %v1585
      %v1587 = vrot.slane %v1585, 4
      %v1588 = vrot.slane %v1179, 6
      %v1589 = vsel %vm773, %v1587, %v1588
      %v1590 = vrot.slane %v1530, 6
      %v1591 = vrot.slane %v1590, 4
      %v1592 = vrot.slane %v971, 6
      %v1593 = vsel %vm773, %v1591, %v1592
      %v1594 = vrot.slane %v1592, 4
      %v1595 = vrot.slane %v1180, 6
      %v1596 = vsel %vm773, %v1594, %v1595
      %v1597 = vrot.slane %v1531, 6
      %v1598 = vrot.slane %v1597, 4
      %v1599 = vrot.slane %v974, 6
      %v1600 = vsel %vm773, %v1598, %v1599
      %v1601 = vrot.slane %v1599, 4
      %v1602 = vrot.slane %v1181, 6
      %v1603 = vsel %vm773, %v1601, %v1602
      %s1604 = scalar_lea.vmem %s1, 10
      %v1605 = vld [vmem:[%s1604] sm:$0x3]
      %v1606 = vunpack.c.l.b16 %v1551
      %v1607 = vunpack.c.l.b16 %v1554
      %v1608 = vunpack.c.l.b16 %v1558
      %v1609 = vunpack.c.l.b16 %v1561
      %v1610 = vunpack.c.l.b16 %v1565
      %v1611 = vunpack.c.l.b16 %v1568
      %v1612 = vunpack.c.l.b16 %v1572
      %v1613 = vunpack.c.l.b16 %v1575
      %v1614 = vunpack.c.l.b16 %v1579
      %v1615 = vunpack.c.l.b16 %v1582
      %v1616 = vunpack.c.l.b16 %v1586
      %v1617 = vunpack.c.l.b16 %v1589
      %v1618 = vunpack.c.l.b16 %v1593
      %v1619 = vunpack.c.l.b16 %v1596
      %v1620 = vunpack.c.l.b16 %v1600
      %v1621 = vunpack.c.l.b16 %v1603
      %v1622 = vpack.c.b16 %v1607, %v1606
      %v1623 = vpack.c.b16 %v1609, %v1608
      %v1624 = vpack.c.b16 %v1611, %v1610
      %v1625 = vpack.c.b16 %v1613, %v1612
      %v1626 = vpack.c.b16 %v1615, %v1614
      %v1627 = vpack.c.b16 %v1617, %v1616
      %v1628 = vpack.c.b16 %v1619, %v1618
      %v1629 = vpack.c.b16 %v1621, %v1620
      %v1631 = vsel %vm569, %v1622, 0
      %v1634 = vsel %vm569, %v1623, 0
      %v1637 = vsel %vm569, %v1624, 0
      %v1640 = vsel %vm569, %v1625, 0
      %v1643 = vsel %vm569, %v1626, 0
      %v1646 = vsel %vm569, %v1627, 0
      %v1649 = vsel %vm569, %v1628, 0
      %v1652 = vsel %vm569, %v1629, 0
      %v1655 = vsel %vm594, %v1605, 0
      %1657 = vmatpush.bf16.msra.mxu0 0
      %1658 = vmatpush.bf16.msra.mxu0 0
      %1659 = vmatpush.bf16.msra.mxu0 0
      %1660 = vmatpush.bf16.msra.mxu0 0
      %1661 = vmatpush.bf16.msra.mxu0 0
      %1662 = vmatpush.bf16.msra.mxu0 0
      %1663 = vmatpush.bf16.msra.mxu0 0
      %1664 = vmatpush.bf16.msra.mxu0 %v1655
      %1665 = vmatmul.bf16.gmra.mxu0 %v1631
      %v1666 = vpop.f32.mrf.mxu0
      %v1667 = vadd.f32 0.0, %v1666
      %v1668 = vpop.f32.mrf.mxu0
      %v1669 = vadd.f32 0.0, %v1668
      %1670 = vmatmul.bf16.gmra.mxu0 %v1634
      %v1671 = vpop.f32.mrf.mxu0
      %v1672 = vadd.f32 0.0, %v1671
      %v1673 = vpop.f32.mrf.mxu0
      %v1674 = vadd.f32 0.0, %v1673
      %1675 = vmatmul.bf16.gmra.mxu0 %v1637
      %v1676 = vpop.f32.mrf.mxu0
      %v1677 = vadd.f32 0.0, %v1676
      %v1678 = vpop.f32.mrf.mxu0
      %v1679 = vadd.f32 0.0, %v1678
      %1680 = vmatmul.bf16.gmra.mxu0 %v1640
      %v1681 = vpop.f32.mrf.mxu0
      %v1682 = vadd.f32 0.0, %v1681
      %v1683 = vpop.f32.mrf.mxu0
      %v1684 = vadd.f32 0.0, %v1683
      %1685 = vmatmul.bf16.gmra.mxu0 %v1643
      %v1686 = vpop.f32.mrf.mxu0
      %v1687 = vadd.f32 0.0, %v1686
      %v1688 = vpop.f32.mrf.mxu0
      %v1689 = vadd.f32 0.0, %v1688
      %1690 = vmatmul.bf16.gmra.mxu0 %v1646
      %v1691 = vpop.f32.mrf.mxu0
      %v1692 = vadd.f32 0.0, %v1691
      %v1693 = vpop.f32.mrf.mxu0
      %v1694 = vadd.f32 0.0, %v1693
      %1695 = vmatmul.bf16.gmra.mxu0 %v1649
      %v1696 = vpop.f32.mrf.mxu0
      %v1697 = vadd.f32 0.0, %v1696
      %v1698 = vpop.f32.mrf.mxu0
      %v1699 = vadd.f32 0.0, %v1698
      %1700 = vmatmul.bf16.gmra.mxu0 %v1652
      %v1701 = vpop.f32.mrf.mxu0
      %v1702 = vadd.f32 0.0, %v1701
      %v1703 = vpop.f32.mrf.mxu0
      %v1704 = vadd.f32 0.0, %v1703
      %1705 = vdwg.mxu0
      %v1706 = vadd.f32 %v1508, %v1667
      %v1707 = vadd.f32 %v1509, %v1669
      %v1708 = vadd.f32 %v1510, %v1672
      %v1709 = vadd.f32 %v1511, %v1674
      %v1710 = vadd.f32 %v1512, %v1677
      %v1711 = vadd.f32 %v1513, %v1679
      %v1712 = vadd.f32 %v1514, %v1682
      %v1713 = vadd.f32 %v1515, %v1684
      %v1714 = vadd.f32 %v1516, %v1687
      %v1715 = vadd.f32 %v1517, %v1689
      %v1716 = vadd.f32 %v1518, %v1692
      %v1717 = vadd.f32 %v1519, %v1694
      %v1718 = vadd.f32 %v1520, %v1697
      %v1719 = vadd.f32 %v1521, %v1699
      %v1720 = vadd.f32 %v1522, %v1702
      %v1721 = vadd.f32 %v1523, %v1704
      %s1722 = sadd.s32 %s195, 4
      %s1723 = smul.u32 %s1722, 3
      %s1724 = smul.addr %s1723, 4
      %s1725 = scalar_lea.vmem %s183, %s1724
      %v1726 = vld [vmem:[%s1725] sm:$0xe]
      %v1727 = vld [vmem:[%s1725 + $0x4] sm:$0xf]
      %v1728 = vld [vmem:[%s1725 + $0x8] sm:$0x1]
      %v1729 = vld [vmem:[%s1725 + $0xc] sm:$0xe]
      %v1730 = vld [vmem:[%s1725 + $0x10] sm:$0xf]
      %v1731 = vld [vmem:[%s1725 + $0x14] sm:$0x1]
      %v1732 = vld [vmem:[%s1725 + $0x18] sm:$0xe]
      %v1733 = vld [vmem:[%s1725 + $0x1c] sm:$0xf]
      %v1734 = vld [vmem:[%s1725 + $0x20] sm:$0x1]
      %v1735 = vld [vmem:[%s1725 + $0x24] sm:$0xe]
      %v1736 = vld [vmem:[%s1725 + $0x28] sm:$0xf]
      %v1737 = vld [vmem:[%s1725 + $0x2c] sm:$0x1]
      %v1738 = vld [vmem:[%s1725 + $0x30] sm:$0xe]
      %v1739 = vld [vmem:[%s1725 + $0x34] sm:$0xf]
      %v1740 = vld [vmem:[%s1725 + $0x38] sm:$0x1]
      %v1741 = vld [vmem:[%s1725 + $0x3c] sm:$0xe]
      %v1742 = vld [vmem:[%s1725 + $0x40] sm:$0xf]
      %v1743 = vld [vmem:[%s1725 + $0x44] sm:$0x1]
      %v1744 = vld [vmem:[%s1725 + $0x48] sm:$0xe]
      %v1745 = vld [vmem:[%s1725 + $0x4c] sm:$0xf]
      %v1746 = vld [vmem:[%s1725 + $0x50] sm:$0x1]
      %v1747 = vld [vmem:[%s1725 + $0x54] sm:$0xe]
      %v1748 = vld [vmem:[%s1725 + $0x58] sm:$0xf]
      %v1749 = vld [vmem:[%s1725 + $0x5c] sm:$0x1]
      %v1774 = vrot.slane %v1726, 5
      %v1775 = vrot.slane %v1774, 4
      %v1776 = vrot.slane %v1727, 5
      %v1777 = vsel %vm250, %v1775, %v1776
      %v1778 = vrot.slane %v1776, 4
      %v1779 = vrot.slane %v1728, 5
      %v1780 = vsel %vm250, %v1778, %v1779
      %v1781 = vrot.slane %v1729, 5
      %v1782 = vrot.slane %v1781, 4
      %v1783 = vrot.slane %v1730, 5
      %v1784 = vsel %vm250, %v1782, %v1783
      %v1785 = vrot.slane %v1783, 4
      %v1786 = vrot.slane %v1731, 5
      %v1787 = vsel %vm250, %v1785, %v1786
      %v1788 = vrot.slane %v1732, 5
      %v1789 = vrot.slane %v1788, 4
      %v1790 = vrot.slane %v1733, 5
      %v1791 = vsel %vm250, %v1789, %v1790
      %v1792 = vrot.slane %v1790, 4
      %v1793 = vrot.slane %v1734, 5
      %v1794 = vsel %vm250, %v1792, %v1793
      %v1795 = vrot.slane %v1735, 5
      %v1796 = vrot.slane %v1795, 4
      %v1797 = vrot.slane %v1736, 5
      %v1798 = vsel %vm250, %v1796, %v1797
      %v1799 = vrot.slane %v1797, 4
      %v1800 = vrot.slane %v1737, 5
      %v1801 = vsel %vm250, %v1799, %v1800
      %v1802 = vrot.slane %v1738, 5
      %v1803 = vrot.slane %v1802, 4
      %v1804 = vrot.slane %v1739, 5
      %v1805 = vsel %vm250, %v1803, %v1804
      %v1806 = vrot.slane %v1804, 4
      %v1807 = vrot.slane %v1740, 5
      %v1808 = vsel %vm250, %v1806, %v1807
      %v1809 = vrot.slane %v1741, 5
      %v1810 = vrot.slane %v1809, 4
      %v1811 = vrot.slane %v1742, 5
      %v1812 = vsel %vm250, %v1810, %v1811
      %v1813 = vrot.slane %v1811, 4
      %v1814 = vrot.slane %v1743, 5
      %v1815 = vsel %vm250, %v1813, %v1814
      %v1816 = vrot.slane %v1744, 5
      %v1817 = vrot.slane %v1816, 4
      %v1818 = vrot.slane %v1745, 5
      %v1819 = vsel %vm250, %v1817, %v1818
      %v1820 = vrot.slane %v1818, 4
      %v1821 = vrot.slane %v1746, 5
      %v1822 = vsel %vm250, %v1820, %v1821
      %v1823 = vrot.slane %v1747, 5
      %v1824 = vrot.slane %v1823, 4
      %v1825 = vrot.slane %v1748, 5
      %v1826 = vsel %vm250, %v1824, %v1825
      %v1827 = vrot.slane %v1825, 4
      %v1828 = vrot.slane %v1749, 5
      %v1829 = vsel %vm250, %v1827, %v1828
      %s1830 = scalar_lea.vmem %s1, 12
      %v1831 = vld [vmem:[%s1830] sm:$0x3]
      %v1832 = vunpack.c.l.b16 %v1777
      %v1833 = vunpack.c.l.b16 %v1780
      %v1834 = vunpack.c.l.b16 %v1784
      %v1835 = vunpack.c.l.b16 %v1787
      %v1836 = vunpack.c.l.b16 %v1791
      %v1837 = vunpack.c.l.b16 %v1794
      %v1838 = vunpack.c.l.b16 %v1798
      %v1839 = vunpack.c.l.b16 %v1801
      %v1840 = vunpack.c.l.b16 %v1805
      %v1841 = vunpack.c.l.b16 %v1808
      %v1842 = vunpack.c.l.b16 %v1812
      %v1843 = vunpack.c.l.b16 %v1815
      %v1844 = vunpack.c.l.b16 %v1819
      %v1845 = vunpack.c.l.b16 %v1822
      %v1846 = vunpack.c.l.b16 %v1826
      %v1847 = vunpack.c.l.b16 %v1829
      %v1848 = vpack.c.b16 %v1833, %v1832
      %v1849 = vpack.c.b16 %v1835, %v1834
      %v1850 = vpack.c.b16 %v1837, %v1836
      %v1851 = vpack.c.b16 %v1839, %v1838
      %v1852 = vpack.c.b16 %v1841, %v1840
      %v1853 = vpack.c.b16 %v1843, %v1842
      %v1854 = vpack.c.b16 %v1845, %v1844
      %v1855 = vpack.c.b16 %v1847, %v1846
      %v1857 = vsel %vm569, %v1848, 0
      %v1860 = vsel %vm569, %v1849, 0
      %v1863 = vsel %vm569, %v1850, 0
      %v1866 = vsel %vm569, %v1851, 0
      %v1869 = vsel %vm569, %v1852, 0
      %v1872 = vsel %vm569, %v1853, 0
      %v1875 = vsel %vm569, %v1854, 0
      %v1878 = vsel %vm569, %v1855, 0
      %v1881 = vsel %vm594, %v1831, 0
      %1883 = vmatpush.bf16.msra.mxu0 0
      %1884 = vmatpush.bf16.msra.mxu0 0
      %1885 = vmatpush.bf16.msra.mxu0 0
      %1886 = vmatpush.bf16.msra.mxu0 0
      %1887 = vmatpush.bf16.msra.mxu0 0
      %1888 = vmatpush.bf16.msra.mxu0 0
      %1889 = vmatpush.bf16.msra.mxu0 0
      %1890 = vmatpush.bf16.msra.mxu0 %v1881
      %1891 = vmatmul.bf16.gmra.mxu0 %v1857
      %v1892 = vpop.f32.mrf.mxu0
      %v1893 = vadd.f32 0.0, %v1892
      %v1894 = vpop.f32.mrf.mxu0
      %v1895 = vadd.f32 0.0, %v1894
      %1896 = vmatmul.bf16.gmra.mxu0 %v1860
      %v1897 = vpop.f32.mrf.mxu0
      %v1898 = vadd.f32 0.0, %v1897
      %v1899 = vpop.f32.mrf.mxu0
      %v1900 = vadd.f32 0.0, %v1899
      %1901 = vmatmul.bf16.gmra.mxu0 %v1863
      %v1902 = vpop.f32.mrf.mxu0
      %v1903 = vadd.f32 0.0, %v1902
      %v1904 = vpop.f32.mrf.mxu0
      %v1905 = vadd.f32 0.0, %v1904
      %1906 = vmatmul.bf16.gmra.mxu0 %v1866
      %v1907 = vpop.f32.mrf.mxu0
      %v1908 = vadd.f32 0.0, %v1907
      %v1909 = vpop.f32.mrf.mxu0
      %v1910 = vadd.f32 0.0, %v1909
      %1911 = vmatmul.bf16.gmra.mxu0 %v1869
      %v1912 = vpop.f32.mrf.mxu0
      %v1913 = vadd.f32 0.0, %v1912
      %v1914 = vpop.f32.mrf.mxu0
      %v1915 = vadd.f32 0.0, %v1914
      %1916 = vmatmul.bf16.gmra.mxu0 %v1872
      %v1917 = vpop.f32.mrf.mxu0
      %v1918 = vadd.f32 0.0, %v1917
      %v1919 = vpop.f32.mrf.mxu0
      %v1920 = vadd.f32 0.0, %v1919
      %1921 = vmatmul.bf16.gmra.mxu0 %v1875
      %v1922 = vpop.f32.mrf.mxu0
      %v1923 = vadd.f32 0.0, %v1922
      %v1924 = vpop.f32.mrf.mxu0
      %v1925 = vadd.f32 0.0, %v1924
      %1926 = vmatmul.bf16.gmra.mxu0 %v1878
      %v1927 = vpop.f32.mrf.mxu0
      %v1928 = vadd.f32 0.0, %v1927
      %v1929 = vpop.f32.mrf.mxu0
      %v1930 = vadd.f32 0.0, %v1929
      %1931 = vdwg.mxu0
      %v1932 = vadd.f32 %v1706, %v1893
      %v1933 = vadd.f32 %v1707, %v1895
      %v1934 = vadd.f32 %v1708, %v1898
      %v1935 = vadd.f32 %v1709, %v1900
      %v1936 = vadd.f32 %v1710, %v1903
      %v1937 = vadd.f32 %v1711, %v1905
      %v1938 = vadd.f32 %v1712, %v1908
      %v1939 = vadd.f32 %v1713, %v1910
      %v1940 = vadd.f32 %v1714, %v1913
      %v1941 = vadd.f32 %v1715, %v1915
      %v1942 = vadd.f32 %v1716, %v1918
      %v1943 = vadd.f32 %v1717, %v1920
      %v1944 = vadd.f32 %v1718, %v1923
      %v1945 = vadd.f32 %v1719, %v1925
      %v1946 = vadd.f32 %v1720, %v1928
      %v1947 = vadd.f32 %v1721, %v1930
      %v1948 = vld [vmem:[%s1725 + $0x8] sm:$0x3]
      %v1949 = vld [vmem:[%s1725 + $0x14] sm:$0x3]
      %v1950 = vld [vmem:[%s1725 + $0x20] sm:$0x3]
      %v1951 = vld [vmem:[%s1725 + $0x2c] sm:$0x3]
      %v1952 = vld [vmem:[%s1725 + $0x38] sm:$0x3]
      %v1953 = vld [vmem:[%s1725 + $0x44] sm:$0x3]
      %v1954 = vld [vmem:[%s1725 + $0x50] sm:$0x3]
      %v1955 = vld [vmem:[%s1725 + $0x5c] sm:$0x3]
      %v1957 = vshrl.u32 %v1726, 16
      %v1959 = vrot.slane %v1957, 5
      %v1960 = vshll.u32 %v1726, 16
      %v1962 = vrot.slane %v1960, 6
      %v1963 = vor.u32 %v1959, %v1962
      %v1964 = vrot.slane %v1963, 4
      %v1966 = vshrl.u32 %v1727, 16
      %v1968 = vrot.slane %v1966, 5
      %v1969 = vshll.u32 %v1727, 16
      %v1971 = vrot.slane %v1969, 6
      %v1972 = vor.u32 %v1968, %v1971
      %v1973 = vsel %vm318, %v1964, %v1972
      %v1974 = vrot.slane %v1972, 4
      %v1976 = vshrl.u32 %v1948, 16
      %v1978 = vrot.slane %v1976, 5
      %v1979 = vshll.u32 %v1948, 16
      %v1981 = vrot.slane %v1979, 6
      %v1982 = vor.u32 %v1978, %v1981
      %v1983 = vsel %vm318, %v1974, %v1982
      %v1985 = vshrl.u32 %v1729, 16
      %v1987 = vrot.slane %v1985, 5
      %v1988 = vshll.u32 %v1729, 16
      %v1990 = vrot.slane %v1988, 6
      %v1991 = vor.u32 %v1987, %v1990
      %v1992 = vrot.slane %v1991, 4
      %v1994 = vshrl.u32 %v1730, 16
      %v1996 = vrot.slane %v1994, 5
      %v1997 = vshll.u32 %v1730, 16
      %v1999 = vrot.slane %v1997, 6
      %v2000 = vor.u32 %v1996, %v1999
      %v2001 = vsel %vm318, %v1992, %v2000
      %v2002 = vrot.slane %v2000, 4
      %v2004 = vshrl.u32 %v1949, 16
      %v2006 = vrot.slane %v2004, 5
      %v2007 = vshll.u32 %v1949, 16
      %v2009 = vrot.slane %v2007, 6
      %v2010 = vor.u32 %v2006, %v2009
      %v2011 = vsel %vm318, %v2002, %v2010
      %v2013 = vshrl.u32 %v1732, 16
      %v2015 = vrot.slane %v2013, 5
      %v2016 = vshll.u32 %v1732, 16
      %v2018 = vrot.slane %v2016, 6
      %v2019 = vor.u32 %v2015, %v2018
      %v2020 = vrot.slane %v2019, 4
      %v2022 = vshrl.u32 %v1733, 16
      %v2024 = vrot.slane %v2022, 5
      %v2025 = vshll.u32 %v1733, 16
      %v2027 = vrot.slane %v2025, 6
      %v2028 = vor.u32 %v2024, %v2027
      %v2029 = vsel %vm318, %v2020, %v2028
      %v2030 = vrot.slane %v2028, 4
      %v2032 = vshrl.u32 %v1950, 16
      %v2034 = vrot.slane %v2032, 5
      %v2035 = vshll.u32 %v1950, 16
      %v2037 = vrot.slane %v2035, 6
      %v2038 = vor.u32 %v2034, %v2037
      %v2039 = vsel %vm318, %v2030, %v2038
      %v2041 = vshrl.u32 %v1735, 16
      %v2043 = vrot.slane %v2041, 5
      %v2044 = vshll.u32 %v1735, 16
      %v2046 = vrot.slane %v2044, 6
      %v2047 = vor.u32 %v2043, %v2046
      %v2048 = vrot.slane %v2047, 4
      %v2050 = vshrl.u32 %v1736, 16
      %v2052 = vrot.slane %v2050, 5
      %v2053 = vshll.u32 %v1736, 16
      %v2055 = vrot.slane %v2053, 6
      %v2056 = vor.u32 %v2052, %v2055
      %v2057 = vsel %vm318, %v2048, %v2056
      %v2058 = vrot.slane %v2056, 4
      %v2060 = vshrl.u32 %v1951, 16
      %v2062 = vrot.slane %v2060, 5
      %v2063 = vshll.u32 %v1951, 16
      %v2065 = vrot.slane %v2063, 6
      %v2066 = vor.u32 %v2062, %v2065
      %v2067 = vsel %vm318, %v2058, %v2066
      %v2069 = vshrl.u32 %v1738, 16
      %v2071 = vrot.slane %v2069, 5
      %v2072 = vshll.u32 %v1738, 16
      %v2074 = vrot.slane %v2072, 6
      %v2075 = vor.u32 %v2071, %v2074
      %v2076 = vrot.slane %v2075, 4
      %v2078 = vshrl.u32 %v1739, 16
      %v2080 = vrot.slane %v2078, 5
      %v2081 = vshll.u32 %v1739, 16
      %v2083 = vrot.slane %v2081, 6
      %v2084 = vor.u32 %v2080, %v2083
      %v2085 = vsel %vm318, %v2076, %v2084
      %v2086 = vrot.slane %v2084, 4
      %v2088 = vshrl.u32 %v1952, 16
      %v2090 = vrot.slane %v2088, 5
      %v2091 = vshll.u32 %v1952, 16
      %v2093 = vrot.slane %v2091, 6
      %v2094 = vor.u32 %v2090, %v2093
      %v2095 = vsel %vm318, %v2086, %v2094
      %v2097 = vshrl.u32 %v1741, 16
      %v2099 = vrot.slane %v2097, 5
      %v2100 = vshll.u32 %v1741, 16
      %v2102 = vrot.slane %v2100, 6
      %v2103 = vor.u32 %v2099, %v2102
      %v2104 = vrot.slane %v2103, 4
      %v2106 = vshrl.u32 %v1742, 16
      %v2108 = vrot.slane %v2106, 5
      %v2109 = vshll.u32 %v1742, 16
      %v2111 = vrot.slane %v2109, 6
      %v2112 = vor.u32 %v2108, %v2111
      %v2113 = vsel %vm318, %v2104, %v2112
      %v2114 = vrot.slane %v2112, 4
      %v2116 = vshrl.u32 %v1953, 16
      %v2118 = vrot.slane %v2116, 5
      %v2119 = vshll.u32 %v1953, 16
      %v2121 = vrot.slane %v2119, 6
      %v2122 = vor.u32 %v2118, %v2121
      %v2123 = vsel %vm318, %v2114, %v2122
      %v2125 = vshrl.u32 %v1744, 16
      %v2127 = vrot.slane %v2125, 5
      %v2128 = vshll.u32 %v1744, 16
      %v2130 = vrot.slane %v2128, 6
      %v2131 = vor.u32 %v2127, %v2130
      %v2132 = vrot.slane %v2131, 4
      %v2134 = vshrl.u32 %v1745, 16
      %v2136 = vrot.slane %v2134, 5
      %v2137 = vshll.u32 %v1745, 16
      %v2139 = vrot.slane %v2137, 6
      %v2140 = vor.u32 %v2136, %v2139
      %v2141 = vsel %vm318, %v2132, %v2140
      %v2142 = vrot.slane %v2140, 4
      %v2144 = vshrl.u32 %v1954, 16
      %v2146 = vrot.slane %v2144, 5
      %v2147 = vshll.u32 %v1954, 16
      %v2149 = vrot.slane %v2147, 6
      %v2150 = vor.u32 %v2146, %v2149
      %v2151 = vsel %vm318, %v2142, %v2150
      %v2153 = vshrl.u32 %v1747, 16
      %v2155 = vrot.slane %v2153, 5
      %v2156 = vshll.u32 %v1747, 16
      %v2158 = vrot.slane %v2156, 6
      %v2159 = vor.u32 %v2155, %v2158
      %v2160 = vrot.slane %v2159, 4
      %v2162 = vshrl.u32 %v1748, 16
      %v2164 = vrot.slane %v2162, 5
      %v2165 = vshll.u32 %v1748, 16
      %v2167 = vrot.slane %v2165, 6
      %v2168 = vor.u32 %v2164, %v2167
      %v2169 = vsel %vm318, %v2160, %v2168
      %v2170 = vrot.slane %v2168, 4
      %v2172 = vshrl.u32 %v1955, 16
      %v2174 = vrot.slane %v2172, 5
      %v2175 = vshll.u32 %v1955, 16
      %v2177 = vrot.slane %v2175, 6
      %v2178 = vor.u32 %v2174, %v2177
      %v2179 = vsel %vm318, %v2170, %v2178
      %s2180 = scalar_lea.vmem %s1, 14
      %v2181 = vld [vmem:[%s2180] sm:$0x3]
      %v2182 = vunpack.c.l.b16 %v1973
      %v2183 = vunpack.c.l.b16 %v1983
      %v2184 = vunpack.c.l.b16 %v2001
      %v2185 = vunpack.c.l.b16 %v2011
      %v2186 = vunpack.c.l.b16 %v2029
      %v2187 = vunpack.c.l.b16 %v2039
      %v2188 = vunpack.c.l.b16 %v2057
      %v2189 = vunpack.c.l.b16 %v2067
      %v2190 = vunpack.c.l.b16 %v2085
      %v2191 = vunpack.c.l.b16 %v2095
      %v2192 = vunpack.c.l.b16 %v2113
      %v2193 = vunpack.c.l.b16 %v2123
      %v2194 = vunpack.c.l.b16 %v2141
      %v2195 = vunpack.c.l.b16 %v2151
      %v2196 = vunpack.c.l.b16 %v2169
      %v2197 = vunpack.c.l.b16 %v2179
      %v2198 = vpack.c.b16 %v2183, %v2182
      %v2199 = vpack.c.b16 %v2185, %v2184
      %v2200 = vpack.c.b16 %v2187, %v2186
      %v2201 = vpack.c.b16 %v2189, %v2188
      %v2202 = vpack.c.b16 %v2191, %v2190
      %v2203 = vpack.c.b16 %v2193, %v2192
      %v2204 = vpack.c.b16 %v2195, %v2194
      %v2205 = vpack.c.b16 %v2197, %v2196
      %v2207 = vsel %vm569, %v2198, 0
      %v2210 = vsel %vm569, %v2199, 0
      %v2213 = vsel %vm569, %v2200, 0
      %v2216 = vsel %vm569, %v2201, 0
      %v2219 = vsel %vm569, %v2202, 0
      %v2222 = vsel %vm569, %v2203, 0
      %v2225 = vsel %vm569, %v2204, 0
      %v2228 = vsel %vm569, %v2205, 0
      %v2231 = vsel %vm594, %v2181, 0
      %2233 = vmatpush.bf16.msra.mxu0 0
      %2234 = vmatpush.bf16.msra.mxu0 0
      %2235 = vmatpush.bf16.msra.mxu0 0
      %2236 = vmatpush.bf16.msra.mxu0 0
      %2237 = vmatpush.bf16.msra.mxu0 0
      %2238 = vmatpush.bf16.msra.mxu0 0
      %2239 = vmatpush.bf16.msra.mxu0 0
      %2240 = vmatpush.bf16.msra.mxu0 %v2231
      %2241 = vmatmul.bf16.gmra.mxu0 %v2207
      %v2242 = vpop.f32.mrf.mxu0
      %v2243 = vadd.f32 0.0, %v2242
      %v2244 = vpop.f32.mrf.mxu0
      %v2245 = vadd.f32 0.0, %v2244
      %2246 = vmatmul.bf16.gmra.mxu0 %v2210
      %v2247 = vpop.f32.mrf.mxu0
      %v2248 = vadd.f32 0.0, %v2247
      %v2249 = vpop.f32.mrf.mxu0
      %v2250 = vadd.f32 0.0, %v2249
      %2251 = vmatmul.bf16.gmra.mxu0 %v2213
      %v2252 = vpop.f32.mrf.mxu0
      %v2253 = vadd.f32 0.0, %v2252
      %v2254 = vpop.f32.mrf.mxu0
      %v2255 = vadd.f32 0.0, %v2254
      %2256 = vmatmul.bf16.gmra.mxu0 %v2216
      %v2257 = vpop.f32.mrf.mxu0
      %v2258 = vadd.f32 0.0, %v2257
      %v2259 = vpop.f32.mrf.mxu0
      %v2260 = vadd.f32 0.0, %v2259
      %2261 = vmatmul.bf16.gmra.mxu0 %v2219
      %v2262 = vpop.f32.mrf.mxu0
      %v2263 = vadd.f32 0.0, %v2262
      %v2264 = vpop.f32.mrf.mxu0
      %v2265 = vadd.f32 0.0, %v2264
      %2266 = vmatmul.bf16.gmra.mxu0 %v2222
      %v2267 = vpop.f32.mrf.mxu0
      %v2268 = vadd.f32 0.0, %v2267
      %v2269 = vpop.f32.mrf.mxu0
      %v2270 = vadd.f32 0.0, %v2269
      %2271 = vmatmul.bf16.gmra.mxu0 %v2225
      %v2272 = vpop.f32.mrf.mxu0
      %v2273 = vadd.f32 0.0, %v2272
      %v2274 = vpop.f32.mrf.mxu0
      %v2275 = vadd.f32 0.0, %v2274
      %2276 = vmatmul.bf16.gmra.mxu0 %v2228
      %v2277 = vpop.f32.mrf.mxu0
      %v2278 = vadd.f32 0.0, %v2277
      %v2279 = vpop.f32.mrf.mxu0
      %v2280 = vadd.f32 0.0, %v2279
      %2281 = vdwg.mxu0
      %v2282 = vadd.f32 %v1932, %v2243
      %v2283 = vadd.f32 %v1933, %v2245
      %v2284 = vadd.f32 %v1934, %v2248
      %v2285 = vadd.f32 %v1935, %v2250
      %v2286 = vadd.f32 %v1936, %v2253
      %v2287 = vadd.f32 %v1937, %v2255
      %v2288 = vadd.f32 %v1938, %v2258
      %v2289 = vadd.f32 %v1939, %v2260
      %v2290 = vadd.f32 %v1940, %v2263
      %v2291 = vadd.f32 %v1941, %v2265
      %v2292 = vadd.f32 %v1942, %v2268
      %v2293 = vadd.f32 %v1943, %v2270
      %v2294 = vadd.f32 %v1944, %v2273
      %v2295 = vadd.f32 %v1945, %v2275
      %v2296 = vadd.f32 %v1946, %v2278
      %v2297 = vadd.f32 %v1947, %v2280
      %v2298 = vld [vmem:[%s1725] sm:$0xc]
      %v2299 = vld [vmem:[%s1725 + $0xc] sm:$0xc]
      %v2300 = vld [vmem:[%s1725 + $0x18] sm:$0xc]
      %v2301 = vld [vmem:[%s1725 + $0x24] sm:$0xc]
      %v2302 = vld [vmem:[%s1725 + $0x30] sm:$0xc]
      %v2303 = vld [vmem:[%s1725 + $0x3c] sm:$0xc]
      %v2304 = vld [vmem:[%s1725 + $0x48] sm:$0xc]
      %v2305 = vld [vmem:[%s1725 + $0x54] sm:$0xc]
      %v2322 = vrot.slane %v2298, 6
      %v2323 = vrot.slane %v2322, 4
      %v2324 = vrot.slane %v1727, 6
      %v2325 = vsel %vm773, %v2323, %v2324
      %v2326 = vrot.slane %v2324, 4
      %v2327 = vrot.slane %v1948, 6
      %v2328 = vsel %vm773, %v2326, %v2327
      %v2329 = vrot.slane %v2299, 6
      %v2330 = vrot.slane %v2329, 4
      %v2331 = vrot.slane %v1730, 6
      %v2332 = vsel %vm773, %v2330, %v2331
      %v2333 = vrot.slane %v2331, 4
      %v2334 = vrot.slane %v1949, 6
      %v2335 = vsel %vm773, %v2333, %v2334
      %v2336 = vrot.slane %v2300, 6
      %v2337 = vrot.slane %v2336, 4
      %v2338 = vrot.slane %v1733, 6
      %v2339 = vsel %vm773, %v2337, %v2338
      %v2340 = vrot.slane %v2338, 4
      %v2341 = vrot.slane %v1950, 6
      %v2342 = vsel %vm773, %v2340, %v2341
      %v2343 = vrot.slane %v2301, 6
      %v2344 = vrot.slane %v2343, 4
      %v2345 = vrot.slane %v1736, 6
      %v2346 = vsel %vm773, %v2344, %v2345
      %v2347 = vrot.slane %v2345, 4
      %v2348 = vrot.slane %v1951, 6
      %v2349 = vsel %vm773, %v2347, %v2348
      %v2350 = vrot.slane %v2302, 6
      %v2351 = vrot.slane %v2350, 4
      %v2352 = vrot.slane %v1739, 6
      %v2353 = vsel %vm773, %v2351, %v2352
      %v2354 = vrot.slane %v2352, 4
      %v2355 = vrot.slane %v1952, 6
      %v2356 = vsel %vm773, %v2354, %v2355
      %v2357 = vrot.slane %v2303, 6
      %v2358 = vrot.slane %v2357, 4
      %v2359 = vrot.slane %v1742, 6
      %v2360 = vsel %vm773, %v2358, %v2359
      %v2361 = vrot.slane %v2359, 4
      %v2362 = vrot.slane %v1953, 6
      %v2363 = vsel %vm773, %v2361, %v2362
      %v2364 = vrot.slane %v2304, 6
      %v2365 = vrot.slane %v2364, 4
      %v2366 = vrot.slane %v1745, 6
      %v2367 = vsel %vm773, %v2365, %v2366
      %v2368 = vrot.slane %v2366, 4
      %v2369 = vrot.slane %v1954, 6
      %v2370 = vsel %vm773, %v2368, %v2369
      %v2371 = vrot.slane %v2305, 6
      %v2372 = vrot.slane %v2371, 4
      %v2373 = vrot.slane %v1748, 6
      %v2374 = vsel %vm773, %v2372, %v2373
      %v2375 = vrot.slane %v2373, 4
      %v2376 = vrot.slane %v1955, 6
      %v2377 = vsel %vm773, %v2375, %v2376
      %s2378 = scalar_lea.vmem %s1, 16
      %v2379 = vld [vmem:[%s2378] sm:$0x3]
      %v2380 = vunpack.c.l.b16 %v2325
      %v2381 = vunpack.c.l.b16 %v2328
      %v2382 = vunpack.c.l.b16 %v2332
      %v2383 = vunpack.c.l.b16 %v2335
      %v2384 = vunpack.c.l.b16 %v2339
      %v2385 = vunpack.c.l.b16 %v2342
      %v2386 = vunpack.c.l.b16 %v2346
      %v2387 = vunpack.c.l.b16 %v2349
      %v2388 = vunpack.c.l.b16 %v2353
      %v2389 = vunpack.c.l.b16 %v2356
      %v2390 = vunpack.c.l.b16 %v2360
      %v2391 = vunpack.c.l.b16 %v2363
      %v2392 = vunpack.c.l.b16 %v2367
      %v2393 = vunpack.c.l.b16 %v2370
      %v2394 = vunpack.c.l.b16 %v2374
      %v2395 = vunpack.c.l.b16 %v2377
      %v2396 = vpack.c.b16 %v2381, %v2380
      %v2397 = vpack.c.b16 %v2383, %v2382
      %v2398 = vpack.c.b16 %v2385, %v2384
      %v2399 = vpack.c.b16 %v2387, %v2386
      %v2400 = vpack.c.b16 %v2389, %v2388
      %v2401 = vpack.c.b16 %v2391, %v2390
      %v2402 = vpack.c.b16 %v2393, %v2392
      %v2403 = vpack.c.b16 %v2395, %v2394
      %v2405 = vsel %vm569, %v2396, 0
      %v2408 = vsel %vm569, %v2397, 0
      %v2411 = vsel %vm569, %v2398, 0
      %v2414 = vsel %vm569, %v2399, 0
      %v2417 = vsel %vm569, %v2400, 0
      %v2420 = vsel %vm569, %v2401, 0
      %v2423 = vsel %vm569, %v2402, 0
      %v2426 = vsel %vm569, %v2403, 0
      %v2429 = vsel %vm594, %v2379, 0
      %2431 = vmatpush.bf16.msra.mxu0 0
      %2432 = vmatpush.bf16.msra.mxu0 0
      %2433 = vmatpush.bf16.msra.mxu0 0
      %2434 = vmatpush.bf16.msra.mxu0 0
      %2435 = vmatpush.bf16.msra.mxu0 0
      %2436 = vmatpush.bf16.msra.mxu0 0
      %2437 = vmatpush.bf16.msra.mxu0 0
      %2438 = vmatpush.bf16.msra.mxu0 %v2429
      %2439 = vmatmul.bf16.gmra.mxu0 %v2405
      %v2440 = vpop.f32.mrf.mxu0
      %v2441 = vadd.f32 0.0, %v2440
      %v2442 = vpop.f32.mrf.mxu0
      %v2443 = vadd.f32 0.0, %v2442
      %2444 = vmatmul.bf16.gmra.mxu0 %v2408
      %v2445 = vpop.f32.mrf.mxu0
      %v2446 = vadd.f32 0.0, %v2445
      %v2447 = vpop.f32.mrf.mxu0
      %v2448 = vadd.f32 0.0, %v2447
      %2449 = vmatmul.bf16.gmra.mxu0 %v2411
      %v2450 = vpop.f32.mrf.mxu0
      %v2451 = vadd.f32 0.0, %v2450
      %v2452 = vpop.f32.mrf.mxu0
      %v2453 = vadd.f32 0.0, %v2452
      %2454 = vmatmul.bf16.gmra.mxu0 %v2414
      %v2455 = vpop.f32.mrf.mxu0
      %v2456 = vadd.f32 0.0, %v2455
      %v2457 = vpop.f32.mrf.mxu0
      %v2458 = vadd.f32 0.0, %v2457
      %2459 = vmatmul.bf16.gmra.mxu0 %v2417
      %v2460 = vpop.f32.mrf.mxu0
      %v2461 = vadd.f32 0.0, %v2460
      %v2462 = vpop.f32.mrf.mxu0
      %v2463 = vadd.f32 0.0, %v2462
      %2464 = vmatmul.bf16.gmra.mxu0 %v2420
      %v2465 = vpop.f32.mrf.mxu0
      %v2466 = vadd.f32 0.0, %v2465
      %v2467 = vpop.f32.mrf.mxu0
      %v2468 = vadd.f32 0.0, %v2467
      %2469 = vmatmul.bf16.gmra.mxu0 %v2423
      %v2470 = vpop.f32.mrf.mxu0
      %v2471 = vadd.f32 0.0, %v2470
      %v2472 = vpop.f32.mrf.mxu0
      %v2473 = vadd.f32 0.0, %v2472
      %2474 = vmatmul.bf16.gmra.mxu0 %v2426
      %v2475 = vpop.f32.mrf.mxu0
      %v2476 = vadd.f32 0.0, %v2475
      %v2477 = vpop.f32.mrf.mxu0
      %v2478 = vadd.f32 0.0, %v2477
      %2479 = vdwg.mxu0
      %v2480 = vadd.f32 %v2282, %v2441
      %v2481 = vadd.f32 %v2283, %v2443
      %v2482 = vadd.f32 %v2284, %v2446
      %v2483 = vadd.f32 %v2285, %v2448
      %v2484 = vadd.f32 %v2286, %v2451
      %v2485 = vadd.f32 %v2287, %v2453
      %v2486 = vadd.f32 %v2288, %v2456
      %v2487 = vadd.f32 %v2289, %v2458
      %v2488 = vadd.f32 %v2290, %v2461
      %v2489 = vadd.f32 %v2291, %v2463
      %v2490 = vadd.f32 %v2292, %v2466
      %v2491 = vadd.f32 %v2293, %v2468
      %v2492 = vadd.f32 %v2294, %v2471
      %v2493 = vadd.f32 %v2295, %v2473
      %v2494 = vadd.f32 %v2296, %v2476
      %v2495 = vadd.f32 %v2297, %v2478
      %v2496 = vld [vmem:[%s2] sm:$0x1]
      %v2498 = vperm.slane %v2496, 0
      %v2500 = vadd.f32 %v2480, %v2498
      %v2501 = vadd.f32 %v2481, %v2498
      %v2502 = vadd.f32 %v2482, %v2498
      %v2503 = vadd.f32 %v2483, %v2498
      %v2504 = vadd.f32 %v2484, %v2498
      %v2505 = vadd.f32 %v2485, %v2498
      %v2506 = vadd.f32 %v2486, %v2498
      %v2507 = vadd.f32 %v2487, %v2498
      %v2508 = vadd.f32 %v2488, %v2498
      %v2509 = vadd.f32 %v2489, %v2498
      %v2510 = vadd.f32 %v2490, %v2498
      %v2511 = vadd.f32 %v2491, %v2498
      %v2512 = vadd.f32 %v2492, %v2498
      %v2513 = vadd.f32 %v2493, %v2498
      %v2514 = vadd.f32 %v2494, %v2498
      %v2515 = vadd.f32 %v2495, %v2498
      %v2516 = vmax.f32 %v2500, 0.0
      %v2517 = vmax.f32 %v2501, 0.0
      %v2518 = vmax.f32 %v2502, 0.0
      %v2519 = vmax.f32 %v2503, 0.0
      %v2520 = vmax.f32 %v2504, 0.0
      %v2521 = vmax.f32 %v2505, 0.0
      %v2522 = vmax.f32 %v2506, 0.0
      %v2523 = vmax.f32 %v2507, 0.0
      %v2524 = vmax.f32 %v2508, 0.0
      %v2525 = vmax.f32 %v2509, 0.0
      %v2526 = vmax.f32 %v2510, 0.0
      %v2527 = vmax.f32 %v2511, 0.0
      %v2528 = vmax.f32 %v2512, 0.0
      %v2529 = vmax.f32 %v2513, 0.0
      %v2530 = vmax.f32 %v2514, 0.0
      %v2531 = vmax.f32 %v2515, 0.0
      %v2532 = vpack.c.bf16 %v2516, %v2516
      %v2533 = vpack.c.bf16 %v2517, %v2517
      %v2534 = vpack.c.bf16 %v2518, %v2518
      %v2535 = vpack.c.bf16 %v2519, %v2519
      %v2536 = vpack.c.bf16 %v2520, %v2520
      %v2537 = vpack.c.bf16 %v2521, %v2521
      %v2538 = vpack.c.bf16 %v2522, %v2522
      %v2539 = vpack.c.bf16 %v2523, %v2523
      %v2540 = vpack.c.bf16 %v2524, %v2524
      %v2541 = vpack.c.bf16 %v2525, %v2525
      %v2542 = vpack.c.bf16 %v2526, %v2526
      %v2543 = vpack.c.bf16 %v2527, %v2527
      %v2544 = vpack.c.bf16 %v2528, %v2528
      %v2545 = vpack.c.bf16 %v2529, %v2529
      %v2546 = vpack.c.bf16 %v2530, %v2530
      %v2547 = vpack.c.bf16 %v2531, %v2531
      %vm2548 = vcmask 60416
      %2549 = vst.msk [vmem:[%s192] sm:$0xf] %vm2548, %v2532
      %2550 = vst.msk [vmem:[%s192 + $0x4] sm:$0xf] %vm2548, %v2533
      %2551 = vst.msk [vmem:[%s192 + $0x8] sm:$0xf] %vm2548, %v2534
      %2552 = vst.msk [vmem:[%s192 + $0xc] sm:$0xf] %vm2548, %v2535
      %2553 = vst.msk [vmem:[%s192 + $0x10] sm:$0xf] %vm2548, %v2536
      %2554 = vst.msk [vmem:[%s192 + $0x14] sm:$0xf] %vm2548, %v2537
      %2555 = vst.msk [vmem:[%s192 + $0x18] sm:$0xf] %vm2548, %v2538
      %2556 = vst.msk [vmem:[%s192 + $0x1c] sm:$0xf] %vm2548, %v2539
      %2557 = vst.msk [vmem:[%s192 + $0x20] sm:$0xf] %vm2548, %v2540
      %2558 = vst.msk [vmem:[%s192 + $0x24] sm:$0xf] %vm2548, %v2541
      %2559 = vst.msk [vmem:[%s192 + $0x28] sm:$0xf] %vm2548, %v2542
      %2560 = vst.msk [vmem:[%s192 + $0x2c] sm:$0xf] %vm2548, %v2543
      %2561 = vst.msk [vmem:[%s192 + $0x30] sm:$0xf] %vm2548, %v2544
      %2562 = vst.msk [vmem:[%s192 + $0x34] sm:$0xf] %vm2548, %v2545
      %2563 = vst.msk [vmem:[%s192 + $0x38] sm:$0xf] %vm2548, %v2546
      %2564 = vst.msk [vmem:[%s192 + $0x3c] sm:$0xf] %vm2548, %v2547
      %s2565 = smul.u32 16, %s19
      %p2566 = scmp.lt.s32.totalorder %s18, 1
      %s2567 = scalar_select %p2566, %s18, 1
      %p2568 = scmp.lt.s32.totalorder %s2565, 31
      %s2569 = scalar_select %p2568, %s2565, 31
      %s2570 = smul.addr %s2567, 32
      %s2571 = sadd.s32 %s2569, %s2570
      %s2572 = smul.addr %s2571, 4
      %s2573 = scalar_lea.vmem %s3, %s2572
      // Predicated region
      $region33: #{aspp_forward.5} parent=31 // pred_check
        %p2574 = pneg %p114
      $region34: #{aspp_forward.5} parent=31 // pred_check_branch
        %2576 = sbr.rel (%p2574) target = $region36
      $region35: #{aspp_forward.5} parent=31 // pred_region
        %s2577 = smul.u32 16, %s19
      $region36: #{aspp_forward.5} parent=31 // pred_fallthru
        _
    $region32: #{aspp_forward.5} parent=5 // pred_fallthru
      _
    %p2578 = scmp.le.s32.totalorder 2, %s9
    // Predicated region
    $region37: #{aspp_forward.5} parent=5 // pred_check
      %p2579 = pneg %p2578
    $region38: #{aspp_forward.5} parent=5 // pred_check_branch
      %2581 = sbr.rel (%p2579) target = $region40
    $region39: #{aspp_forward.5} parent=5 // pred_region
      %s2582 = ssub.s32 %s9, 2
      // Predicated region
      $region41: #{aspp_forward.5} parent=39 // pred_check
        %p2583 = pneg %p120
      $region42: #{aspp_forward.5} parent=39 // pred_check_branch
        %2585 = sbr.rel (%p2583) target = $region44
      $region43: #{aspp_forward.5} parent=39 // pred_region
        %s2586 = smul.u32 16, %s21
        %p2587 = scmp.lt.s32.totalorder %s20, 1
        %s2588 = scalar_select %p2587, %s20, 1
        %p2589 = scmp.lt.s32.totalorder %s2586, 31
        %s2590 = scalar_select %p2589, %s2586, 31
        %s2591 = smul.addr %s2588, 32
        %s2592 = sadd.s32 %s2590, %s2591
        %s2593 = smul.addr %s2592, 4
        %s2594 = scalar_lea.vmem %s3, %s2593
      $region44: #{aspp_forward.5} parent=39 // pred_fallthru
        _
    $region40: #{aspp_forward.5} parent=5 // pred_fallthru
      _
  $region6: #{aspp_forward.5} parent=0 // loop_footer
    %s13 = sadd.s32 1, %s9
  $region7: #{aspp_forward.5} parent=0 // loop_footer_branch
    %8 = sbr.rel target = $region3
  $region8: #{aspp_forward.5} parent=0 // loop_exit
    _

// kernel: aspp_forward.6
$region0: #{aspp_forward.6}
  #allocation0 [shape = 'u32[]', space=smem, size = 0x4, offset = 0x4, fixed_abs, tag = 'smem constant byte address 0x4 - core index']
  #allocation1 [shape = 'u32[72,128]{1,0:T(1,128)}', space=vmem, size = 0x9000, scoped, tag = 'internal scratch']
  %s0 = inlined_call_operand.vmem [shape: bf16[2,22,22,4], index: 0, kind: input, shape index: {}]
  %s1 = inlined_call_operand.vmem [shape: bf16[3,3,4,8], index: 1, kind: input, shape index: {}]
  %s2 = inlined_call_operand.vmem [shape: f32[1,8], index: 2, kind: input, shape index: {}]
  %s3 = inlined_call_operand.vmem [shape: bf16[2,256,8], index: 3, kind: output, shape index: {}]
  %s4 = sld [smem:[#allocation0]]
  $region45: #{aspp_forward.6} parent=0
    _
  %s6 = ssub.s32 1, %s4
  %s7 = scalar_select 0, %s6, %s4
  loop: start=0, step=1, limit=6
  $region2: #{aspp_forward.6} parent=0 // loop_pre_header
    _
  $region3: #{aspp_forward.6} parent=0 // loop_header
    %s9 = sphi 0, %s13
    %p10 = scmp.ge.s32.totalorder %s9, 6
    %s16 = sphi 0, %s28
    %s17 = sphi 0, %s24
    %s18 = sphi 0, %s16
    %s19 = sphi 0, %s17
    %s20 = sphi 0, %s18
    %s21 = sphi 0, %s19
    %s31 = sphi 0, %s33
    %s34 = sphi 0, %s31
    %s35 = sphi 0, %s34
    %s51 = sphi 0, %s35
    %s55 = sphi 0, %s55
    %s57 = sphi 0, %s55
    %s58 = sphi 0, %s57
    %s72 = sphi 0, %s58
    %s76 = sphi 0, %s76
    %s78 = sphi 0, %s76
    %s79 = sphi 0, %s78
    %s93 = sphi 0, %s79
    %s101 = sphi 0, %s103
    %s104 = sphi 0, %s101
    %s105 = sphi 0, %s104
    %s121 = sphi 0, %s105
  $region4: #{aspp_forward.6} parent=0 // loop_header_branch
    %12 = sbr.rel (%p10) target = $region8
  $region5: #{aspp_forward.6} parent=0 // loop_body
    %s14 = ssub.s32 %s9, 1
    %s15 = ssub.s32 %s9, 2
    %s22 = sadd.s32 1, %s17
    %p23 = scmp.ge.s32.totalorder %s22, 2
    %s24 = scalar_select %p23, 0, %s22
    %s25 = sadd.s32 1, %s16
    %s26 = scalar_select %p23, %s25, %s16
    %p27 = scmp.ge.s32.totalorder %s26, 2
    %s28 = scalar_select %p27, 0, %s26
    %s29 = ssub.s32 %s16, %s28
    %p30 = scmp.eq.s32.totalorder %s29, 0
    %s32 = sadd.s32 %s31, 1
    %s33 = scalar_select %p30, %s31, %s32
    %p36 = pneg %p30
    %p37 = scmp.eq.s32.totalorder %s9, 3
    %p38 = por %p36, %p37
    %p39 = scmp.ne.s32.totalorder %s31, %s34
    %p40 = scmp.eq.s32.totalorder %s9, 0
    %p41 = por %p39, %p40
    %p42 = scmp.ne.s32.totalorder %s31, %s34
    %p43 = scmp.eq.s32.totalorder %s14, 3
    %p44 = por %p42, %p43
    %p45 = scmp.ne.s32.totalorder %s34, %s35
    %p46 = scmp.eq.s32.totalorder %s14, 0
    %p47 = por %p45, %p46
    %p48 = scmp.ne.s32.totalorder %s34, %s35
    %p49 = scmp.eq.s32.totalorder %s15, 3
    %p50 = por %p48, %p49
    %p52 = scmp.ne.s32.totalorder %s35, %s51
    %p53 = scmp.eq.s32.totalorder %s15, 0
    %p54 = por %p52, %p53
    %s56 = sadd.s32 %s55, 1
    %p59 = scmp.eq.s32.totalorder %s9, 3
    %p60 = scmp.ne.s32.totalorder %s55, %s57
    %p61 = scmp.eq.s32.totalorder %s9, 0
    %p62 = por %p60, %p61
    %p63 = scmp.ne.s32.totalorder %s55, %s57
    %p64 = scmp.eq.s32.totalorder %s14, 3
    %p65 = por %p63, %p64
    %p66 = scmp.ne.s32.totalorder %s57, %s58
    %p67 = scmp.eq.s32.totalorder %s14, 0
    %p68 = por %p66, %p67
    %p69 = scmp.ne.s32.totalorder %s57, %s58
    %p70 = scmp.eq.s32.totalorder %s15, 3
    %p71 = por %p69, %p70
    %p73 = scmp.ne.s32.totalorder %s58, %s72
    %p74 = scmp.eq.s32.totalorder %s15, 0
    %p75 = por %p73, %p74
    %s77 = sadd.s32 %s76, 1
    %p80 = scmp.eq.s32.totalorder %s9, 3
    %p81 = scmp.ne.s32.totalorder %s76, %s78
    %p82 = scmp.eq.s32.totalorder %s9, 0
    %p83 = por %p81, %p82
    %p84 = scmp.ne.s32.totalorder %s76, %s78
    %p85 = scmp.eq.s32.totalorder %s14, 3
    %p86 = por %p84, %p85
    %p87 = scmp.ne.s32.totalorder %s78, %s79
    %p88 = scmp.eq.s32.totalorder %s14, 0
    %p89 = por %p87, %p88
    %p90 = scmp.ne.s32.totalorder %s78, %s79
    %p91 = scmp.eq.s32.totalorder %s15, 3
    %p92 = por %p90, %p91
    %p94 = scmp.ne.s32.totalorder %s79, %s93
    %p95 = scmp.eq.s32.totalorder %s15, 0
    %p96 = por %p94, %p95
    %s97 = ssub.s32 %s16, %s28
    %s98 = ssub.s32 %s17, %s24
    %s99 = sor.u32 %s97, %s98
    %p100 = scmp.eq.s32.totalorder %s99, 0
    %s102 = sadd.s32 %s101, 1
    %s103 = scalar_select %p100, %s101, %s102
    %p106 = pneg %p100
    %p107 = scmp.eq.s32.totalorder %s9, 3
    %p108 = por %p106, %p107
    %p109 = scmp.ne.s32.totalorder %s101, %s104
    %p110 = scmp.eq.s32.totalorder %s9, 0
    %p111 = por %p109, %p110
    %p112 = scmp.ne.s32.totalorder %s101, %s104
    %p113 = scmp.eq.s32.totalorder %s14, 3
    %p114 = por %p112, %p113
    %p115 = scmp.ne.s32.totalorder %s104, %s105
    %p116 = scmp.eq.s32.totalorder %s14, 0
    %p117 = por %p115, %p116
    %p118 = scmp.ne.s32.totalorder %s104, %s105
    %p119 = scmp.eq.s32.totalorder %s15, 3
    %p120 = por %p118, %p119
    %p122 = scmp.ne.s32.totalorder %s105, %s121
    %p123 = scmp.eq.s32.totalorder %s15, 0
    %p124 = por %p122, %p123
    %p125 = scmp.le.s32.totalorder 1, %s9
    %p126 = scmp.lt.s32.totalorder %s9, 5
    %p127 = pnand %p125, %p126
    %p128 = pneg %p127
    // Predicated region
    $region9: #{aspp_forward.6} parent=5 // pred_check
      _
    $region10: #{aspp_forward.6} parent=5 // pred_check_branch
      %130 = sbr.rel (%p127) target = $region12
    $region11: #{aspp_forward.6} parent=5 // pred_region
      %s131 = ssub.s32 %s9, 1
      // Predicated region
      $region13: #{aspp_forward.6} parent=11 // pred_check
        %p132 = pneg %p68
      $region14: #{aspp_forward.6} parent=11 // pred_check_branch
        %134 = sbr.rel (%p132) target = $region16
      $region15: #{aspp_forward.6} parent=11 // pred_region
        _
      $region16: #{aspp_forward.6} parent=11 // pred_fallthru
        _
      // Predicated region
      $region17: #{aspp_forward.6} parent=11 // pred_check
        %p135 = pneg %p89
      $region18: #{aspp_forward.6} parent=11 // pred_check_branch
        %137 = sbr.rel (%p135) target = $region20
      $region19: #{aspp_forward.6} parent=11 // pred_region
        _
      $region20: #{aspp_forward.6} parent=11 // pred_fallthru
        _
    $region12: #{aspp_forward.6} parent=5 // pred_fallthru
      _
    %p138 = scmp.lt.s32.totalorder %s9, 4
    // Predicated region
    $region21: #{aspp_forward.6} parent=5 // pred_check
      %p139 = pneg %p138
    $region22: #{aspp_forward.6} parent=5 // pred_check_branch
      %141 = sbr.rel (%p139) target = $region24
    $region23: #{aspp_forward.6} parent=5 // pred_region
      // Predicated region
      $region25: #{aspp_forward.6} parent=23 // pred_check
        %p142 = pneg %p41
      $region26: #{aspp_forward.6} parent=23 // pred_check_branch
        %144 = sbr.rel (%p142) target = $region28
      $region27: #{aspp_forward.6} parent=23 // pred_region
        %p145 = scmp.lt.s32.totalorder %s16, 1
        %s146 = scalar_select %p145, %s16, 1
        %s147 = smul.addr %s146, 66
        %s148 = smul.addr %s147, 4
        %s149 = scalar_lea.vmem %s0, %s148
      $region28: #{aspp_forward.6} parent=23 // pred_fallthru
        _
    $region24: #{aspp_forward.6} parent=5 // pred_fallthru
      _
    %p150 = scmp.le.s32.totalorder 1, %s9
    %p151 = scmp.lt.s32.totalorder %s9, 5
    %p152 = pnand %p150, %p151
    %p153 = pneg %p152
    // Predicated region
    $region29: #{aspp_forward.6} parent=5 // pred_check
      _
    $region30: #{aspp_forward.6} parent=5 // pred_check_branch
      %155 = sbr.rel (%p152) target = $region32
    $region31: #{aspp_forward.6} parent=5 // pred_region
      %s156 = ssub.s32 %s9, 1
      %p157 = scmp.lt.s32.totalorder %s18, 1
      %s158 = scalar_select %p157, %s18, 1
      %s159 = smul.addr %s158, 66
      %s160 = smul.addr %s159, 4
      %s161 = scalar_lea.vmem %s0, %s160
      %p162 = pneg %p47
      %p163 = pneg %p44
      %p164 = pneg %p68
      %p165 = pneg %p65
      %p166 = pneg %p89
      %p167 = pneg %p86
      %p168 = pneg %p117
      %p169 = pneg %p114
      %s170 = smul.u32 16, %s19
      %p171 = scmp.lt.s32.totalorder %s18, 1
      %s172 = scalar_select %p171, %s18, 1
      %p173 = scmp.lt.s32.totalorder %s170, 31
      %s174 = scalar_select %p173, %s170, 31
      %s175 = smul.addr %s172, 32
      %s176 = sadd.s32 %s174, %s175
      %s177 = smul.addr %s176, 4
      %s178 = scalar_lea.vmem %s3, %s177
      %p179 = scmp.lt.s32.totalorder %s18, 1
      %s180 = scalar_select %p179, %s18, 1
      %s181 = smul.addr %s180, 66
      %s182 = smul.addr %s181, 4
      %s183 = scalar_lea.vmem %s0, %s182
      %s184 = smul.u32 16, %s19
      %p185 = scmp.lt.s32.totalorder %s18, 1
      %s186 = scalar_select %p185, %s18, 1
      %p187 = scmp.lt.s32.totalorder %s184, 31
      %s188 = scalar_select %p187, %s184, 31
      %s189 = smul.addr %s186, 32
      %s190 = sadd.s32 %s188, %s189
      %s191 = smul.addr %s190, 4
      %s192 = scalar_lea.vmem %s3, %s191
      %s193 = smul.u32 16, %s19
      %s195 = smul.u32 %s19, 8
      %s196 = sadd.s32 %s195, 1
      %s197 = smul.u32 %s196, 3
      %s198 = smul.addr %s197, 4
      %s199 = scalar_lea.vmem %s183, %s198
      %v200 = vld [vmem:[%s199] sm:$0xf]
      %v201 = vld [vmem:[%s199 + $0x4] sm:$0xf]
      %v202 = vld [vmem:[%s199 + $0x8] sm:$0x1]
      %v203 = vld [vmem:[%s199 + $0xc] sm:$0xf]
      %v204 = vld [vmem:[%s199 + $0x10] sm:$0xf]
      %v205 = vld [vmem:[%s199 + $0x14] sm:$0x1]
      %v206 = vld [vmem:[%s199 + $0x18] sm:$0xf]
      %v207 = vld [vmem:[%s199 + $0x1c] sm:$0xf]
      %v208 = vld [vmem:[%s199 + $0x20] sm:$0x1]
      %v209 = vld [vmem:[%s199 + $0x24] sm:$0xf]
      %v210 = vld [vmem:[%s199 + $0x28] sm:$0xf]
      %v211 = vld [vmem:[%s199 + $0x2c] sm:$0x1]
      %v212 = vld [vmem:[%s199 + $0x30] sm:$0xf]
      %v213 = vld [vmem:[%s199 + $0x34] sm:$0xf]
      %v214 = vld [vmem:[%s199 + $0x38] sm:$0x1]
      %v215 = vld [vmem:[%s199 + $0x3c] sm:$0xf]
      %v216 = vld [vmem:[%s199 + $0x40] sm:$0xf]
      %v217 = vld [vmem:[%s199 + $0x44] sm:$0x1]
      %v218 = vld [vmem:[%s199 + $0x48] sm:$0xf]
      %v219 = vld [vmem:[%s199 + $0x4c] sm:$0xf]
      %v220 = vld [vmem:[%s199 + $0x50] sm:$0x1]
      %v221 = vld [vmem:[%s199 + $0x54] sm:$0xf]
      %v222 = vld [vmem:[%s199 + $0x58] sm:$0xf]
      %v223 = vld [vmem:[%s199 + $0x5c] sm:$0x1]
      %vm224 = vsmask.f32 3328
      %vm225 = vsmask.f32 7440
      %vm226 = vmor %vm224, %vm225
      %v228 = vshrl.u32 %v200, 16
      %v230 = vrot.slane %v228, 4
      %v231 = vshll.u32 %v200, 16
      %v233 = vrot.slane %v231, 5
      %v234 = vor.u32 %v230, %v233
      %v235 = vrot.slane %v234, 4
      %v237 = vshll.u32 %v201, 16
      %v239 = vrot.slane %v237, 5
      %v240 = vsel %vm226, %v235, %v239
      %v241 = vshrl.u32 %v201, 16
      %v243 = vrot.slane %v241, 4
      %v244 = vor.u32 %v243, %v239
      %v245 = vrot.slane %v244, 4
      %v247 = vshll.u32 %v202, 16
      %v249 = vrot.slane %v247, 5
      %v250 = vsel %vm226, %v245, %v249
      %v252 = vshrl.u32 %v203, 16
      %v254 = vrot.slane %v252, 4
      %v255 = vshll.u32 %v203, 16
      %v257 = vrot.slane %v255, 5
      %v258 = vor.u32 %v254, %v257
      %v259 = vrot.slane %v258, 4
      %v261 = vshll.u32 %v204, 16
      %v263 = vrot.slane %v261, 5
      %v264 = vsel %vm226, %v259, %v263
      %v265 = vshrl.u32 %v204, 16
      %v267 = vrot.slane %v265, 4
      %v268 = vor.u32 %v267, %v263
      %v269 = vrot.slane %v268, 4
      %v271 = vshll.u32 %v205, 16
      %v273 = vrot.slane %v271, 5
      %v274 = vsel %vm226, %v269, %v273
      %v276 = vshrl.u32 %v206, 16
      %v278 = vrot.slane %v276, 4
      %v279 = vshll.u32 %v206, 16
      %v281 = vrot.slane %v279, 5
      %v282 = vor.u32 %v278, %v281
      %v283 = vrot.slane %v282, 4
      %v285 = vshll.u32 %v207, 16
      %v287 = vrot.slane %v285, 5
      %v288 = vsel %vm226, %v283, %v287
      %v289 = vshrl.u32 %v207, 16
      %v291 = vrot.slane %v289, 4
      %v292 = vor.u32 %v291, %v287
      %v293 = vrot.slane %v292, 4
      %v295 = vshll.u32 %v208, 16
      %v297 = vrot.slane %v295, 5
      %v298 = vsel %vm226, %v293, %v297
      %v300 = vshrl.u32 %v209, 16
      %v302 = vrot.slane %v300, 4
      %v303 = vshll.u32 %v209, 16
      %v305 = vrot.slane %v303, 5
      %v306 = vor.u32 %v302, %v305
      %v307 = vrot.slane %v306, 4
      %v309 = vshll.u32 %v210, 16
      %v311 = vrot.slane %v309, 5
      %v312 = vsel %vm226, %v307, %v311
      %v313 = vshrl.u32 %v210, 16
      %v315 = vrot.slane %v313, 4
      %v316 = vor.u32 %v315, %v311
      %v317 = vrot.slane %v316, 4
      %v319 = vshll.u32 %v211, 16
      %v321 = vrot.slane %v319, 5
      %v322 = vsel %vm226, %v317, %v321
      %v324 = vshrl.u32 %v212, 16
      %v326 = vrot.slane %v324, 4
      %v327 = vshll.u32 %v212, 16
      %v329 = vrot.slane %v327, 5
      %v330 = vor.u32 %v326, %v329
      %v331 = vrot.slane %v330, 4
      %v333 = vshll.u32 %v213, 16
      %v335 = vrot.slane %v333, 5
      %v336 = vsel %vm226, %v331, %v335
      %v337 = vshrl.u32 %v213, 16
      %v339 = vrot.slane %v337, 4
      %v340 = vor.u32 %v339, %v335
      %v341 = vrot.slane %v340, 4
      %v343 = vshll.u32 %v214, 16
      %v345 = vrot.slane %v343, 5
      %v346 = vsel %vm226, %v341, %v345
      %v348 = vshrl.u32 %v215, 16
      %v350 = vrot.slane %v348, 4
      %v351 = vshll.u32 %v215, 16
      %v353 = vrot.slane %v351, 5
      %v354 = vor.u32 %v350, %v353
      %v355 = vrot.slane %v354, 4
      %v357 = vshll.u32 %v216, 16
      %v359 = vrot.slane %v357, 5
      %v360 = vsel %vm226, %v355, %v359
      %v361 = vshrl.u32 %v216, 16
      %v363 = vrot.slane %v361, 4
      %v364 = vor.u32 %v363, %v359
      %v365 = vrot.slane %v364, 4
      %v367 = vshll.u32 %v217, 16
      %v369 = vrot.slane %v367, 5
      %v370 = vsel %vm226, %v365, %v369
      %v372 = vshrl.u32 %v218, 16
      %v374 = vrot.slane %v372, 4
      %v375 = vshll.u32 %v218, 16
      %v377 = vrot.slane %v375, 5
      %v378 = vor.u32 %v374, %v377
      %v379 = vrot.slane %v378, 4
      %v381 = vshll.u32 %v219, 16
      %v383 = vrot.slane %v381, 5
      %v384 = vsel %vm226, %v379, %v383
      %v385 = vshrl.u32 %v219, 16
      %v387 = vrot.slane %v385, 4
      %v388 = vor.u32 %v387, %v383
      %v389 = vrot.slane %v388, 4
      %v391 = vshll.u32 %v220, 16
      %v393 = vrot.slane %v391, 5
      %v394 = vsel %vm226, %v389, %v393
      %v396 = vshrl.u32 %v221, 16
      %v398 = vrot.slane %v396, 4
      %v399 = vshll.u32 %v221, 16
      %v401 = vrot.slane %v399, 5
      %v402 = vor.u32 %v398, %v401
      %v403 = vrot.slane %v402, 4
      %v405 = vshll.u32 %v222, 16
      %v407 = vrot.slane %v405, 5
      %v408 = vsel %vm226, %v403, %v407
      %v409 = vshrl.u32 %v222, 16
      %v411 = vrot.slane %v409, 4
      %v412 = vor.u32 %v411, %v407
      %v413 = vrot.slane %v412, 4
      %v415 = vshll.u32 %v223, 16
      %v417 = vrot.slane %v415, 5
      %v418 = vsel %vm226, %v413, %v417
      %v419 = vld [vmem:[%s1] sm:$0x3]
      %v420 = vld [vmem:[%s199] sm:$0xe]
      %v421 = vld [vmem:[%s199 + $0x8] sm:$0x3]
      %v422 = vld [vmem:[%s199 + $0xc] sm:$0xe]
      %v423 = vld [vmem:[%s199 + $0x14] sm:$0x3]
      %v424 = vld [vmem:[%s199 + $0x18] sm:$0xe]
      %v425 = vld [vmem:[%s199 + $0x20] sm:$0x3]
      %v426 = vld [vmem:[%s199 + $0x24] sm:$0xe]
      %v427 = vld [vmem:[%s199 + $0x2c] sm:$0x3]
      %v428 = vld [vmem:[%s199 + $0x30] sm:$0xe]
      %v429 = vld [vmem:[%s199 + $0x38] sm:$0x3]
      %v430 = vld [vmem:[%s199 + $0x3c] sm:$0xe]
      %v431 = vld [vmem:[%s199 + $0x44] sm:$0x3]
      %v432 = vld [vmem:[%s199 + $0x48] sm:$0xe]
      %v433 = vld [vmem:[%s199 + $0x50] sm:$0x3]
      %v434 = vld [vmem:[%s199 + $0x54] sm:$0xe]
      %v435 = vld [vmem:[%s199 + $0x5c] sm:$0x3]
      %vm436 = vsmask.f32 2304
      %vm437 = vsmask.f32 6416
      %vm438 = vmor %vm436, %vm437
      %v440 = vshrl.u32 %v420, 16
      %v442 = vrot.slane %v440, 5
      %v443 = vshll.u32 %v420, 16
      %v445 = vrot.slane %v443, 6
      %v446 = vor.u32 %v442, %v445
      %v447 = vrot.slane %v446, 4
      %v448 = vrot.slane %v241, 5
      %v449 = vrot.slane %v237, 6
      %v450 = vor.u32 %v448, %v449
      %v451 = vsel %vm438, %v447, %v450
      %v452 = vrot.slane %v450, 4
      %v454 = vshrl.u32 %v421, 16
      %v456 = vrot.slane %v454, 5
      %v457 = vshll.u32 %v421, 16
      %v459 = vrot.slane %v457, 6
      %v460 = vor.u32 %v456, %v459
      %v461 = vsel %vm438, %v452, %v460
      %v463 = vshrl.u32 %v422, 16
      %v465 = vrot.slane %v463, 5
      %v466 = vshll.u32 %v422, 16
      %v468 = vrot.slane %v466, 6
      %v469 = vor.u32 %v465, %v468
      %v470 = vrot.slane %v469, 4
      %v471 = vrot.slane %v265, 5
      %v472 = vrot.slane %v261, 6
      %v473 = vor.u32 %v471, %v472
      %v474 = vsel %vm438, %v470, %v473
      %v475 = vrot.slane %v473, 4
      %v477 = vshrl.u32 %v423, 16
      %v479 = vrot.slane %v477, 5
      %v480 = vshll.u32 %v423, 16
      %v482 = vrot.slane %v480, 6
      %v483 = vor.u32 %v479, %v482
      %v484 = vsel %vm438, %v475, %v483
      %v486 = vshrl.u32 %v424, 16
      %v488 = vrot.slane %v486, 5
      %v489 = vshll.u32 %v424, 16
      %v491 = vrot.slane %v489, 6
      %v492 = vor.u32 %v488, %v491
      %v493 = vrot.slane %v492, 4
      %v494 = vrot.slane %v289, 5
      %v495 = vrot.slane %v285, 6
      %v496 = vor.u32 %v494, %v495
      %v497 = vsel %vm438, %v493, %v496
      %v498 = vrot.slane %v496, 4
      %v500 = vshrl.u32 %v425, 16
      %v502 = vrot.slane %v500, 5
      %v503 = vshll.u32 %v425, 16
      %v505 = vrot.slane %v503, 6
      %v506 = vor.u32 %v502, %v505
      %v507 = vsel %vm438, %v498, %v506
      %v509 = vshrl.u32 %v426, 16
      %v511 = vrot.slane %v509, 5
      %v512 = vshll.u32 %v426, 16
      %v514 = vrot.slane %v512, 6
      %v515 = vor.u32 %v511, %v514
      %v516 = vrot.slane %v515, 4
      %v517 = vrot.slane %v313, 5
      %v518 = vrot.slane %v309, 6
      %v519 = vor.u32 %v517, %v518
      %v520 = vsel %vm438, %v516, %v519
      %v521 = vrot.slane %v519, 4
      %v523 = vshrl.u32 %v427, 16
      %v525 = vrot.slane %v523, 5
      %v526 = vshll.u32 %v427, 16
      %v528 = vrot.slane %v526, 6
      %v529 = vor.u32 %v525, %v528
      %v530 = vsel %vm438, %v521, %v529
      %v532 = vshrl.u32 %v428, 16
      %v534 = vrot.slane %v532, 5
      %v535 = vshll.u32 %v428, 16
      %v537 = vrot.slane %v535, 6
      %v538 = vor.u32 %v534, %v537
      %v539 = vrot.slane %v538, 4
      %v540 = vrot.slane %v337, 5
      %v541 = vrot.slane %v333, 6
      %v542 = vor.u32 %v540, %v541
      %v543 = vsel %vm438, %v539, %v542
      %v544 = vrot.slane %v542, 4
      %v546 = vshrl.u32 %v429, 16
      %v548 = vrot.slane %v546, 5
      %v549 = vshll.u32 %v429, 16
      %v551 = vrot.slane %v549, 6
      %v552 = vor.u32 %v548, %v551
      %v553 = vsel %vm438, %v544, %v552
      %v555 = vshrl.u32 %v430, 16
      %v557 = vrot.slane %v555, 5
      %v558 = vshll.u32 %v430, 16
      %v560 = vrot.slane %v558, 6
      %v561 = vor.u32 %v557, %v560
      %v562 = vrot.slane %v561, 4
      %v563 = vrot.slane %v361, 5
      %v564 = vrot.slane %v357, 6
      %v565 = vor.u32 %v563, %v564
      %v566 = vsel %vm438, %v562, %v565
      %v567 = vrot.slane %v565, 4
      %v569 = vshrl.u32 %v431, 16
      %v571 = vrot.slane %v569, 5
      %v572 = vshll.u32 %v431, 16
      %v574 = vrot.slane %v572, 6
      %v575 = vor.u32 %v571, %v574
      %v576 = vsel %vm438, %v567, %v575
      %v578 = vshrl.u32 %v432, 16
      %v580 = vrot.slane %v578, 5
      %v581 = vshll.u32 %v432, 16
      %v583 = vrot.slane %v581, 6
      %v584 = vor.u32 %v580, %v583
      %v585 = vrot.slane %v584, 4
      %v586 = vrot.slane %v385, 5
      %v587 = vrot.slane %v381, 6
      %v588 = vor.u32 %v586, %v587
      %v589 = vsel %vm438, %v585, %v588
      %v590 = vrot.slane %v588, 4
      %v592 = vshrl.u32 %v433, 16
      %v594 = vrot.slane %v592, 5
      %v595 = vshll.u32 %v433, 16
      %v597 = vrot.slane %v595, 6
      %v598 = vor.u32 %v594, %v597
      %v599 = vsel %vm438, %v590, %v598
      %v601 = vshrl.u32 %v434, 16
      %v603 = vrot.slane %v601, 5
      %v604 = vshll.u32 %v434, 16
      %v606 = vrot.slane %v604, 6
      %v607 = vor.u32 %v603, %v606
      %v608 = vrot.slane %v607, 4
      %v609 = vrot.slane %v409, 5
      %v610 = vrot.slane %v405, 6
      %v611 = vor.u32 %v609, %v610
      %v612 = vsel %vm438, %v608, %v611
      %v613 = vrot.slane %v611, 4
      %v615 = vshrl.u32 %v435, 16
      %v617 = vrot.slane %v615, 5
      %v618 = vshll.u32 %v435, 16
      %v620 = vrot.slane %v618, 6
      %v621 = vor.u32 %v617, %v620
      %v622 = vsel %vm438, %v613, %v621
      %s623 = scalar_lea.vmem %s1, 2
      %v624 = vld [vmem:[%s623] sm:$0x3]
      %v625 = vunpack.c.l.b16 %v451
      %v626 = vunpack.c.l.b16 %v461
      %v627 = vunpack.c.l.b16 %v474
      %v628 = vunpack.c.l.b16 %v484
      %v629 = vunpack.c.l.b16 %v497
      %v630 = vunpack.c.l.b16 %v507
      %v631 = vunpack.c.l.b16 %v520
      %v632 = vunpack.c.l.b16 %v530
      %v633 = vunpack.c.l.b16 %v543
      %v634 = vunpack.c.l.b16 %v553
      %v635 = vunpack.c.l.b16 %v566
      %v636 = vunpack.c.l.b16 %v576
      %v637 = vunpack.c.l.b16 %v589
      %v638 = vunpack.c.l.b16 %v599
      %v639 = vunpack.c.l.b16 %v612
      %v640 = vunpack.c.l.b16 %v622
      %v641 = vpack.c.b16 %v626, %v625
      %v642 = vpack.c.b16 %v628, %v627
      %v643 = vpack.c.b16 %v630, %v629
      %v644 = vpack.c.b16 %v632, %v631
      %v645 = vpack.c.b16 %v634, %v633
      %v646 = vpack.c.b16 %v636, %v635
      %v647 = vpack.c.b16 %v638, %v637
      %v648 = vpack.c.b16 %v640, %v639
      %vm649 = vcmask 31744
      %v651 = vsel %vm649, %v641, 0
      %v654 = vsel %vm649, %v642, 0
      %v657 = vsel %vm649, %v643, 0
      %v660 = vsel %vm649, %v644, 0
      %v663 = vsel %vm649, %v645, 0
      %v666 = vsel %vm649, %v646, 0
      %v669 = vsel %vm649, %v647, 0
      %v672 = vsel %vm649, %v648, 0
      %vm674 = vcmask 1041408
      %v676 = vsel %vm674, %v624, 0
      %678 = vmatpush.bf16.msra.mxu0 0
      %679 = vmatpush.bf16.msra.mxu0 0
      %680 = vmatpush.bf16.msra.mxu0 0
      %681 = vmatpush.bf16.msra.mxu0 0
      %682 = vmatpush.bf16.msra.mxu0 0
      %683 = vmatpush.bf16.msra.mxu0 0
      %684 = vmatpush.bf16.msra.mxu0 0
      %685 = vmatpush.bf16.msra.mxu0 %v676
      %686 = vmatmul.bf16.gmra.mxu0 %v651
      %v687 = vpop.f32.mrf.mxu0
      %v688 = vadd.f32 0.0, %v687
      %v689 = vpop.f32.mrf.mxu0
      %v690 = vadd.f32 0.0, %v689
      %691 = vmatmul.bf16.gmra.mxu0 %v654
      %v692 = vpop.f32.mrf.mxu0
      %v693 = vadd.f32 0.0, %v692
      %v694 = vpop.f32.mrf.mxu0
      %v695 = vadd.f32 0.0, %v694
      %696 = vmatmul.bf16.gmra.mxu0 %v657
      %v697 = vpop.f32.mrf.mxu0
      %v698 = vadd.f32 0.0, %v697
      %v699 = vpop.f32.mrf.mxu0
      %v700 = vadd.f32 0.0, %v699
      %701 = vmatmul.bf16.gmra.mxu0 %v660
      %v702 = vpop.f32.mrf.mxu0
      %v703 = vadd.f32 0.0, %v702
      %v704 = vpop.f32.mrf.mxu0
      %v705 = vadd.f32 0.0, %v704
      %706 = vmatmul.bf16.gmra.mxu0 %v663
      %v707 = vpop.f32.mrf.mxu0
      %v708 = vadd.f32 0.0, %v707
      %v709 = vpop.f32.mrf.mxu0
      %v710 = vadd.f32 0.0, %v709
      %711 = vmatmul.bf16.gmra.mxu0 %v666
      %v712 = vpop.f32.mrf.mxu0
      %v713 = vadd.f32 0.0, %v712
      %v714 = vpop.f32.mrf.mxu0
      %v715 = vadd.f32 0.0, %v714
      %716 = vmatmul.bf16.gmra.mxu0 %v669
      %v717 = vpop.f32.mrf.mxu0
      %v718 = vadd.f32 0.0, %v717
      %v719 = vpop.f32.mrf.mxu0
      %v720 = vadd.f32 0.0, %v719
      %721 = vmatmul.bf16.gmra.mxu0 %v672
      %v722 = vpop.f32.mrf.mxu0
      %v723 = vadd.f32 0.0, %v722
      %v724 = vpop.f32.mrf.mxu0
      %v725 = vadd.f32 0.0, %v724
      %726 = vdwg.mxu0
      %v727 = vunpack.c.l.b16 %v240
      %v728 = vunpack.c.l.b16 %v250
      %v729 = vunpack.c.l.b16 %v264
      %v730 = vunpack.c.l.b16 %v274
      %v731 = vunpack.c.l.b16 %v288
      %v732 = vunpack.c.l.b16 %v298
      %v733 = vunpack.c.l.b16 %v312
      %v734 = vunpack.c.l.b16 %v322
      %v735 = vunpack.c.l.b16 %v336
      %v736 = vunpack.c.l.b16 %v346
      %v737 = vunpack.c.l.b16 %v360
      %v738 = vunpack.c.l.b16 %v370
      %v739 = vunpack.c.l.b16 %v384
      %v740 = vunpack.c.l.b16 %v394
      %v741 = vunpack.c.l.b16 %v408
      %v742 = vunpack.c.l.b16 %v418
      %v743 = vpack.c.b16 %v728, %v727
      %v744 = vpack.c.b16 %v730, %v729
      %v745 = vpack.c.b16 %v732, %v731
      %v746 = vpack.c.b16 %v734, %v733
      %v747 = vpack.c.b16 %v736, %v735
      %v748 = vpack.c.b16 %v738, %v737
      %v749 = vpack.c.b16 %v740, %v739
      %v750 = vpack.c.b16 %v742, %v741
      %v752 = vsel %vm649, %v743, 0
      %v755 = vsel %vm649, %v744, 0
      %v758 = vsel %vm649, %v745, 0
      %v761 = vsel %vm649, %v746, 0
      %v764 = vsel %vm649, %v747, 0
      %v767 = vsel %vm649, %v748, 0
      %v770 = vsel %vm649, %v749, 0
      %v773 = vsel %vm649, %v750, 0
      %v776 = vsel %vm674, %v419, 0
      %778 = vmatpush.bf16.msra.mxu0 0
      %779 = vmatpush.bf16.msra.mxu0 0
      %780 = vmatpush.bf16.msra.mxu0 0
      %781 = vmatpush.bf16.msra.mxu0 0
      %782 = vmatpush.bf16.msra.mxu0 0
      %783 = vmatpush.bf16.msra.mxu0 0
      %784 = vmatpush.bf16.msra.mxu0 0
      %785 = vmatpush.bf16.msra.mxu0 %v776
      %786 = vmatmul.bf16.gmra.mxu0 %v752
      %v787 = vpop.f32.mrf.mxu0
      %v788 = vadd.f32 %v688, %v787
      %v789 = vpop.f32.mrf.mxu0
      %v790 = vadd.f32 %v690, %v789
      %791 = vmatmul.bf16.gmra.mxu0 %v755
      %v792 = vpop.f32.mrf.mxu0
      %v793 = vadd.f32 %v693, %v792
      %v794 = vpop.f32.mrf.mxu0
      %v795 = vadd.f32 %v695, %v794
      %796 = vmatmul.bf16.gmra.mxu0 %v758
      %v797 = vpop.f32.mrf.mxu0
      %v798 = vadd.f32 %v698, %v797
      %v799 = vpop.f32.mrf.mxu0
      %v800 = vadd.f32 %v700, %v799
      %801 = vmatmul.bf16.gmra.mxu0 %v761
      %v802 = vpop.f32.mrf.mxu0
      %v803 = vadd.f32 %v703, %v802
      %v804 = vpop.f32.mrf.mxu0
      %v805 = vadd.f32 %v705, %v804
      %806 = vmatmul.bf16.gmra.mxu0 %v764
      %v807 = vpop.f32.mrf.mxu0
      %v808 = vadd.f32 %v708, %v807
      %v809 = vpop.f32.mrf.mxu0
      %v810 = vadd.f32 %v710, %v809
      %811 = vmatmul.bf16.gmra.mxu0 %v767
      %v812 = vpop.f32.mrf.mxu0
      %v813 = vadd.f32 %v713, %v812
      %v814 = vpop.f32.mrf.mxu0
      %v815 = vadd.f32 %v715, %v814
      %816 = vmatmul.bf16.gmra.mxu0 %v770
      %v817 = vpop.f32.mrf.mxu0
      %v818 = vadd.f32 %v718, %v817
      %v819 = vpop.f32.mrf.mxu0
      %v820 = vadd.f32 %v720, %v819
      %821 = vmatmul.bf16.gmra.mxu0 %v773
      %v822 = vpop.f32.mrf.mxu0
      %v823 = vadd.f32 %v723, %v822
      %v824 = vpop.f32.mrf.mxu0
      %v825 = vadd.f32 %v725, %v824
      %826 = vdwg.mxu0
      %v827 = vld [vmem:[%s199] sm:$0xc]
      %v828 = vld [vmem:[%s199 + $0x8] sm:$0x7]
      %v829 = vld [vmem:[%s199 + $0xc] sm:$0xc]
      %v830 = vld [vmem:[%s199 + $0x14] sm:$0x7]
      %v831 = vld [vmem:[%s199 + $0x18] sm:$0xc]
      %v832 = vld [vmem:[%s199 + $0x20] sm:$0x7]
      %v833 = vld [vmem:[%s199 + $0x24] sm:$0xc]
      %v834 = vld [vmem:[%s199 + $0x2c] sm:$0x7]
      %v835 = vld [vmem:[%s199 + $0x30] sm:$0xc]
      %v836 = vld [vmem:[%s199 + $0x38] sm:$0x7]
      %v837 = vld [vmem:[%s199 + $0x3c] sm:$0xc]
      %v838 = vld [vmem:[%s199 + $0x44] sm:$0x7]
      %v839 = vld [vmem:[%s199 + $0x48] sm:$0xc]
      %v840 = vld [vmem:[%s199 + $0x50] sm:$0x7]
      %v841 = vld [vmem:[%s199 + $0x54] sm:$0xc]
      %v842 = vld [vmem:[%s199 + $0x5c] sm:$0x7]
      %vm843 = vsmask.f32 1280
      %vm844 = vsmask.f32 5392
      %vm845 = vmor %vm843, %vm844
      %v847 = vshrl.u32 %v827, 16
      %v849 = vrot.slane %v847, 6
      %v850 = vshll.u32 %v827, 16
      %v852 = vrot.slane %v850, 7
      %v853 = vor.u32 %v849, %v852
      %v854 = vrot.slane %v853, 4
      %v855 = vrot.slane %v241, 6
      %v856 = vrot.slane %v237, 7
      %v857 = vor.u32 %v855, %v856
      %v858 = vsel %vm845, %v854, %v857
      %v859 = vrot.slane %v857, 4
      %v861 = vshrl.u32 %v828, 16
      %v863 = vrot.slane %v861, 6
      %v864 = vshll.u32 %v828, 16
      %v866 = vrot.slane %v864, 7
      %v867 = vor.u32 %v863, %v866
      %v868 = vsel %vm845, %v859, %v867
      %v870 = vshrl.u32 %v829, 16
      %v872 = vrot.slane %v870, 6
      %v873 = vshll.u32 %v829, 16
      %v875 = vrot.slane %v873, 7
      %v876 = vor.u32 %v872, %v875
      %v877 = vrot.slane %v876, 4
      %v878 = vrot.slane %v265, 6
      %v879 = vrot.slane %v261, 7
      %v880 = vor.u32 %v878, %v879
      %v881 = vsel %vm845, %v877, %v880
      %v882 = vrot.slane %v880, 4
      %v884 = vshrl.u32 %v830, 16
      %v886 = vrot.slane %v884, 6
      %v887 = vshll.u32 %v830, 16
      %v889 = vrot.slane %v887, 7
      %v890 = vor.u32 %v886, %v889
      %v891 = vsel %vm845, %v882, %v890
      %v893 = vshrl.u32 %v831, 16
      %v895 = vrot.slane %v893, 6
      %v896 = vshll.u32 %v831, 16
      %v898 = vrot.slane %v896, 7
      %v899 = vor.u32 %v895, %v898
      %v900 = vrot.slane %v899, 4
      %v901 = vrot.slane %v289, 6
      %v902 = vrot.slane %v285, 7
      %v903 = vor.u32 %v901, %v902
      %v904 = vsel %vm845, %v900, %v903
      %v905 = vrot.slane %v903, 4
      %v907 = vshrl.u32 %v832, 16
      %v909 = vrot.slane %v907, 6
      %v910 = vshll.u32 %v832, 16
      %v912 = vrot.slane %v910, 7
      %v913 = vor.u32 %v909, %v912
      %v914 = vsel %vm845, %v905, %v913
      %v916 = vshrl.u32 %v833, 16
      %v918 = vrot.slane %v916, 6
      %v919 = vshll.u32 %v833, 16
      %v921 = vrot.slane %v919, 7
      %v922 = vor.u32 %v918, %v921
      %v923 = vrot.slane %v922, 4
      %v924 = vrot.slane %v313, 6
      %v925 = vrot.slane %v309, 7
      %v926 = vor.u32 %v924, %v925
      %v927 = vsel %vm845, %v923, %v926
      %v928 = vrot.slane %v926, 4
      %v930 = vshrl.u32 %v834, 16
      %v932 = vrot.slane %v930, 6
      %v933 = vshll.u32 %v834, 16
      %v935 = vrot.slane %v933, 7
      %v936 = vor.u32 %v932, %v935
      %v937 = vsel %vm845, %v928, %v936
      %v939 = vshrl.u32 %v835, 16
      %v941 = vrot.slane %v939, 6
      %v942 = vshll.u32 %v835, 16
      %v944 = vrot.slane %v942, 7
      %v945 = vor.u32 %v941, %v944
      %v946 = vrot.slane %v945, 4
      %v947 = vrot.slane %v337, 6
      %v948 = vrot.slane %v333, 7
      %v949 = vor.u32 %v947, %v948
      %v950 = vsel %vm845, %v946, %v949
      %v951 = vrot.slane %v949, 4
      %v953 = vshrl.u32 %v836, 16
      %v955 = vrot.slane %v953, 6
      %v956 = vshll.u32 %v836, 16
      %v958 = vrot.slane %v956, 7
      %v959 = vor.u32 %v955, %v958
      %v960 = vsel %vm845, %v951, %v959
      %v962 = vshrl.u32 %v837, 16
      %v964 = vrot.slane %v962, 6
      %v965 = vshll.u32 %v837, 16
      %v967 = vrot.slane %v965, 7
      %v968 = vor.u32 %v964, %v967
      %v969 = vrot.slane %v968, 4
      %v970 = vrot.slane %v361, 6
      %v971 = vrot.slane %v357, 7
      %v972 = vor.u32 %v970, %v971
      %v973 = vsel %vm845, %v969, %v972
      %v974 = vrot.slane %v972, 4
      %v976 = vshrl.u32 %v838, 16
      %v978 = vrot.slane %v976, 6
      %v979 = vshll.u32 %v838, 16
      %v981 = vrot.slane %v979, 7
      %v982 = vor.u32 %v978, %v981
      %v983 = vsel %vm845, %v974, %v982
      %v985 = vshrl.u32 %v839, 16
      %v987 = vrot.slane %v985, 6
      %v988 = vshll.u32 %v839, 16
      %v990 = vrot.slane %v988, 7
      %v991 = vor.u32 %v987, %v990
      %v992 = vrot.slane %v991, 4
      %v993 = vrot.slane %v385, 6
      %v994 = vrot.slane %v381, 7
      %v995 = vor.u32 %v993, %v994
      %v996 = vsel %vm845, %v992, %v995
      %v997 = vrot.slane %v995, 4
      %v999 = vshrl.u32 %v840, 16
      %v1001 = vrot.slane %v999, 6
      %v1002 = vshll.u32 %v840, 16
      %v1004 = vrot.slane %v1002, 7
      %v1005 = vor.u32 %v1001, %v1004
      %v1006 = vsel %vm845, %v997, %v1005
      %v1008 = vshrl.u32 %v841, 16
      %v1010 = vrot.slane %v1008, 6
      %v1011 = vshll.u32 %v841, 16
      %v1013 = vrot.slane %v1011, 7
      %v1014 = vor.u32 %v1010, %v1013
      %v1015 = vrot.slane %v1014, 4
      %v1016 = vrot.slane %v409, 6
      %v1017 = vrot.slane %v405, 7
      %v1018 = vor.u32 %v1016, %v1017
      %v1019 = vsel %vm845, %v1015, %v1018
      %v1020 = vrot.slane %v1018, 4
      %v1022 = vshrl.u32 %v842, 16
      %v1024 = vrot.slane %v1022, 6
      %v1025 = vshll.u32 %v842, 16
      %v1027 = vrot.slane %v1025, 7
      %v1028 = vor.u32 %v1024, %v1027
      %v1029 = vsel %vm845, %v1020, %v1028
      %s1030 = scalar_lea.vmem %s1, 4
      %v1031 = vld [vmem:[%s1030] sm:$0x3]
      %v1032 = vunpack.c.l.b16 %v858
      %v1033 = vunpack.c.l.b16 %v868
      %v1034 = vunpack.c.l.b16 %v881
      %v1035 = vunpack.c.l.b16 %v891
      %v1036 = vunpack.c.l.b16 %v904
      %v1037 = vunpack.c.l.b16 %v914
      %v1038 = vunpack.c.l.b16 %v927
      %v1039 = vunpack.c.l.b16 %v937
      %v1040 = vunpack.c.l.b16 %v950
      %v1041 = vunpack.c.l.b16 %v960
      %v1042 = vunpack.c.l.b16 %v973
      %v1043 = vunpack.c.l.b16 %v983
      %v1044 = vunpack.c.l.b16 %v996
      %v1045 = vunpack.c.l.b16 %v1006
      %v1046 = vunpack.c.l.b16 %v1019
      %v1047 = vunpack.c.l.b16 %v1029
      %v1048 = vpack.c.b16 %v1033, %v1032
      %v1049 = vpack.c.b16 %v1035, %v1034
      %v1050 = vpack.c.b16 %v1037, %v1036
      %v1051 = vpack.c.b16 %v1039, %v1038
      %v1052 = vpack.c.b16 %v1041, %v1040
      %v1053 = vpack.c.b16 %v1043, %v1042
      %v1054 = vpack.c.b16 %v1045, %v1044
      %v1055 = vpack.c.b16 %v1047, %v1046
      %v1057 = vsel %vm649, %v1048, 0
      %v1060 = vsel %vm649, %v1049, 0
      %v1063 = vsel %vm649, %v1050, 0
      %v1066 = vsel %vm649, %v1051, 0
      %v1069 = vsel %vm649, %v1052, 0
      %v1072 = vsel %vm649, %v1053, 0
      %v1075 = vsel %vm649, %v1054, 0
      %v1078 = vsel %vm649, %v1055, 0
      %v1081 = vsel %vm674, %v1031, 0
      %1083 = vmatpush.bf16.msra.mxu0 0
      %1084 = vmatpush.bf16.msra.mxu0 0
      %1085 = vmatpush.bf16.msra.mxu0 0
      %1086 = vmatpush.bf16.msra.mxu0 0
      %1087 = vmatpush.bf16.msra.mxu0 0
      %1088 = vmatpush.bf16.msra.mxu0 0
      %1089 = vmatpush.bf16.msra.mxu0 0
      %1090 = vmatpush.bf16.msra.mxu0 %v1081
      %1091 = vmatmul.bf16.gmra.mxu0 %v1057
      %v1092 = vpop.f32.mrf.mxu0
      %v1093 = vadd.f32 0.0, %v1092
      %v1094 = vpop.f32.mrf.mxu0
      %v1095 = vadd.f32 0.0, %v1094
      %1096 = vmatmul.bf16.gmra.mxu0 %v1060
      %v1097 = vpop.f32.mrf.mxu0
      %v1098 = vadd.f32 0.0, %v1097
      %v1099 = vpop.f32.mrf.mxu0
      %v1100 = vadd.f32 0.0, %v1099
      %1101 = vmatmul.bf16.gmra.mxu0 %v1063
      %v1102 = vpop.f32.mrf.mxu0
      %v1103 = vadd.f32 0.0, %v1102
      %v1104 = vpop.f32.mrf.mxu0
      %v1105 = vadd.f32 0.0, %v1104
      %1106 = vmatmul.bf16.gmra.mxu0 %v1066
      %v1107 = vpop.f32.mrf.mxu0
      %v1108 = vadd.f32 0.0, %v1107
      %v1109 = vpop.f32.mrf.mxu0
      %v1110 = vadd.f32 0.0, %v1109
      %1111 = vmatmul.bf16.gmra.mxu0 %v1069
      %v1112 = vpop.f32.mrf.mxu0
      %v1113 = vadd.f32 0.0, %v1112
      %v1114 = vpop.f32.mrf.mxu0
      %v1115 = vadd.f32 0.0, %v1114
      %1116 = vmatmul.bf16.gmra.mxu0 %v1072
      %v1117 = vpop.f32.mrf.mxu0
      %v1118 = vadd.f32 0.0, %v1117
      %v1119 = vpop.f32.mrf.mxu0
      %v1120 = vadd.f32 0.0, %v1119
      %1121 = vmatmul.bf16.gmra.mxu0 %v1075
      %v1122 = vpop.f32.mrf.mxu0
      %v1123 = vadd.f32 0.0, %v1122
      %v1124 = vpop.f32.mrf.mxu0
      %v1125 = vadd.f32 0.0, %v1124
      %1126 = vmatmul.bf16.gmra.mxu0 %v1078
      %v1127 = vpop.f32.mrf.mxu0
      %v1128 = vadd.f32 0.0, %v1127
      %v1129 = vpop.f32.mrf.mxu0
      %v1130 = vadd.f32 0.0, %v1129
      %1131 = vdwg.mxu0
      %v1132 = vadd.f32 %v788, %v1093
      %v1133 = vadd.f32 %v790, %v1095
      %v1134 = vadd.f32 %v793, %v1098
      %v1135 = vadd.f32 %v795, %v1100
      %v1136 = vadd.f32 %v798, %v1103
      %v1137 = vadd.f32 %v800, %v1105
      %v1138 = vadd.f32 %v803, %v1108
      %v1139 = vadd.f32 %v805, %v1110
      %v1140 = vadd.f32 %v808, %v1113
      %v1141 = vadd.f32 %v810, %v1115
      %v1142 = vadd.f32 %v813, %v1118
      %v1143 = vadd.f32 %v815, %v1120
      %v1144 = vadd.f32 %v818, %v1123
      %v1145 = vadd.f32 %v820, %v1125
      %v1146 = vadd.f32 %v823, %v1128
      %v1147 = vadd.f32 %v825, %v1130
      %s1148 = sadd.s32 %s195, 3
      %s1149 = smul.u32 %s1148, 3
      %s1150 = smul.addr %s1149, 4
      %s1151 = scalar_lea.vmem %s183, %s1150
      %v1152 = vld [vmem:[%s1151] sm:$0xf]
      %v1153 = vld [vmem:[%s1151 + $0x4] sm:$0xf]
      %v1154 = vld [vmem:[%s1151 + $0x8] sm:$0x1]
      %v1155 = vld [vmem:[%s1151 + $0xc] sm:$0xf]
      %v1156 = vld [vmem:[%s1151 + $0x10] sm:$0xf]
      %v1157 = vld [vmem:[%s1151 + $0x14] sm:$0x1]
      %v1158 = vld [vmem:[%s1151 + $0x18] sm:$0xf]
      %v1159 = vld [vmem:[%s1151 + $0x1c] sm:$0xf]
      %v1160 = vld [vmem:[%s1151 + $0x20] sm:$0x1]
      %v1161 = vld [vmem:[%s1151 + $0x24] sm:$0xf]
      %v1162 = vld [vmem:[%s1151 + $0x28] sm:$0xf]
      %v1163 = vld [vmem:[%s1151 + $0x2c] sm:$0x1]
      %v1164 = vld [vmem:[%s1151 + $0x30] sm:$0xf]
      %v1165 = vld [vmem:[%s1151 + $0x34] sm:$0xf]
      %v1166 = vld [vmem:[%s1151 + $0x38] sm:$0x1]
      %v1167 = vld [vmem:[%s1151 + $0x3c] sm:$0xf]
      %v1168 = vld [vmem:[%s1151 + $0x40] sm:$0xf]
      %v1169 = vld [vmem:[%s1151 + $0x44] sm:$0x1]
      %v1170 = vld [vmem:[%s1151 + $0x48] sm:$0xf]
      %v1171 = vld [vmem:[%s1151 + $0x4c] sm:$0xf]
      %v1172 = vld [vmem:[%s1151 + $0x50] sm:$0x1]
      %v1173 = vld [vmem:[%s1151 + $0x54] sm:$0xf]
      %v1174 = vld [vmem:[%s1151 + $0x58] sm:$0xf]
      %v1175 = vld [vmem:[%s1151 + $0x5c] sm:$0x1]
      %v1177 = vshrl.u32 %v1152, 16
      %v1179 = vrot.slane %v1177, 4
      %v1180 = vshll.u32 %v1152, 16
      %v1182 = vrot.slane %v1180, 5
      %v1183 = vor.u32 %v1179, %v1182
      %v1184 = vrot.slane %v1183, 4
      %v1186 = vshll.u32 %v1153, 16
      %v1188 = vrot.slane %v1186, 5
      %v1189 = vsel %vm226, %v1184, %v1188
      %v1190 = vshrl.u32 %v1153, 16
      %v1192 = vrot.slane %v1190, 4
      %v1193 = vor.u32 %v1192, %v1188
      %v1194 = vrot.slane %v1193, 4
      %v1196 = vshll.u32 %v1154, 16
      %v1198 = vrot.slane %v1196, 5
      %v1199 = vsel %vm226, %v1194, %v1198
      %v1201 = vshrl.u32 %v1155, 16
      %v1203 = vrot.slane %v1201, 4
      %v1204 = vshll.u32 %v1155, 16
      %v1206 = vrot.slane %v1204, 5
      %v1207 = vor.u32 %v1203, %v1206
      %v1208 = vrot.slane %v1207, 4
      %v1210 = vshll.u32 %v1156, 16
      %v1212 = vrot.slane %v1210, 5
      %v1213 = vsel %vm226, %v1208, %v1212
      %v1214 = vshrl.u32 %v1156, 16
      %v1216 = vrot.slane %v1214, 4
      %v1217 = vor.u32 %v1216, %v1212
      %v1218 = vrot.slane %v1217, 4
      %v1220 = vshll.u32 %v1157, 16
      %v1222 = vrot.slane %v1220, 5
      %v1223 = vsel %vm226, %v1218, %v1222
      %v1225 = vshrl.u32 %v1158, 16
      %v1227 = vrot.slane %v1225, 4
      %v1228 = vshll.u32 %v1158, 16
      %v1230 = vrot.slane %v1228, 5
      %v1231 = vor.u32 %v1227, %v1230
      %v1232 = vrot.slane %v1231, 4
      %v1234 = vshll.u32 %v1159, 16
      %v1236 = vrot.slane %v1234, 5
      %v1237 = vsel %vm226, %v1232, %v1236
      %v1238 = vshrl.u32 %v1159, 16
      %v1240 = vrot.slane %v1238, 4
      %v1241 = vor.u32 %v1240, %v1236
      %v1242 = vrot.slane %v1241, 4
      %v1244 = vshll.u32 %v1160, 16
      %v1246 = vrot.slane %v1244, 5
      %v1247 = vsel %vm226, %v1242, %v1246
      %v1249 = vshrl.u32 %v1161, 16
      %v1251 = vrot.slane %v1249, 4
      %v1252 = vshll.u32 %v1161, 16
      %v1254 = vrot.slane %v1252, 5
      %v1255 = vor.u32 %v1251, %v1254
      %v1256 = vrot.slane %v1255, 4
      %v1258 = vshll.u32 %v1162, 16
      %v1260 = vrot.slane %v1258, 5
      %v1261 = vsel %vm226, %v1256, %v1260
      %v1262 = vshrl.u32 %v1162, 16
      %v1264 = vrot.slane %v1262, 4
      %v1265 = vor.u32 %v1264, %v1260
      %v1266 = vrot.slane %v1265, 4
      %v1268 = vshll.u32 %v1163, 16
      %v1270 = vrot.slane %v1268, 5
      %v1271 = vsel %vm226, %v1266, %v1270
      %v1273 = vshrl.u32 %v1164, 16
      %v1275 = vrot.slane %v1273, 4
      %v1276 = vshll.u32 %v1164, 16
      %v1278 = vrot.slane %v1276, 5
      %v1279 = vor.u32 %v1275, %v1278
      %v1280 = vrot.slane %v1279, 4
      %v1282 = vshll.u32 %v1165, 16
      %v1284 = vrot.slane %v1282, 5
      %v1285 = vsel %vm226, %v1280, %v1284
      %v1286 = vshrl.u32 %v1165, 16
      %v1288 = vrot.slane %v1286, 4
      %v1289 = vor.u32 %v1288, %v1284
      %v1290 = vrot.slane %v1289, 4
      %v1292 = vshll.u32 %v1166, 16
      %v1294 = vrot.slane %v1292, 5
      %v1295 = vsel %vm226, %v1290, %v1294
      %v1297 = vshrl.u32 %v1167, 16
      %v1299 = vrot.slane %v1297, 4
      %v1300 = vshll.u32 %v1167, 16
      %v1302 = vrot.slane %v1300, 5
      %v1303 = vor.u32 %v1299, %v1302
      %v1304 = vrot.slane %v1303, 4
      %v1306 = vshll.u32 %v1168, 16
      %v1308 = vrot.slane %v1306, 5
      %v1309 = vsel %vm226, %v1304, %v1308
      %v1310 = vshrl.u32 %v1168, 16
      %v1312 = vrot.slane %v1310, 4
      %v1313 = vor.u32 %v1312, %v1308
      %v1314 = vrot.slane %v1313, 4
      %v1316 = vshll.u32 %v1169, 16
      %v1318 = vrot.slane %v1316, 5
      %v1319 = vsel %vm226, %v1314, %v1318
      %v1321 = vshrl.u32 %v1170, 16
      %v1323 = vrot.slane %v1321, 4
      %v1324 = vshll.u32 %v1170, 16
      %v1326 = vrot.slane %v1324, 5
      %v1327 = vor.u32 %v1323, %v1326
      %v1328 = vrot.slane %v1327, 4
      %v1330 = vshll.u32 %v1171, 16
      %v1332 = vrot.slane %v1330, 5
      %v1333 = vsel %vm226, %v1328, %v1332
      %v1334 = vshrl.u32 %v1171, 16
      %v1336 = vrot.slane %v1334, 4
      %v1337 = vor.u32 %v1336, %v1332
      %v1338 = vrot.slane %v1337, 4
      %v1340 = vshll.u32 %v1172, 16
      %v1342 = vrot.slane %v1340, 5
      %v1343 = vsel %vm226, %v1338, %v1342
      %v1345 = vshrl.u32 %v1173, 16
      %v1347 = vrot.slane %v1345, 4
      %v1348 = vshll.u32 %v1173, 16
      %v1350 = vrot.slane %v1348, 5
      %v1351 = vor.u32 %v1347, %v1350
      %v1352 = vrot.slane %v1351, 4
      %v1354 = vshll.u32 %v1174, 16
      %v1356 = vrot.slane %v1354, 5
      %v1357 = vsel %vm226, %v1352, %v1356
      %v1358 = vshrl.u32 %v1174, 16
      %v1360 = vrot.slane %v1358, 4
      %v1361 = vor.u32 %v1360, %v1356
      %v1362 = vrot.slane %v1361, 4
      %v1364 = vshll.u32 %v1175, 16
      %v1366 = vrot.slane %v1364, 5
      %v1367 = vsel %vm226, %v1362, %v1366
      %s1368 = scalar_lea.vmem %s1, 6
      %v1369 = vld [vmem:[%s1368] sm:$0x3]
      %v1370 = vunpack.c.l.b16 %v1189
      %v1371 = vunpack.c.l.b16 %v1199
      %v1372 = vunpack.c.l.b16 %v1213
      %v1373 = vunpack.c.l.b16 %v1223
      %v1374 = vunpack.c.l.b16 %v1237
      %v1375 = vunpack.c.l.b16 %v1247
      %v1376 = vunpack.c.l.b16 %v1261
      %v1377 = vunpack.c.l.b16 %v1271
      %v1378 = vunpack.c.l.b16 %v1285
      %v1379 = vunpack.c.l.b16 %v1295
      %v1380 = vunpack.c.l.b16 %v1309
      %v1381 = vunpack.c.l.b16 %v1319
      %v1382 = vunpack.c.l.b16 %v1333
      %v1383 = vunpack.c.l.b16 %v1343
      %v1384 = vunpack.c.l.b16 %v1357
      %v1385 = vunpack.c.l.b16 %v1367
      %v1386 = vpack.c.b16 %v1371, %v1370
      %v1387 = vpack.c.b16 %v1373, %v1372
      %v1388 = vpack.c.b16 %v1375, %v1374
      %v1389 = vpack.c.b16 %v1377, %v1376
      %v1390 = vpack.c.b16 %v1379, %v1378
      %v1391 = vpack.c.b16 %v1381, %v1380
      %v1392 = vpack.c.b16 %v1383, %v1382
      %v1393 = vpack.c.b16 %v1385, %v1384
      %v1395 = vsel %vm649, %v1386, 0
      %v1398 = vsel %vm649, %v1387, 0
      %v1401 = vsel %vm649, %v1388, 0
      %v1404 = vsel %vm649, %v1389, 0
      %v1407 = vsel %vm649, %v1390, 0
      %v1410 = vsel %vm649, %v1391, 0
      %v1413 = vsel %vm649, %v1392, 0
      %v1416 = vsel %vm649, %v1393, 0
      %v1419 = vsel %vm674, %v1369, 0
      %1421 = vmatpush.bf16.msra.mxu0 0
      %1422 = vmatpush.bf16.msra.mxu0 0
      %1423 = vmatpush.bf16.msra.mxu0 0
      %1424 = vmatpush.bf16.msra.mxu0 0
      %1425 = vmatpush.bf16.msra.mxu0 0
      %1426 = vmatpush.bf16.msra.mxu0 0
      %1427 = vmatpush.bf16.msra.mxu0 0
      %1428 = vmatpush.bf16.msra.mxu0 %v1419
      %1429 = vmatmul.bf16.gmra.mxu0 %v1395
      %v1430 = vpop.f32.mrf.mxu0
      %v1431 = vadd.f32 0.0, %v1430
      %v1432 = vpop.f32.mrf.mxu0
      %v1433 = vadd.f32 0.0, %v1432
      %1434 = vmatmul.bf16.gmra.mxu0 %v1398
      %v1435 = vpop.f32.mrf.mxu0
      %v1436 = vadd.f32 0.0, %v1435
      %v1437 = vpop.f32.mrf.mxu0
      %v1438 = vadd.f32 0.0, %v1437
      %1439 = vmatmul.bf16.gmra.mxu0 %v1401
      %v1440 = vpop.f32.mrf.mxu0
      %v1441 = vadd.f32 0.0, %v1440
      %v1442 = vpop.f32.mrf.mxu0
      %v1443 = vadd.f32 0.0, %v1442
      %1444 = vmatmul.bf16.gmra.mxu0 %v1404
      %v1445 = vpop.f32.mrf.mxu0
      %v1446 = vadd.f32 0.0, %v1445
      %v1447 = vpop.f32.mrf.mxu0
      %v1448 = vadd.f32 0.0, %v1447
      %1449 = vmatmul.bf16.gmra.mxu0 %v1407
      %v1450 = vpop.f32.mrf.mxu0
      %v1451 = vadd.f32 0.0, %v1450
      %v1452 = vpop.f32.mrf.mxu0
      %v1453 = vadd.f32 0.0, %v1452
      %1454 = vmatmul.bf16.gmra.mxu0 %v1410
      %v1455 = vpop.f32.mrf.mxu0
      %v1456 = vadd.f32 0.0, %v1455
      %v1457 = vpop.f32.mrf.mxu0
      %v1458 = vadd.f32 0.0, %v1457
      %1459 = vmatmul.bf16.gmra.mxu0 %v1413
      %v1460 = vpop.f32.mrf.mxu0
      %v1461 = vadd.f32 0.0, %v1460
      %v1462 = vpop.f32.mrf.mxu0
      %v1463 = vadd.f32 0.0, %v1462
      %1464 = vmatmul.bf16.gmra.mxu0 %v1416
      %v1465 = vpop.f32.mrf.mxu0
      %v1466 = vadd.f32 0.0, %v1465
      %v1467 = vpop.f32.mrf.mxu0
      %v1468 = vadd.f32 0.0, %v1467
      %1469 = vdwg.mxu0
      %v1470 = vadd.f32 %v1132, %v1431
      %v1471 = vadd.f32 %v1133, %v1433
      %v1472 = vadd.f32 %v1134, %v1436
      %v1473 = vadd.f32 %v1135, %v1438
      %v1474 = vadd.f32 %v1136, %v1441
      %v1475 = vadd.f32 %v1137, %v1443
      %v1476 = vadd.f32 %v1138, %v1446
      %v1477 = vadd.f32 %v1139, %v1448
      %v1478 = vadd.f32 %v1140, %v1451
      %v1479 = vadd.f32 %v1141, %v1453
      %v1480 = vadd.f32 %v1142, %v1456
      %v1481 = vadd.f32 %v1143, %v1458
      %v1482 = vadd.f32 %v1144, %v1461
      %v1483 = vadd.f32 %v1145, %v1463
      %v1484 = vadd.f32 %v1146, %v1466
      %v1485 = vadd.f32 %v1147, %v1468
      %v1486 = vld [vmem:[%s1151] sm:$0xe]
      %v1487 = vld [vmem:[%s1151 + $0x8] sm:$0x3]
      %v1488 = vld [vmem:[%s1151 + $0xc] sm:$0xe]
      %v1489 = vld [vmem:[%s1151 + $0x14] sm:$0x3]
      %v1490 = vld [vmem:[%s1151 + $0x18] sm:$0xe]
      %v1491 = vld [vmem:[%s1151 + $0x20] sm:$0x3]
      %v1492 = vld [vmem:[%s1151 + $0x24] sm:$0xe]
      %v1493 = vld [vmem:[%s1151 + $0x2c] sm:$0x3]
      %v1494 = vld [vmem:[%s1151 + $0x30] sm:$0xe]
      %v1495 = vld [vmem:[%s1151 + $0x38] sm:$0x3]
      %v1496 = vld [vmem:[%s1151 + $0x3c] sm:$0xe]
      %v1497 = vld [vmem:[%s1151 + $0x44] sm:$0x3]
      %v1498 = vld [vmem:[%s1151 + $0x48] sm:$0xe]
      %v1499 = vld [vmem:[%s1151 + $0x50] sm:$0x3]
      %v1500 = vld [vmem:[%s1151 + $0x54] sm:$0xe]
      %v1501 = vld [vmem:[%s1151 + $0x5c] sm:$0x3]
      %v1503 = vshrl.u32 %v1486, 16
      %v1505 = vrot.slane %v1503, 5
      %v1506 = vshll.u32 %v1486, 16
      %v1508 = vrot.slane %v1506, 6
      %v1509 = vor.u32 %v1505, %v1508
      %v1510 = vrot.slane %v1509, 4
      %v1511 = vrot.slane %v1190, 5
      %v1512 = vrot.slane %v1186, 6
      %v1513 = vor.u32 %v1511, %v1512
      %v1514 = vsel %vm438, %v1510, %v1513
      %v1515 = vrot.slane %v1513, 4
      %v1517 = vshrl.u32 %v1487, 16
      %v1519 = vrot.slane %v1517, 5
      %v1520 = vshll.u32 %v1487, 16
      %v1522 = vrot.slane %v1520, 6
      %v1523 = vor.u32 %v1519, %v1522
      %v1524 = vsel %vm438, %v1515, %v1523
      %v1526 = vshrl.u32 %v1488, 16
      %v1528 = vrot.slane %v1526, 5
      %v1529 = vshll.u32 %v1488, 16
      %v1531 = vrot.slane %v1529, 6
      %v1532 = vor.u32 %v1528, %v1531
      %v1533 = vrot.slane %v1532, 4
      %v1534 = vrot.slane %v1214, 5
      %v1535 = vrot.slane %v1210, 6
      %v1536 = vor.u32 %v1534, %v1535
      %v1537 = vsel %vm438, %v1533, %v1536
      %v1538 = vrot.slane %v1536, 4
      %v1540 = vshrl.u32 %v1489, 16
      %v1542 = vrot.slane %v1540, 5
      %v1543 = vshll.u32 %v1489, 16
      %v1545 = vrot.slane %v1543, 6
      %v1546 = vor.u32 %v1542, %v1545
      %v1547 = vsel %vm438, %v1538, %v1546
      %v1549 = vshrl.u32 %v1490, 16
      %v1551 = vrot.slane %v1549, 5
      %v1552 = vshll.u32 %v1490, 16
      %v1554 = vrot.slane %v1552, 6
      %v1555 = vor.u32 %v1551, %v1554
      %v1556 = vrot.slane %v1555, 4
      %v1557 = vrot.slane %v1238, 5
      %v1558 = vrot.slane %v1234, 6
      %v1559 = vor.u32 %v1557, %v1558
      %v1560 = vsel %vm438, %v1556, %v1559
      %v1561 = vrot.slane %v1559, 4
      %v1563 = vshrl.u32 %v1491, 16
      %v1565 = vrot.slane %v1563, 5
      %v1566 = vshll.u32 %v1491, 16
      %v1568 = vrot.slane %v1566, 6
      %v1569 = vor.u32 %v1565, %v1568
      %v1570 = vsel %vm438, %v1561, %v1569
      %v1572 = vshrl.u32 %v1492, 16
      %v1574 = vrot.slane %v1572, 5
      %v1575 = vshll.u32 %v1492, 16
      %v1577 = vrot.slane %v1575, 6
      %v1578 = vor.u32 %v1574, %v1577
      %v1579 = vrot.slane %v1578, 4
      %v1580 = vrot.slane %v1262, 5
      %v1581 = vrot.slane %v1258, 6
      %v1582 = vor.u32 %v1580, %v1581
      %v1583 = vsel %vm438, %v1579, %v1582
      %v1584 = vrot.slane %v1582, 4
      %v1586 = vshrl.u32 %v1493, 16
      %v1588 = vrot.slane %v1586, 5
      %v1589 = vshll.u32 %v1493, 16
      %v1591 = vrot.slane %v1589, 6
      %v1592 = vor.u32 %v1588, %v1591
      %v1593 = vsel %vm438, %v1584, %v1592
      %v1595 = vshrl.u32 %v1494, 16
      %v1597 = vrot.slane %v1595, 5
      %v1598 = vshll.u32 %v1494, 16
      %v1600 = vrot.slane %v1598, 6
      %v1601 = vor.u32 %v1597, %v1600
      %v1602 = vrot.slane %v1601, 4
      %v1603 = vrot.slane %v1286, 5
      %v1604 = vrot.slane %v1282, 6
      %v1605 = vor.u32 %v1603, %v1604
      %v1606 = vsel %vm438, %v1602, %v1605
      %v1607 = vrot.slane %v1605, 4
      %v1609 = vshrl.u32 %v1495, 16
      %v1611 = vrot.slane %v1609, 5
      %v1612 = vshll.u32 %v1495, 16
      %v1614 = vrot.slane %v1612, 6
      %v1615 = vor.u32 %v1611, %v1614
      %v1616 = vsel %vm438, %v1607, %v1615
      %v1618 = vshrl.u32 %v1496, 16
      %v1620 = vrot.slane %v1618, 5
      %v1621 = vshll.u32 %v1496, 16
      %v1623 = vrot.slane %v1621, 6
      %v1624 = vor.u32 %v1620, %v1623
      %v1625 = vrot.slane %v1624, 4
      %v1626 = vrot.slane %v1310, 5
      %v1627 = vrot.slane %v1306, 6
      %v1628 = vor.u32 %v1626, %v1627
      %v1629 = vsel %vm438, %v1625, %v1628
      %v1630 = vrot.slane %v1628, 4
      %v1632 = vshrl.u32 %v1497, 16
      %v1634 = vrot.slane %v1632, 5
      %v1635 = vshll.u32 %v1497, 16
      %v1637 = vrot.slane %v1635, 6
      %v1638 = vor.u32 %v1634, %v1637
      %v1639 = vsel %vm438, %v1630, %v1638
      %v1641 = vshrl.u32 %v1498, 16
      %v1643 = vrot.slane %v1641, 5
      %v1644 = vshll.u32 %v1498, 16
      %v1646 = vrot.slane %v1644, 6
      %v1647 = vor.u32 %v1643, %v1646
      %v1648 = vrot.slane %v1647, 4
      %v1649 = vrot.slane %v1334, 5
      %v1650 = vrot.slane %v1330, 6
      %v1651 = vor.u32 %v1649, %v1650
      %v1652 = vsel %vm438, %v1648, %v1651
      %v1653 = vrot.slane %v1651, 4
      %v1655 = vshrl.u32 %v1499, 16
      %v1657 = vrot.slane %v1655, 5
      %v1658 = vshll.u32 %v1499, 16
      %v1660 = vrot.slane %v1658, 6
      %v1661 = vor.u32 %v1657, %v1660
      %v1662 = vsel %vm438, %v1653, %v1661
      %v1664 = vshrl.u32 %v1500, 16
      %v1666 = vrot.slane %v1664, 5
      %v1667 = vshll.u32 %v1500, 16
      %v1669 = vrot.slane %v1667, 6
      %v1670 = vor.u32 %v1666, %v1669
      %v1671 = vrot.slane %v1670, 4
      %v1672 = vrot.slane %v1358, 5
      %v1673 = vrot.slane %v1354, 6
      %v1674 = vor.u32 %v1672, %v1673
      %v1675 = vsel %vm438, %v1671, %v1674
      %v1676 = vrot.slane %v1674, 4
      %v1678 = vshrl.u32 %v1501, 16
      %v1680 = vrot.slane %v1678, 5
      %v1681 = vshll.u32 %v1501, 16
      %v1683 = vrot.slane %v1681, 6
      %v1684 = vor.u32 %v1680, %v1683
      %v1685 = vsel %vm438, %v1676, %v1684
      %s1686 = scalar_lea.vmem %s1, 8
      %v1687 = vld [vmem:[%s1686] sm:$0x3]
      %v1688 = vunpack.c.l.b16 %v1514
      %v1689 = vunpack.c.l.b16 %v1524
      %v1690 = vunpack.c.l.b16 %v1537
      %v1691 = vunpack.c.l.b16 %v1547
      %v1692 = vunpack.c.l.b16 %v1560
      %v1693 = vunpack.c.l.b16 %v1570
      %v1694 = vunpack.c.l.b16 %v1583
      %v1695 = vunpack.c.l.b16 %v1593
      %v1696 = vunpack.c.l.b16 %v1606
      %v1697 = vunpack.c.l.b16 %v1616
      %v1698 = vunpack.c.l.b16 %v1629
      %v1699 = vunpack.c.l.b16 %v1639
      %v1700 = vunpack.c.l.b16 %v1652
      %v1701 = vunpack.c.l.b16 %v1662
      %v1702 = vunpack.c.l.b16 %v1675
      %v1703 = vunpack.c.l.b16 %v1685
      %v1704 = vpack.c.b16 %v1689, %v1688
      %v1705 = vpack.c.b16 %v1691, %v1690
      %v1706 = vpack.c.b16 %v1693, %v1692
      %v1707 = vpack.c.b16 %v1695, %v1694
      %v1708 = vpack.c.b16 %v1697, %v1696
      %v1709 = vpack.c.b16 %v1699, %v1698
      %v1710 = vpack.c.b16 %v1701, %v1700
      %v1711 = vpack.c.b16 %v1703, %v1702
      %v1713 = vsel %vm649, %v1704, 0
      %v1716 = vsel %vm649, %v1705, 0
      %v1719 = vsel %vm649, %v1706, 0
      %v1722 = vsel %vm649, %v1707, 0
      %v1725 = vsel %vm649, %v1708, 0
      %v1728 = vsel %vm649, %v1709, 0
      %v1731 = vsel %vm649, %v1710, 0
      %v1734 = vsel %vm649, %v1711, 0
      %v1737 = vsel %vm674, %v1687, 0
      %1739 = vmatpush.bf16.msra.mxu0 0
      %1740 = vmatpush.bf16.msra.mxu0 0
      %1741 = vmatpush.bf16.msra.mxu0 0
      %1742 = vmatpush.bf16.msra.mxu0 0
      %1743 = vmatpush.bf16.msra.mxu0 0
      %1744 = vmatpush.bf16.msra.mxu0 0
      %1745 = vmatpush.bf16.msra.mxu0 0
      %1746 = vmatpush.bf16.msra.mxu0 %v1737
      %1747 = vmatmul.bf16.gmra.mxu0 %v1713
      %v1748 = vpop.f32.mrf.mxu0
      %v1749 = vadd.f32 0.0, %v1748
      %v1750 = vpop.f32.mrf.mxu0
      %v1751 = vadd.f32 0.0, %v1750
      %1752 = vmatmul.bf16.gmra.mxu0 %v1716
      %v1753 = vpop.f32.mrf.mxu0
      %v1754 = vadd.f32 0.0, %v1753
      %v1755 = vpop.f32.mrf.mxu0
      %v1756 = vadd.f32 0.0, %v1755
      %1757 = vmatmul.bf16.gmra.mxu0 %v1719
      %v1758 = vpop.f32.mrf.mxu0
      %v1759 = vadd.f32 0.0, %v1758
      %v1760 = vpop.f32.mrf.mxu0
      %v1761 = vadd.f32 0.0, %v1760
      %1762 = vmatmul.bf16.gmra.mxu0 %v1722
      %v1763 = vpop.f32.mrf.mxu0
      %v1764 = vadd.f32 0.0, %v1763
      %v1765 = vpop.f32.mrf.mxu0
      %v1766 = vadd.f32 0.0, %v1765
      %1767 = vmatmul.bf16.gmra.mxu0 %v1725
      %v1768 = vpop.f32.mrf.mxu0
      %v1769 = vadd.f32 0.0, %v1768
      %v1770 = vpop.f32.mrf.mxu0
      %v1771 = vadd.f32 0.0, %v1770
      %1772 = vmatmul.bf16.gmra.mxu0 %v1728
      %v1773 = vpop.f32.mrf.mxu0
      %v1774 = vadd.f32 0.0, %v1773
      %v1775 = vpop.f32.mrf.mxu0
      %v1776 = vadd.f32 0.0, %v1775
      %1777 = vmatmul.bf16.gmra.mxu0 %v1731
      %v1778 = vpop.f32.mrf.mxu0
      %v1779 = vadd.f32 0.0, %v1778
      %v1780 = vpop.f32.mrf.mxu0
      %v1781 = vadd.f32 0.0, %v1780
      %1782 = vmatmul.bf16.gmra.mxu0 %v1734
      %v1783 = vpop.f32.mrf.mxu0
      %v1784 = vadd.f32 0.0, %v1783
      %v1785 = vpop.f32.mrf.mxu0
      %v1786 = vadd.f32 0.0, %v1785
      %1787 = vdwg.mxu0
      %v1788 = vadd.f32 %v1470, %v1749
      %v1789 = vadd.f32 %v1471, %v1751
      %v1790 = vadd.f32 %v1472, %v1754
      %v1791 = vadd.f32 %v1473, %v1756
      %v1792 = vadd.f32 %v1474, %v1759
      %v1793 = vadd.f32 %v1475, %v1761
      %v1794 = vadd.f32 %v1476, %v1764
      %v1795 = vadd.f32 %v1477, %v1766
      %v1796 = vadd.f32 %v1478, %v1769
      %v1797 = vadd.f32 %v1479, %v1771
      %v1798 = vadd.f32 %v1480, %v1774
      %v1799 = vadd.f32 %v1481, %v1776
      %v1800 = vadd.f32 %v1482, %v1779
      %v1801 = vadd.f32 %v1483, %v1781
      %v1802 = vadd.f32 %v1484, %v1784
      %v1803 = vadd.f32 %v1485, %v1786
      %v1804 = vld [vmem:[%s1151] sm:$0xc]
      %v1805 = vld [vmem:[%s1151 + $0x8] sm:$0x7]
      %v1806 = vld [vmem:[%s1151 + $0xc] sm:$0xc]
      %v1807 = vld [vmem:[%s1151 + $0x14] sm:$0x7]
      %v1808 = vld [vmem:[%s1151 + $0x18] sm:$0xc]
      %v1809 = vld [vmem:[%s1151 + $0x20] sm:$0x7]
      %v1810 = vld [vmem:[%s1151 + $0x24] sm:$0xc]
      %v1811 = vld [vmem:[%s1151 + $0x2c] sm:$0x7]
      %v1812 = vld [vmem:[%s1151 + $0x30] sm:$0xc]
      %v1813 = vld [vmem:[%s1151 + $0x38] sm:$0x7]
      %v1814 = vld [vmem:[%s1151 + $0x3c] sm:$0xc]
      %v1815 = vld [vmem:[%s1151 + $0x44] sm:$0x7]
      %v1816 = vld [vmem:[%s1151 + $0x48] sm:$0xc]
      %v1817 = vld [vmem:[%s1151 + $0x50] sm:$0x7]
      %v1818 = vld [vmem:[%s1151 + $0x54] sm:$0xc]
      %v1819 = vld [vmem:[%s1151 + $0x5c] sm:$0x7]
      %v1821 = vshrl.u32 %v1804, 16
      %v1823 = vrot.slane %v1821, 6
      %v1824 = vshll.u32 %v1804, 16
      %v1826 = vrot.slane %v1824, 7
      %v1827 = vor.u32 %v1823, %v1826
      %v1828 = vrot.slane %v1827, 4
      %v1829 = vrot.slane %v1190, 6
      %v1830 = vrot.slane %v1186, 7
      %v1831 = vor.u32 %v1829, %v1830
      %v1832 = vsel %vm845, %v1828, %v1831
      %v1833 = vrot.slane %v1831, 4
      %v1835 = vshrl.u32 %v1805, 16
      %v1837 = vrot.slane %v1835, 6
      %v1838 = vshll.u32 %v1805, 16
      %v1840 = vrot.slane %v1838, 7
      %v1841 = vor.u32 %v1837, %v1840
      %v1842 = vsel %vm845, %v1833, %v1841
      %v1844 = vshrl.u32 %v1806, 16
      %v1846 = vrot.slane %v1844, 6
      %v1847 = vshll.u32 %v1806, 16
      %v1849 = vrot.slane %v1847, 7
      %v1850 = vor.u32 %v1846, %v1849
      %v1851 = vrot.slane %v1850, 4
      %v1852 = vrot.slane %v1214, 6
      %v1853 = vrot.slane %v1210, 7
      %v1854 = vor.u32 %v1852, %v1853
      %v1855 = vsel %vm845, %v1851, %v1854
      %v1856 = vrot.slane %v1854, 4
      %v1858 = vshrl.u32 %v1807, 16
      %v1860 = vrot.slane %v1858, 6
      %v1861 = vshll.u32 %v1807, 16
      %v1863 = vrot.slane %v1861, 7
      %v1864 = vor.u32 %v1860, %v1863
      %v1865 = vsel %vm845, %v1856, %v1864
      %v1867 = vshrl.u32 %v1808, 16
      %v1869 = vrot.slane %v1867, 6
      %v1870 = vshll.u32 %v1808, 16
      %v1872 = vrot.slane %v1870, 7
      %v1873 = vor.u32 %v1869, %v1872
      %v1874 = vrot.slane %v1873, 4
      %v1875 = vrot.slane %v1238, 6
      %v1876 = vrot.slane %v1234, 7
      %v1877 = vor.u32 %v1875, %v1876
      %v1878 = vsel %vm845, %v1874, %v1877
      %v1879 = vrot.slane %v1877, 4
      %v1881 = vshrl.u32 %v1809, 16
      %v1883 = vrot.slane %v1881, 6
      %v1884 = vshll.u32 %v1809, 16
      %v1886 = vrot.slane %v1884, 7
      %v1887 = vor.u32 %v1883, %v1886
      %v1888 = vsel %vm845, %v1879, %v1887
      %v1890 = vshrl.u32 %v1810, 16
      %v1892 = vrot.slane %v1890, 6
      %v1893 = vshll.u32 %v1810, 16
      %v1895 = vrot.slane %v1893, 7
      %v1896 = vor.u32 %v1892, %v1895
      %v1897 = vrot.slane %v1896, 4
      %v1898 = vrot.slane %v1262, 6
      %v1899 = vrot.slane %v1258, 7
      %v1900 = vor.u32 %v1898, %v1899
      %v1901 = vsel %vm845, %v1897, %v1900
      %v1902 = vrot.slane %v1900, 4
      %v1904 = vshrl.u32 %v1811, 16
      %v1906 = vrot.slane %v1904, 6
      %v1907 = vshll.u32 %v1811, 16
      %v1909 = vrot.slane %v1907, 7
      %v1910 = vor.u32 %v1906, %v1909
      %v1911 = vsel %vm845, %v1902, %v1910
      %v1913 = vshrl.u32 %v1812, 16
      %v1915 = vrot.slane %v1913, 6
      %v1916 = vshll.u32 %v1812, 16
      %v1918 = vrot.slane %v1916, 7
      %v1919 = vor.u32 %v1915, %v1918
      %v1920 = vrot.slane %v1919, 4
      %v1921 = vrot.slane %v1286, 6
      %v1922 = vrot.slane %v1282, 7
      %v1923 = vor.u32 %v1921, %v1922
      %v1924 = vsel %vm845, %v1920, %v1923
      %v1925 = vrot.slane %v1923, 4
      %v1927 = vshrl.u32 %v1813, 16
      %v1929 = vrot.slane %v1927, 6
      %v1930 = vshll.u32 %v1813, 16
      %v1932 = vrot.slane %v1930, 7
      %v1933 = vor.u32 %v1929, %v1932
      %v1934 = vsel %vm845, %v1925, %v1933
      %v1936 = vshrl.u32 %v1814, 16
      %v1938 = vrot.slane %v1936, 6
      %v1939 = vshll.u32 %v1814, 16
      %v1941 = vrot.slane %v1939, 7
      %v1942 = vor.u32 %v1938, %v1941
      %v1943 = vrot.slane %v1942, 4
      %v1944 = vrot.slane %v1310, 6
      %v1945 = vrot.slane %v1306, 7
      %v1946 = vor.u32 %v1944, %v1945
      %v1947 = vsel %vm845, %v1943, %v1946
      %v1948 = vrot.slane %v1946, 4
      %v1950 = vshrl.u32 %v1815, 16
      %v1952 = vrot.slane %v1950, 6
      %v1953 = vshll.u32 %v1815, 16
      %v1955 = vrot.slane %v1953, 7
      %v1956 = vor.u32 %v1952, %v1955
      %v1957 = vsel %vm845, %v1948, %v1956
      %v1959 = vshrl.u32 %v1816, 16
      %v1961 = vrot.slane %v1959, 6
      %v1962 = vshll.u32 %v1816, 16
      %v1964 = vrot.slane %v1962, 7
      %v1965 = vor.u32 %v1961, %v1964
      %v1966 = vrot.slane %v1965, 4
      %v1967 = vrot.slane %v1334, 6
      %v1968 = vrot.slane %v1330, 7
      %v1969 = vor.u32 %v1967, %v1968
      %v1970 = vsel %vm845, %v1966, %v1969
      %v1971 = vrot.slane %v1969, 4
      %v1973 = vshrl.u32 %v1817, 16
      %v1975 = vrot.slane %v1973, 6
      %v1976 = vshll.u32 %v1817, 16
      %v1978 = vrot.slane %v1976, 7
      %v1979 = vor.u32 %v1975, %v1978
      %v1980 = vsel %vm845, %v1971, %v1979
      %v1982 = vshrl.u32 %v1818, 16
      %v1984 = vrot.slane %v1982, 6
      %v1985 = vshll.u32 %v1818, 16
      %v1987 = vrot.slane %v1985, 7
      %v1988 = vor.u32 %v1984, %v1987
      %v1989 = vrot.slane %v1988, 4
      %v1990 = vrot.slane %v1358, 6
      %v1991 = vrot.slane %v1354, 7
      %v1992 = vor.u32 %v1990, %v1991
      %v1993 = vsel %vm845, %v1989, %v1992
      %v1994 = vrot.slane %v1992, 4
      %v1996 = vshrl.u32 %v1819, 16
      %v1998 = vrot.slane %v1996, 6
      %v1999 = vshll.u32 %v1819, 16
      %v2001 = vrot.slane %v1999, 7
      %v2002 = vor.u32 %v1998, %v2001
      %v2003 = vsel %vm845, %v1994, %v2002
      %s2004 = scalar_lea.vmem %s1, 10
      %v2005 = vld [vmem:[%s2004] sm:$0x3]
      %v2006 = vunpack.c.l.b16 %v1832
      %v2007 = vunpack.c.l.b16 %v1842
      %v2008 = vunpack.c.l.b16 %v1855
      %v2009 = vunpack.c.l.b16 %v1865
      %v2010 = vunpack.c.l.b16 %v1878
      %v2011 = vunpack.c.l.b16 %v1888
      %v2012 = vunpack.c.l.b16 %v1901
      %v2013 = vunpack.c.l.b16 %v1911
      %v2014 = vunpack.c.l.b16 %v1924
      %v2015 = vunpack.c.l.b16 %v1934
      %v2016 = vunpack.c.l.b16 %v1947
      %v2017 = vunpack.c.l.b16 %v1957
      %v2018 = vunpack.c.l.b16 %v1970
      %v2019 = vunpack.c.l.b16 %v1980
      %v2020 = vunpack.c.l.b16 %v1993
      %v2021 = vunpack.c.l.b16 %v2003
      %v2022 = vpack.c.b16 %v2007, %v2006
      %v2023 = vpack.c.b16 %v2009, %v2008
      %v2024 = vpack.c.b16 %v2011, %v2010
      %v2025 = vpack.c.b16 %v2013, %v2012
      %v2026 = vpack.c.b16 %v2015, %v2014
      %v2027 = vpack.c.b16 %v2017, %v2016
      %v2028 = vpack.c.b16 %v2019, %v2018
      %v2029 = vpack.c.b16 %v2021, %v2020
      %v2031 = vsel %vm649, %v2022, 0
      %v2034 = vsel %vm649, %v2023, 0
      %v2037 = vsel %vm649, %v2024, 0
      %v2040 = vsel %vm649, %v2025, 0
      %v2043 = vsel %vm649, %v2026, 0
      %v2046 = vsel %vm649, %v2027, 0
      %v2049 = vsel %vm649, %v2028, 0
      %v2052 = vsel %vm649, %v2029, 0
      %v2055 = vsel %vm674, %v2005, 0
      %2057 = vmatpush.bf16.msra.mxu0 0
      %2058 = vmatpush.bf16.msra.mxu0 0
      %2059 = vmatpush.bf16.msra.mxu0 0
      %2060 = vmatpush.bf16.msra.mxu0 0
      %2061 = vmatpush.bf16.msra.mxu0 0
      %2062 = vmatpush.bf16.msra.mxu0 0
      %2063 = vmatpush.bf16.msra.mxu0 0
      %2064 = vmatpush.bf16.msra.mxu0 %v2055
      %2065 = vmatmul.bf16.gmra.mxu0 %v2031
      %v2066 = vpop.f32.mrf.mxu0
      %v2067 = vadd.f32 0.0, %v2066
      %v2068 = vpop.f32.mrf.mxu0
      %v2069 = vadd.f32 0.0, %v2068
      %2070 = vmatmul.bf16.gmra.mxu0 %v2034
      %v2071 = vpop.f32.mrf.mxu0
      %v2072 = vadd.f32 0.0, %v2071
      %v2073 = vpop.f32.mrf.mxu0
      %v2074 = vadd.f32 0.0, %v2073
      %2075 = vmatmul.bf16.gmra.mxu0 %v2037
      %v2076 = vpop.f32.mrf.mxu0
      %v2077 = vadd.f32 0.0, %v2076
      %v2078 = vpop.f32.mrf.mxu0
      %v2079 = vadd.f32 0.0, %v2078
      %2080 = vmatmul.bf16.gmra.mxu0 %v2040
      %v2081 = vpop.f32.mrf.mxu0
      %v2082 = vadd.f32 0.0, %v2081
      %v2083 = vpop.f32.mrf.mxu0
      %v2084 = vadd.f32 0.0, %v2083
      %2085 = vmatmul.bf16.gmra.mxu0 %v2043
      %v2086 = vpop.f32.mrf.mxu0
      %v2087 = vadd.f32 0.0, %v2086
      %v2088 = vpop.f32.mrf.mxu0
      %v2089 = vadd.f32 0.0, %v2088
      %2090 = vmatmul.bf16.gmra.mxu0 %v2046
      %v2091 = vpop.f32.mrf.mxu0
      %v2092 = vadd.f32 0.0, %v2091
      %v2093 = vpop.f32.mrf.mxu0
      %v2094 = vadd.f32 0.0, %v2093
      %2095 = vmatmul.bf16.gmra.mxu0 %v2049
      %v2096 = vpop.f32.mrf.mxu0
      %v2097 = vadd.f32 0.0, %v2096
      %v2098 = vpop.f32.mrf.mxu0
      %v2099 = vadd.f32 0.0, %v2098
      %2100 = vmatmul.bf16.gmra.mxu0 %v2052
      %v2101 = vpop.f32.mrf.mxu0
      %v2102 = vadd.f32 0.0, %v2101
      %v2103 = vpop.f32.mrf.mxu0
      %v2104 = vadd.f32 0.0, %v2103
      %2105 = vdwg.mxu0
      %v2106 = vadd.f32 %v1788, %v2067
      %v2107 = vadd.f32 %v1789, %v2069
      %v2108 = vadd.f32 %v1790, %v2072
      %v2109 = vadd.f32 %v1791, %v2074
      %v2110 = vadd.f32 %v1792, %v2077
      %v2111 = vadd.f32 %v1793, %v2079
      %v2112 = vadd.f32 %v1794, %v2082
      %v2113 = vadd.f32 %v1795, %v2084
      %v2114 = vadd.f32 %v1796, %v2087
      %v2115 = vadd.f32 %v1797, %v2089
      %v2116 = vadd.f32 %v1798, %v2092
      %v2117 = vadd.f32 %v1799, %v2094
      %v2118 = vadd.f32 %v1800, %v2097
      %v2119 = vadd.f32 %v1801, %v2099
      %v2120 = vadd.f32 %v1802, %v2102
      %v2121 = vadd.f32 %v1803, %v2104
      %s2122 = sadd.s32 %s195, 5
      %s2123 = smul.u32 %s2122, 3
      %s2124 = smul.addr %s2123, 4
      %s2125 = scalar_lea.vmem %s183, %s2124
      %v2126 = vld [vmem:[%s2125] sm:$0xf]
      %v2127 = vld [vmem:[%s2125 + $0x4] sm:$0xf]
      %v2128 = vld [vmem:[%s2125 + $0x8] sm:$0x1]
      %v2129 = vld [vmem:[%s2125 + $0xc] sm:$0xf]
      %v2130 = vld [vmem:[%s2125 + $0x10] sm:$0xf]
      %v2131 = vld [vmem:[%s2125 + $0x14] sm:$0x1]
      %v2132 = vld [vmem:[%s2125 + $0x18] sm:$0xf]
      %v2133 = vld [vmem:[%s2125 + $0x1c] sm:$0xf]
      %v2134 = vld [vmem:[%s2125 + $0x20] sm:$0x1]
      %v2135 = vld [vmem:[%s2125 + $0x24] sm:$0xf]
      %v2136 = vld [vmem:[%s2125 + $0x28] sm:$0xf]
      %v2137 = vld [vmem:[%s2125 + $0x2c] sm:$0x1]
      %v2138 = vld [vmem:[%s2125 + $0x30] sm:$0xf]
      %v2139 = vld [vmem:[%s2125 + $0x34] sm:$0xf]
      %v2140 = vld [vmem:[%s2125 + $0x38] sm:$0x1]
      %v2141 = vld [vmem:[%s2125 + $0x3c] sm:$0xf]
      %v2142 = vld [vmem:[%s2125 + $0x40] sm:$0xf]
      %v2143 = vld [vmem:[%s2125 + $0x44] sm:$0x1]
      %v2144 = vld [vmem:[%s2125 + $0x48] sm:$0xf]
      %v2145 = vld [vmem:[%s2125 + $0x4c] sm:$0xf]
      %v2146 = vld [vmem:[%s2125 + $0x50] sm:$0x1]
      %v2147 = vld [vmem:[%s2125 + $0x54] sm:$0xf]
      %v2148 = vld [vmem:[%s2125 + $0x58] sm:$0xf]
      %v2149 = vld [vmem:[%s2125 + $0x5c] sm:$0x1]
      %v2151 = vshrl.u32 %v2126, 16
      %v2153 = vrot.slane %v2151, 4
      %v2154 = vshll.u32 %v2126, 16
      %v2156 = vrot.slane %v2154, 5
      %v2157 = vor.u32 %v2153, %v2156
      %v2158 = vrot.slane %v2157, 4
      %v2160 = vshll.u32 %v2127, 16
      %v2162 = vrot.slane %v2160, 5
      %v2163 = vsel %vm226, %v2158, %v2162
      %v2164 = vshrl.u32 %v2127, 16
      %v2166 = vrot.slane %v2164, 4
      %v2167 = vor.u32 %v2166, %v2162
      %v2168 = vrot.slane %v2167, 4
      %v2170 = vshll.u32 %v2128, 16
      %v2172 = vrot.slane %v2170, 5
      %v2173 = vsel %vm226, %v2168, %v2172
      %v2175 = vshrl.u32 %v2129, 16
      %v2177 = vrot.slane %v2175, 4
      %v2178 = vshll.u32 %v2129, 16
      %v2180 = vrot.slane %v2178, 5
      %v2181 = vor.u32 %v2177, %v2180
      %v2182 = vrot.slane %v2181, 4
      %v2184 = vshll.u32 %v2130, 16
      %v2186 = vrot.slane %v2184, 5
      %v2187 = vsel %vm226, %v2182, %v2186
      %v2188 = vshrl.u32 %v2130, 16
      %v2190 = vrot.slane %v2188, 4
      %v2191 = vor.u32 %v2190, %v2186
      %v2192 = vrot.slane %v2191, 4
      %v2194 = vshll.u32 %v2131, 16
      %v2196 = vrot.slane %v2194, 5
      %v2197 = vsel %vm226, %v2192, %v2196
      %v2199 = vshrl.u32 %v2132, 16
      %v2201 = vrot.slane %v2199, 4
      %v2202 = vshll.u32 %v2132, 16
      %v2204 = vrot.slane %v2202, 5
      %v2205 = vor.u32 %v2201, %v2204
      %v2206 = vrot.slane %v2205, 4
      %v2208 = vshll.u32 %v2133, 16
      %v2210 = vrot.slane %v2208, 5
      %v2211 = vsel %vm226, %v2206, %v2210
      %v2212 = vshrl.u32 %v2133, 16
      %v2214 = vrot.slane %v2212, 4
      %v2215 = vor.u32 %v2214, %v2210
      %v2216 = vrot.slane %v2215, 4
      %v2218 = vshll.u32 %v2134, 16
      %v2220 = vrot.slane %v2218, 5
      %v2221 = vsel %vm226, %v2216, %v2220
      %v2223 = vshrl.u32 %v2135, 16
      %v2225 = vrot.slane %v2223, 4
      %v2226 = vshll.u32 %v2135, 16
      %v2228 = vrot.slane %v2226, 5
      %v2229 = vor.u32 %v2225, %v2228
      %v2230 = vrot.slane %v2229, 4
      %v2232 = vshll.u32 %v2136, 16
      %v2234 = vrot.slane %v2232, 5
      %v2235 = vsel %vm226, %v2230, %v2234
      %v2236 = vshrl.u32 %v2136, 16
      %v2238 = vrot.slane %v2236, 4
      %v2239 = vor.u32 %v2238, %v2234
      %v2240 = vrot.slane %v2239, 4
      %v2242 = vshll.u32 %v2137, 16
      %v2244 = vrot.slane %v2242, 5
      %v2245 = vsel %vm226, %v2240, %v2244
      %v2247 = vshrl.u32 %v2138, 16
      %v2249 = vrot.slane %v2247, 4
      %v2250 = vshll.u32 %v2138, 16
      %v2252 = vrot.slane %v2250, 5
      %v2253 = vor.u32 %v2249, %v2252
      %v2254 = vrot.slane %v2253, 4
      %v2256 = vshll.u32 %v2139, 16
      %v2258 = vrot.slane %v2256, 5
      %v2259 = vsel %vm226, %v2254, %v2258
      %v2260 = vshrl.u32 %v2139, 16
      %v2262 = vrot.slane %v2260, 4
      %v2263 = vor.u32 %v2262, %v2258
      %v2264 = vrot.slane %v2263, 4
      %v2266 = vshll.u32 %v2140, 16
      %v2268 = vrot.slane %v2266, 5
      %v2269 = vsel %vm226, %v2264, %v2268
      %v2271 = vshrl.u32 %v2141, 16
      %v2273 = vrot.slane %v2271, 4
      %v2274 = vshll.u32 %v2141, 16
      %v2276 = vrot.slane %v2274, 5
      %v2277 = vor.u32 %v2273, %v2276
      %v2278 = vrot.slane %v2277, 4
      %v2280 = vshll.u32 %v2142, 16
      %v2282 = vrot.slane %v2280, 5
      %v2283 = vsel %vm226, %v2278, %v2282
      %v2284 = vshrl.u32 %v2142, 16
      %v2286 = vrot.slane %v2284, 4
      %v2287 = vor.u32 %v2286, %v2282
      %v2288 = vrot.slane %v2287, 4
      %v2290 = vshll.u32 %v2143, 16
      %v2292 = vrot.slane %v2290, 5
      %v2293 = vsel %vm226, %v2288, %v2292
      %v2295 = vshrl.u32 %v2144, 16
      %v2297 = vrot.slane %v2295, 4
      %v2298 = vshll.u32 %v2144, 16
      %v2300 = vrot.slane %v2298, 5
      %v2301 = vor.u32 %v2297, %v2300
      %v2302 = vrot.slane %v2301, 4
      %v2304 = vshll.u32 %v2145, 16
      %v2306 = vrot.slane %v2304, 5
      %v2307 = vsel %vm226, %v2302, %v2306
      %v2308 = vshrl.u32 %v2145, 16
      %v2310 = vrot.slane %v2308, 4
      %v2311 = vor.u32 %v2310, %v2306
      %v2312 = vrot.slane %v2311, 4
      %v2314 = vshll.u32 %v2146, 16
      %v2316 = vrot.slane %v2314, 5
      %v2317 = vsel %vm226, %v2312, %v2316
      %v2319 = vshrl.u32 %v2147, 16
      %v2321 = vrot.slane %v2319, 4
      %v2322 = vshll.u32 %v2147, 16
      %v2324 = vrot.slane %v2322, 5
      %v2325 = vor.u32 %v2321, %v2324
      %v2326 = vrot.slane %v2325, 4
      %v2328 = vshll.u32 %v2148, 16
      %v2330 = vrot.slane %v2328, 5
      %v2331 = vsel %vm226, %v2326, %v2330
      %v2332 = vshrl.u32 %v2148, 16
      %v2334 = vrot.slane %v2332, 4
      %v2335 = vor.u32 %v2334, %v2330
      %v2336 = vrot.slane %v2335, 4
      %v2338 = vshll.u32 %v2149, 16
      %v2340 = vrot.slane %v2338, 5
      %v2341 = vsel %vm226, %v2336, %v2340
      %s2342 = scalar_lea.vmem %s1, 12
      %v2343 = vld [vmem:[%s2342] sm:$0x3]
      %v2344 = vunpack.c.l.b16 %v2163
      %v2345 = vunpack.c.l.b16 %v2173
      %v2346 = vunpack.c.l.b16 %v2187
      %v2347 = vunpack.c.l.b16 %v2197
      %v2348 = vunpack.c.l.b16 %v2211
      %v2349 = vunpack.c.l.b16 %v2221
      %v2350 = vunpack.c.l.b16 %v2235
      %v2351 = vunpack.c.l.b16 %v2245
      %v2352 = vunpack.c.l.b16 %v2259
      %v2353 = vunpack.c.l.b16 %v2269
      %v2354 = vunpack.c.l.b16 %v2283
      %v2355 = vunpack.c.l.b16 %v2293
      %v2356 = vunpack.c.l.b16 %v2307
      %v2357 = vunpack.c.l.b16 %v2317
      %v2358 = vunpack.c.l.b16 %v2331
      %v2359 = vunpack.c.l.b16 %v2341
      %v2360 = vpack.c.b16 %v2345, %v2344
      %v2361 = vpack.c.b16 %v2347, %v2346
      %v2362 = vpack.c.b16 %v2349, %v2348
      %v2363 = vpack.c.b16 %v2351, %v2350
      %v2364 = vpack.c.b16 %v2353, %v2352
      %v2365 = vpack.c.b16 %v2355, %v2354
      %v2366 = vpack.c.b16 %v2357, %v2356
      %v2367 = vpack.c.b16 %v2359, %v2358
      %v2369 = vsel %vm649, %v2360, 0
      %v2372 = vsel %vm649, %v2361, 0
      %v2375 = vsel %vm649, %v2362, 0
      %v2378 = vsel %vm649, %v2363, 0
      %v2381 = vsel %vm649, %v2364, 0
      %v2384 = vsel %vm649, %v2365, 0
      %v2387 = vsel %vm649, %v2366, 0
      %v2390 = vsel %vm649, %v2367, 0
      %v2393 = vsel %vm674, %v2343, 0
      %2395 = vmatpush.bf16.msra.mxu0 0
      %2396 = vmatpush.bf16.msra.mxu0 0
      %2397 = vmatpush.bf16.msra.mxu0 0
      %2398 = vmatpush.bf16.msra.mxu0 0
      %2399 = vmatpush.bf16.msra.mxu0 0
      %2400 = vmatpush.bf16.msra.mxu0 0
      %2401 = vmatpush.bf16.msra.mxu0 0
      %2402 = vmatpush.bf16.msra.mxu0 %v2393
      %2403 = vmatmul.bf16.gmra.mxu0 %v2369
      %v2404 = vpop.f32.mrf.mxu0
      %v2405 = vadd.f32 0.0, %v2404
      %v2406 = vpop.f32.mrf.mxu0
      %v2407 = vadd.f32 0.0, %v2406
      %2408 = vmatmul.bf16.gmra.mxu0 %v2372
      %v2409 = vpop.f32.mrf.mxu0
      %v2410 = vadd.f32 0.0, %v2409
      %v2411 = vpop.f32.mrf.mxu0
      %v2412 = vadd.f32 0.0, %v2411
      %2413 = vmatmul.bf16.gmra.mxu0 %v2375
      %v2414 = vpop.f32.mrf.mxu0
      %v2415 = vadd.f32 0.0, %v2414
      %v2416 = vpop.f32.mrf.mxu0
      %v2417 = vadd.f32 0.0, %v2416
      %2418 = vmatmul.bf16.gmra.mxu0 %v2378
      %v2419 = vpop.f32.mrf.mxu0
      %v2420 = vadd.f32 0.0, %v2419
      %v2421 = vpop.f32.mrf.mxu0
      %v2422 = vadd.f32 0.0, %v2421
      %2423 = vmatmul.bf16.gmra.mxu0 %v2381
      %v2424 = vpop.f32.mrf.mxu0
      %v2425 = vadd.f32 0.0, %v2424
      %v2426 = vpop.f32.mrf.mxu0
      %v2427 = vadd.f32 0.0, %v2426
      %2428 = vmatmul.bf16.gmra.mxu0 %v2384
      %v2429 = vpop.f32.mrf.mxu0
      %v2430 = vadd.f32 0.0, %v2429
      %v2431 = vpop.f32.mrf.mxu0
      %v2432 = vadd.f32 0.0, %v2431
      %2433 = vmatmul.bf16.gmra.mxu0 %v2387
      %v2434 = vpop.f32.mrf.mxu0
      %v2435 = vadd.f32 0.0, %v2434
      %v2436 = vpop.f32.mrf.mxu0
      %v2437 = vadd.f32 0.0, %v2436
      %2438 = vmatmul.bf16.gmra.mxu0 %v2390
      %v2439 = vpop.f32.mrf.mxu0
      %v2440 = vadd.f32 0.0, %v2439
      %v2441 = vpop.f32.mrf.mxu0
      %v2442 = vadd.f32 0.0, %v2441
      %2443 = vdwg.mxu0
      %v2444 = vadd.f32 %v2106, %v2405
      %v2445 = vadd.f32 %v2107, %v2407
      %v2446 = vadd.f32 %v2108, %v2410
      %v2447 = vadd.f32 %v2109, %v2412
      %v2448 = vadd.f32 %v2110, %v2415
      %v2449 = vadd.f32 %v2111, %v2417
      %v2450 = vadd.f32 %v2112, %v2420
      %v2451 = vadd.f32 %v2113, %v2422
      %v2452 = vadd.f32 %v2114, %v2425
      %v2453 = vadd.f32 %v2115, %v2427
      %v2454 = vadd.f32 %v2116, %v2430
      %v2455 = vadd.f32 %v2117, %v2432
      %v2456 = vadd.f32 %v2118, %v2435
      %v2457 = vadd.f32 %v2119, %v2437
      %v2458 = vadd.f32 %v2120, %v2440
      %v2459 = vadd.f32 %v2121, %v2442
      %v2460 = vld [vmem:[%s2125] sm:$0xe]
      %v2461 = vld [vmem:[%s2125 + $0x8] sm:$0x3]
      %v2462 = vld [vmem:[%s2125 + $0xc] sm:$0xe]
      %v2463 = vld [vmem:[%s2125 + $0x14] sm:$0x3]
      %v2464 = vld [vmem:[%s2125 + $0x18] sm:$0xe]
      %v2465 = vld [vmem:[%s2125 + $0x20] sm:$0x3]
      %v2466 = vld [vmem:[%s2125 + $0x24] sm:$0xe]
      %v2467 = vld [vmem:[%s2125 + $0x2c] sm:$0x3]
      %v2468 = vld [vmem:[%s2125 + $0x30] sm:$0xe]
      %v2469 = vld [vmem:[%s2125 + $0x38] sm:$0x3]
      %v2470 = vld [vmem:[%s2125 + $0x3c] sm:$0xe]
      %v2471 = vld [vmem:[%s2125 + $0x44] sm:$0x3]
      %v2472 = vld [vmem:[%s2125 + $0x48] sm:$0xe]
      %v2473 = vld [vmem:[%s2125 + $0x50] sm:$0x3]
      %v2474 = vld [vmem:[%s2125 + $0x54] sm:$0xe]
      %v2475 = vld [vmem:[%s2125 + $0x5c] sm:$0x3]
      %v2477 = vshrl.u32 %v2460, 16
      %v2479 = vrot.slane %v2477, 5
      %v2480 = vshll.u32 %v2460, 16
      %v2482 = vrot.slane %v2480, 6
      %v2483 = vor.u32 %v2479, %v2482
      %v2484 = vrot.slane %v2483, 4
      %v2485 = vrot.slane %v2164, 5
      %v2486 = vrot.slane %v2160, 6
      %v2487 = vor.u32 %v2485, %v2486
      %v2488 = vsel %vm438, %v2484, %v2487
      %v2489 = vrot.slane %v2487, 4
      %v2491 = vshrl.u32 %v2461, 16
      %v2493 = vrot.slane %v2491, 5
      %v2494 = vshll.u32 %v2461, 16
      %v2496 = vrot.slane %v2494, 6
      %v2497 = vor.u32 %v2493, %v2496
      %v2498 = vsel %vm438, %v2489, %v2497
      %v2500 = vshrl.u32 %v2462, 16
      %v2502 = vrot.slane %v2500, 5
      %v2503 = vshll.u32 %v2462, 16
      %v2505 = vrot.slane %v2503, 6
      %v2506 = vor.u32 %v2502, %v2505
      %v2507 = vrot.slane %v2506, 4
      %v2508 = vrot.slane %v2188, 5
      %v2509 = vrot.slane %v2184, 6
      %v2510 = vor.u32 %v2508, %v2509
      %v2511 = vsel %vm438, %v2507, %v2510
      %v2512 = vrot.slane %v2510, 4
      %v2514 = vshrl.u32 %v2463, 16
      %v2516 = vrot.slane %v2514, 5
      %v2517 = vshll.u32 %v2463, 16
      %v2519 = vrot.slane %v2517, 6
      %v2520 = vor.u32 %v2516, %v2519
      %v2521 = vsel %vm438, %v2512, %v2520
      %v2523 = vshrl.u32 %v2464, 16
      %v2525 = vrot.slane %v2523, 5
      %v2526 = vshll.u32 %v2464, 16
      %v2528 = vrot.slane %v2526, 6
      %v2529 = vor.u32 %v2525, %v2528
      %v2530 = vrot.slane %v2529, 4
      %v2531 = vrot.slane %v2212, 5
      %v2532 = vrot.slane %v2208, 6
      %v2533 = vor.u32 %v2531, %v2532
      %v2534 = vsel %vm438, %v2530, %v2533
      %v2535 = vrot.slane %v2533, 4
      %v2537 = vshrl.u32 %v2465, 16
      %v2539 = vrot.slane %v2537, 5
      %v2540 = vshll.u32 %v2465, 16
      %v2542 = vrot.slane %v2540, 6
      %v2543 = vor.u32 %v2539, %v2542
      %v2544 = vsel %vm438, %v2535, %v2543
      %v2546 = vshrl.u32 %v2466, 16
      %v2548 = vrot.slane %v2546, 5
      %v2549 = vshll.u32 %v2466, 16
      %v2551 = vrot.slane %v2549, 6
      %v2552 = vor.u32 %v2548, %v2551
      %v2553 = vrot.slane %v2552, 4
      %v2554 = vrot.slane %v2236, 5
      %v2555 = vrot.slane %v2232, 6
      %v2556 = vor.u32 %v2554, %v2555
      %v2557 = vsel %vm438, %v2553, %v2556
      %v2558 = vrot.slane %v2556, 4
      %v2560 = vshrl.u32 %v2467, 16
      %v2562 = vrot.slane %v2560, 5
      %v2563 = vshll.u32 %v2467, 16
      %v2565 = vrot.slane %v2563, 6
      %v2566 = vor.u32 %v2562, %v2565
      %v2567 = vsel %vm438, %v2558, %v2566
      %v2569 = vshrl.u32 %v2468, 16
      %v2571 = vrot.slane %v2569, 5
      %v2572 = vshll.u32 %v2468, 16
      %v2574 = vrot.slane %v2572, 6
      %v2575 = vor.u32 %v2571, %v2574
      %v2576 = vrot.slane %v2575, 4
      %v2577 = vrot.slane %v2260, 5
      %v2578 = vrot.slane %v2256, 6
      %v2579 = vor.u32 %v2577, %v2578
      %v2580 = vsel %vm438, %v2576, %v2579
      %v2581 = vrot.slane %v2579, 4
      %v2583 = vshrl.u32 %v2469, 16
      %v2585 = vrot.slane %v2583, 5
      %v2586 = vshll.u32 %v2469, 16
      %v2588 = vrot.slane %v2586, 6
      %v2589 = vor.u32 %v2585, %v2588
      %v2590 = vsel %vm438, %v2581, %v2589
      %v2592 = vshrl.u32 %v2470, 16
      %v2594 = vrot.slane %v2592, 5
      %v2595 = vshll.u32 %v2470, 16
      %v2597 = vrot.slane %v2595, 6
      %v2598 = vor.u32 %v2594, %v2597
      %v2599 = vrot.slane %v2598, 4
      %v2600 = vrot.slane %v2284, 5
      %v2601 = vrot.slane %v2280, 6
      %v2602 = vor.u32 %v2600, %v2601
      %v2603 = vsel %vm438, %v2599, %v2602
      %v2604 = vrot.slane %v2602, 4
      %v2606 = vshrl.u32 %v2471, 16
      %v2608 = vrot.slane %v2606, 5
      %v2609 = vshll.u32 %v2471, 16
      %v2611 = vrot.slane %v2609, 6
      %v2612 = vor.u32 %v2608, %v2611
      %v2613 = vsel %vm438, %v2604, %v2612
      %v2615 = vshrl.u32 %v2472, 16
      %v2617 = vrot.slane %v2615, 5
      %v2618 = vshll.u32 %v2472, 16
      %v2620 = vrot.slane %v2618, 6
      %v2621 = vor.u32 %v2617, %v2620
      %v2622 = vrot.slane %v2621, 4
      %v2623 = vrot.slane %v2308, 5
      %v2624 = vrot.slane %v2304, 6
      %v2625 = vor.u32 %v2623, %v2624
      %v2626 = vsel %vm438, %v2622, %v2625
      %v2627 = vrot.slane %v2625, 4
      %v2629 = vshrl.u32 %v2473, 16
      %v2631 = vrot.slane %v2629, 5
      %v2632 = vshll.u32 %v2473, 16
      %v2634 = vrot.slane %v2632, 6
      %v2635 = vor.u32 %v2631, %v2634
      %v2636 = vsel %vm438, %v2627, %v2635
      %v2638 = vshrl.u32 %v2474, 16
      %v2640 = vrot.slane %v2638, 5
      %v2641 = vshll.u32 %v2474, 16
      %v2643 = vrot.slane %v2641, 6
      %v2644 = vor.u32 %v2640, %v2643
      %v2645 = vrot.slane %v2644, 4
      %v2646 = vrot.slane %v2332, 5
      %v2647 = vrot.slane %v2328, 6
      %v2648 = vor.u32 %v2646, %v2647
      %v2649 = vsel %vm438, %v2645, %v2648
      %v2650 = vrot.slane %v2648, 4
      %v2652 = vshrl.u32 %v2475, 16
      %v2654 = vrot.slane %v2652, 5
      %v2655 = vshll.u32 %v2475, 16
      %v2657 = vrot.slane %v2655, 6
      %v2658 = vor.u32 %v2654, %v2657
      %v2659 = vsel %vm438, %v2650, %v2658
      %s2660 = scalar_lea.vmem %s1, 14
      %v2661 = vld [vmem:[%s2660] sm:$0x3]
      %v2662 = vunpack.c.l.b16 %v2488
      %v2663 = vunpack.c.l.b16 %v2498
      %v2664 = vunpack.c.l.b16 %v2511
      %v2665 = vunpack.c.l.b16 %v2521
      %v2666 = vunpack.c.l.b16 %v2534
      %v2667 = vunpack.c.l.b16 %v2544
      %v2668 = vunpack.c.l.b16 %v2557
      %v2669 = vunpack.c.l.b16 %v2567
      %v2670 = vunpack.c.l.b16 %v2580
      %v2671 = vunpack.c.l.b16 %v2590
      %v2672 = vunpack.c.l.b16 %v2603
      %v2673 = vunpack.c.l.b16 %v2613
      %v2674 = vunpack.c.l.b16 %v2626
      %v2675 = vunpack.c.l.b16 %v2636
      %v2676 = vunpack.c.l.b16 %v2649
      %v2677 = vunpack.c.l.b16 %v2659
      %v2678 = vpack.c.b16 %v2663, %v2662
      %v2679 = vpack.c.b16 %v2665, %v2664
      %v2680 = vpack.c.b16 %v2667, %v2666
      %v2681 = vpack.c.b16 %v2669, %v2668
      %v2682 = vpack.c.b16 %v2671, %v2670
      %v2683 = vpack.c.b16 %v2673, %v2672
      %v2684 = vpack.c.b16 %v2675, %v2674
      %v2685 = vpack.c.b16 %v2677, %v2676
      %v2687 = vsel %vm649, %v2678, 0
      %v2690 = vsel %vm649, %v2679, 0
      %v2693 = vsel %vm649, %v2680, 0
      %v2696 = vsel %vm649, %v2681, 0
      %v2699 = vsel %vm649, %v2682, 0
      %v2702 = vsel %vm649, %v2683, 0
      %v2705 = vsel %vm649, %v2684, 0
      %v2708 = vsel %vm649, %v2685, 0
      %v2711 = vsel %vm674, %v2661, 0
      %2713 = vmatpush.bf16.msra.mxu0 0
      %2714 = vmatpush.bf16.msra.mxu0 0
      %2715 = vmatpush.bf16.msra.mxu0 0
      %2716 = vmatpush.bf16.msra.mxu0 0
      %2717 = vmatpush.bf16.msra.mxu0 0
      %2718 = vmatpush.bf16.msra.mxu0 0
      %2719 = vmatpush.bf16.msra.mxu0 0
      %2720 = vmatpush.bf16.msra.mxu0 %v2711
      %2721 = vmatmul.bf16.gmra.mxu0 %v2687
      %v2722 = vpop.f32.mrf.mxu0
      %v2723 = vadd.f32 0.0, %v2722
      %v2724 = vpop.f32.mrf.mxu0
      %v2725 = vadd.f32 0.0, %v2724
      %2726 = vmatmul.bf16.gmra.mxu0 %v2690
      %v2727 = vpop.f32.mrf.mxu0
      %v2728 = vadd.f32 0.0, %v2727
      %v2729 = vpop.f32.mrf.mxu0
      %v2730 = vadd.f32 0.0, %v2729
      %2731 = vmatmul.bf16.gmra.mxu0 %v2693
      %v2732 = vpop.f32.mrf.mxu0
      %v2733 = vadd.f32 0.0, %v2732
      %v2734 = vpop.f32.mrf.mxu0
      %v2735 = vadd.f32 0.0, %v2734
      %2736 = vmatmul.bf16.gmra.mxu0 %v2696
      %v2737 = vpop.f32.mrf.mxu0
      %v2738 = vadd.f32 0.0, %v2737
      %v2739 = vpop.f32.mrf.mxu0
      %v2740 = vadd.f32 0.0, %v2739
      %2741 = vmatmul.bf16.gmra.mxu0 %v2699
      %v2742 = vpop.f32.mrf.mxu0
      %v2743 = vadd.f32 0.0, %v2742
      %v2744 = vpop.f32.mrf.mxu0
      %v2745 = vadd.f32 0.0, %v2744
      %2746 = vmatmul.bf16.gmra.mxu0 %v2702
      %v2747 = vpop.f32.mrf.mxu0
      %v2748 = vadd.f32 0.0, %v2747
      %v2749 = vpop.f32.mrf.mxu0
      %v2750 = vadd.f32 0.0, %v2749
      %2751 = vmatmul.bf16.gmra.mxu0 %v2705
      %v2752 = vpop.f32.mrf.mxu0
      %v2753 = vadd.f32 0.0, %v2752
      %v2754 = vpop.f32.mrf.mxu0
      %v2755 = vadd.f32 0.0, %v2754
      %2756 = vmatmul.bf16.gmra.mxu0 %v2708
      %v2757 = vpop.f32.mrf.mxu0
      %v2758 = vadd.f32 0.0, %v2757
      %v2759 = vpop.f32.mrf.mxu0
      %v2760 = vadd.f32 0.0, %v2759
      %2761 = vdwg.mxu0
      %v2762 = vadd.f32 %v2444, %v2723
      %v2763 = vadd.f32 %v2445, %v2725
      %v2764 = vadd.f32 %v2446, %v2728
      %v2765 = vadd.f32 %v2447, %v2730
      %v2766 = vadd.f32 %v2448, %v2733
      %v2767 = vadd.f32 %v2449, %v2735
      %v2768 = vadd.f32 %v2450, %v2738
      %v2769 = vadd.f32 %v2451, %v2740
      %v2770 = vadd.f32 %v2452, %v2743
      %v2771 = vadd.f32 %v2453, %v2745
      %v2772 = vadd.f32 %v2454, %v2748
      %v2773 = vadd.f32 %v2455, %v2750
      %v2774 = vadd.f32 %v2456, %v2753
      %v2775 = vadd.f32 %v2457, %v2755
      %v2776 = vadd.f32 %v2458, %v2758
      %v2777 = vadd.f32 %v2459, %v2760
      %v2778 = vld [vmem:[%s2125] sm:$0xc]
      %v2779 = vld [vmem:[%s2125 + $0x8] sm:$0x7]
      %v2780 = vld [vmem:[%s2125 + $0xc] sm:$0xc]
      %v2781 = vld [vmem:[%s2125 + $0x14] sm:$0x7]
      %v2782 = vld [vmem:[%s2125 + $0x18] sm:$0xc]
      %v2783 = vld [vmem:[%s2125 + $0x20] sm:$0x7]
      %v2784 = vld [vmem:[%s2125 + $0x24] sm:$0xc]
      %v2785 = vld [vmem:[%s2125 + $0x2c] sm:$0x7]
      %v2786 = vld [vmem:[%s2125 + $0x30] sm:$0xc]
      %v2787 = vld [vmem:[%s2125 + $0x38] sm:$0x7]
      %v2788 = vld [vmem:[%s2125 + $0x3c] sm:$0xc]
      %v2789 = vld [vmem:[%s2125 + $0x44] sm:$0x7]
      %v2790 = vld [vmem:[%s2125 + $0x48] sm:$0xc]
      %v2791 = vld [vmem:[%s2125 + $0x50] sm:$0x7]
      %v2792 = vld [vmem:[%s2125 + $0x54] sm:$0xc]
      %v2793 = vld [vmem:[%s2125 + $0x5c] sm:$0x7]
      %v2795 = vshrl.u32 %v2778, 16
      %v2797 = vrot.slane %v2795, 6
      %v2798 = vshll.u32 %v2778, 16
      %v2800 = vrot.slane %v2798, 7
      %v2801 = vor.u32 %v2797, %v2800
      %v2802 = vrot.slane %v2801, 4
      %v2803 = vrot.slane %v2164, 6
      %v2804 = vrot.slane %v2160, 7
      %v2805 = vor.u32 %v2803, %v2804
      %v2806 = vsel %vm845, %v2802, %v2805
      %v2807 = vrot.slane %v2805, 4
      %v2809 = vshrl.u32 %v2779, 16
      %v2811 = vrot.slane %v2809, 6
      %v2812 = vshll.u32 %v2779, 16
      %v2814 = vrot.slane %v2812, 7
      %v2815 = vor.u32 %v2811, %v2814
      %v2816 = vsel %vm845, %v2807, %v2815
      %v2818 = vshrl.u32 %v2780, 16
      %v2820 = vrot.slane %v2818, 6
      %v2821 = vshll.u32 %v2780, 16
      %v2823 = vrot.slane %v2821, 7
      %v2824 = vor.u32 %v2820, %v2823
      %v2825 = vrot.slane %v2824, 4
      %v2826 = vrot.slane %v2188, 6
      %v2827 = vrot.slane %v2184, 7
      %v2828 = vor.u32 %v2826, %v2827
      %v2829 = vsel %vm845, %v2825, %v2828
      %v2830 = vrot.slane %v2828, 4
      %v2832 = vshrl.u32 %v2781, 16
      %v2834 = vrot.slane %v2832, 6
      %v2835 = vshll.u32 %v2781, 16
      %v2837 = vrot.slane %v2835, 7
      %v2838 = vor.u32 %v2834, %v2837
      %v2839 = vsel %vm845, %v2830, %v2838
      %v2841 = vshrl.u32 %v2782, 16
      %v2843 = vrot.slane %v2841, 6
      %v2844 = vshll.u32 %v2782, 16
      %v2846 = vrot.slane %v2844, 7
      %v2847 = vor.u32 %v2843, %v2846
      %v2848 = vrot.slane %v2847, 4
      %v2849 = vrot.slane %v2212, 6
      %v2850 = vrot.slane %v2208, 7
      %v2851 = vor.u32 %v2849, %v2850
      %v2852 = vsel %vm845, %v2848, %v2851
      %v2853 = vrot.slane %v2851, 4
      %v2855 = vshrl.u32 %v2783, 16
      %v2857 = vrot.slane %v2855, 6
      %v2858 = vshll.u32 %v2783, 16
      %v2860 = vrot.slane %v2858, 7
      %v2861 = vor.u32 %v2857, %v2860
      %v2862 = vsel %vm845, %v2853, %v2861
      %v2864 = vshrl.u32 %v2784, 16
      %v2866 = vrot.slane %v2864, 6
      %v2867 = vshll.u32 %v2784, 16
      %v2869 = vrot.slane %v2867, 7
      %v2870 = vor.u32 %v2866, %v2869
      %v2871 = vrot.slane %v2870, 4
      %v2872 = vrot.slane %v2236, 6
      %v2873 = vrot.slane %v2232, 7
      %v2874 = vor.u32 %v2872, %v2873
      %v2875 = vsel %vm845, %v2871, %v2874
      %v2876 = vrot.slane %v2874, 4
      %v2878 = vshrl.u32 %v2785, 16
      %v2880 = vrot.slane %v2878, 6
      %v2881 = vshll.u32 %v2785, 16
      %v2883 = vrot.slane %v2881, 7
      %v2884 = vor.u32 %v2880, %v2883
      %v2885 = vsel %vm845, %v2876, %v2884
      %v2887 = vshrl.u32 %v2786, 16
      %v2889 = vrot.slane %v2887, 6
      %v2890 = vshll.u32 %v2786, 16
      %v2892 = vrot.slane %v2890, 7
      %v2893 = vor.u32 %v2889, %v2892
      %v2894 = vrot.slane %v2893, 4
      %v2895 = vrot.slane %v2260, 6
      %v2896 = vrot.slane %v2256, 7
      %v2897 = vor.u32 %v2895, %v2896
      %v2898 = vsel %vm845, %v2894, %v2897
      %v2899 = vrot.slane %v2897, 4
      %v2901 = vshrl.u32 %v2787, 16
      %v2903 = vrot.slane %v2901, 6
      %v2904 = vshll.u32 %v2787, 16
      %v2906 = vrot.slane %v2904, 7
      %v2907 = vor.u32 %v2903, %v2906
      %v2908 = vsel %vm845, %v2899, %v2907
      %v2910 = vshrl.u32 %v2788, 16
      %v2912 = vrot.slane %v2910, 6
      %v2913 = vshll.u32 %v2788, 16
      %v2915 = vrot.slane %v2913, 7
      %v2916 = vor.u32 %v2912, %v2915
      %v2917 = vrot.slane %v2916, 4
      %v2918 = vrot.slane %v2284, 6
      %v2919 = vrot.slane %v2280, 7
      %v2920 = vor.u32 %v2918, %v2919
      %v2921 = vsel %vm845, %v2917, %v2920
      %v2922 = vrot.slane %v2920, 4
      %v2924 = vshrl.u32 %v2789, 16
      %v2926 = vrot.slane %v2924, 6
      %v2927 = vshll.u32 %v2789, 16
      %v2929 = vrot.slane %v2927, 7
      %v2930 = vor.u32 %v2926, %v2929
      %v2931 = vsel %vm845, %v2922, %v2930
      %v2933 = vshrl.u32 %v2790, 16
      %v2935 = vrot.slane %v2933, 6
      %v2936 = vshll.u32 %v2790, 16
      %v2938 = vrot.slane %v2936, 7
      %v2939 = vor.u32 %v2935, %v2938
      %v2940 = vrot.slane %v2939, 4
      %v2941 = vrot.slane %v2308, 6
      %v2942 = vrot.slane %v2304, 7
      %v2943 = vor.u32 %v2941, %v2942
      %v2944 = vsel %vm845, %v2940, %v2943
      %v2945 = vrot.slane %v2943, 4
      %v2947 = vshrl.u32 %v2791, 16
      %v2949 = vrot.slane %v2947, 6
      %v2950 = vshll.u32 %v2791, 16
      %v2952 = vrot.slane %v2950, 7
      %v2953 = vor.u32 %v2949, %v2952
      %v2954 = vsel %vm845, %v2945, %v2953
      %v2956 = vshrl.u32 %v2792, 16
      %v2958 = vrot.slane %v2956, 6
      %v2959 = vshll.u32 %v2792, 16
      %v2961 = vrot.slane %v2959, 7
      %v2962 = vor.u32 %v2958, %v2961
      %v2963 = vrot.slane %v2962, 4
      %v2964 = vrot.slane %v2332, 6
      %v2965 = vrot.slane %v2328, 7
      %v2966 = vor.u32 %v2964, %v2965
      %v2967 = vsel %vm845, %v2963, %v2966
      %v2968 = vrot.slane %v2966, 4
      %v2970 = vshrl.u32 %v2793, 16
      %v2972 = vrot.slane %v2970, 6
      %v2973 = vshll.u32 %v2793, 16
      %v2975 = vrot.slane %v2973, 7
      %v2976 = vor.u32 %v2972, %v2975
      %v2977 = vsel %vm845, %v2968, %v2976
      %s2978 = scalar_lea.vmem %s1, 16
      %v2979 = vld [vmem:[%s2978] sm:$0x3]
      %v2980 = vunpack.c.l.b16 %v2806
      %v2981 = vunpack.c.l.b16 %v2816
      %v2982 = vunpack.c.l.b16 %v2829
      %v2983 = vunpack.c.l.b16 %v2839
      %v2984 = vunpack.c.l.b16 %v2852
      %v2985 = vunpack.c.l.b16 %v2862
      %v2986 = vunpack.c.l.b16 %v2875
      %v2987 = vunpack.c.l.b16 %v2885
      %v2988 = vunpack.c.l.b16 %v2898
      %v2989 = vunpack.c.l.b16 %v2908
      %v2990 = vunpack.c.l.b16 %v2921
      %v2991 = vunpack.c.l.b16 %v2931
      %v2992 = vunpack.c.l.b16 %v2944
      %v2993 = vunpack.c.l.b16 %v2954
      %v2994 = vunpack.c.l.b16 %v2967
      %v2995 = vunpack.c.l.b16 %v2977
      %v2996 = vpack.c.b16 %v2981, %v2980
      %v2997 = vpack.c.b16 %v2983, %v2982
      %v2998 = vpack.c.b16 %v2985, %v2984
      %v2999 = vpack.c.b16 %v2987, %v2986
      %v3000 = vpack.c.b16 %v2989, %v2988
      %v3001 = vpack.c.b16 %v2991, %v2990
      %v3002 = vpack.c.b16 %v2993, %v2992
      %v3003 = vpack.c.b16 %v2995, %v2994
      %v3005 = vsel %vm649, %v2996, 0
      %v3008 = vsel %vm649, %v2997, 0
      %v3011 = vsel %vm649, %v2998, 0
      %v3014 = vsel %vm649, %v2999, 0
      %v3017 = vsel %vm649, %v3000, 0
      %v3020 = vsel %vm649, %v3001, 0
      %v3023 = vsel %vm649, %v3002, 0
      %v3026 = vsel %vm649, %v3003, 0
      %v3029 = vsel %vm674, %v2979, 0
      %3031 = vmatpush.bf16.msra.mxu0 0
      %3032 = vmatpush.bf16.msra.mxu0 0
      %3033 = vmatpush.bf16.msra.mxu0 0
      %3034 = vmatpush.bf16.msra.mxu0 0
      %3035 = vmatpush.bf16.msra.mxu0 0
      %3036 = vmatpush.bf16.msra.mxu0 0
      %3037 = vmatpush.bf16.msra.mxu0 0
      %3038 = vmatpush.bf16.msra.mxu0 %v3029
      %3039 = vmatmul.bf16.gmra.mxu0 %v3005
      %v3040 = vpop.f32.mrf.mxu0
      %v3041 = vadd.f32 0.0, %v3040
      %v3042 = vpop.f32.mrf.mxu0
      %v3043 = vadd.f32 0.0, %v3042
      %3044 = vmatmul.bf16.gmra.mxu0 %v3008
      %v3045 = vpop.f32.mrf.mxu0
      %v3046 = vadd.f32 0.0, %v3045
      %v3047 = vpop.f32.mrf.mxu0
      %v3048 = vadd.f32 0.0, %v3047
      %3049 = vmatmul.bf16.gmra.mxu0 %v3011
      %v3050 = vpop.f32.mrf.mxu0
      %v3051 = vadd.f32 0.0, %v3050
      %v3052 = vpop.f32.mrf.mxu0
      %v3053 = vadd.f32 0.0, %v3052
      %3054 = vmatmul.bf16.gmra.mxu0 %v3014
      %v3055 = vpop.f32.mrf.mxu0
      %v3056 = vadd.f32 0.0, %v3055
      %v3057 = vpop.f32.mrf.mxu0
      %v3058 = vadd.f32 0.0, %v3057
      %3059 = vmatmul.bf16.gmra.mxu0 %v3017
      %v3060 = vpop.f32.mrf.mxu0
      %v3061 = vadd.f32 0.0, %v3060
      %v3062 = vpop.f32.mrf.mxu0
      %v3063 = vadd.f32 0.0, %v3062
      %3064 = vmatmul.bf16.gmra.mxu0 %v3020
      %v3065 = vpop.f32.mrf.mxu0
      %v3066 = vadd.f32 0.0, %v3065
      %v3067 = vpop.f32.mrf.mxu0
      %v3068 = vadd.f32 0.0, %v3067
      %3069 = vmatmul.bf16.gmra.mxu0 %v3023
      %v3070 = vpop.f32.mrf.mxu0
      %v3071 = vadd.f32 0.0, %v3070
      %v3072 = vpop.f32.mrf.mxu0
      %v3073 = vadd.f32 0.0, %v3072
      %3074 = vmatmul.bf16.gmra.mxu0 %v3026
      %v3075 = vpop.f32.mrf.mxu0
      %v3076 = vadd.f32 0.0, %v3075
      %v3077 = vpop.f32.mrf.mxu0
      %v3078 = vadd.f32 0.0, %v3077
      %3079 = vdwg.mxu0
      %v3080 = vadd.f32 %v2762, %v3041
      %v3081 = vadd.f32 %v2763, %v3043
      %v3082 = vadd.f32 %v2764, %v3046
      %v3083 = vadd.f32 %v2765, %v3048
      %v3084 = vadd.f32 %v2766, %v3051
      %v3085 = vadd.f32 %v2767, %v3053
      %v3086 = vadd.f32 %v2768, %v3056
      %v3087 = vadd.f32 %v2769, %v3058
      %v3088 = vadd.f32 %v2770, %v3061
      %v3089 = vadd.f32 %v2771, %v3063
      %v3090 = vadd.f32 %v2772, %v3066
      %v3091 = vadd.f32 %v2773, %v3068
      %v3092 = vadd.f32 %v2774, %v3071
      %v3093 = vadd.f32 %v2775, %v3073
      %v3094 = vadd.f32 %v2776, %v3076
      %v3095 = vadd.f32 %v2777, %v3078
      %v3096 = vld [vmem:[%s2] sm:$0x1]
      %v3098 = vperm.slane %v3096, 0
      %v3100 = vadd.f32 %v3080, %v3098
      %v3101 = vadd.f32 %v3081, %v3098
      %v3102 = vadd.f32 %v3082, %v3098
      %v3103 = vadd.f32 %v3083, %v3098
      %v3104 = vadd.f32 %v3084, %v3098
      %v3105 = vadd.f32 %v3085, %v3098
      %v3106 = vadd.f32 %v3086, %v3098
      %v3107 = vadd.f32 %v3087, %v3098
      %v3108 = vadd.f32 %v3088, %v3098
      %v3109 = vadd.f32 %v3089, %v3098
      %v3110 = vadd.f32 %v3090, %v3098
      %v3111 = vadd.f32 %v3091, %v3098
      %v3112 = vadd.f32 %v3092, %v3098
      %v3113 = vadd.f32 %v3093, %v3098
      %v3114 = vadd.f32 %v3094, %v3098
      %v3115 = vadd.f32 %v3095, %v3098
      %v3116 = vmax.f32 %v3100, 0.0
      %v3117 = vmax.f32 %v3101, 0.0
      %v3118 = vmax.f32 %v3102, 0.0
      %v3119 = vmax.f32 %v3103, 0.0
      %v3120 = vmax.f32 %v3104, 0.0
      %v3121 = vmax.f32 %v3105, 0.0
      %v3122 = vmax.f32 %v3106, 0.0
      %v3123 = vmax.f32 %v3107, 0.0
      %v3124 = vmax.f32 %v3108, 0.0
      %v3125 = vmax.f32 %v3109, 0.0
      %v3126 = vmax.f32 %v3110, 0.0
      %v3127 = vmax.f32 %v3111, 0.0
      %v3128 = vmax.f32 %v3112, 0.0
      %v3129 = vmax.f32 %v3113, 0.0
      %v3130 = vmax.f32 %v3114, 0.0
      %v3131 = vmax.f32 %v3115, 0.0
      %v3132 = vpack.c.bf16 %v3116, %v3116
      %v3133 = vpack.c.bf16 %v3117, %v3117
      %v3134 = vpack.c.bf16 %v3118, %v3118
      %v3135 = vpack.c.bf16 %v3119, %v3119
      %v3136 = vpack.c.bf16 %v3120, %v3120
      %v3137 = vpack.c.bf16 %v3121, %v3121
      %v3138 = vpack.c.bf16 %v3122, %v3122
      %v3139 = vpack.c.bf16 %v3123, %v3123
      %v3140 = vpack.c.bf16 %v3124, %v3124
      %v3141 = vpack.c.bf16 %v3125, %v3125
      %v3142 = vpack.c.bf16 %v3126, %v3126
      %v3143 = vpack.c.bf16 %v3127, %v3127
      %v3144 = vpack.c.bf16 %v3128, %v3128
      %v3145 = vpack.c.bf16 %v3129, %v3129
      %v3146 = vpack.c.bf16 %v3130, %v3130
      %v3147 = vpack.c.bf16 %v3131, %v3131
      %vm3148 = vcmask 60416
      %3149 = vst.msk [vmem:[%s192] sm:$0xf] %vm3148, %v3132
      %3150 = vst.msk [vmem:[%s192 + $0x4] sm:$0xf] %vm3148, %v3133
      %3151 = vst.msk [vmem:[%s192 + $0x8] sm:$0xf] %vm3148, %v3134
      %3152 = vst.msk [vmem:[%s192 + $0xc] sm:$0xf] %vm3148, %v3135
      %3153 = vst.msk [vmem:[%s192 + $0x10] sm:$0xf] %vm3148, %v3136
      %3154 = vst.msk [vmem:[%s192 + $0x14] sm:$0xf] %vm3148, %v3137
      %3155 = vst.msk [vmem:[%s192 + $0x18] sm:$0xf] %vm3148, %v3138
      %3156 = vst.msk [vmem:[%s192 + $0x1c] sm:$0xf] %vm3148, %v3139
      %3157 = vst.msk [vmem:[%s192 + $0x20] sm:$0xf] %vm3148, %v3140
      %3158 = vst.msk [vmem:[%s192 + $0x24] sm:$0xf] %vm3148, %v3141
      %3159 = vst.msk [vmem:[%s192 + $0x28] sm:$0xf] %vm3148, %v3142
      %3160 = vst.msk [vmem:[%s192 + $0x2c] sm:$0xf] %vm3148, %v3143
      %3161 = vst.msk [vmem:[%s192 + $0x30] sm:$0xf] %vm3148, %v3144
      %3162 = vst.msk [vmem:[%s192 + $0x34] sm:$0xf] %vm3148, %v3145
      %3163 = vst.msk [vmem:[%s192 + $0x38] sm:$0xf] %vm3148, %v3146
      %3164 = vst.msk [vmem:[%s192 + $0x3c] sm:$0xf] %vm3148, %v3147
      %s3165 = smul.u32 16, %s19
      %p3166 = scmp.lt.s32.totalorder %s18, 1
      %s3167 = scalar_select %p3166, %s18, 1
      %p3168 = scmp.lt.s32.totalorder %s3165, 31
      %s3169 = scalar_select %p3168, %s3165, 31
      %s3170 = smul.addr %s3167, 32
      %s3171 = sadd.s32 %s3169, %s3170
      %s3172 = smul.addr %s3171, 4
      %s3173 = scalar_lea.vmem %s3, %s3172
      // Predicated region
      $region33: #{aspp_forward.6} parent=31 // pred_check
        %p3174 = pneg %p114
      $region34: #{aspp_forward.6} parent=31 // pred_check_branch
        %3176 = sbr.rel (%p3174) target = $region36
      $region35: #{aspp_forward.6} parent=31 // pred_region
        %s3177 = smul.u32 16, %s19
      $region36: #{aspp_forward.6} parent=31 // pred_fallthru
        _
    $region32: #{aspp_forward.6} parent=5 // pred_fallthru
      _
    %p3178 = scmp.le.s32.totalorder 2, %s9
    // Predicated region
    $region37: #{aspp_forward.6} parent=5 // pred_check
      %p3179 = pneg %p3178
    $region38: #{aspp_forward.6} parent=5 // pred_check_branch
      %3181 = sbr.rel (%p3179) target = $region40
    $region39: #{aspp_forward.6} parent=5 // pred_region
      %s3182 = ssub.s32 %s9, 2
      // Predicated region
      $region41: #{aspp_forward.6} parent=39 // pred_check
        %p3183 = pneg %p120
      $region42: #{aspp_forward.6} parent=39 // pred_check_branch
        %3185 = sbr.rel (%p3183) target = $region44
      $region43: #{aspp_forward.6} parent=39 // pred_region
        %s3186 = smul.u32 16, %s21
        %p3187 = scmp.lt.s32.totalorder %s20, 1
        %s3188 = scalar_select %p3187, %s20, 1
        %p3189 = scmp.lt.s32.totalorder %s3186, 31
        %s3190 = scalar_select %p3189, %s3186, 31
        %s3191 = smul.addr %s3188, 32
        %s3192 = sadd.s32 %s3190, %s3191
        %s3193 = smul.addr %s3192, 4
        %s3194 = scalar_lea.vmem %s3, %s3193
      $region44: #{aspp_forward.6} parent=39 // pred_fallthru
        _
    $region40: #{aspp_forward.6} parent=5 // pred_fallthru
      _
  $region6: #{aspp_forward.6} parent=0 // loop_footer
    %s13 = sadd.s32 1, %s9
  $region7: #{aspp_forward.6} parent=0 // loop_footer_branch
    %8 = sbr.rel target = $region3
  $region8: #{aspp_forward.6} parent=0 // loop_exit
    _

// kernel: aspp_forward.7
$region0: #{aspp_forward.7}
  #allocation0 [shape = 'u32[]', space=smem, size = 0x4, offset = 0x4, fixed_abs, tag = 'smem constant byte address 0x4 - core index']
  #allocation1 [shape = 'u32[72,128]{1,0:T(1,128)}', space=vmem, size = 0x9000, scoped, tag = 'internal scratch']
  %s0 = inlined_call_operand.vmem [shape: bf16[2,22,22,4], index: 0, kind: input, shape index: {}]
  %s1 = inlined_call_operand.vmem [shape: bf16[3,3,4,8], index: 1, kind: input, shape index: {}]
  %s2 = inlined_call_operand.vmem [shape: f32[1,8], index: 2, kind: input, shape index: {}]
  %s3 = inlined_call_operand.vmem [shape: bf16[2,256,8], index: 3, kind: output, shape index: {}]
  %s4 = sld [smem:[#allocation0]]
  $region45: #{aspp_forward.7} parent=0
    _
  %s6 = ssub.s32 1, %s4
  %s7 = scalar_select 0, %s6, %s4
  loop: start=0, step=1, limit=6
  $region2: #{aspp_forward.7} parent=0 // loop_pre_header
    _
  $region3: #{aspp_forward.7} parent=0 // loop_header
    %s9 = sphi 0, %s13
    %p10 = scmp.ge.s32.totalorder %s9, 6
    %s16 = sphi 0, %s28
    %s17 = sphi 0, %s24
    %s18 = sphi 0, %s16
    %s19 = sphi 0, %s17
    %s20 = sphi 0, %s18
    %s21 = sphi 0, %s19
    %s31 = sphi 0, %s33
    %s34 = sphi 0, %s31
    %s35 = sphi 0, %s34
    %s51 = sphi 0, %s35
    %s55 = sphi 0, %s55
    %s57 = sphi 0, %s55
    %s58 = sphi 0, %s57
    %s72 = sphi 0, %s58
    %s76 = sphi 0, %s76
    %s78 = sphi 0, %s76
    %s79 = sphi 0, %s78
    %s93 = sphi 0, %s79
    %s101 = sphi 0, %s103
    %s104 = sphi 0, %s101
    %s105 = sphi 0, %s104
    %s121 = sphi 0, %s105
  $region4: #{aspp_forward.7} parent=0 // loop_header_branch
    %12 = sbr.rel (%p10) target = $region8
  $region5: #{aspp_forward.7} parent=0 // loop_body
    %s14 = ssub.s32 %s9, 1
    %s15 = ssub.s32 %s9, 2
    %s22 = sadd.s32 1, %s17
    %p23 = scmp.ge.s32.totalorder %s22, 2
    %s24 = scalar_select %p23, 0, %s22
    %s25 = sadd.s32 1, %s16
    %s26 = scalar_select %p23, %s25, %s16
    %p27 = scmp.ge.s32.totalorder %s26, 2
    %s28 = scalar_select %p27, 0, %s26
    %s29 = ssub.s32 %s16, %s28
    %p30 = scmp.eq.s32.totalorder %s29, 0
    %s32 = sadd.s32 %s31, 1
    %s33 = scalar_select %p30, %s31, %s32
    %p36 = pneg %p30
    %p37 = scmp.eq.s32.totalorder %s9, 3
    %p38 = por %p36, %p37
    %p39 = scmp.ne.s32.totalorder %s31, %s34
    %p40 = scmp.eq.s32.totalorder %s9, 0
    %p41 = por %p39, %p40
    %p42 = scmp.ne.s32.totalorder %s31, %s34
    %p43 = scmp.eq.s32.totalorder %s14, 3
    %p44 = por %p42, %p43
    %p45 = scmp.ne.s32.totalorder %s34, %s35
    %p46 = scmp.eq.s32.totalorder %s14, 0
    %p47 = por %p45, %p46
    %p48 = scmp.ne.s32.totalorder %s34, %s35
    %p49 = scmp.eq.s32.totalorder %s15, 3
    %p50 = por %p48, %p49
    %p52 = scmp.ne.s32.totalorder %s35, %s51
    %p53 = scmp.eq.s32.totalorder %s15, 0
    %p54 = por %p52, %p53
    %s56 = sadd.s32 %s55, 1
    %p59 = scmp.eq.s32.totalorder %s9, 3
    %p60 = scmp.ne.s32.totalorder %s55, %s57
    %p61 = scmp.eq.s32.totalorder %s9, 0
    %p62 = por %p60, %p61
    %p63 = scmp.ne.s32.totalorder %s55, %s57
    %p64 = scmp.eq.s32.totalorder %s14, 3
    %p65 = por %p63, %p64
    %p66 = scmp.ne.s32.totalorder %s57, %s58
    %p67 = scmp.eq.s32.totalorder %s14, 0
    %p68 = por %p66, %p67
    %p69 = scmp.ne.s32.totalorder %s57, %s58
    %p70 = scmp.eq.s32.totalorder %s15, 3
    %p71 = por %p69, %p70
    %p73 = scmp.ne.s32.totalorder %s58, %s72
    %p74 = scmp.eq.s32.totalorder %s15, 0
    %p75 = por %p73, %p74
    %s77 = sadd.s32 %s76, 1
    %p80 = scmp.eq.s32.totalorder %s9, 3
    %p81 = scmp.ne.s32.totalorder %s76, %s78
    %p82 = scmp.eq.s32.totalorder %s9, 0
    %p83 = por %p81, %p82
    %p84 = scmp.ne.s32.totalorder %s76, %s78
    %p85 = scmp.eq.s32.totalorder %s14, 3
    %p86 = por %p84, %p85
    %p87 = scmp.ne.s32.totalorder %s78, %s79
    %p88 = scmp.eq.s32.totalorder %s14, 0
    %p89 = por %p87, %p88
    %p90 = scmp.ne.s32.totalorder %s78, %s79
    %p91 = scmp.eq.s32.totalorder %s15, 3
    %p92 = por %p90, %p91
    %p94 = scmp.ne.s32.totalorder %s79, %s93
    %p95 = scmp.eq.s32.totalorder %s15, 0
    %p96 = por %p94, %p95
    %s97 = ssub.s32 %s16, %s28
    %s98 = ssub.s32 %s17, %s24
    %s99 = sor.u32 %s97, %s98
    %p100 = scmp.eq.s32.totalorder %s99, 0
    %s102 = sadd.s32 %s101, 1
    %s103 = scalar_select %p100, %s101, %s102
    %p106 = pneg %p100
    %p107 = scmp.eq.s32.totalorder %s9, 3
    %p108 = por %p106, %p107
    %p109 = scmp.ne.s32.totalorder %s101, %s104
    %p110 = scmp.eq.s32.totalorder %s9, 0
    %p111 = por %p109, %p110
    %p112 = scmp.ne.s32.totalorder %s101, %s104
    %p113 = scmp.eq.s32.totalorder %s14, 3
    %p114 = por %p112, %p113
    %p115 = scmp.ne.s32.totalorder %s104, %s105
    %p116 = scmp.eq.s32.totalorder %s14, 0
    %p117 = por %p115, %p116
    %p118 = scmp.ne.s32.totalorder %s104, %s105
    %p119 = scmp.eq.s32.totalorder %s15, 3
    %p120 = por %p118, %p119
    %p122 = scmp.ne.s32.totalorder %s105, %s121
    %p123 = scmp.eq.s32.totalorder %s15, 0
    %p124 = por %p122, %p123
    %p125 = scmp.le.s32.totalorder 1, %s9
    %p126 = scmp.lt.s32.totalorder %s9, 5
    %p127 = pnand %p125, %p126
    %p128 = pneg %p127
    // Predicated region
    $region9: #{aspp_forward.7} parent=5 // pred_check
      _
    $region10: #{aspp_forward.7} parent=5 // pred_check_branch
      %130 = sbr.rel (%p127) target = $region12
    $region11: #{aspp_forward.7} parent=5 // pred_region
      %s131 = ssub.s32 %s9, 1
      // Predicated region
      $region13: #{aspp_forward.7} parent=11 // pred_check
        %p132 = pneg %p68
      $region14: #{aspp_forward.7} parent=11 // pred_check_branch
        %134 = sbr.rel (%p132) target = $region16
      $region15: #{aspp_forward.7} parent=11 // pred_region
        _
      $region16: #{aspp_forward.7} parent=11 // pred_fallthru
        _
      // Predicated region
      $region17: #{aspp_forward.7} parent=11 // pred_check
        %p135 = pneg %p89
      $region18: #{aspp_forward.7} parent=11 // pred_check_branch
        %137 = sbr.rel (%p135) target = $region20
      $region19: #{aspp_forward.7} parent=11 // pred_region
        _
      $region20: #{aspp_forward.7} parent=11 // pred_fallthru
        _
    $region12: #{aspp_forward.7} parent=5 // pred_fallthru
      _
    %p138 = scmp.lt.s32.totalorder %s9, 4
    // Predicated region
    $region21: #{aspp_forward.7} parent=5 // pred_check
      %p139 = pneg %p138
    $region22: #{aspp_forward.7} parent=5 // pred_check_branch
      %141 = sbr.rel (%p139) target = $region24
    $region23: #{aspp_forward.7} parent=5 // pred_region
      // Predicated region
      $region25: #{aspp_forward.7} parent=23 // pred_check
        %p142 = pneg %p41
      $region26: #{aspp_forward.7} parent=23 // pred_check_branch
        %144 = sbr.rel (%p142) target = $region28
      $region27: #{aspp_forward.7} parent=23 // pred_region
        %p145 = scmp.lt.s32.totalorder %s16, 1
        %s146 = scalar_select %p145, %s16, 1
        %s147 = smul.addr %s146, 66
        %s148 = smul.addr %s147, 4
        %s149 = scalar_lea.vmem %s0, %s148
      $region28: #{aspp_forward.7} parent=23 // pred_fallthru
        _
    $region24: #{aspp_forward.7} parent=5 // pred_fallthru
      _
    %p150 = scmp.le.s32.totalorder 1, %s9
    %p151 = scmp.lt.s32.totalorder %s9, 5
    %p152 = pnand %p150, %p151
    %p153 = pneg %p152
    // Predicated region
    $region29: #{aspp_forward.7} parent=5 // pred_check
      _
    $region30: #{aspp_forward.7} parent=5 // pred_check_branch
      %155 = sbr.rel (%p152) target = $region32
    $region31: #{aspp_forward.7} parent=5 // pred_region
      %s156 = ssub.s32 %s9, 1
      %p157 = scmp.lt.s32.totalorder %s18, 1
      %s158 = scalar_select %p157, %s18, 1
      %s159 = smul.addr %s158, 66
      %s160 = smul.addr %s159, 4
      %s161 = scalar_lea.vmem %s0, %s160
      %p162 = pneg %p47
      %p163 = pneg %p44
      %p164 = pneg %p68
      %p165 = pneg %p65
      %p166 = pneg %p89
      %p167 = pneg %p86
      %p168 = pneg %p117
      %p169 = pneg %p114
      %s170 = smul.u32 16, %s19
      %p171 = scmp.lt.s32.totalorder %s18, 1
      %s172 = scalar_select %p171, %s18, 1
      %p173 = scmp.lt.s32.totalorder %s170, 31
      %s174 = scalar_select %p173, %s170, 31
      %s175 = smul.addr %s172, 32
      %s176 = sadd.s32 %s174, %s175
      %s177 = smul.addr %s176, 4
      %s178 = scalar_lea.vmem %s3, %s177
      %p179 = scmp.lt.s32.totalorder %s18, 1
      %s180 = scalar_select %p179, %s18, 1
      %s181 = smul.addr %s180, 66
      %s182 = smul.addr %s181, 4
      %s183 = scalar_lea.vmem %s0, %s182
      %s184 = smul.u32 16, %s19
      %p185 = scmp.lt.s32.totalorder %s18, 1
      %s186 = scalar_select %p185, %s18, 1
      %p187 = scmp.lt.s32.totalorder %s184, 31
      %s188 = scalar_select %p187, %s184, 31
      %s189 = smul.addr %s186, 32
      %s190 = sadd.s32 %s188, %s189
      %s191 = smul.addr %s190, 4
      %s192 = scalar_lea.vmem %s3, %s191
      %s193 = smul.u32 16, %s19
      %s195 = smul.u32 %s19, 8
      %s196 = smul.u32 %s195, 3
      %s197 = smul.addr %s196, 4
      %s198 = scalar_lea.vmem %s183, %s197
      %v199 = vld [vmem:[%s198] sm:$0xf]
      %v200 = vld [vmem:[%s198 + $0x4] sm:$0xf]
      %v201 = vld [vmem:[%s198 + $0xc] sm:$0xf]
      %v202 = vld [vmem:[%s198 + $0x10] sm:$0xf]
      %v203 = vld [vmem:[%s198 + $0x18] sm:$0xf]
      %v204 = vld [vmem:[%s198 + $0x1c] sm:$0xf]
      %v205 = vld [vmem:[%s198 + $0x24] sm:$0xf]
      %v206 = vld [vmem:[%s198 + $0x28] sm:$0xf]
      %v207 = vld [vmem:[%s198 + $0x30] sm:$0xf]
      %v208 = vld [vmem:[%s198 + $0x34] sm:$0xf]
      %v209 = vld [vmem:[%s198 + $0x3c] sm:$0xf]
      %v210 = vld [vmem:[%s198 + $0x40] sm:$0xf]
      %v211 = vld [vmem:[%s198 + $0x48] sm:$0xf]
      %v212 = vld [vmem:[%s198 + $0x4c] sm:$0xf]
      %v213 = vld [vmem:[%s198 + $0x54] sm:$0xf]
      %v214 = vld [vmem:[%s198 + $0x58] sm:$0xf]
      %v215 = vld [vmem:[%s1] sm:$0x3]
      %v216 = vld [vmem:[%s198] sm:$0xe]
      %v217 = vld [vmem:[%s198 + $0x8] sm:$0x3]
      %v218 = vld [vmem:[%s198 + $0xc] sm:$0xe]
      %v219 = vld [vmem:[%s198 + $0x14] sm:$0x3]
      %v220 = vld [vmem:[%s198 + $0x18] sm:$0xe]
      %v221 = vld [vmem:[%s198 + $0x20] sm:$0x3]
      %v222 = vld [vmem:[%s198 + $0x24] sm:$0xe]
      %v223 = vld [vmem:[%s198 + $0x2c] sm:$0x3]
      %v224 = vld [vmem:[%s198 + $0x30] sm:$0xe]
      %v225 = vld [vmem:[%s198 + $0x38] sm:$0x3]
      %v226 = vld [vmem:[%s198 + $0x3c] sm:$0xe]
      %v227 = vld [vmem:[%s198 + $0x44] sm:$0x3]
      %v228 = vld [vmem:[%s198 + $0x48] sm:$0xe]
      %v229 = vld [vmem:[%s198 + $0x50] sm:$0x3]
      %v230 = vld [vmem:[%s198 + $0x54] sm:$0xe]
      %v231 = vld [vmem:[%s198 + $0x5c] sm:$0x3]
      %vm232 = vsmask.f32 2304
      %vm233 = vsmask.f32 6416
      %vm234 = vmor %vm232, %vm233
      %v236 = vshrl.u32 %v216, 16
      %v238 = vrot.slane %v236, 5
      %v239 = vshll.u32 %v216, 16
      %v241 = vrot.slane %v239, 6
      %v242 = vor.u32 %v238, %v241
      %v243 = vrot.slane %v242, 4
      %v245 = vshrl.u32 %v200, 16
      %v247 = vrot.slane %v245, 5
      %v248 = vshll.u32 %v200, 16
      %v250 = vrot.slane %v248, 6
      %v251 = vor.u32 %v247, %v250
      %v252 = vsel %vm234, %v243, %v251
      %v253 = vrot.slane %v251, 4
      %v255 = vshrl.u32 %v217, 16
      %v257 = vrot.slane %v255, 5
      %v258 = vshll.u32 %v217, 16
      %v260 = vrot.slane %v258, 6
      %v261 = vor.u32 %v257, %v260
      %v262 = vsel %vm234, %v253, %v261
      %v264 = vshrl.u32 %v218, 16
      %v266 = vrot.slane %v264, 5
      %v267 = vshll.u32 %v218, 16
      %v269 = vrot.slane %v267, 6
      %v270 = vor.u32 %v266, %v269
      %v271 = vrot.slane %v270, 4
      %v273 = vshrl.u32 %v202, 16
      %v275 = vrot.slane %v273, 5
      %v276 = vshll.u32 %v202, 16
      %v278 = vrot.slane %v276, 6
      %v279 = vor.u32 %v275, %v278
      %v280 = vsel %vm234, %v271, %v279
      %v281 = vrot.slane %v279, 4
      %v283 = vshrl.u32 %v219, 16
      %v285 = vrot.slane %v283, 5
      %v286 = vshll.u32 %v219, 16
      %v288 = vrot.slane %v286, 6
      %v289 = vor.u32 %v285, %v288
      %v290 = vsel %vm234, %v281, %v289
      %v292 = vshrl.u32 %v220, 16
      %v294 = vrot.slane %v292, 5
      %v295 = vshll.u32 %v220, 16
      %v297 = vrot.slane %v295, 6
      %v298 = vor.u32 %v294, %v297
      %v299 = vrot.slane %v298, 4
      %v301 = vshrl.u32 %v204, 16
      %v303 = vrot.slane %v301, 5
      %v304 = vshll.u32 %v204, 16
      %v306 = vrot.slane %v304, 6
      %v307 = vor.u32 %v303, %v306
      %v308 = vsel %vm234, %v299, %v307
      %v309 = vrot.slane %v307, 4
      %v311 = vshrl.u32 %v221, 16
      %v313 = vrot.slane %v311, 5
      %v314 = vshll.u32 %v221, 16
      %v316 = vrot.slane %v314, 6
      %v317 = vor.u32 %v313, %v316
      %v318 = vsel %vm234, %v309, %v317
      %v320 = vshrl.u32 %v222, 16
      %v322 = vrot.slane %v320, 5
      %v323 = vshll.u32 %v222, 16
      %v325 = vrot.slane %v323, 6
      %v326 = vor.u32 %v322, %v325
      %v327 = vrot.slane %v326, 4
      %v329 = vshrl.u32 %v206, 16
      %v331 = vrot.slane %v329, 5
      %v332 = vshll.u32 %v206, 16
      %v334 = vrot.slane %v332, 6
      %v335 = vor.u32 %v331, %v334
      %v336 = vsel %vm234, %v327, %v335
      %v337 = vrot.slane %v335, 4
      %v339 = vshrl.u32 %v223, 16
      %v341 = vrot.slane %v339, 5
      %v342 = vshll.u32 %v223, 16
      %v344 = vrot.slane %v342, 6
      %v345 = vor.u32 %v341, %v344
      %v346 = vsel %vm234, %v337, %v345
      %v348 = vshrl.u32 %v224, 16
      %v350 = vrot.slane %v348, 5
      %v351 = vshll.u32 %v224, 16
      %v353 = vrot.slane %v351, 6
      %v354 = vor.u32 %v350, %v353
      %v355 = vrot.slane %v354, 4
      %v357 = vshrl.u32 %v208, 16
      %v359 = vrot.slane %v357, 5
      %v360 = vshll.u32 %v208, 16
      %v362 = vrot.slane %v360, 6
      %v363 = vor.u32 %v359, %v362
      %v364 = vsel %vm234, %v355, %v363
      %v365 = vrot.slane %v363, 4
      %v367 = vshrl.u32 %v225, 16
      %v369 = vrot.slane %v367, 5
      %v370 = vshll.u32 %v225, 16
      %v372 = vrot.slane %v370, 6
      %v373 = vor.u32 %v369, %v372
      %v374 = vsel %vm234, %v365, %v373
      %v376 = vshrl.u32 %v226, 16
      %v378 = vrot.slane %v376, 5
      %v379 = vshll.u32 %v226, 16
      %v381 = vrot.slane %v379, 6
      %v382 = vor.u32 %v378, %v381
      %v383 = vrot.slane %v382, 4
      %v385 = vshrl.u32 %v210, 16
      %v387 = vrot.slane %v385, 5
      %v388 = vshll.u32 %v210, 16
      %v390 = vrot.slane %v388, 6
      %v391 = vor.u32 %v387, %v390
      %v392 = vsel %vm234, %v383, %v391
      %v393 = vrot.slane %v391, 4
      %v395 = vshrl.u32 %v227, 16
      %v397 = vrot.slane %v395, 5
      %v398 = vshll.u32 %v227, 16
      %v400 = vrot.slane %v398, 6
      %v401 = vor.u32 %v397, %v400
      %v402 = vsel %vm234, %v393, %v401
      %v404 = vshrl.u32 %v228, 16
      %v406 = vrot.slane %v404, 5
      %v407 = vshll.u32 %v228, 16
      %v409 = vrot.slane %v407, 6
      %v410 = vor.u32 %v406, %v409
      %v411 = vrot.slane %v410, 4
      %v413 = vshrl.u32 %v212, 16
      %v415 = vrot.slane %v413, 5
      %v416 = vshll.u32 %v212, 16
      %v418 = vrot.slane %v416, 6
      %v419 = vor.u32 %v415, %v418
      %v420 = vsel %vm234, %v411, %v419
      %v421 = vrot.slane %v419, 4
      %v423 = vshrl.u32 %v229, 16
      %v425 = vrot.slane %v423, 5
      %v426 = vshll.u32 %v229, 16
      %v428 = vrot.slane %v426, 6
      %v429 = vor.u32 %v425, %v428
      %v430 = vsel %vm234, %v421, %v429
      %v432 = vshrl.u32 %v230, 16
      %v434 = vrot.slane %v432, 5
      %v435 = vshll.u32 %v230, 16
      %v437 = vrot.slane %v435, 6
      %v438 = vor.u32 %v434, %v437
      %v439 = vrot.slane %v438, 4
      %v441 = vshrl.u32 %v214, 16
      %v443 = vrot.slane %v441, 5
      %v444 = vshll.u32 %v214, 16
      %v446 = vrot.slane %v444, 6
      %v447 = vor.u32 %v443, %v446
      %v448 = vsel %vm234, %v439, %v447
      %v449 = vrot.slane %v447, 4
      %v451 = vshrl.u32 %v231, 16
      %v453 = vrot.slane %v451, 5
      %v454 = vshll.u32 %v231, 16
      %v456 = vrot.slane %v454, 6
      %v457 = vor.u32 %v453, %v456
      %v458 = vsel %vm234, %v449, %v457
      %s459 = scalar_lea.vmem %s1, 2
      %v460 = vld [vmem:[%s459] sm:$0x3]
      %v461 = vunpack.c.l.b16 %v252
      %v462 = vunpack.c.l.b16 %v262
      %v463 = vunpack.c.l.b16 %v280
      %v464 = vunpack.c.l.b16 %v290
      %v465 = vunpack.c.l.b16 %v308
      %v466 = vunpack.c.l.b16 %v318
      %v467 = vunpack.c.l.b16 %v336
      %v468 = vunpack.c.l.b16 %v346
      %v469 = vunpack.c.l.b16 %v364
      %v470 = vunpack.c.l.b16 %v374
      %v471 = vunpack.c.l.b16 %v392
      %v472 = vunpack.c.l.b16 %v402
      %v473 = vunpack.c.l.b16 %v420
      %v474 = vunpack.c.l.b16 %v430
      %v475 = vunpack.c.l.b16 %v448
      %v476 = vunpack.c.l.b16 %v458
      %v477 = vpack.c.b16 %v462, %v461
      %v478 = vpack.c.b16 %v464, %v463
      %v479 = vpack.c.b16 %v466, %v465
      %v480 = vpack.c.b16 %v468, %v467
      %v481 = vpack.c.b16 %v470, %v469
      %v482 = vpack.c.b16 %v472, %v471
      %v483 = vpack.c.b16 %v474, %v473
      %v484 = vpack.c.b16 %v476, %v475
      %vm485 = vcmask 31744
      %v487 = vsel %vm485, %v477, 0
      %v490 = vsel %vm485, %v478, 0
      %v493 = vsel %vm485, %v479, 0
      %v496 = vsel %vm485, %v480, 0
      %v499 = vsel %vm485, %v481, 0
      %v502 = vsel %vm485, %v482, 0
      %v505 = vsel %vm485, %v483, 0
      %v508 = vsel %vm485, %v484, 0
      %vm510 = vcmask 1041408
      %v512 = vsel %vm510, %v460, 0
      %514 = vmatpush.bf16.msra.mxu0 0
      %515 = vmatpush.bf16.msra.mxu0 0
      %516 = vmatpush.bf16.msra.mxu0 0
      %517 = vmatpush.bf16.msra.mxu0 0
      %518 = vmatpush.bf16.msra.mxu0 0
      %519 = vmatpush.bf16.msra.mxu0 0
      %520 = vmatpush.bf16.msra.mxu0 0
      %521 = vmatpush.bf16.msra.mxu0 %v512
      %522 = vmatmul.bf16.gmra.mxu0 %v487
      %v523 = vpop.f32.mrf.mxu0
      %v524 = vadd.f32 0.0, %v523
      %v525 = vpop.f32.mrf.mxu0
      %v526 = vadd.f32 0.0, %v525
      %527 = vmatmul.bf16.gmra.mxu0 %v490
      %v528 = vpop.f32.mrf.mxu0
      %v529 = vadd.f32 0.0, %v528
      %v530 = vpop.f32.mrf.mxu0
      %v531 = vadd.f32 0.0, %v530
      %532 = vmatmul.bf16.gmra.mxu0 %v493
      %v533 = vpop.f32.mrf.mxu0
      %v534 = vadd.f32 0.0, %v533
      %v535 = vpop.f32.mrf.mxu0
      %v536 = vadd.f32 0.0, %v535
      %537 = vmatmul.bf16.gmra.mxu0 %v496
      %v538 = vpop.f32.mrf.mxu0
      %v539 = vadd.f32 0.0, %v538
      %v540 = vpop.f32.mrf.mxu0
      %v541 = vadd.f32 0.0, %v540
      %542 = vmatmul.bf16.gmra.mxu0 %v499
      %v543 = vpop.f32.mrf.mxu0
      %v544 = vadd.f32 0.0, %v543
      %v545 = vpop.f32.mrf.mxu0
      %v546 = vadd.f32 0.0, %v545
      %547 = vmatmul.bf16.gmra.mxu0 %v502
      %v548 = vpop.f32.mrf.mxu0
      %v549 = vadd.f32 0.0, %v548
      %v550 = vpop.f32.mrf.mxu0
      %v551 = vadd.f32 0.0, %v550
      %552 = vmatmul.bf16.gmra.mxu0 %v505
      %v553 = vpop.f32.mrf.mxu0
      %v554 = vadd.f32 0.0, %v553
      %v555 = vpop.f32.mrf.mxu0
      %v556 = vadd.f32 0.0, %v555
      %557 = vmatmul.bf16.gmra.mxu0 %v508
      %v558 = vpop.f32.mrf.mxu0
      %v559 = vadd.f32 0.0, %v558
      %v560 = vpop.f32.mrf.mxu0
      %v561 = vadd.f32 0.0, %v560
      %562 = vdwg.mxu0
      %v579 = vunpack.c.l.b16 %v199
      %v580 = vunpack.c.l.b16 %v200
      %v581 = vunpack.c.l.b16 %v201
      %v582 = vunpack.c.l.b16 %v202
      %v583 = vunpack.c.l.b16 %v203
      %v584 = vunpack.c.l.b16 %v204
      %v585 = vunpack.c.l.b16 %v205
      %v586 = vunpack.c.l.b16 %v206
      %v587 = vunpack.c.l.b16 %v207
      %v588 = vunpack.c.l.b16 %v208
      %v589 = vunpack.c.l.b16 %v209
      %v590 = vunpack.c.l.b16 %v210
      %v591 = vunpack.c.l.b16 %v211
      %v592 = vunpack.c.l.b16 %v212
      %v593 = vunpack.c.l.b16 %v213
      %v594 = vunpack.c.l.b16 %v214
      %v595 = vpack.c.b16 %v580, %v579
      %v596 = vpack.c.b16 %v582, %v581
      %v597 = vpack.c.b16 %v584, %v583
      %v598 = vpack.c.b16 %v586, %v585
      %v599 = vpack.c.b16 %v588, %v587
      %v600 = vpack.c.b16 %v590, %v589
      %v601 = vpack.c.b16 %v592, %v591
      %v602 = vpack.c.b16 %v594, %v593
      %v604 = vsel %vm485, %v595, 0
      %v607 = vsel %vm485, %v596, 0
      %v610 = vsel %vm485, %v597, 0
      %v613 = vsel %vm485, %v598, 0
      %v616 = vsel %vm485, %v599, 0
      %v619 = vsel %vm485, %v600, 0
      %v622 = vsel %vm485, %v601, 0
      %v625 = vsel %vm485, %v602, 0
      %v628 = vsel %vm510, %v215, 0
      %630 = vmatpush.bf16.msra.mxu0 0
      %631 = vmatpush.bf16.msra.mxu0 0
      %632 = vmatpush.bf16.msra.mxu0 0
      %633 = vmatpush.bf16.msra.mxu0 0
      %634 = vmatpush.bf16.msra.mxu0 0
      %635 = vmatpush.bf16.msra.mxu0 0
      %636 = vmatpush.bf16.msra.mxu0 0
      %637 = vmatpush.bf16.msra.mxu0 %v628
      %638 = vmatmul.bf16.gmra.mxu0 %v604
      %v639 = vpop.f32.mrf.mxu0
      %v640 = vadd.f32 %v524, %v639
      %v641 = vpop.f32.mrf.mxu0
      %v642 = vadd.f32 %v526, %v641
      %643 = vmatmul.bf16.gmra.mxu0 %v607
      %v644 = vpop.f32.mrf.mxu0
      %v645 = vadd.f32 %v529, %v644
      %v646 = vpop.f32.mrf.mxu0
      %v647 = vadd.f32 %v531, %v646
      %648 = vmatmul.bf16.gmra.mxu0 %v610
      %v649 = vpop.f32.mrf.mxu0
      %v650 = vadd.f32 %v534, %v649
      %v651 = vpop.f32.mrf.mxu0
      %v652 = vadd.f32 %v536, %v651
      %653 = vmatmul.bf16.gmra.mxu0 %v613
      %v654 = vpop.f32.mrf.mxu0
      %v655 = vadd.f32 %v539, %v654
      %v656 = vpop.f32.mrf.mxu0
      %v657 = vadd.f32 %v541, %v656
      %658 = vmatmul.bf16.gmra.mxu0 %v616
      %v659 = vpop.f32.mrf.mxu0
      %v660 = vadd.f32 %v544, %v659
      %v661 = vpop.f32.mrf.mxu0
      %v662 = vadd.f32 %v546, %v661
      %663 = vmatmul.bf16.gmra.mxu0 %v619
      %v664 = vpop.f32.mrf.mxu0
      %v665 = vadd.f32 %v549, %v664
      %v666 = vpop.f32.mrf.mxu0
      %v667 = vadd.f32 %v551, %v666
      %668 = vmatmul.bf16.gmra.mxu0 %v622
      %v669 = vpop.f32.mrf.mxu0
      %v670 = vadd.f32 %v554, %v669
      %v671 = vpop.f32.mrf.mxu0
      %v672 = vadd.f32 %v556, %v671
      %673 = vmatmul.bf16.gmra.mxu0 %v625
      %v674 = vpop.f32.mrf.mxu0
      %v675 = vadd.f32 %v559, %v674
      %v676 = vpop.f32.mrf.mxu0
      %v677 = vadd.f32 %v561, %v676
      %678 = vdwg.mxu0
      %v679 = vld [vmem:[%s198] sm:$0x8]
      %v680 = vld [vmem:[%s198 + $0x8] sm:$0x7]
      %v681 = vld [vmem:[%s198 + $0xc] sm:$0x8]
      %v682 = vld [vmem:[%s198 + $0x14] sm:$0x7]
      %v683 = vld [vmem:[%s198 + $0x18] sm:$0x8]
      %v684 = vld [vmem:[%s198 + $0x20] sm:$0x7]
      %v685 = vld [vmem:[%s198 + $0x24] sm:$0x8]
      %v686 = vld [vmem:[%s198 + $0x2c] sm:$0x7]
      %v687 = vld [vmem:[%s198 + $0x30] sm:$0x8]
      %v688 = vld [vmem:[%s198 + $0x38] sm:$0x7]
      %v689 = vld [vmem:[%s198 + $0x3c] sm:$0x8]
      %v690 = vld [vmem:[%s198 + $0x44] sm:$0x7]
      %v691 = vld [vmem:[%s198 + $0x48] sm:$0x8]
      %v692 = vld [vmem:[%s198 + $0x50] sm:$0x7]
      %v693 = vld [vmem:[%s198 + $0x54] sm:$0x8]
      %v694 = vld [vmem:[%s198 + $0x5c] sm:$0x7]
      %vm711 = vcmask 1040384
      %vm712 = vcmask 1044484
      %vm713 = vmor %vm711, %vm712
      %v714 = vrot.slane %v679, 7
      %v715 = vrot.slane %v714, 4
      %v716 = vrot.slane %v200, 7
      %v717 = vsel %vm713, %v715, %v716
      %v718 = vrot.slane %v716, 4
      %v719 = vrot.slane %v680, 7
      %v720 = vsel %vm713, %v718, %v719
      %v721 = vrot.slane %v681, 7
      %v722 = vrot.slane %v721, 4
      %v723 = vrot.slane %v202, 7
      %v724 = vsel %vm713, %v722, %v723
      %v725 = vrot.slane %v723, 4
      %v726 = vrot.slane %v682, 7
      %v727 = vsel %vm713, %v725, %v726
      %v728 = vrot.slane %v683, 7
      %v729 = vrot.slane %v728, 4
      %v730 = vrot.slane %v204, 7
      %v731 = vsel %vm713, %v729, %v730
      %v732 = vrot.slane %v730, 4
      %v733 = vrot.slane %v684, 7
      %v734 = vsel %vm713, %v732, %v733
      %v735 = vrot.slane %v685, 7
      %v736 = vrot.slane %v735, 4
      %v737 = vrot.slane %v206, 7
      %v738 = vsel %vm713, %v736, %v737
      %v739 = vrot.slane %v737, 4
      %v740 = vrot.slane %v686, 7
      %v741 = vsel %vm713, %v739, %v740
      %v742 = vrot.slane %v687, 7
      %v743 = vrot.slane %v742, 4
      %v744 = vrot.slane %v208, 7
      %v745 = vsel %vm713, %v743, %v744
      %v746 = vrot.slane %v744, 4
      %v747 = vrot.slane %v688, 7
      %v748 = vsel %vm713, %v746, %v747
      %v749 = vrot.slane %v689, 7
      %v750 = vrot.slane %v749, 4
      %v751 = vrot.slane %v210, 7
      %v752 = vsel %vm713, %v750, %v751
      %v753 = vrot.slane %v751, 4
      %v754 = vrot.slane %v690, 7
      %v755 = vsel %vm713, %v753, %v754
      %v756 = vrot.slane %v691, 7
      %v757 = vrot.slane %v756, 4
      %v758 = vrot.slane %v212, 7
      %v759 = vsel %vm713, %v757, %v758
      %v760 = vrot.slane %v758, 4
      %v761 = vrot.slane %v692, 7
      %v762 = vsel %vm713, %v760, %v761
      %v763 = vrot.slane %v693, 7
      %v764 = vrot.slane %v763, 4
      %v765 = vrot.slane %v214, 7
      %v766 = vsel %vm713, %v764, %v765
      %v767 = vrot.slane %v765, 4
      %v768 = vrot.slane %v694, 7
      %v769 = vsel %vm713, %v767, %v768
      %s770 = scalar_lea.vmem %s1, 4
      %v771 = vld [vmem:[%s770] sm:$0x3]
      %v772 = vunpack.c.l.b16 %v717
      %v773 = vunpack.c.l.b16 %v720
      %v774 = vunpack.c.l.b16 %v724
      %v775 = vunpack.c.l.b16 %v727
      %v776 = vunpack.c.l.b16 %v731
      %v777 = vunpack.c.l.b16 %v734
      %v778 = vunpack.c.l.b16 %v738
      %v779 = vunpack.c.l.b16 %v741
      %v780 = vunpack.c.l.b16 %v745
      %v781 = vunpack.c.l.b16 %v748
      %v782 = vunpack.c.l.b16 %v752
      %v783 = vunpack.c.l.b16 %v755
      %v784 = vunpack.c.l.b16 %v759
      %v785 = vunpack.c.l.b16 %v762
      %v786 = vunpack.c.l.b16 %v766
      %v787 = vunpack.c.l.b16 %v769
      %v788 = vpack.c.b16 %v773, %v772
      %v789 = vpack.c.b16 %v775, %v774
      %v790 = vpack.c.b16 %v777, %v776
      %v791 = vpack.c.b16 %v779, %v778
      %v792 = vpack.c.b16 %v781, %v780
      %v793 = vpack.c.b16 %v783, %v782
      %v794 = vpack.c.b16 %v785, %v784
      %v795 = vpack.c.b16 %v787, %v786
      %v797 = vsel %vm485, %v788, 0
      %v800 = vsel %vm485, %v789, 0
      %v803 = vsel %vm485, %v790, 0
      %v806 = vsel %vm485, %v791, 0
      %v809 = vsel %vm485, %v792, 0
      %v812 = vsel %vm485, %v793, 0
      %v815 = vsel %vm485, %v794, 0
      %v818 = vsel %vm485, %v795, 0
      %v821 = vsel %vm510, %v771, 0
      %823 = vmatpush.bf16.msra.mxu0 0
      %824 = vmatpush.bf16.msra.mxu0 0
      %825 = vmatpush.bf16.msra.mxu0 0
      %826 = vmatpush.bf16.msra.mxu0 0
      %827 = vmatpush.bf16.msra.mxu0 0
      %828 = vmatpush.bf16.msra.mxu0 0
      %829 = vmatpush.bf16.msra.mxu0 0
      %830 = vmatpush.bf16.msra.mxu0 %v821
      %831 = vmatmul.bf16.gmra.mxu0 %v797
      %v832 = vpop.f32.mrf.mxu0
      %v833 = vadd.f32 0.0, %v832
      %v834 = vpop.f32.mrf.mxu0
      %v835 = vadd.f32 0.0, %v834
      %836 = vmatmul.bf16.gmra.mxu0 %v800
      %v837 = vpop.f32.mrf.mxu0
      %v838 = vadd.f32 0.0, %v837
      %v839 = vpop.f32.mrf.mxu0
      %v840 = vadd.f32 0.0, %v839
      %841 = vmatmul.bf16.gmra.mxu0 %v803
      %v842 = vpop.f32.mrf.mxu0
      %v843 = vadd.f32 0.0, %v842
      %v844 = vpop.f32.mrf.mxu0
      %v845 = vadd.f32 0.0, %v844
      %846 = vmatmul.bf16.gmra.mxu0 %v806
      %v847 = vpop.f32.mrf.mxu0
      %v848 = vadd.f32 0.0, %v847
      %v849 = vpop.f32.mrf.mxu0
      %v850 = vadd.f32 0.0, %v849
      %851 = vmatmul.bf16.gmra.mxu0 %v809
      %v852 = vpop.f32.mrf.mxu0
      %v853 = vadd.f32 0.0, %v852
      %v854 = vpop.f32.mrf.mxu0
      %v855 = vadd.f32 0.0, %v854
      %856 = vmatmul.bf16.gmra.mxu0 %v812
      %v857 = vpop.f32.mrf.mxu0
      %v858 = vadd.f32 0.0, %v857
      %v859 = vpop.f32.mrf.mxu0
      %v860 = vadd.f32 0.0, %v859
      %861 = vmatmul.bf16.gmra.mxu0 %v815
      %v862 = vpop.f32.mrf.mxu0
      %v863 = vadd.f32 0.0, %v862
      %v864 = vpop.f32.mrf.mxu0
      %v865 = vadd.f32 0.0, %v864
      %866 = vmatmul.bf16.gmra.mxu0 %v818
      %v867 = vpop.f32.mrf.mxu0
      %v868 = vadd.f32 0.0, %v867
      %v869 = vpop.f32.mrf.mxu0
      %v870 = vadd.f32 0.0, %v869
      %871 = vdwg.mxu0
      %v872 = vadd.f32 %v640, %v833
      %v873 = vadd.f32 %v642, %v835
      %v874 = vadd.f32 %v645, %v838
      %v875 = vadd.f32 %v647, %v840
      %v876 = vadd.f32 %v650, %v843
      %v877 = vadd.f32 %v652, %v845
      %v878 = vadd.f32 %v655, %v848
      %v879 = vadd.f32 %v657, %v850
      %v880 = vadd.f32 %v660, %v853
      %v881 = vadd.f32 %v662, %v855
      %v882 = vadd.f32 %v665, %v858
      %v883 = vadd.f32 %v667, %v860
      %v884 = vadd.f32 %v670, %v863
      %v885 = vadd.f32 %v672, %v865
      %v886 = vadd.f32 %v675, %v868
      %v887 = vadd.f32 %v677, %v870
      %s888 = sadd.s32 %s195, 3
      %s889 = smul.u32 %s888, 3
      %s890 = smul.addr %s889, 4
      %s891 = scalar_lea.vmem %s183, %s890
      %v892 = vld [vmem:[%s891] sm:$0xf]
      %v893 = vld [vmem:[%s891 + $0x4] sm:$0xf]
      %v894 = vld [vmem:[%s891 + $0xc] sm:$0xf]
      %v895 = vld [vmem:[%s891 + $0x10] sm:$0xf]
      %v896 = vld [vmem:[%s891 + $0x18] sm:$0xf]
      %v897 = vld [vmem:[%s891 + $0x1c] sm:$0xf]
      %v898 = vld [vmem:[%s891 + $0x24] sm:$0xf]
      %v899 = vld [vmem:[%s891 + $0x28] sm:$0xf]
      %v900 = vld [vmem:[%s891 + $0x30] sm:$0xf]
      %v901 = vld [vmem:[%s891 + $0x34] sm:$0xf]
      %v902 = vld [vmem:[%s891 + $0x3c] sm:$0xf]
      %v903 = vld [vmem:[%s891 + $0x40] sm:$0xf]
      %v904 = vld [vmem:[%s891 + $0x48] sm:$0xf]
      %v905 = vld [vmem:[%s891 + $0x4c] sm:$0xf]
      %v906 = vld [vmem:[%s891 + $0x54] sm:$0xf]
      %v907 = vld [vmem:[%s891 + $0x58] sm:$0xf]
      %s908 = scalar_lea.vmem %s1, 6
      %v909 = vld [vmem:[%s908] sm:$0x3]
      %v926 = vunpack.c.l.b16 %v892
      %v927 = vunpack.c.l.b16 %v893
      %v928 = vunpack.c.l.b16 %v894
      %v929 = vunpack.c.l.b16 %v895
      %v930 = vunpack.c.l.b16 %v896
      %v931 = vunpack.c.l.b16 %v897
      %v932 = vunpack.c.l.b16 %v898
      %v933 = vunpack.c.l.b16 %v899
      %v934 = vunpack.c.l.b16 %v900
      %v935 = vunpack.c.l.b16 %v901
      %v936 = vunpack.c.l.b16 %v902
      %v937 = vunpack.c.l.b16 %v903
      %v938 = vunpack.c.l.b16 %v904
      %v939 = vunpack.c.l.b16 %v905
      %v940 = vunpack.c.l.b16 %v906
      %v941 = vunpack.c.l.b16 %v907
      %v942 = vpack.c.b16 %v927, %v926
      %v943 = vpack.c.b16 %v929, %v928
      %v944 = vpack.c.b16 %v931, %v930
      %v945 = vpack.c.b16 %v933, %v932
      %v946 = vpack.c.b16 %v935, %v934
      %v947 = vpack.c.b16 %v937, %v936
      %v948 = vpack.c.b16 %v939, %v938
      %v949 = vpack.c.b16 %v941, %v940
      %v951 = vsel %vm485, %v942, 0
      %v954 = vsel %vm485, %v943, 0
      %v957 = vsel %vm485, %v944, 0
      %v960 = vsel %vm485, %v945, 0
      %v963 = vsel %vm485, %v946, 0
      %v966 = vsel %vm485, %v947, 0
      %v969 = vsel %vm485, %v948, 0
      %v972 = vsel %vm485, %v949, 0
      %v975 = vsel %vm510, %v909, 0
      %977 = vmatpush.bf16.msra.mxu0 0
      %978 = vmatpush.bf16.msra.mxu0 0
      %979 = vmatpush.bf16.msra.mxu0 0
      %980 = vmatpush.bf16.msra.mxu0 0
      %981 = vmatpush.bf16.msra.mxu0 0
      %982 = vmatpush.bf16.msra.mxu0 0
      %983 = vmatpush.bf16.msra.mxu0 0
      %984 = vmatpush.bf16.msra.mxu0 %v975
      %985 = vmatmul.bf16.gmra.mxu0 %v951
      %v986 = vpop.f32.mrf.mxu0
      %v987 = vadd.f32 0.0, %v986
      %v988 = vpop.f32.mrf.mxu0
      %v989 = vadd.f32 0.0, %v988
      %990 = vmatmul.bf16.gmra.mxu0 %v954
      %v991 = vpop.f32.mrf.mxu0
      %v992 = vadd.f32 0.0, %v991
      %v993 = vpop.f32.mrf.mxu0
      %v994 = vadd.f32 0.0, %v993
      %995 = vmatmul.bf16.gmra.mxu0 %v957
      %v996 = vpop.f32.mrf.mxu0
      %v997 = vadd.f32 0.0, %v996
      %v998 = vpop.f32.mrf.mxu0
      %v999 = vadd.f32 0.0, %v998
      %1000 = vmatmul.bf16.gmra.mxu0 %v960
      %v1001 = vpop.f32.mrf.mxu0
      %v1002 = vadd.f32 0.0, %v1001
      %v1003 = vpop.f32.mrf.mxu0
      %v1004 = vadd.f32 0.0, %v1003
      %1005 = vmatmul.bf16.gmra.mxu0 %v963
      %v1006 = vpop.f32.mrf.mxu0
      %v1007 = vadd.f32 0.0, %v1006
      %v1008 = vpop.f32.mrf.mxu0
      %v1009 = vadd.f32 0.0, %v1008
      %1010 = vmatmul.bf16.gmra.mxu0 %v966
      %v1011 = vpop.f32.mrf.mxu0
      %v1012 = vadd.f32 0.0, %v1011
      %v1013 = vpop.f32.mrf.mxu0
      %v1014 = vadd.f32 0.0, %v1013
      %1015 = vmatmul.bf16.gmra.mxu0 %v969
      %v1016 = vpop.f32.mrf.mxu0
      %v1017 = vadd.f32 0.0, %v1016
      %v1018 = vpop.f32.mrf.mxu0
      %v1019 = vadd.f32 0.0, %v1018
      %1020 = vmatmul.bf16.gmra.mxu0 %v972
      %v1021 = vpop.f32.mrf.mxu0
      %v1022 = vadd.f32 0.0, %v1021
      %v1023 = vpop.f32.mrf.mxu0
      %v1024 = vadd.f32 0.0, %v1023
      %1025 = vdwg.mxu0
      %v1026 = vadd.f32 %v872, %v987
      %v1027 = vadd.f32 %v873, %v989
      %v1028 = vadd.f32 %v874, %v992
      %v1029 = vadd.f32 %v875, %v994
      %v1030 = vadd.f32 %v876, %v997
      %v1031 = vadd.f32 %v877, %v999
      %v1032 = vadd.f32 %v878, %v1002
      %v1033 = vadd.f32 %v879, %v1004
      %v1034 = vadd.f32 %v880, %v1007
      %v1035 = vadd.f32 %v881, %v1009
      %v1036 = vadd.f32 %v882, %v1012
      %v1037 = vadd.f32 %v883, %v1014
      %v1038 = vadd.f32 %v884, %v1017
      %v1039 = vadd.f32 %v885, %v1019
      %v1040 = vadd.f32 %v886, %v1022
      %v1041 = vadd.f32 %v887, %v1024
      %v1042 = vld [vmem:[%s891] sm:$0xe]
      %v1043 = vld [vmem:[%s891 + $0x4] sm:$0xf]
      %v1044 = vld [vmem:[%s891 + $0x8] sm:$0x3]
      %v1045 = vld [vmem:[%s891 + $0xc] sm:$0xe]
      %v1046 = vld [vmem:[%s891 + $0x10] sm:$0xf]
      %v1047 = vld [vmem:[%s891 + $0x14] sm:$0x3]
      %v1048 = vld [vmem:[%s891 + $0x18] sm:$0xe]
      %v1049 = vld [vmem:[%s891 + $0x1c] sm:$0xf]
      %v1050 = vld [vmem:[%s891 + $0x20] sm:$0x3]
      %v1051 = vld [vmem:[%s891 + $0x24] sm:$0xe]
      %v1052 = vld [vmem:[%s891 + $0x28] sm:$0xf]
      %v1053 = vld [vmem:[%s891 + $0x2c] sm:$0x3]
      %v1054 = vld [vmem:[%s891 + $0x30] sm:$0xe]
      %v1055 = vld [vmem:[%s891 + $0x34] sm:$0xf]
      %v1056 = vld [vmem:[%s891 + $0x38] sm:$0x3]
      %v1057 = vld [vmem:[%s891 + $0x3c] sm:$0xe]
      %v1058 = vld [vmem:[%s891 + $0x40] sm:$0xf]
      %v1059 = vld [vmem:[%s891 + $0x44] sm:$0x3]
      %v1060 = vld [vmem:[%s891 + $0x48] sm:$0xe]
      %v1061 = vld [vmem:[%s891 + $0x4c] sm:$0xf]
      %v1062 = vld [vmem:[%s891 + $0x50] sm:$0x3]
      %v1063 = vld [vmem:[%s891 + $0x54] sm:$0xe]
      %v1064 = vld [vmem:[%s891 + $0x58] sm:$0xf]
      %v1065 = vld [vmem:[%s891 + $0x5c] sm:$0x3]
      %v1067 = vshrl.u32 %v1042, 16
      %v1069 = vrot.slane %v1067, 5
      %v1070 = vshll.u32 %v1042, 16
      %v1072 = vrot.slane %v1070, 6
      %v1073 = vor.u32 %v1069, %v1072
      %v1074 = vrot.slane %v1073, 4
      %v1076 = vshrl.u32 %v1043, 16
      %v1078 = vrot.slane %v1076, 5
      %v1079 = vshll.u32 %v1043, 16
      %v1081 = vrot.slane %v1079, 6
      %v1082 = vor.u32 %v1078, %v1081
      %v1083 = vsel %vm234, %v1074, %v1082
      %v1084 = vrot.slane %v1082, 4
      %v1086 = vshrl.u32 %v1044, 16
      %v1088 = vrot.slane %v1086, 5
      %v1089 = vshll.u32 %v1044, 16
      %v1091 = vrot.slane %v1089, 6
      %v1092 = vor.u32 %v1088, %v1091
      %v1093 = vsel %vm234, %v1084, %v1092
      %v1095 = vshrl.u32 %v1045, 16
      %v1097 = vrot.slane %v1095, 5
      %v1098 = vshll.u32 %v1045, 16
      %v1100 = vrot.slane %v1098, 6
      %v1101 = vor.u32 %v1097, %v1100
      %v1102 = vrot.slane %v1101, 4
      %v1104 = vshrl.u32 %v1046, 16
      %v1106 = vrot.slane %v1104, 5
      %v1107 = vshll.u32 %v1046, 16
      %v1109 = vrot.slane %v1107, 6
      %v1110 = vor.u32 %v1106, %v1109
      %v1111 = vsel %vm234, %v1102, %v1110
      %v1112 = vrot.slane %v1110, 4
      %v1114 = vshrl.u32 %v1047, 16
      %v1116 = vrot.slane %v1114, 5
      %v1117 = vshll.u32 %v1047, 16
      %v1119 = vrot.slane %v1117, 6
      %v1120 = vor.u32 %v1116, %v1119
      %v1121 = vsel %vm234, %v1112, %v1120
      %v1123 = vshrl.u32 %v1048, 16
      %v1125 = vrot.slane %v1123, 5
      %v1126 = vshll.u32 %v1048, 16
      %v1128 = vrot.slane %v1126, 6
      %v1129 = vor.u32 %v1125, %v1128
      %v1130 = vrot.slane %v1129, 4
      %v1132 = vshrl.u32 %v1049, 16
      %v1134 = vrot.slane %v1132, 5
      %v1135 = vshll.u32 %v1049, 16
      %v1137 = vrot.slane %v1135, 6
      %v1138 = vor.u32 %v1134, %v1137
      %v1139 = vsel %vm234, %v1130, %v1138
      %v1140 = vrot.slane %v1138, 4
      %v1142 = vshrl.u32 %v1050, 16
      %v1144 = vrot.slane %v1142, 5
      %v1145 = vshll.u32 %v1050, 16
      %v1147 = vrot.slane %v1145, 6
      %v1148 = vor.u32 %v1144, %v1147
      %v1149 = vsel %vm234, %v1140, %v1148
      %v1151 = vshrl.u32 %v1051, 16
      %v1153 = vrot.slane %v1151, 5
      %v1154 = vshll.u32 %v1051, 16
      %v1156 = vrot.slane %v1154, 6
      %v1157 = vor.u32 %v1153, %v1156
      %v1158 = vrot.slane %v1157, 4
      %v1160 = vshrl.u32 %v1052, 16
      %v1162 = vrot.slane %v1160, 5
      %v1163 = vshll.u32 %v1052, 16
      %v1165 = vrot.slane %v1163, 6
      %v1166 = vor.u32 %v1162, %v1165
      %v1167 = vsel %vm234, %v1158, %v1166
      %v1168 = vrot.slane %v1166, 4
      %v1170 = vshrl.u32 %v1053, 16
      %v1172 = vrot.slane %v1170, 5
      %v1173 = vshll.u32 %v1053, 16
      %v1175 = vrot.slane %v1173, 6
      %v1176 = vor.u32 %v1172, %v1175
      %v1177 = vsel %vm234, %v1168, %v1176
      %v1179 = vshrl.u32 %v1054, 16
      %v1181 = vrot.slane %v1179, 5
      %v1182 = vshll.u32 %v1054, 16
      %v1184 = vrot.slane %v1182, 6
      %v1185 = vor.u32 %v1181, %v1184
      %v1186 = vrot.slane %v1185, 4
      %v1188 = vshrl.u32 %v1055, 16
      %v1190 = vrot.slane %v1188, 5
      %v1191 = vshll.u32 %v1055, 16
      %v1193 = vrot.slane %v1191, 6
      %v1194 = vor.u32 %v1190, %v1193
      %v1195 = vsel %vm234, %v1186, %v1194
      %v1196 = vrot.slane %v1194, 4
      %v1198 = vshrl.u32 %v1056, 16
      %v1200 = vrot.slane %v1198, 5
      %v1201 = vshll.u32 %v1056, 16
      %v1203 = vrot.slane %v1201, 6
      %v1204 = vor.u32 %v1200, %v1203
      %v1205 = vsel %vm234, %v1196, %v1204
      %v1207 = vshrl.u32 %v1057, 16
      %v1209 = vrot.slane %v1207, 5
      %v1210 = vshll.u32 %v1057, 16
      %v1212 = vrot.slane %v1210, 6
      %v1213 = vor.u32 %v1209, %v1212
      %v1214 = vrot.slane %v1213, 4
      %v1216 = vshrl.u32 %v1058, 16
      %v1218 = vrot.slane %v1216, 5
      %v1219 = vshll.u32 %v1058, 16
      %v1221 = vrot.slane %v1219, 6
      %v1222 = vor.u32 %v1218, %v1221
      %v1223 = vsel %vm234, %v1214, %v1222
      %v1224 = vrot.slane %v1222, 4
      %v1226 = vshrl.u32 %v1059, 16
      %v1228 = vrot.slane %v1226, 5
      %v1229 = vshll.u32 %v1059, 16
      %v1231 = vrot.slane %v1229, 6
      %v1232 = vor.u32 %v1228, %v1231
      %v1233 = vsel %vm234, %v1224, %v1232
      %v1235 = vshrl.u32 %v1060, 16
      %v1237 = vrot.slane %v1235, 5
      %v1238 = vshll.u32 %v1060, 16
      %v1240 = vrot.slane %v1238, 6
      %v1241 = vor.u32 %v1237, %v1240
      %v1242 = vrot.slane %v1241, 4
      %v1244 = vshrl.u32 %v1061, 16
      %v1246 = vrot.slane %v1244, 5
      %v1247 = vshll.u32 %v1061, 16
      %v1249 = vrot.slane %v1247, 6
      %v1250 = vor.u32 %v1246, %v1249
      %v1251 = vsel %vm234, %v1242, %v1250
      %v1252 = vrot.slane %v1250, 4
      %v1254 = vshrl.u32 %v1062, 16
      %v1256 = vrot.slane %v1254, 5
      %v1257 = vshll.u32 %v1062, 16
      %v1259 = vrot.slane %v1257, 6
      %v1260 = vor.u32 %v1256, %v1259
      %v1261 = vsel %vm234, %v1252, %v1260
      %v1263 = vshrl.u32 %v1063, 16
      %v1265 = vrot.slane %v1263, 5
      %v1266 = vshll.u32 %v1063, 16
      %v1268 = vrot.slane %v1266, 6
      %v1269 = vor.u32 %v1265, %v1268
      %v1270 = vrot.slane %v1269, 4
      %v1272 = vshrl.u32 %v1064, 16
      %v1274 = vrot.slane %v1272, 5
      %v1275 = vshll.u32 %v1064, 16
      %v1277 = vrot.slane %v1275, 6
      %v1278 = vor.u32 %v1274, %v1277
      %v1279 = vsel %vm234, %v1270, %v1278
      %v1280 = vrot.slane %v1278, 4
      %v1282 = vshrl.u32 %v1065, 16
      %v1284 = vrot.slane %v1282, 5
      %v1285 = vshll.u32 %v1065, 16
      %v1287 = vrot.slane %v1285, 6
      %v1288 = vor.u32 %v1284, %v1287
      %v1289 = vsel %vm234, %v1280, %v1288
      %s1290 = scalar_lea.vmem %s1, 8
      %v1291 = vld [vmem:[%s1290] sm:$0x3]
      %v1292 = vunpack.c.l.b16 %v1083
      %v1293 = vunpack.c.l.b16 %v1093
      %v1294 = vunpack.c.l.b16 %v1111
      %v1295 = vunpack.c.l.b16 %v1121
      %v1296 = vunpack.c.l.b16 %v1139
      %v1297 = vunpack.c.l.b16 %v1149
      %v1298 = vunpack.c.l.b16 %v1167
      %v1299 = vunpack.c.l.b16 %v1177
      %v1300 = vunpack.c.l.b16 %v1195
      %v1301 = vunpack.c.l.b16 %v1205
      %v1302 = vunpack.c.l.b16 %v1223
      %v1303 = vunpack.c.l.b16 %v1233
      %v1304 = vunpack.c.l.b16 %v1251
      %v1305 = vunpack.c.l.b16 %v1261
      %v1306 = vunpack.c.l.b16 %v1279
      %v1307 = vunpack.c.l.b16 %v1289
      %v1308 = vpack.c.b16 %v1293, %v1292
      %v1309 = vpack.c.b16 %v1295, %v1294
      %v1310 = vpack.c.b16 %v1297, %v1296
      %v1311 = vpack.c.b16 %v1299, %v1298
      %v1312 = vpack.c.b16 %v1301, %v1300
      %v1313 = vpack.c.b16 %v1303, %v1302
      %v1314 = vpack.c.b16 %v1305, %v1304
      %v1315 = vpack.c.b16 %v1307, %v1306
      %v1317 = vsel %vm485, %v1308, 0
      %v1320 = vsel %vm485, %v1309, 0
      %v1323 = vsel %vm485, %v1310, 0
      %v1326 = vsel %vm485, %v1311, 0
      %v1329 = vsel %vm485, %v1312, 0
      %v1332 = vsel %vm485, %v1313, 0
      %v1335 = vsel %vm485, %v1314, 0
      %v1338 = vsel %vm485, %v1315, 0
      %v1341 = vsel %vm510, %v1291, 0
      %1343 = vmatpush.bf16.msra.mxu0 0
      %1344 = vmatpush.bf16.msra.mxu0 0
      %1345 = vmatpush.bf16.msra.mxu0 0
      %1346 = vmatpush.bf16.msra.mxu0 0
      %1347 = vmatpush.bf16.msra.mxu0 0
      %1348 = vmatpush.bf16.msra.mxu0 0
      %1349 = vmatpush.bf16.msra.mxu0 0
      %1350 = vmatpush.bf16.msra.mxu0 %v1341
      %1351 = vmatmul.bf16.gmra.mxu0 %v1317
      %v1352 = vpop.f32.mrf.mxu0
      %v1353 = vadd.f32 0.0, %v1352
      %v1354 = vpop.f32.mrf.mxu0
      %v1355 = vadd.f32 0.0, %v1354
      %1356 = vmatmul.bf16.gmra.mxu0 %v1320
      %v1357 = vpop.f32.mrf.mxu0
      %v1358 = vadd.f32 0.0, %v1357
      %v1359 = vpop.f32.mrf.mxu0
      %v1360 = vadd.f32 0.0, %v1359
      %1361 = vmatmul.bf16.gmra.mxu0 %v1323
      %v1362 = vpop.f32.mrf.mxu0
      %v1363 = vadd.f32 0.0, %v1362
      %v1364 = vpop.f32.mrf.mxu0
      %v1365 = vadd.f32 0.0, %v1364
      %1366 = vmatmul.bf16.gmra.mxu0 %v1326
      %v1367 = vpop.f32.mrf.mxu0
      %v1368 = vadd.f32 0.0, %v1367
      %v1369 = vpop.f32.mrf.mxu0
      %v1370 = vadd.f32 0.0, %v1369
      %1371 = vmatmul.bf16.gmra.mxu0 %v1329
      %v1372 = vpop.f32.mrf.mxu0
      %v1373 = vadd.f32 0.0, %v1372
      %v1374 = vpop.f32.mrf.mxu0
      %v1375 = vadd.f32 0.0, %v1374
      %1376 = vmatmul.bf16.gmra.mxu0 %v1332
      %v1377 = vpop.f32.mrf.mxu0
      %v1378 = vadd.f32 0.0, %v1377
      %v1379 = vpop.f32.mrf.mxu0
      %v1380 = vadd.f32 0.0, %v1379
      %1381 = vmatmul.bf16.gmra.mxu0 %v1335
      %v1382 = vpop.f32.mrf.mxu0
      %v1383 = vadd.f32 0.0, %v1382
      %v1384 = vpop.f32.mrf.mxu0
      %v1385 = vadd.f32 0.0, %v1384
      %1386 = vmatmul.bf16.gmra.mxu0 %v1338
      %v1387 = vpop.f32.mrf.mxu0
      %v1388 = vadd.f32 0.0, %v1387
      %v1389 = vpop.f32.mrf.mxu0
      %v1390 = vadd.f32 0.0, %v1389
      %1391 = vdwg.mxu0
      %v1392 = vadd.f32 %v1026, %v1353
      %v1393 = vadd.f32 %v1027, %v1355
      %v1394 = vadd.f32 %v1028, %v1358
      %v1395 = vadd.f32 %v1029, %v1360
      %v1396 = vadd.f32 %v1030, %v1363
      %v1397 = vadd.f32 %v1031, %v1365
      %v1398 = vadd.f32 %v1032, %v1368
      %v1399 = vadd.f32 %v1033, %v1370
      %v1400 = vadd.f32 %v1034, %v1373
      %v1401 = vadd.f32 %v1035, %v1375
      %v1402 = vadd.f32 %v1036, %v1378
      %v1403 = vadd.f32 %v1037, %v1380
      %v1404 = vadd.f32 %v1038, %v1383
      %v1405 = vadd.f32 %v1039, %v1385
      %v1406 = vadd.f32 %v1040, %v1388
      %v1407 = vadd.f32 %v1041, %v1390
      %v1408 = vld [vmem:[%s891] sm:$0x8]
      %v1409 = vld [vmem:[%s891 + $0x8] sm:$0x7]
      %v1410 = vld [vmem:[%s891 + $0xc] sm:$0x8]
      %v1411 = vld [vmem:[%s891 + $0x14] sm:$0x7]
      %v1412 = vld [vmem:[%s891 + $0x18] sm:$0x8]
      %v1413 = vld [vmem:[%s891 + $0x20] sm:$0x7]
      %v1414 = vld [vmem:[%s891 + $0x24] sm:$0x8]
      %v1415 = vld [vmem:[%s891 + $0x2c] sm:$0x7]
      %v1416 = vld [vmem:[%s891 + $0x30] sm:$0x8]
      %v1417 = vld [vmem:[%s891 + $0x38] sm:$0x7]
      %v1418 = vld [vmem:[%s891 + $0x3c] sm:$0x8]
      %v1419 = vld [vmem:[%s891 + $0x44] sm:$0x7]
      %v1420 = vld [vmem:[%s891 + $0x48] sm:$0x8]
      %v1421 = vld [vmem:[%s891 + $0x50] sm:$0x7]
      %v1422 = vld [vmem:[%s891 + $0x54] sm:$0x8]
      %v1423 = vld [vmem:[%s891 + $0x5c] sm:$0x7]
      %v1448 = vrot.slane %v1408, 7
      %v1449 = vrot.slane %v1448, 4
      %v1450 = vrot.slane %v1043, 7
      %v1451 = vsel %vm713, %v1449, %v1450
      %v1452 = vrot.slane %v1450, 4
      %v1453 = vrot.slane %v1409, 7
      %v1454 = vsel %vm713, %v1452, %v1453
      %v1455 = vrot.slane %v1410, 7
      %v1456 = vrot.slane %v1455, 4
      %v1457 = vrot.slane %v1046, 7
      %v1458 = vsel %vm713, %v1456, %v1457
      %v1459 = vrot.slane %v1457, 4
      %v1460 = vrot.slane %v1411, 7
      %v1461 = vsel %vm713, %v1459, %v1460
      %v1462 = vrot.slane %v1412, 7
      %v1463 = vrot.slane %v1462, 4
      %v1464 = vrot.slane %v1049, 7
      %v1465 = vsel %vm713, %v1463, %v1464
      %v1466 = vrot.slane %v1464, 4
      %v1467 = vrot.slane %v1413, 7
      %v1468 = vsel %vm713, %v1466, %v1467
      %v1469 = vrot.slane %v1414, 7
      %v1470 = vrot.slane %v1469, 4
      %v1471 = vrot.slane %v1052, 7
      %v1472 = vsel %vm713, %v1470, %v1471
      %v1473 = vrot.slane %v1471, 4
      %v1474 = vrot.slane %v1415, 7
      %v1475 = vsel %vm713, %v1473, %v1474
      %v1476 = vrot.slane %v1416, 7
      %v1477 = vrot.slane %v1476, 4
      %v1478 = vrot.slane %v1055, 7
      %v1479 = vsel %vm713, %v1477, %v1478
      %v1480 = vrot.slane %v1478, 4
      %v1481 = vrot.slane %v1417, 7
      %v1482 = vsel %vm713, %v1480, %v1481
      %v1483 = vrot.slane %v1418, 7
      %v1484 = vrot.slane %v1483, 4
      %v1485 = vrot.slane %v1058, 7
      %v1486 = vsel %vm713, %v1484, %v1485
      %v1487 = vrot.slane %v1485, 4
      %v1488 = vrot.slane %v1419, 7
      %v1489 = vsel %vm713, %v1487, %v1488
      %v1490 = vrot.slane %v1420, 7
      %v1491 = vrot.slane %v1490, 4
      %v1492 = vrot.slane %v1061, 7
      %v1493 = vsel %vm713, %v1491, %v1492
      %v1494 = vrot.slane %v1492, 4
      %v1495 = vrot.slane %v1421, 7
      %v1496 = vsel %vm713, %v1494, %v1495
      %v1497 = vrot.slane %v1422, 7
      %v1498 = vrot.slane %v1497, 4
      %v1499 = vrot.slane %v1064, 7
      %v1500 = vsel %vm713, %v1498, %v1499
      %v1501 = vrot.slane %v1499, 4
      %v1502 = vrot.slane %v1423, 7
      %v1503 = vsel %vm713, %v1501, %v1502
      %s1504 = scalar_lea.vmem %s1, 10
      %v1505 = vld [vmem:[%s1504] sm:$0x3]
      %v1506 = vunpack.c.l.b16 %v1451
      %v1507 = vunpack.c.l.b16 %v1454
      %v1508 = vunpack.c.l.b16 %v1458
      %v1509 = vunpack.c.l.b16 %v1461
      %v1510 = vunpack.c.l.b16 %v1465
      %v1511 = vunpack.c.l.b16 %v1468
      %v1512 = vunpack.c.l.b16 %v1472
      %v1513 = vunpack.c.l.b16 %v1475
      %v1514 = vunpack.c.l.b16 %v1479
      %v1515 = vunpack.c.l.b16 %v1482
      %v1516 = vunpack.c.l.b16 %v1486
      %v1517 = vunpack.c.l.b16 %v1489
      %v1518 = vunpack.c.l.b16 %v1493
      %v1519 = vunpack.c.l.b16 %v1496
      %v1520 = vunpack.c.l.b16 %v1500
      %v1521 = vunpack.c.l.b16 %v1503
      %v1522 = vpack.c.b16 %v1507, %v1506
      %v1523 = vpack.c.b16 %v1509, %v1508
      %v1524 = vpack.c.b16 %v1511, %v1510
      %v1525 = vpack.c.b16 %v1513, %v1512
      %v1526 = vpack.c.b16 %v1515, %v1514
      %v1527 = vpack.c.b16 %v1517, %v1516
      %v1528 = vpack.c.b16 %v1519, %v1518
      %v1529 = vpack.c.b16 %v1521, %v1520
      %v1531 = vsel %vm485, %v1522, 0
      %v1534 = vsel %vm485, %v1523, 0
      %v1537 = vsel %vm485, %v1524, 0
      %v1540 = vsel %vm485, %v1525, 0
      %v1543 = vsel %vm485, %v1526, 0
      %v1546 = vsel %vm485, %v1527, 0
      %v1549 = vsel %vm485, %v1528, 0
      %v1552 = vsel %vm485, %v1529, 0
      %v1555 = vsel %vm510, %v1505, 0
      %1557 = vmatpush.bf16.msra.mxu0 0
      %1558 = vmatpush.bf16.msra.mxu0 0
      %1559 = vmatpush.bf16.msra.mxu0 0
      %1560 = vmatpush.bf16.msra.mxu0 0
      %1561 = vmatpush.bf16.msra.mxu0 0
      %1562 = vmatpush.bf16.msra.mxu0 0
      %1563 = vmatpush.bf16.msra.mxu0 0
      %1564 = vmatpush.bf16.msra.mxu0 %v1555
      %1565 = vmatmul.bf16.gmra.mxu0 %v1531
      %v1566 = vpop.f32.mrf.mxu0
      %v1567 = vadd.f32 0.0, %v1566
      %v1568 = vpop.f32.mrf.mxu0
      %v1569 = vadd.f32 0.0, %v1568
      %1570 = vmatmul.bf16.gmra.mxu0 %v1534
      %v1571 = vpop.f32.mrf.mxu0
      %v1572 = vadd.f32 0.0, %v1571
      %v1573 = vpop.f32.mrf.mxu0
      %v1574 = vadd.f32 0.0, %v1573
      %1575 = vmatmul.bf16.gmra.mxu0 %v1537
      %v1576 = vpop.f32.mrf.mxu0
      %v1577 = vadd.f32 0.0, %v1576
      %v1578 = vpop.f32.mrf.mxu0
      %v1579 = vadd.f32 0.0, %v1578
      %1580 = vmatmul.bf16.gmra.mxu0 %v1540
      %v1581 = vpop.f32.mrf.mxu0
      %v1582 = vadd.f32 0.0, %v1581
      %v1583 = vpop.f32.mrf.mxu0
      %v1584 = vadd.f32 0.0, %v1583
      %1585 = vmatmul.bf16.gmra.mxu0 %v1543
      %v1586 = vpop.f32.mrf.mxu0
      %v1587 = vadd.f32 0.0, %v1586
      %v1588 = vpop.f32.mrf.mxu0
      %v1589 = vadd.f32 0.0, %v1588
      %1590 = vmatmul.bf16.gmra.mxu0 %v1546
      %v1591 = vpop.f32.mrf.mxu0
      %v1592 = vadd.f32 0.0, %v1591
      %v1593 = vpop.f32.mrf.mxu0
      %v1594 = vadd.f32 0.0, %v1593
      %1595 = vmatmul.bf16.gmra.mxu0 %v1549
      %v1596 = vpop.f32.mrf.mxu0
      %v1597 = vadd.f32 0.0, %v1596
      %v1598 = vpop.f32.mrf.mxu0
      %v1599 = vadd.f32 0.0, %v1598
      %1600 = vmatmul.bf16.gmra.mxu0 %v1552
      %v1601 = vpop.f32.mrf.mxu0
      %v1602 = vadd.f32 0.0, %v1601
      %v1603 = vpop.f32.mrf.mxu0
      %v1604 = vadd.f32 0.0, %v1603
      %1605 = vdwg.mxu0
      %v1606 = vadd.f32 %v1392, %v1567
      %v1607 = vadd.f32 %v1393, %v1569
      %v1608 = vadd.f32 %v1394, %v1572
      %v1609 = vadd.f32 %v1395, %v1574
      %v1610 = vadd.f32 %v1396, %v1577
      %v1611 = vadd.f32 %v1397, %v1579
      %v1612 = vadd.f32 %v1398, %v1582
      %v1613 = vadd.f32 %v1399, %v1584
      %v1614 = vadd.f32 %v1400, %v1587
      %v1615 = vadd.f32 %v1401, %v1589
      %v1616 = vadd.f32 %v1402, %v1592
      %v1617 = vadd.f32 %v1403, %v1594
      %v1618 = vadd.f32 %v1404, %v1597
      %v1619 = vadd.f32 %v1405, %v1599
      %v1620 = vadd.f32 %v1406, %v1602
      %v1621 = vadd.f32 %v1407, %v1604
      %s1622 = sadd.s32 %s195, 6
      %s1623 = smul.u32 %s1622, 3
      %s1624 = smul.addr %s1623, 4
      %s1625 = scalar_lea.vmem %s183, %s1624
      %v1626 = vld [vmem:[%s1625] sm:$0xf]
      %v1627 = vld [vmem:[%s1625 + $0x4] sm:$0xf]
      %v1628 = vld [vmem:[%s1625 + $0xc] sm:$0xf]
      %v1629 = vld [vmem:[%s1625 + $0x10] sm:$0xf]
      %v1630 = vld [vmem:[%s1625 + $0x18] sm:$0xf]
      %v1631 = vld [vmem:[%s1625 + $0x1c] sm:$0xf]
      %v1632 = vld [vmem:[%s1625 + $0x24] sm:$0xf]
      %v1633 = vld [vmem:[%s1625 + $0x28] sm:$0xf]
      %v1634 = vld [vmem:[%s1625 + $0x30] sm:$0xf]
      %v1635 = vld [vmem:[%s1625 + $0x34] sm:$0xf]
      %v1636 = vld [vmem:[%s1625 + $0x3c] sm:$0xf]
      %v1637 = vld [vmem:[%s1625 + $0x40] sm:$0xf]
      %v1638 = vld [vmem:[%s1625 + $0x48] sm:$0xf]
      %v1639 = vld [vmem:[%s1625 + $0x4c] sm:$0xf]
      %v1640 = vld [vmem:[%s1625 + $0x54] sm:$0xf]
      %v1641 = vld [vmem:[%s1625 + $0x58] sm:$0xf]
      %s1642 = scalar_lea.vmem %s1, 12
      %v1643 = vld [vmem:[%s1642] sm:$0x3]
      %v1660 = vunpack.c.l.b16 %v1626
      %v1661 = vunpack.c.l.b16 %v1627
      %v1662 = vunpack.c.l.b16 %v1628
      %v1663 = vunpack.c.l.b16 %v1629
      %v1664 = vunpack.c.l.b16 %v1630
      %v1665 = vunpack.c.l.b16 %v1631
      %v1666 = vunpack.c.l.b16 %v1632
      %v1667 = vunpack.c.l.b16 %v1633
      %v1668 = vunpack.c.l.b16 %v1634
      %v1669 = vunpack.c.l.b16 %v1635
      %v1670 = vunpack.c.l.b16 %v1636
      %v1671 = vunpack.c.l.b16 %v1637
      %v1672 = vunpack.c.l.b16 %v1638
      %v1673 = vunpack.c.l.b16 %v1639
      %v1674 = vunpack.c.l.b16 %v1640
      %v1675 = vunpack.c.l.b16 %v1641
      %v1676 = vpack.c.b16 %v1661, %v1660
      %v1677 = vpack.c.b16 %v1663, %v1662
      %v1678 = vpack.c.b16 %v1665, %v1664
      %v1679 = vpack.c.b16 %v1667, %v1666
      %v1680 = vpack.c.b16 %v1669, %v1668
      %v1681 = vpack.c.b16 %v1671, %v1670
      %v1682 = vpack.c.b16 %v1673, %v1672
      %v1683 = vpack.c.b16 %v1675, %v1674
      %v1685 = vsel %vm485, %v1676, 0
      %v1688 = vsel %vm485, %v1677, 0
      %v1691 = vsel %vm485, %v1678, 0
      %v1694 = vsel %vm485, %v1679, 0
      %v1697 = vsel %vm485, %v1680, 0
      %v1700 = vsel %vm485, %v1681, 0
      %v1703 = vsel %vm485, %v1682, 0
      %v1706 = vsel %vm485, %v1683, 0
      %v1709 = vsel %vm510, %v1643, 0
      %1711 = vmatpush.bf16.msra.mxu0 0
      %1712 = vmatpush.bf16.msra.mxu0 0
      %1713 = vmatpush.bf16.msra.mxu0 0
      %1714 = vmatpush.bf16.msra.mxu0 0
      %1715 = vmatpush.bf16.msra.mxu0 0
      %1716 = vmatpush.bf16.msra.mxu0 0
      %1717 = vmatpush.bf16.msra.mxu0 0
      %1718 = vmatpush.bf16.msra.mxu0 %v1709
      %1719 = vmatmul.bf16.gmra.mxu0 %v1685
      %v1720 = vpop.f32.mrf.mxu0
      %v1721 = vadd.f32 0.0, %v1720
      %v1722 = vpop.f32.mrf.mxu0
      %v1723 = vadd.f32 0.0, %v1722
      %1724 = vmatmul.bf16.gmra.mxu0 %v1688
      %v1725 = vpop.f32.mrf.mxu0
      %v1726 = vadd.f32 0.0, %v1725
      %v1727 = vpop.f32.mrf.mxu0
      %v1728 = vadd.f32 0.0, %v1727
      %1729 = vmatmul.bf16.gmra.mxu0 %v1691
      %v1730 = vpop.f32.mrf.mxu0
      %v1731 = vadd.f32 0.0, %v1730
      %v1732 = vpop.f32.mrf.mxu0
      %v1733 = vadd.f32 0.0, %v1732
      %1734 = vmatmul.bf16.gmra.mxu0 %v1694
      %v1735 = vpop.f32.mrf.mxu0
      %v1736 = vadd.f32 0.0, %v1735
      %v1737 = vpop.f32.mrf.mxu0
      %v1738 = vadd.f32 0.0, %v1737
      %1739 = vmatmul.bf16.gmra.mxu0 %v1697
      %v1740 = vpop.f32.mrf.mxu0
      %v1741 = vadd.f32 0.0, %v1740
      %v1742 = vpop.f32.mrf.mxu0
      %v1743 = vadd.f32 0.0, %v1742
      %1744 = vmatmul.bf16.gmra.mxu0 %v1700
      %v1745 = vpop.f32.mrf.mxu0
      %v1746 = vadd.f32 0.0, %v1745
      %v1747 = vpop.f32.mrf.mxu0
      %v1748 = vadd.f32 0.0, %v1747
      %1749 = vmatmul.bf16.gmra.mxu0 %v1703
      %v1750 = vpop.f32.mrf.mxu0
      %v1751 = vadd.f32 0.0, %v1750
      %v1752 = vpop.f32.mrf.mxu0
      %v1753 = vadd.f32 0.0, %v1752
      %1754 = vmatmul.bf16.gmra.mxu0 %v1706
      %v1755 = vpop.f32.mrf.mxu0
      %v1756 = vadd.f32 0.0, %v1755
      %v1757 = vpop.f32.mrf.mxu0
      %v1758 = vadd.f32 0.0, %v1757
      %1759 = vdwg.mxu0
      %v1760 = vadd.f32 %v1606, %v1721
      %v1761 = vadd.f32 %v1607, %v1723
      %v1762 = vadd.f32 %v1608, %v1726
      %v1763 = vadd.f32 %v1609, %v1728
      %v1764 = vadd.f32 %v1610, %v1731
      %v1765 = vadd.f32 %v1611, %v1733
      %v1766 = vadd.f32 %v1612, %v1736
      %v1767 = vadd.f32 %v1613, %v1738
      %v1768 = vadd.f32 %v1614, %v1741
      %v1769 = vadd.f32 %v1615, %v1743
      %v1770 = vadd.f32 %v1616, %v1746
      %v1771 = vadd.f32 %v1617, %v1748
      %v1772 = vadd.f32 %v1618, %v1751
      %v1773 = vadd.f32 %v1619, %v1753
      %v1774 = vadd.f32 %v1620, %v1756
      %v1775 = vadd.f32 %v1621, %v1758
      %v1776 = vld [vmem:[%s1625] sm:$0xe]
      %v1777 = vld [vmem:[%s1625 + $0x4] sm:$0xf]
      %v1778 = vld [vmem:[%s1625 + $0x8] sm:$0x3]
      %v1779 = vld [vmem:[%s1625 + $0xc] sm:$0xe]
      %v1780 = vld [vmem:[%s1625 + $0x10] sm:$0xf]
      %v1781 = vld [vmem:[%s1625 + $0x14] sm:$0x3]
      %v1782 = vld [vmem:[%s1625 + $0x18] sm:$0xe]
      %v1783 = vld [vmem:[%s1625 + $0x1c] sm:$0xf]
      %v1784 = vld [vmem:[%s1625 + $0x20] sm:$0x3]
      %v1785 = vld [vmem:[%s1625 + $0x24] sm:$0xe]
      %v1786 = vld [vmem:[%s1625 + $0x28] sm:$0xf]
      %v1787 = vld [vmem:[%s1625 + $0x2c] sm:$0x3]
      %v1788 = vld [vmem:[%s1625 + $0x30] sm:$0xe]
      %v1789 = vld [vmem:[%s1625 + $0x34] sm:$0xf]
      %v1790 = vld [vmem:[%s1625 + $0x38] sm:$0x3]
      %v1791 = vld [vmem:[%s1625 + $0x3c] sm:$0xe]
      %v1792 = vld [vmem:[%s1625 + $0x40] sm:$0xf]
      %v1793 = vld [vmem:[%s1625 + $0x44] sm:$0x3]
      %v1794 = vld [vmem:[%s1625 + $0x48] sm:$0xe]
      %v1795 = vld [vmem:[%s1625 + $0x4c] sm:$0xf]
      %v1796 = vld [vmem:[%s1625 + $0x50] sm:$0x3]
      %v1797 = vld [vmem:[%s1625 + $0x54] sm:$0xe]
      %v1798 = vld [vmem:[%s1625 + $0x58] sm:$0xf]
      %v1799 = vld [vmem:[%s1625 + $0x5c] sm:$0x3]
      %v1801 = vshrl.u32 %v1776, 16
      %v1803 = vrot.slane %v1801, 5
      %v1804 = vshll.u32 %v1776, 16
      %v1806 = vrot.slane %v1804, 6
      %v1807 = vor.u32 %v1803, %v1806
      %v1808 = vrot.slane %v1807, 4
      %v1810 = vshrl.u32 %v1777, 16
      %v1812 = vrot.slane %v1810, 5
      %v1813 = vshll.u32 %v1777, 16
      %v1815 = vrot.slane %v1813, 6
      %v1816 = vor.u32 %v1812, %v1815
      %v1817 = vsel %vm234, %v1808, %v1816
      %v1818 = vrot.slane %v1816, 4
      %v1820 = vshrl.u32 %v1778, 16
      %v1822 = vrot.slane %v1820, 5
      %v1823 = vshll.u32 %v1778, 16
      %v1825 = vrot.slane %v1823, 6
      %v1826 = vor.u32 %v1822, %v1825
      %v1827 = vsel %vm234, %v1818, %v1826
      %v1829 = vshrl.u32 %v1779, 16
      %v1831 = vrot.slane %v1829, 5
      %v1832 = vshll.u32 %v1779, 16
      %v1834 = vrot.slane %v1832, 6
      %v1835 = vor.u32 %v1831, %v1834
      %v1836 = vrot.slane %v1835, 4
      %v1838 = vshrl.u32 %v1780, 16
      %v1840 = vrot.slane %v1838, 5
      %v1841 = vshll.u32 %v1780, 16
      %v1843 = vrot.slane %v1841, 6
      %v1844 = vor.u32 %v1840, %v1843
      %v1845 = vsel %vm234, %v1836, %v1844
      %v1846 = vrot.slane %v1844, 4
      %v1848 = vshrl.u32 %v1781, 16
      %v1850 = vrot.slane %v1848, 5
      %v1851 = vshll.u32 %v1781, 16
      %v1853 = vrot.slane %v1851, 6
      %v1854 = vor.u32 %v1850, %v1853
      %v1855 = vsel %vm234, %v1846, %v1854
      %v1857 = vshrl.u32 %v1782, 16
      %v1859 = vrot.slane %v1857, 5
      %v1860 = vshll.u32 %v1782, 16
      %v1862 = vrot.slane %v1860, 6
      %v1863 = vor.u32 %v1859, %v1862
      %v1864 = vrot.slane %v1863, 4
      %v1866 = vshrl.u32 %v1783, 16
      %v1868 = vrot.slane %v1866, 5
      %v1869 = vshll.u32 %v1783, 16
      %v1871 = vrot.slane %v1869, 6
      %v1872 = vor.u32 %v1868, %v1871
      %v1873 = vsel %vm234, %v1864, %v1872
      %v1874 = vrot.slane %v1872, 4
      %v1876 = vshrl.u32 %v1784, 16
      %v1878 = vrot.slane %v1876, 5
      %v1879 = vshll.u32 %v1784, 16
      %v1881 = vrot.slane %v1879, 6
      %v1882 = vor.u32 %v1878, %v1881
      %v1883 = vsel %vm234, %v1874, %v1882
      %v1885 = vshrl.u32 %v1785, 16
      %v1887 = vrot.slane %v1885, 5
      %v1888 = vshll.u32 %v1785, 16
      %v1890 = vrot.slane %v1888, 6
      %v1891 = vor.u32 %v1887, %v1890
      %v1892 = vrot.slane %v1891, 4
      %v1894 = vshrl.u32 %v1786, 16
      %v1896 = vrot.slane %v1894, 5
      %v1897 = vshll.u32 %v1786, 16
      %v1899 = vrot.slane %v1897, 6
      %v1900 = vor.u32 %v1896, %v1899
      %v1901 = vsel %vm234, %v1892, %v1900
      %v1902 = vrot.slane %v1900, 4
      %v1904 = vshrl.u32 %v1787, 16
      %v1906 = vrot.slane %v1904, 5
      %v1907 = vshll.u32 %v1787, 16
      %v1909 = vrot.slane %v1907, 6
      %v1910 = vor.u32 %v1906, %v1909
      %v1911 = vsel %vm234, %v1902, %v1910
      %v1913 = vshrl.u32 %v1788, 16
      %v1915 = vrot.slane %v1913, 5
      %v1916 = vshll.u32 %v1788, 16
      %v1918 = vrot.slane %v1916, 6
      %v1919 = vor.u32 %v1915, %v1918
      %v1920 = vrot.slane %v1919, 4
      %v1922 = vshrl.u32 %v1789, 16
      %v1924 = vrot.slane %v1922, 5
      %v1925 = vshll.u32 %v1789, 16
      %v1927 = vrot.slane %v1925, 6
      %v1928 = vor.u32 %v1924, %v1927
      %v1929 = vsel %vm234, %v1920, %v1928
      %v1930 = vrot.slane %v1928, 4
      %v1932 = vshrl.u32 %v1790, 16
      %v1934 = vrot.slane %v1932, 5
      %v1935 = vshll.u32 %v1790, 16
      %v1937 = vrot.slane %v1935, 6
      %v1938 = vor.u32 %v1934, %v1937
      %v1939 = vsel %vm234, %v1930, %v1938
      %v1941 = vshrl.u32 %v1791, 16
      %v1943 = vrot.slane %v1941, 5
      %v1944 = vshll.u32 %v1791, 16
      %v1946 = vrot.slane %v1944, 6
      %v1947 = vor.u32 %v1943, %v1946
      %v1948 = vrot.slane %v1947, 4
      %v1950 = vshrl.u32 %v1792, 16
      %v1952 = vrot.slane %v1950, 5
      %v1953 = vshll.u32 %v1792, 16
      %v1955 = vrot.slane %v1953, 6
      %v1956 = vor.u32 %v1952, %v1955
      %v1957 = vsel %vm234, %v1948, %v1956
      %v1958 = vrot.slane %v1956, 4
      %v1960 = vshrl.u32 %v1793, 16
      %v1962 = vrot.slane %v1960, 5
      %v1963 = vshll.u32 %v1793, 16
      %v1965 = vrot.slane %v1963, 6
      %v1966 = vor.u32 %v1962, %v1965
      %v1967 = vsel %vm234, %v1958, %v1966
      %v1969 = vshrl.u32 %v1794, 16
      %v1971 = vrot.slane %v1969, 5
      %v1972 = vshll.u32 %v1794, 16
      %v1974 = vrot.slane %v1972, 6
      %v1975 = vor.u32 %v1971, %v1974
      %v1976 = vrot.slane %v1975, 4
      %v1978 = vshrl.u32 %v1795, 16
      %v1980 = vrot.slane %v1978, 5
      %v1981 = vshll.u32 %v1795, 16
      %v1983 = vrot.slane %v1981, 6
      %v1984 = vor.u32 %v1980, %v1983
      %v1985 = vsel %vm234, %v1976, %v1984
      %v1986 = vrot.slane %v1984, 4
      %v1988 = vshrl.u32 %v1796, 16
      %v1990 = vrot.slane %v1988, 5
      %v1991 = vshll.u32 %v1796, 16
      %v1993 = vrot.slane %v1991, 6
      %v1994 = vor.u32 %v1990, %v1993
      %v1995 = vsel %vm234, %v1986, %v1994
      %v1997 = vshrl.u32 %v1797, 16
      %v1999 = vrot.slane %v1997, 5
      %v2000 = vshll.u32 %v1797, 16
      %v2002 = vrot.slane %v2000, 6
      %v2003 = vor.u32 %v1999, %v2002
      %v2004 = vrot.slane %v2003, 4
      %v2006 = vshrl.u32 %v1798, 16
      %v2008 = vrot.slane %v2006, 5
      %v2009 = vshll.u32 %v1798, 16
      %v2011 = vrot.slane %v2009, 6
      %v2012 = vor.u32 %v2008, %v2011
      %v2013 = vsel %vm234, %v2004, %v2012
      %v2014 = vrot.slane %v2012, 4
      %v2016 = vshrl.u32 %v1799, 16
      %v2018 = vrot.slane %v2016, 5
      %v2019 = vshll.u32 %v1799, 16
      %v2021 = vrot.slane %v2019, 6
      %v2022 = vor.u32 %v2018, %v2021
      %v2023 = vsel %vm234, %v2014, %v2022
      %s2024 = scalar_lea.vmem %s1, 14
      %v2025 = vld [vmem:[%s2024] sm:$0x3]
      %v2026 = vunpack.c.l.b16 %v1817
      %v2027 = vunpack.c.l.b16 %v1827
      %v2028 = vunpack.c.l.b16 %v1845
      %v2029 = vunpack.c.l.b16 %v1855
      %v2030 = vunpack.c.l.b16 %v1873
      %v2031 = vunpack.c.l.b16 %v1883
      %v2032 = vunpack.c.l.b16 %v1901
      %v2033 = vunpack.c.l.b16 %v1911
      %v2034 = vunpack.c.l.b16 %v1929
      %v2035 = vunpack.c.l.b16 %v1939
      %v2036 = vunpack.c.l.b16 %v1957
      %v2037 = vunpack.c.l.b16 %v1967
      %v2038 = vunpack.c.l.b16 %v1985
      %v2039 = vunpack.c.l.b16 %v1995
      %v2040 = vunpack.c.l.b16 %v2013
      %v2041 = vunpack.c.l.b16 %v2023
      %v2042 = vpack.c.b16 %v2027, %v2026
      %v2043 = vpack.c.b16 %v2029, %v2028
      %v2044 = vpack.c.b16 %v2031, %v2030
      %v2045 = vpack.c.b16 %v2033, %v2032
      %v2046 = vpack.c.b16 %v2035, %v2034
      %v2047 = vpack.c.b16 %v2037, %v2036
      %v2048 = vpack.c.b16 %v2039, %v2038
      %v2049 = vpack.c.b16 %v2041, %v2040
      %v2051 = vsel %vm485, %v2042, 0
      %v2054 = vsel %vm485, %v2043, 0
      %v2057 = vsel %vm485, %v2044, 0
      %v2060 = vsel %vm485, %v2045, 0
      %v2063 = vsel %vm485, %v2046, 0
      %v2066 = vsel %vm485, %v2047, 0
      %v2069 = vsel %vm485, %v2048, 0
      %v2072 = vsel %vm485, %v2049, 0
      %v2075 = vsel %vm510, %v2025, 0
      %2077 = vmatpush.bf16.msra.mxu0 0
      %2078 = vmatpush.bf16.msra.mxu0 0
      %2079 = vmatpush.bf16.msra.mxu0 0
      %2080 = vmatpush.bf16.msra.mxu0 0
      %2081 = vmatpush.bf16.msra.mxu0 0
      %2082 = vmatpush.bf16.msra.mxu0 0
      %2083 = vmatpush.bf16.msra.mxu0 0
      %2084 = vmatpush.bf16.msra.mxu0 %v2075
      %2085 = vmatmul.bf16.gmra.mxu0 %v2051
      %v2086 = vpop.f32.mrf.mxu0
      %v2087 = vadd.f32 0.0, %v2086
      %v2088 = vpop.f32.mrf.mxu0
      %v2089 = vadd.f32 0.0, %v2088
      %2090 = vmatmul.bf16.gmra.mxu0 %v2054
      %v2091 = vpop.f32.mrf.mxu0
      %v2092 = vadd.f32 0.0, %v2091
      %v2093 = vpop.f32.mrf.mxu0
      %v2094 = vadd.f32 0.0, %v2093
      %2095 = vmatmul.bf16.gmra.mxu0 %v2057
      %v2096 = vpop.f32.mrf.mxu0
      %v2097 = vadd.f32 0.0, %v2096
      %v2098 = vpop.f32.mrf.mxu0
      %v2099 = vadd.f32 0.0, %v2098
      %2100 = vmatmul.bf16.gmra.mxu0 %v2060
      %v2101 = vpop.f32.mrf.mxu0
      %v2102 = vadd.f32 0.0, %v2101
      %v2103 = vpop.f32.mrf.mxu0
      %v2104 = vadd.f32 0.0, %v2103
      %2105 = vmatmul.bf16.gmra.mxu0 %v2063
      %v2106 = vpop.f32.mrf.mxu0
      %v2107 = vadd.f32 0.0, %v2106
      %v2108 = vpop.f32.mrf.mxu0
      %v2109 = vadd.f32 0.0, %v2108
      %2110 = vmatmul.bf16.gmra.mxu0 %v2066
      %v2111 = vpop.f32.mrf.mxu0
      %v2112 = vadd.f32 0.0, %v2111
      %v2113 = vpop.f32.mrf.mxu0
      %v2114 = vadd.f32 0.0, %v2113
      %2115 = vmatmul.bf16.gmra.mxu0 %v2069
      %v2116 = vpop.f32.mrf.mxu0
      %v2117 = vadd.f32 0.0, %v2116
      %v2118 = vpop.f32.mrf.mxu0
      %v2119 = vadd.f32 0.0, %v2118
      %2120 = vmatmul.bf16.gmra.mxu0 %v2072
      %v2121 = vpop.f32.mrf.mxu0
      %v2122 = vadd.f32 0.0, %v2121
      %v2123 = vpop.f32.mrf.mxu0
      %v2124 = vadd.f32 0.0, %v2123
      %2125 = vdwg.mxu0
      %v2126 = vadd.f32 %v1760, %v2087
      %v2127 = vadd.f32 %v1761, %v2089
      %v2128 = vadd.f32 %v1762, %v2092
      %v2129 = vadd.f32 %v1763, %v2094
      %v2130 = vadd.f32 %v1764, %v2097
      %v2131 = vadd.f32 %v1765, %v2099
      %v2132 = vadd.f32 %v1766, %v2102
      %v2133 = vadd.f32 %v1767, %v2104
      %v2134 = vadd.f32 %v1768, %v2107
      %v2135 = vadd.f32 %v1769, %v2109
      %v2136 = vadd.f32 %v1770, %v2112
      %v2137 = vadd.f32 %v1771, %v2114
      %v2138 = vadd.f32 %v1772, %v2117
      %v2139 = vadd.f32 %v1773, %v2119
      %v2140 = vadd.f32 %v1774, %v2122
      %v2141 = vadd.f32 %v1775, %v2124
      %v2142 = vld [vmem:[%s1625] sm:$0x8]
      %v2143 = vld [vmem:[%s1625 + $0x8] sm:$0x7]
      %v2144 = vld [vmem:[%s1625 + $0xc] sm:$0x8]
      %v2145 = vld [vmem:[%s1625 + $0x14] sm:$0x7]
      %v2146 = vld [vmem:[%s1625 + $0x18] sm:$0x8]
      %v2147 = vld [vmem:[%s1625 + $0x20] sm:$0x7]
      %v2148 = vld [vmem:[%s1625 + $0x24] sm:$0x8]
      %v2149 = vld [vmem:[%s1625 + $0x2c] sm:$0x7]
      %v2150 = vld [vmem:[%s1625 + $0x30] sm:$0x8]
      %v2151 = vld [vmem:[%s1625 + $0x38] sm:$0x7]
      %v2152 = vld [vmem:[%s1625 + $0x3c] sm:$0x8]
      %v2153 = vld [vmem:[%s1625 + $0x44] sm:$0x7]
      %v2154 = vld [vmem:[%s1625 + $0x48] sm:$0x8]
      %v2155 = vld [vmem:[%s1625 + $0x50] sm:$0x7]
      %v2156 = vld [vmem:[%s1625 + $0x54] sm:$0x8]
      %v2157 = vld [vmem:[%s1625 + $0x5c] sm:$0x7]
      %v2182 = vrot.slane %v2142, 7
      %v2183 = vrot.slane %v2182, 4
      %v2184 = vrot.slane %v1777, 7
      %v2185 = vsel %vm713, %v2183, %v2184
      %v2186 = vrot.slane %v2184, 4
      %v2187 = vrot.slane %v2143, 7
      %v2188 = vsel %vm713, %v2186, %v2187
      %v2189 = vrot.slane %v2144, 7
      %v2190 = vrot.slane %v2189, 4
      %v2191 = vrot.slane %v1780, 7
      %v2192 = vsel %vm713, %v2190, %v2191
      %v2193 = vrot.slane %v2191, 4
      %v2194 = vrot.slane %v2145, 7
      %v2195 = vsel %vm713, %v2193, %v2194
      %v2196 = vrot.slane %v2146, 7
      %v2197 = vrot.slane %v2196, 4
      %v2198 = vrot.slane %v1783, 7
      %v2199 = vsel %vm713, %v2197, %v2198
      %v2200 = vrot.slane %v2198, 4
      %v2201 = vrot.slane %v2147, 7
      %v2202 = vsel %vm713, %v2200, %v2201
      %v2203 = vrot.slane %v2148, 7
      %v2204 = vrot.slane %v2203, 4
      %v2205 = vrot.slane %v1786, 7
      %v2206 = vsel %vm713, %v2204, %v2205
      %v2207 = vrot.slane %v2205, 4
      %v2208 = vrot.slane %v2149, 7
      %v2209 = vsel %vm713, %v2207, %v2208
      %v2210 = vrot.slane %v2150, 7
      %v2211 = vrot.slane %v2210, 4
      %v2212 = vrot.slane %v1789, 7
      %v2213 = vsel %vm713, %v2211, %v2212
      %v2214 = vrot.slane %v2212, 4
      %v2215 = vrot.slane %v2151, 7
      %v2216 = vsel %vm713, %v2214, %v2215
      %v2217 = vrot.slane %v2152, 7
      %v2218 = vrot.slane %v2217, 4
      %v2219 = vrot.slane %v1792, 7
      %v2220 = vsel %vm713, %v2218, %v2219
      %v2221 = vrot.slane %v2219, 4
      %v2222 = vrot.slane %v2153, 7
      %v2223 = vsel %vm713, %v2221, %v2222
      %v2224 = vrot.slane %v2154, 7
      %v2225 = vrot.slane %v2224, 4
      %v2226 = vrot.slane %v1795, 7
      %v2227 = vsel %vm713, %v2225, %v2226
      %v2228 = vrot.slane %v2226, 4
      %v2229 = vrot.slane %v2155, 7
      %v2230 = vsel %vm713, %v2228, %v2229
      %v2231 = vrot.slane %v2156, 7
      %v2232 = vrot.slane %v2231, 4
      %v2233 = vrot.slane %v1798, 7
      %v2234 = vsel %vm713, %v2232, %v2233
      %v2235 = vrot.slane %v2233, 4
      %v2236 = vrot.slane %v2157, 7
      %v2237 = vsel %vm713, %v2235, %v2236
      %s2238 = scalar_lea.vmem %s1, 16
      %v2239 = vld [vmem:[%s2238] sm:$0x3]
      %v2240 = vunpack.c.l.b16 %v2185
      %v2241 = vunpack.c.l.b16 %v2188
      %v2242 = vunpack.c.l.b16 %v2192
      %v2243 = vunpack.c.l.b16 %v2195
      %v2244 = vunpack.c.l.b16 %v2199
      %v2245 = vunpack.c.l.b16 %v2202
      %v2246 = vunpack.c.l.b16 %v2206
      %v2247 = vunpack.c.l.b16 %v2209
      %v2248 = vunpack.c.l.b16 %v2213
      %v2249 = vunpack.c.l.b16 %v2216
      %v2250 = vunpack.c.l.b16 %v2220
      %v2251 = vunpack.c.l.b16 %v2223
      %v2252 = vunpack.c.l.b16 %v2227
      %v2253 = vunpack.c.l.b16 %v2230
      %v2254 = vunpack.c.l.b16 %v2234
      %v2255 = vunpack.c.l.b16 %v2237
      %v2256 = vpack.c.b16 %v2241, %v2240
      %v2257 = vpack.c.b16 %v2243, %v2242
      %v2258 = vpack.c.b16 %v2245, %v2244
      %v2259 = vpack.c.b16 %v2247, %v2246
      %v2260 = vpack.c.b16 %v2249, %v2248
      %v2261 = vpack.c.b16 %v2251, %v2250
      %v2262 = vpack.c.b16 %v2253, %v2252
      %v2263 = vpack.c.b16 %v2255, %v2254
      %v2265 = vsel %vm485, %v2256, 0
      %v2268 = vsel %vm485, %v2257, 0
      %v2271 = vsel %vm485, %v2258, 0
      %v2274 = vsel %vm485, %v2259, 0
      %v2277 = vsel %vm485, %v2260, 0
      %v2280 = vsel %vm485, %v2261, 0
      %v2283 = vsel %vm485, %v2262, 0
      %v2286 = vsel %vm485, %v2263, 0
      %v2289 = vsel %vm510, %v2239, 0
      %2291 = vmatpush.bf16.msra.mxu0 0
      %2292 = vmatpush.bf16.msra.mxu0 0
      %2293 = vmatpush.bf16.msra.mxu0 0
      %2294 = vmatpush.bf16.msra.mxu0 0
      %2295 = vmatpush.bf16.msra.mxu0 0
      %2296 = vmatpush.bf16.msra.mxu0 0
      %2297 = vmatpush.bf16.msra.mxu0 0
      %2298 = vmatpush.bf16.msra.mxu0 %v2289
      %2299 = vmatmul.bf16.gmra.mxu0 %v2265
      %v2300 = vpop.f32.mrf.mxu0
      %v2301 = vadd.f32 0.0, %v2300
      %v2302 = vpop.f32.mrf.mxu0
      %v2303 = vadd.f32 0.0, %v2302
      %2304 = vmatmul.bf16.gmra.mxu0 %v2268
      %v2305 = vpop.f32.mrf.mxu0
      %v2306 = vadd.f32 0.0, %v2305
      %v2307 = vpop.f32.mrf.mxu0
      %v2308 = vadd.f32 0.0, %v2307
      %2309 = vmatmul.bf16.gmra.mxu0 %v2271
      %v2310 = vpop.f32.mrf.mxu0
      %v2311 = vadd.f32 0.0, %v2310
      %v2312 = vpop.f32.mrf.mxu0
      %v2313 = vadd.f32 0.0, %v2312
      %2314 = vmatmul.bf16.gmra.mxu0 %v2274
      %v2315 = vpop.f32.mrf.mxu0
      %v2316 = vadd.f32 0.0, %v2315
      %v2317 = vpop.f32.mrf.mxu0
      %v2318 = vadd.f32 0.0, %v2317
      %2319 = vmatmul.bf16.gmra.mxu0 %v2277
      %v2320 = vpop.f32.mrf.mxu0
      %v2321 = vadd.f32 0.0, %v2320
      %v2322 = vpop.f32.mrf.mxu0
      %v2323 = vadd.f32 0.0, %v2322
      %2324 = vmatmul.bf16.gmra.mxu0 %v2280
      %v2325 = vpop.f32.mrf.mxu0
      %v2326 = vadd.f32 0.0, %v2325
      %v2327 = vpop.f32.mrf.mxu0
      %v2328 = vadd.f32 0.0, %v2327
      %2329 = vmatmul.bf16.gmra.mxu0 %v2283
      %v2330 = vpop.f32.mrf.mxu0
      %v2331 = vadd.f32 0.0, %v2330
      %v2332 = vpop.f32.mrf.mxu0
      %v2333 = vadd.f32 0.0, %v2332
      %2334 = vmatmul.bf16.gmra.mxu0 %v2286
      %v2335 = vpop.f32.mrf.mxu0
      %v2336 = vadd.f32 0.0, %v2335
      %v2337 = vpop.f32.mrf.mxu0
      %v2338 = vadd.f32 0.0, %v2337
      %2339 = vdwg.mxu0
      %v2340 = vadd.f32 %v2126, %v2301
      %v2341 = vadd.f32 %v2127, %v2303
      %v2342 = vadd.f32 %v2128, %v2306
      %v2343 = vadd.f32 %v2129, %v2308
      %v2344 = vadd.f32 %v2130, %v2311
      %v2345 = vadd.f32 %v2131, %v2313
      %v2346 = vadd.f32 %v2132, %v2316
      %v2347 = vadd.f32 %v2133, %v2318
      %v2348 = vadd.f32 %v2134, %v2321
      %v2349 = vadd.f32 %v2135, %v2323
      %v2350 = vadd.f32 %v2136, %v2326
      %v2351 = vadd.f32 %v2137, %v2328
      %v2352 = vadd.f32 %v2138, %v2331
      %v2353 = vadd.f32 %v2139, %v2333
      %v2354 = vadd.f32 %v2140, %v2336
      %v2355 = vadd.f32 %v2141, %v2338
      %v2356 = vld [vmem:[%s2] sm:$0x1]
      %v2358 = vperm.slane %v2356, 0
      %v2360 = vadd.f32 %v2340, %v2358
      %v2361 = vadd.f32 %v2341, %v2358
      %v2362 = vadd.f32 %v2342, %v2358
      %v2363 = vadd.f32 %v2343, %v2358
      %v2364 = vadd.f32 %v2344, %v2358
      %v2365 = vadd.f32 %v2345, %v2358
      %v2366 = vadd.f32 %v2346, %v2358
      %v2367 = vadd.f32 %v2347, %v2358
      %v2368 = vadd.f32 %v2348, %v2358
      %v2369 = vadd.f32 %v2349, %v2358
      %v2370 = vadd.f32 %v2350, %v2358
      %v2371 = vadd.f32 %v2351, %v2358
      %v2372 = vadd.f32 %v2352, %v2358
      %v2373 = vadd.f32 %v2353, %v2358
      %v2374 = vadd.f32 %v2354, %v2358
      %v2375 = vadd.f32 %v2355, %v2358
      %v2376 = vmax.f32 %v2360, 0.0
      %v2377 = vmax.f32 %v2361, 0.0
      %v2378 = vmax.f32 %v2362, 0.0
      %v2379 = vmax.f32 %v2363, 0.0
      %v2380 = vmax.f32 %v2364, 0.0
      %v2381 = vmax.f32 %v2365, 0.0
      %v2382 = vmax.f32 %v2366, 0.0
      %v2383 = vmax.f32 %v2367, 0.0
      %v2384 = vmax.f32 %v2368, 0.0
      %v2385 = vmax.f32 %v2369, 0.0
      %v2386 = vmax.f32 %v2370, 0.0
      %v2387 = vmax.f32 %v2371, 0.0
      %v2388 = vmax.f32 %v2372, 0.0
      %v2389 = vmax.f32 %v2373, 0.0
      %v2390 = vmax.f32 %v2374, 0.0
      %v2391 = vmax.f32 %v2375, 0.0
      %v2392 = vpack.c.bf16 %v2376, %v2376
      %v2393 = vpack.c.bf16 %v2377, %v2377
      %v2394 = vpack.c.bf16 %v2378, %v2378
      %v2395 = vpack.c.bf16 %v2379, %v2379
      %v2396 = vpack.c.bf16 %v2380, %v2380
      %v2397 = vpack.c.bf16 %v2381, %v2381
      %v2398 = vpack.c.bf16 %v2382, %v2382
      %v2399 = vpack.c.bf16 %v2383, %v2383
      %v2400 = vpack.c.bf16 %v2384, %v2384
      %v2401 = vpack.c.bf16 %v2385, %v2385
      %v2402 = vpack.c.bf16 %v2386, %v2386
      %v2403 = vpack.c.bf16 %v2387, %v2387
      %v2404 = vpack.c.bf16 %v2388, %v2388
      %v2405 = vpack.c.bf16 %v2389, %v2389
      %v2406 = vpack.c.bf16 %v2390, %v2390
      %v2407 = vpack.c.bf16 %v2391, %v2391
      %vm2408 = vcmask 60416
      %2409 = vst.msk [vmem:[%s192] sm:$0xf] %vm2408, %v2392
      %2410 = vst.msk [vmem:[%s192 + $0x4] sm:$0xf] %vm2408, %v2393
      %2411 = vst.msk [vmem:[%s192 + $0x8] sm:$0xf] %vm2408, %v2394
      %2412 = vst.msk [vmem:[%s192 + $0xc] sm:$0xf] %vm2408, %v2395
      %2413 = vst.msk [vmem:[%s192 + $0x10] sm:$0xf] %vm2408, %v2396
      %2414 = vst.msk [vmem:[%s192 + $0x14] sm:$0xf] %vm2408, %v2397
      %2415 = vst.msk [vmem:[%s192 + $0x18] sm:$0xf] %vm2408, %v2398
      %2416 = vst.msk [vmem:[%s192 + $0x1c] sm:$0xf] %vm2408, %v2399
      %2417 = vst.msk [vmem:[%s192 + $0x20] sm:$0xf] %vm2408, %v2400
      %2418 = vst.msk [vmem:[%s192 + $0x24] sm:$0xf] %vm2408, %v2401
      %2419 = vst.msk [vmem:[%s192 + $0x28] sm:$0xf] %vm2408, %v2402
      %2420 = vst.msk [vmem:[%s192 + $0x2c] sm:$0xf] %vm2408, %v2403
      %2421 = vst.msk [vmem:[%s192 + $0x30] sm:$0xf] %vm2408, %v2404
      %2422 = vst.msk [vmem:[%s192 + $0x34] sm:$0xf] %vm2408, %v2405
      %2423 = vst.msk [vmem:[%s192 + $0x38] sm:$0xf] %vm2408, %v2406
      %2424 = vst.msk [vmem:[%s192 + $0x3c] sm:$0xf] %vm2408, %v2407
      %s2425 = smul.u32 16, %s19
      %p2426 = scmp.lt.s32.totalorder %s18, 1
      %s2427 = scalar_select %p2426, %s18, 1
      %p2428 = scmp.lt.s32.totalorder %s2425, 31
      %s2429 = scalar_select %p2428, %s2425, 31
      %s2430 = smul.addr %s2427, 32
      %s2431 = sadd.s32 %s2429, %s2430
      %s2432 = smul.addr %s2431, 4
      %s2433 = scalar_lea.vmem %s3, %s2432
      // Predicated region
      $region33: #{aspp_forward.7} parent=31 // pred_check
        %p2434 = pneg %p114
      $region34: #{aspp_forward.7} parent=31 // pred_check_branch
        %2436 = sbr.rel (%p2434) target = $region36
      $region35: #{aspp_forward.7} parent=31 // pred_region
        %s2437 = smul.u32 16, %s19
      $region36: #{aspp_forward.7} parent=31 // pred_fallthru
        _
    $region32: #{aspp_forward.7} parent=5 // pred_fallthru
      _
    %p2438 = scmp.le.s32.totalorder 2, %s9
    // Predicated region
    $region37: #{aspp_forward.7} parent=5 // pred_check
      %p2439 = pneg %p2438
    $region38: #{aspp_forward.7} parent=5 // pred_check_branch
      %2441 = sbr.rel (%p2439) target = $region40
    $region39: #{aspp_forward.7} parent=5 // pred_region
      %s2442 = ssub.s32 %s9, 2
      // Predicated region
      $region41: #{aspp_forward.7} parent=39 // pred_check
        %p2443 = pneg %p120
      $region42: #{aspp_forward.7} parent=39 // pred_check_branch
        %2445 = sbr.rel (%p2443) target = $region44
      $region43: #{aspp_forward.7} parent=39 // pred_region
        %s2446 = smul.u32 16, %s21
        %p2447 = scmp.lt.s32.totalorder %s20, 1
        %s2448 = scalar_select %p2447, %s20, 1
        %p2449 = scmp.lt.s32.totalorder %s2446, 31
        %s2450 = scalar_select %p2449, %s2446, 31
        %s2451 = smul.addr %s2448, 32
        %s2452 = sadd.s32 %s2450, %s2451
        %s2453 = smul.addr %s2452, 4
        %s2454 = scalar_lea.vmem %s3, %s2453
      $region44: #{aspp_forward.7} parent=39 // pred_fallthru
        _
    $region40: #{aspp_forward.7} parent=5 // pred_fallthru
      _
  $region6: #{aspp_forward.7} parent=0 // loop_footer
    %s13 = sadd.s32 1, %s9
  $region7: #{aspp_forward.7} parent=0 // loop_footer_branch
    %8 = sbr.rel target = $region3
  $region8: #{aspp_forward.7} parent=0 // loop_exit
    _

</llo_original>
